<compile_context>
chip_gen: v6e
topology: v6e:2x2x1
jax: 0.10.0
libtpu: 0.0.40
codegen_flags: <defaults>
</compile_context>

<pallas_src>
import jax
import jax.numpy as jnp
from jax import lax
from jax.experimental import pallas as pl
from jax.experimental.pallas import tpu as pltpu

FC1_OUT = 64            # FC1_OUTPUT_SIZE
FC1_K = 6               # FC1_KERNEL_SIZE
FC1_PAD = 3
FC2_OUT = 4             # FC2_OUTPUT_SIZE
POOL_K = 8              # POOL_SIZE (non-resnet18 branch)
P = POOL_K * POOL_K     # 64 spatial positions after fc1
OUT_W = 8               # lane-padded output width (3 real channels + 5 zeros)


def _head_kernel(x_ref, w1_ref, w2_ref, b2_ref, wpool_ref, bpool_ref, out_ref):
    """Per batch-tile: fc1(6x6 conv, no bias) -> relu -> [dropout == id]
    -> fc2(1x1 conv)+bias -> relu -> L2-normalize(rgb over ch)
    -> softmax(conf over pixels) -> rgb*conf
    -> fc_pool(8x8 conv == global weighted reduction)+bias -> relu."""
    TB, Hp, Wp, Cin = x_ref.shape

    # Upcast once: with f32 the (TB, 8, 8, Cin) -> (TB*64, Cin) collapse is a
    # clean sublane-tile regroup (8 == f32 sublane tile).
    x = x_ref[...].astype(jnp.float32)                          # (TB, Hp, Wp, Cin)

    # fc1: 36 accumulated shifted bf16 matmuls (one per kernel tap), f32 acc.
    acc = jnp.zeros((TB * P, FC1_OUT), jnp.float32)
    for kh in range(FC1_K):
        for kw in range(FC1_K):
            xs = x[:, kh:kh + POOL_K, kw:kw + POOL_K, :]        # (TB, 8, 8, Cin)
            xs = xs.reshape(TB * P, Cin).astype(jnp.bfloat16)
            wk = w1_ref[kh * FC1_K + kw]                        # (Cin, 64) bf16
            acc = acc + jnp.dot(xs, wk, preferred_element_type=jnp.float32)
    y1 = jnp.maximum(acc, 0.0)                                  # (TB*P, 64) f32
    # dropout(0.5) is the identity at inference.

    # fc2 (1x1 conv) + bias + relu; tiny N=4 matmul kept in f32.
    y2 = jnp.dot(y1, w2_ref[...], preferred_element_type=jnp.float32) + b2_ref[...]
    y2 = jnp.maximum(y2, 0.0)                                   # (TB*P, 4)
    y2 = y2.reshape(TB, P, FC2_OUT)                             # (TB, 64, 4)

    # Keep the block 4-wide; use channel masks instead of narrow lane slices.
    ch = lax.broadcasted_iota(jnp.int32, y2.shape, 2)

    # F.normalize(p=2, dim=channel): rsqrt on the EUP instead of sqrt + divide.
    sum_sq = jnp.sum(jnp.where(ch < 3, y2 * y2, 0.0), axis=2, keepdims=True)
    inv_nrm = lax.rsqrt(sum_sq + 1e-24)                         # (TB, P, 1)

    # Softmax of the confidence channel over the 64 spatial positions.
    conf = jnp.sum(jnp.where(ch == 3, y2, 0.0), axis=2, keepdims=True)   # (TB, P, 1)
    m = jnp.max(conf, axis=1, keepdims=True)
    e = jnp.exp(conf - m)
    denom = jnp.sum(e, axis=1, keepdims=True)
    conf = e * pl.reciprocal(denom, approx=True)                # (TB, P, 1)

    # Channel 3 of `weighted` is junk but multiplies a zeroed weight column.
    weighted = y2 * (inv_nrm * conf)                            # (TB, P, 4)

    # fc_pool: kernel size == spatial size => one weighted reduction over
    # (pixel, channel) per output channel.  wpool_ref[o] is (P, 4), pad ch zeroed.
    lane = lax.broadcasted_iota(jnp.int32, (1, OUT_W), 1)
    pooled = jnp.zeros((TB, OUT_W), jnp.float32)
    for o in range(3):
        w_o = wpool_ref[o]                                      # (P, 4)
        s = jnp.sum(weighted * w_o[None, :, :], axis=2)         # (TB, P)
        s = jnp.sum(s, axis=1, keepdims=True)                   # (TB, 1)
        pooled = pooled + jnp.where(lane == o, s, 0.0)          # place in lane o
    pooled = pooled + bpool_ref[...]                            # (TB, 8)
    out_ref[0] = jnp.maximum(pooled, 0.0)


def init_params(key, cin):
    """Deterministic synthetic parameters with PyTorch conv weight layouts (OIHW)."""
    k1, k2, k3, k4, k5 = jax.random.split(key, 5)
    s = 0.05
    return dict(
        w1=jax.random.normal(k1, (FC1_OUT, cin, FC1_K, FC1_K), jnp.float32) * s,
        w2=jax.random.normal(k2, (FC2_OUT, FC1_OUT, 1, 1), jnp.float32) * s,
        b2=jax.random.normal(k3, (FC2_OUT,), jnp.float32) * s,
        wpool=jax.random.normal(k4, (3, 3, POOL_K, POOL_K), jnp.float32) * s,
        bpool=jax.random.normal(k5, (3,), jnp.float32) * s,
    )


def cc_fcn4_head(x_nchw, params, *, tile_b=2):
    """x_nchw: backbone feature map (B, Cin, H, W) -> output rgb (B, 3, 1, 1)."""
    B, Cin, H, W = x_nchw.shape
    Ho = H + 2 * FC1_PAD - FC1_K + 1
    Wo = W + 2 * FC1_PAD - FC1_K + 1
    assert Ho == POOL_K and Wo == POOL_K, "fc_pool (kernel=8, no pad) expects an 8x8 map"

    # Batch tile folded into the MXU M dimension (M = TB*64). TB=2 -> M=128.
    TB = max(1, min(tile_b, B))
    while B % TB:
        TB -= 1

    # ---- glue (plain JAX): NHWC + spatial pad + tiny weight repacks ----
    # bf16 feature map halves the HBM->VMEM DMA (dominant input traffic).
    x = jnp.transpose(x_nchw, (0, 2, 3, 1)).astype(jnp.bfloat16)
    x_pad = jnp.pad(x, ((0, 0), (FC1_PAD, FC1_PAD), (FC1_PAD, FC1_PAD), (0, 0)))
    Hp, Wp = H + 2 * FC1_PAD, W + 2 * FC1_PAD

    # fc1 weights as 36 taps: [kh*6+kw, ci, co], bf16.
    w1_r = jnp.transpose(params['w1'], (2, 3, 1, 0)).reshape(
        FC1_K * FC1_K, Cin, FC1_OUT).astype(jnp.bfloat16)
    w2_mat = params['w2'][:, :, 0, 0].T.astype(jnp.float32)                # (64, 4)
    b2 = params['b2'].reshape(1, FC2_OUT).astype(jnp.float32)
    # fc_pool weights: [o, pixel, c_in] with the pad input channel zeroed.
    wpool_r = jnp.transpose(params['wpool'], (0, 2, 3, 1)).reshape(3, P, 3)
    wpool_r = jnp.pad(wpool_r, ((0, 0), (0, 0), (0, FC2_OUT - 3)))          # (3, P, 4)
    bpool_pad = jnp.pad(params['bpool'].reshape(1, 3), ((0, 0), (0, OUT_W - 3)))

    flops = (2 * B * P * (FC1_K * FC1_K * Cin) * FC1_OUT
             + 2 * B * P * FC1_OUT * FC2_OUT
             + 2 * B * P * FC2_OUT * 3)
    transcendentals = 3 * B * P
    bytes_accessed = (x_pad.size * 2 + w1_r.size * 2
                      + (w2_mat.size + b2.size + wpool_r.size + bpool_pad.size) * 4
                      + B * OUT_W * 4)

    out = pl.pallas_call(
        _head_kernel,
        out_shape=jax.ShapeDtypeStruct((B // TB, TB, OUT_W), jnp.float32),
        grid_spec=pltpu.PrefetchScalarGridSpec(
            num_scalar_prefetch=0,
            grid=(B // TB,),
            in_specs=[
                pl.BlockSpec((TB, Hp, Wp, Cin), lambda b: (b, 0, 0, 0)),
                pl.BlockSpec((FC1_K * FC1_K, Cin, FC1_OUT), lambda b: (0, 0, 0)),
                pl.BlockSpec((FC1_OUT, FC2_OUT), lambda b: (0, 0)),
                pl.BlockSpec((1, FC2_OUT), lambda b: (0, 0)),
                pl.BlockSpec((3, P, FC2_OUT), lambda b: (0, 0, 0)),
                pl.BlockSpec((1, OUT_W), lambda b: (0, 0)),
            ],
            out_specs=pl.BlockSpec((1, TB, OUT_W), lambda b: (b, 0, 0)),
        ),
        compiler_params=pltpu.CompilerParams(
            dimension_semantics=("parallel",)),
        cost_estimate=pl.CostEstimate(flops=flops,
                                      transcendentals=transcendentals,
                                      bytes_accessed=bytes_accessed),
    )(x_pad, w1_r, w2_mat, b2, wpool_r, bpool_pad)

    out = out.reshape(B, OUT_W)[:, :3]
    return out.reshape(B, 3, 1, 1)                                          # NCHW


def cc_fcn4_head_ref(x, p):
    """Pure-JAX f32 reference mirroring the PyTorch forward (NCHW)."""
    dn = ('NCHW', 'OIHW', 'NCHW')
    y = lax.conv_general_dilated(x, p['w1'], (1, 1), [(3, 3), (3, 3)], dimension_numbers=dn)
    y = jnp.maximum(y, 0.0)
    y = lax.conv_general_dilated(y, p['w2'], (1, 1), 'VALID', dimension_numbers=dn)
    y = jnp.maximum(y + p['b2'].reshape(1, -1, 1, 1), 0.0)
    B, _, h, w = y.shape
    rgb = y[:, :3]
    nrm = jnp.sqrt(jnp.sum(rgb * rgb, axis=1, keepdims=True))
    rgb = rgb / jnp.maximum(nrm, 1e-12)
    conf = jax.nn.softmax(y[:, 3:4].reshape(B, h * w), axis=1).reshape(B, 1, h, w)
    rgb = rgb * conf
    out = lax.conv_general_dilated(rgb, p['wpool'], (1, 1), 'VALID', dimension_numbers=dn)
    return jnp.maximum(out + p['bpool'].reshape(1, -1, 1, 1), 0.0)


if __name__ == "__main__":
    key = jax.random.PRNGKey(0)
    kx, kp = jax.random.split(key)

    # Backbone feature map: 7x7 -> fc1(pad=3, k=6) gives 8x8 -> fc_pool(k=8) gives 1x1.
    B, Cin, H, W = 4, 32, 7, 7
    x = jax.random.normal(kx, (B, Cin, H, W), jnp.float32)
    params = init_params(kp, Cin)

    out = jax.block_until_ready(cc_fcn4_head(x, params))
    ref = cc_fcn4_head_ref(x, params)

    assert out.shape == (B, 3, 1, 1), out.shape
    # Tolerance accounts for the bf16 feature-map/fc1-weight path.
    assert jnp.allclose(out, ref, rtol=3e-2, atol=1e-3), (out, ref)
    print("KERNEL_OK")
</pallas_src>

<mosaic_0001>
module attributes {stable_mosaic.version = 11 : i64} {
  func.func @_head_kernel(%arg0: i32, %arg1: memref<2x13x13x32xbf16, #tpu.memory_space<vmem>>, %arg2: memref<36x32x64xbf16, #tpu.memory_space<vmem>>, %arg3: memref<64x4xf32, #tpu.memory_space<vmem>>, %arg4: memref<1x4xf32, #tpu.memory_space<vmem>>, %arg5: memref<3x64x4xf32, #tpu.memory_space<vmem>>, %arg6: memref<1x8xf32, #tpu.memory_space<vmem>>, %arg7: memref<1x2x8xf32, #tpu.memory_space<vmem>>) attributes {dimension_semantics = [#tpu.dimension_semantics<parallel>], iteration_bounds = array<i64: 2>, scalar_prefetch = 0 : i64, scratch_operands = 0 : i64, tpu.core_type = #tpu.core_type<tc>, window_params = [{transform_indices = @transform_0, window_bounds = array<i64: 2, 13, 13, 32>}, {pipeline_mode = #tpu.pipeline_mode<synchronous>, transform_indices = @transform_1, window_bounds = array<i64: 36, 32, 64>}, {pipeline_mode = #tpu.pipeline_mode<synchronous>, transform_indices = @transform_2, window_bounds = array<i64: 64, 4>}, {pipeline_mode = #tpu.pipeline_mode<synchronous>, transform_indices = @transform_3, window_bounds = array<i64: 1, 4>}, {pipeline_mode = #tpu.pipeline_mode<synchronous>, transform_indices = @transform_4, window_bounds = array<i64: 3, 64, 4>}, {pipeline_mode = #tpu.pipeline_mode<synchronous>, transform_indices = @transform_5, window_bounds = array<i64: 1, 8>}, {transform_indices = @transform_6, window_bounds = array<i64: 1, 2, 8>}]} {
    %c0 = arith.constant 0 : index
    %c0_0 = arith.constant 0 : index
    %c0_1 = arith.constant 0 : index
    %c0_2 = arith.constant 0 : index
    %0 = vector.load %arg1[%c0, %c0_0, %c0_1, %c0_2] : memref<2x13x13x32xbf16, #tpu.memory_space<vmem>>, vector<2x13x13x32xbf16>
    %1 = arith.extf %0 : vector<2x13x13x32xbf16> to vector<2x13x13x32xf32>
    %cst = arith.constant 0.000000e+00 : f32
    %2 = vector.broadcast %cst : f32 to vector<128x64xf32>
    %3 = vector.extract_strided_slice %1 {offsets = [0, 0, 0, 0], sizes = [2, 8, 8, 32], strides = [1, 1, 1, 1]} : vector<2x13x13x32xf32> to vector<2x8x8x32xf32>
    %4 = vector.shape_cast %3 : vector<2x8x8x32xf32> to vector<128x32xf32>
    %5 = arith.truncf %4 : vector<128x32xf32> to vector<128x32xbf16>
    %c0_3 = arith.constant 0 : index
    %c0_4 = arith.constant 0 : index
    %c0_5 = arith.constant 0 : index
    %6 = vector.load %arg2[%c0_3, %c0_4, %c0_5] : memref<36x32x64xbf16, #tpu.memory_space<vmem>>, vector<1x32x64xbf16>
    %7 = vector.shape_cast %6 : vector<1x32x64xbf16> to vector<32x64xbf16>
    %cst_6 = arith.constant dense<0.000000e+00> : vector<128x64xf32>
    %8 = tpu.matmul %5, %7, %cst_6 {dimension_numbers = #tpu.dot_dimension_numbers<[1], [0], [0], [1], [0, 0, 1, 1], [], []>} : vector<128x32xbf16>, vector<32x64xbf16>, vector<128x64xf32> -> vector<128x64xf32>
    %9 = arith.addf %2, %8 : vector<128x64xf32>
    %10 = vector.extract_strided_slice %1 {offsets = [0, 0, 1, 0], sizes = [2, 8, 8, 32], strides = [1, 1, 1, 1]} : vector<2x13x13x32xf32> to vector<2x8x8x32xf32>
    %11 = vector.shape_cast %10 : vector<2x8x8x32xf32> to vector<128x32xf32>
    %12 = arith.truncf %11 : vector<128x32xf32> to vector<128x32xbf16>
    %c1 = arith.constant 1 : index
    %c0_7 = arith.constant 0 : index
    %c0_8 = arith.constant 0 : index
    %13 = vector.load %arg2[%c1, %c0_7, %c0_8] : memref<36x32x64xbf16, #tpu.memory_space<vmem>>, vector<1x32x64xbf16>
    %14 = vector.shape_cast %13 : vector<1x32x64xbf16> to vector<32x64xbf16>
    %cst_9 = arith.constant dense<0.000000e+00> : vector<128x64xf32>
    %15 = tpu.matmul %12, %14, %cst_9 {dimension_numbers = #tpu.dot_dimension_numbers<[1], [0], [0], [1], [0, 0, 1, 1], [], []>} : vector<128x32xbf16>, vector<32x64xbf16>, vector<128x64xf32> -> vector<128x64xf32>
    %16 = arith.addf %9, %15 : vector<128x64xf32>
    %17 = vector.extract_strided_slice %1 {offsets = [0, 0, 2, 0], sizes = [2, 8, 8, 32], strides = [1, 1, 1, 1]} : vector<2x13x13x32xf32> to vector<2x8x8x32xf32>
    %18 = vector.shape_cast %17 : vector<2x8x8x32xf32> to vector<128x32xf32>
    %19 = arith.truncf %18 : vector<128x32xf32> to vector<128x32xbf16>
    %c2 = arith.constant 2 : index
    %c0_10 = arith.constant 0 : index
    %c0_11 = arith.constant 0 : index
    %20 = vector.load %arg2[%c2, %c0_10, %c0_11] : memref<36x32x64xbf16, #tpu.memory_space<vmem>>, vector<1x32x64xbf16>
    %21 = vector.shape_cast %20 : vector<1x32x64xbf16> to vector<32x64xbf16>
    %cst_12 = arith.constant dense<0.000000e+00> : vector<128x64xf32>
    %22 = tpu.matmul %19, %21, %cst_12 {dimension_numbers = #tpu.dot_dimension_numbers<[1], [0], [0], [1], [0, 0, 1, 1], [], []>} : vector<128x32xbf16>, vector<32x64xbf16>, vector<128x64xf32> -> vector<128x64xf32>
    %23 = arith.addf %16, %22 : vector<128x64xf32>
    %24 = vector.extract_strided_slice %1 {offsets = [0, 0, 3, 0], sizes = [2, 8, 8, 32], strides = [1, 1, 1, 1]} : vector<2x13x13x32xf32> to vector<2x8x8x32xf32>
    %25 = vector.shape_cast %24 : vector<2x8x8x32xf32> to vector<128x32xf32>
    %26 = arith.truncf %25 : vector<128x32xf32> to vector<128x32xbf16>
    %c3 = arith.constant 3 : index
    %c0_13 = arith.constant 0 : index
    %c0_14 = arith.constant 0 : index
    %27 = vector.load %arg2[%c3, %c0_13, %c0_14] : memref<36x32x64xbf16, #tpu.memory_space<vmem>>, vector<1x32x64xbf16>
    %28 = vector.shape_cast %27 : vector<1x32x64xbf16> to vector<32x64xbf16>
    %cst_15 = arith.constant dense<0.000000e+00> : vector<128x64xf32>
    %29 = tpu.matmul %26, %28, %cst_15 {dimension_numbers = #tpu.dot_dimension_numbers<[1], [0], [0], [1], [0, 0, 1, 1], [], []>} : vector<128x32xbf16>, vector<32x64xbf16>, vector<128x64xf32> -> vector<128x64xf32>
    %30 = arith.addf %23, %29 : vector<128x64xf32>
    %31 = vector.extract_strided_slice %1 {offsets = [0, 0, 4, 0], sizes = [2, 8, 8, 32], strides = [1, 1, 1, 1]} : vector<2x13x13x32xf32> to vector<2x8x8x32xf32>
    %32 = vector.shape_cast %31 : vector<2x8x8x32xf32> to vector<128x32xf32>
    %33 = arith.truncf %32 : vector<128x32xf32> to vector<128x32xbf16>
    %c4 = arith.constant 4 : index
    %c0_16 = arith.constant 0 : index
    %c0_17 = arith.constant 0 : index
    %34 = vector.load %arg2[%c4, %c0_16, %c0_17] : memref<36x32x64xbf16, #tpu.memory_space<vmem>>, vector<1x32x64xbf16>
    %35 = vector.shape_cast %34 : vector<1x32x64xbf16> to vector<32x64xbf16>
    %cst_18 = arith.constant dense<0.000000e+00> : vector<128x64xf32>
    %36 = tpu.matmul %33, %35, %cst_18 {dimension_numbers = #tpu.dot_dimension_numbers<[1], [0], [0], [1], [0, 0, 1, 1], [], []>} : vector<128x32xbf16>, vector<32x64xbf16>, vector<128x64xf32> -> vector<128x64xf32>
    %37 = arith.addf %30, %36 : vector<128x64xf32>
    %38 = vector.extract_strided_slice %1 {offsets = [0, 0, 5, 0], sizes = [2, 8, 8, 32], strides = [1, 1, 1, 1]} : vector<2x13x13x32xf32> to vector<2x8x8x32xf32>
    %39 = vector.shape_cast %38 : vector<2x8x8x32xf32> to vector<128x32xf32>
    %40 = arith.truncf %39 : vector<128x32xf32> to vector<128x32xbf16>
    %c5 = arith.constant 5 : index
    %c0_19 = arith.constant 0 : index
    %c0_20 = arith.constant 0 : index
    %41 = vector.load %arg2[%c5, %c0_19, %c0_20] : memref<36x32x64xbf16, #tpu.memory_space<vmem>>, vector<1x32x64xbf16>
    %42 = vector.shape_cast %41 : vector<1x32x64xbf16> to vector<32x64xbf16>
    %cst_21 = arith.constant dense<0.000000e+00> : vector<128x64xf32>
    %43 = tpu.matmul %40, %42, %cst_21 {dimension_numbers = #tpu.dot_dimension_numbers<[1], [0], [0], [1], [0, 0, 1, 1], [], []>} : vector<128x32xbf16>, vector<32x64xbf16>, vector<128x64xf32> -> vector<128x64xf32>
    %44 = arith.addf %37, %43 : vector<128x64xf32>
    %45 = vector.extract_strided_slice %1 {offsets = [0, 1, 0, 0], sizes = [2, 8, 8, 32], strides = [1, 1, 1, 1]} : vector<2x13x13x32xf32> to vector<2x8x8x32xf32>
    %46 = vector.shape_cast %45 : vector<2x8x8x32xf32> to vector<128x32xf32>
    %47 = arith.truncf %46 : vector<128x32xf32> to vector<128x32xbf16>
    %c6 = arith.constant 6 : index
    %c0_22 = arith.constant 0 : index
    %c0_23 = arith.constant 0 : index
    %48 = vector.load %arg2[%c6, %c0_22, %c0_23] : memref<36x32x64xbf16, #tpu.memory_space<vmem>>, vector<1x32x64xbf16>
    %49 = vector.shape_cast %48 : vector<1x32x64xbf16> to vector<32x64xbf16>
    %cst_24 = arith.constant dense<0.000000e+00> : vector<128x64xf32>
    %50 = tpu.matmul %47, %49, %cst_24 {dimension_numbers = #tpu.dot_dimension_numbers<[1], [0], [0], [1], [0, 0, 1, 1], [], []>} : vector<128x32xbf16>, vector<32x64xbf16>, vector<128x64xf32> -> vector<128x64xf32>
    %51 = arith.addf %44, %50 : vector<128x64xf32>
    %52 = vector.extract_strided_slice %1 {offsets = [0, 1, 1, 0], sizes = [2, 8, 8, 32], strides = [1, 1, 1, 1]} : vector<2x13x13x32xf32> to vector<2x8x8x32xf32>
    %53 = vector.shape_cast %52 : vector<2x8x8x32xf32> to vector<128x32xf32>
    %54 = arith.truncf %53 : vector<128x32xf32> to vector<128x32xbf16>
    %c7 = arith.constant 7 : index
    %c0_25 = arith.constant 0 : index
    %c0_26 = arith.constant 0 : index
    %55 = vector.load %arg2[%c7, %c0_25, %c0_26] : memref<36x32x64xbf16, #tpu.memory_space<vmem>>, vector<1x32x64xbf16>
    %56 = vector.shape_cast %55 : vector<1x32x64xbf16> to vector<32x64xbf16>
    %cst_27 = arith.constant dense<0.000000e+00> : vector<128x64xf32>
    %57 = tpu.matmul %54, %56, %cst_27 {dimension_numbers = #tpu.dot_dimension_numbers<[1], [0], [0], [1], [0, 0, 1, 1], [], []>} : vector<128x32xbf16>, vector<32x64xbf16>, vector<128x64xf32> -> vector<128x64xf32>
    %58 = arith.addf %51, %57 : vector<128x64xf32>
    %59 = vector.extract_strided_slice %1 {offsets = [0, 1, 2, 0], sizes = [2, 8, 8, 32], strides = [1, 1, 1, 1]} : vector<2x13x13x32xf32> to vector<2x8x8x32xf32>
    %60 = vector.shape_cast %59 : vector<2x8x8x32xf32> to vector<128x32xf32>
    %61 = arith.truncf %60 : vector<128x32xf32> to vector<128x32xbf16>
    %c8 = arith.constant 8 : index
    %c0_28 = arith.constant 0 : index
    %c0_29 = arith.constant 0 : index
    %62 = vector.load %arg2[%c8, %c0_28, %c0_29] : memref<36x32x64xbf16, #tpu.memory_space<vmem>>, vector<1x32x64xbf16>
    %63 = vector.shape_cast %62 : vector<1x32x64xbf16> to vector<32x64xbf16>
    %cst_30 = arith.constant dense<0.000000e+00> : vector<128x64xf32>
    %64 = tpu.matmul %61, %63, %cst_30 {dimension_numbers = #tpu.dot_dimension_numbers<[1], [0], [0], [1], [0, 0, 1, 1], [], []>} : vector<128x32xbf16>, vector<32x64xbf16>, vector<128x64xf32> -> vector<128x64xf32>
    %65 = arith.addf %58, %64 : vector<128x64xf32>
    %66 = vector.extract_strided_slice %1 {offsets = [0, 1, 3, 0], sizes = [2, 8, 8, 32], strides = [1, 1, 1, 1]} : vector<2x13x13x32xf32> to vector<2x8x8x32xf32>
    %67 = vector.shape_cast %66 : vector<2x8x8x32xf32> to vector<128x32xf32>
    %68 = arith.truncf %67 : vector<128x32xf32> to vector<128x32xbf16>
    %c9 = arith.constant 9 : index
    %c0_31 = arith.constant 0 : index
    %c0_32 = arith.constant 0 : index
    %69 = vector.load %arg2[%c9, %c0_31, %c0_32] : memref<36x32x64xbf16, #tpu.memory_space<vmem>>, vector<1x32x64xbf16>
    %70 = vector.shape_cast %69 : vector<1x32x64xbf16> to vector<32x64xbf16>
    %cst_33 = arith.constant dense<0.000000e+00> : vector<128x64xf32>
    %71 = tpu.matmul %68, %70, %cst_33 {dimension_numbers = #tpu.dot_dimension_numbers<[1], [0], [0], [1], [0, 0, 1, 1], [], []>} : vector<128x32xbf16>, vector<32x64xbf16>, vector<128x64xf32> -> vector<128x64xf32>
    %72 = arith.addf %65, %71 : vector<128x64xf32>
    %73 = vector.extract_strided_slice %1 {offsets = [0, 1, 4, 0], sizes = [2, 8, 8, 32], strides = [1, 1, 1, 1]} : vector<2x13x13x32xf32> to vector<2x8x8x32xf32>
    %74 = vector.shape_cast %73 : vector<2x8x8x32xf32> to vector<128x32xf32>
    %75 = arith.truncf %74 : vector<128x32xf32> to vector<128x32xbf16>
    %c10 = arith.constant 10 : index
    %c0_34 = arith.constant 0 : index
    %c0_35 = arith.constant 0 : index
    %76 = vector.load %arg2[%c10, %c0_34, %c0_35] : memref<36x32x64xbf16, #tpu.memory_space<vmem>>, vector<1x32x64xbf16>
    %77 = vector.shape_cast %76 : vector<1x32x64xbf16> to vector<32x64xbf16>
    %cst_36 = arith.constant dense<0.000000e+00> : vector<128x64xf32>
    %78 = tpu.matmul %75, %77, %cst_36 {dimension_numbers = #tpu.dot_dimension_numbers<[1], [0], [0], [1], [0, 0, 1, 1], [], []>} : vector<128x32xbf16>, vector<32x64xbf16>, vector<128x64xf32> -> vector<128x64xf32>
    %79 = arith.addf %72, %78 : vector<128x64xf32>
    %80 = vector.extract_strided_slice %1 {offsets = [0, 1, 5, 0], sizes = [2, 8, 8, 32], strides = [1, 1, 1, 1]} : vector<2x13x13x32xf32> to vector<2x8x8x32xf32>
    %81 = vector.shape_cast %80 : vector<2x8x8x32xf32> to vector<128x32xf32>
    %82 = arith.truncf %81 : vector<128x32xf32> to vector<128x32xbf16>
    %c11 = arith.constant 11 : index
    %c0_37 = arith.constant 0 : index
    %c0_38 = arith.constant 0 : index
    %83 = vector.load %arg2[%c11, %c0_37, %c0_38] : memref<36x32x64xbf16, #tpu.memory_space<vmem>>, vector<1x32x64xbf16>
    %84 = vector.shape_cast %83 : vector<1x32x64xbf16> to vector<32x64xbf16>
    %cst_39 = arith.constant dense<0.000000e+00> : vector<128x64xf32>
    %85 = tpu.matmul %82, %84, %cst_39 {dimension_numbers = #tpu.dot_dimension_numbers<[1], [0], [0], [1], [0, 0, 1, 1], [], []>} : vector<128x32xbf16>, vector<32x64xbf16>, vector<128x64xf32> -> vector<128x64xf32>
    %86 = arith.addf %79, %85 : vector<128x64xf32>
    %87 = vector.extract_strided_slice %1 {offsets = [0, 2, 0, 0], sizes = [2, 8, 8, 32], strides = [1, 1, 1, 1]} : vector<2x13x13x32xf32> to vector<2x8x8x32xf32>
    %88 = vector.shape_cast %87 : vector<2x8x8x32xf32> to vector<128x32xf32>
    %89 = arith.truncf %88 : vector<128x32xf32> to vector<128x32xbf16>
    %c12 = arith.constant 12 : index
    %c0_40 = arith.constant 0 : index
    %c0_41 = arith.constant 0 : index
    %90 = vector.load %arg2[%c12, %c0_40, %c0_41] : memref<36x32x64xbf16, #tpu.memory_space<vmem>>, vector<1x32x64xbf16>
    %91 = vector.shape_cast %90 : vector<1x32x64xbf16> to vector<32x64xbf16>
    %cst_42 = arith.constant dense<0.000000e+00> : vector<128x64xf32>
    %92 = tpu.matmul %89, %91, %cst_42 {dimension_numbers = #tpu.dot_dimension_numbers<[1], [0], [0], [1], [0, 0, 1, 1], [], []>} : vector<128x32xbf16>, vector<32x64xbf16>, vector<128x64xf32> -> vector<128x64xf32>
    %93 = arith.addf %86, %92 : vector<128x64xf32>
    %94 = vector.extract_strided_slice %1 {offsets = [0, 2, 1, 0], sizes = [2, 8, 8, 32], strides = [1, 1, 1, 1]} : vector<2x13x13x32xf32> to vector<2x8x8x32xf32>
    %95 = vector.shape_cast %94 : vector<2x8x8x32xf32> to vector<128x32xf32>
    %96 = arith.truncf %95 : vector<128x32xf32> to vector<128x32xbf16>
    %c13 = arith.constant 13 : index
    %c0_43 = arith.constant 0 : index
    %c0_44 = arith.constant 0 : index
    %97 = vector.load %arg2[%c13, %c0_43, %c0_44] : memref<36x32x64xbf16, #tpu.memory_space<vmem>>, vector<1x32x64xbf16>
    %98 = vector.shape_cast %97 : vector<1x32x64xbf16> to vector<32x64xbf16>
    %cst_45 = arith.constant dense<0.000000e+00> : vector<128x64xf32>
    %99 = tpu.matmul %96, %98, %cst_45 {dimension_numbers = #tpu.dot_dimension_numbers<[1], [0], [0], [1], [0, 0, 1, 1], [], []>} : vector<128x32xbf16>, vector<32x64xbf16>, vector<128x64xf32> -> vector<128x64xf32>
    %100 = arith.addf %93, %99 : vector<128x64xf32>
    %101 = vector.extract_strided_slice %1 {offsets = [0, 2, 2, 0], sizes = [2, 8, 8, 32], strides = [1, 1, 1, 1]} : vector<2x13x13x32xf32> to vector<2x8x8x32xf32>
    %102 = vector.shape_cast %101 : vector<2x8x8x32xf32> to vector<128x32xf32>
    %103 = arith.truncf %102 : vector<128x32xf32> to vector<128x32xbf16>
    %c14 = arith.constant 14 : index
    %c0_46 = arith.constant 0 : index
    %c0_47 = arith.constant 0 : index
    %104 = vector.load %arg2[%c14, %c0_46, %c0_47] : memref<36x32x64xbf16, #tpu.memory_space<vmem>>, vector<1x32x64xbf16>
    %105 = vector.shape_cast %104 : vector<1x32x64xbf16> to vector<32x64xbf16>
    %cst_48 = arith.constant dense<0.000000e+00> : vector<128x64xf32>
    %106 = tpu.matmul %103, %105, %cst_48 {dimension_numbers = #tpu.dot_dimension_numbers<[1], [0], [0], [1], [0, 0, 1, 1], [], []>} : vector<128x32xbf16>, vector<32x64xbf16>, vector<128x64xf32> -> vector<128x64xf32>
    %107 = arith.addf %100, %106 : vector<128x64xf32>
    %108 = vector.extract_strided_slice %1 {offsets = [0, 2, 3, 0], sizes = [2, 8, 8, 32], strides = [1, 1, 1, 1]} : vector<2x13x13x32xf32> to vector<2x8x8x32xf32>
    %109 = vector.shape_cast %108 : vector<2x8x8x32xf32> to vector<128x32xf32>
    %110 = arith.truncf %109 : vector<128x32xf32> to vector<128x32xbf16>
    %c15 = arith.constant 15 : index
    %c0_49 = arith.constant 0 : index
    %c0_50 = arith.constant 0 : index
    %111 = vector.load %arg2[%c15, %c0_49, %c0_50] : memref<36x32x64xbf16, #tpu.memory_space<vmem>>, vector<1x32x64xbf16>
    %112 = vector.shape_cast %111 : vector<1x32x64xbf16> to vector<32x64xbf16>
    %cst_51 = arith.constant dense<0.000000e+00> : vector<128x64xf32>
    %113 = tpu.matmul %110, %112, %cst_51 {dimension_numbers = #tpu.dot_dimension_numbers<[1], [0], [0], [1], [0, 0, 1, 1], [], []>} : vector<128x32xbf16>, vector<32x64xbf16>, vector<128x64xf32> -> vector<128x64xf32>
    %114 = arith.addf %107, %113 : vector<128x64xf32>
    %115 = vector.extract_strided_slice %1 {offsets = [0, 2, 4, 0], sizes = [2, 8, 8, 32], strides = [1, 1, 1, 1]} : vector<2x13x13x32xf32> to vector<2x8x8x32xf32>
    %116 = vector.shape_cast %115 : vector<2x8x8x32xf32> to vector<128x32xf32>
    %117 = arith.truncf %116 : vector<128x32xf32> to vector<128x32xbf16>
    %c16 = arith.constant 16 : index
    %c0_52 = arith.constant 0 : index
    %c0_53 = arith.constant 0 : index
    %118 = vector.load %arg2[%c16, %c0_52, %c0_53] : memref<36x32x64xbf16, #tpu.memory_space<vmem>>, vector<1x32x64xbf16>
    %119 = vector.shape_cast %118 : vector<1x32x64xbf16> to vector<32x64xbf16>
    %cst_54 = arith.constant dense<0.000000e+00> : vector<128x64xf32>
    %120 = tpu.matmul %117, %119, %cst_54 {dimension_numbers = #tpu.dot_dimension_numbers<[1], [0], [0], [1], [0, 0, 1, 1], [], []>} : vector<128x32xbf16>, vector<32x64xbf16>, vector<128x64xf32> -> vector<128x64xf32>
    %121 = arith.addf %114, %120 : vector<128x64xf32>
    %122 = vector.extract_strided_slice %1 {offsets = [0, 2, 5, 0], sizes = [2, 8, 8, 32], strides = [1, 1, 1, 1]} : vector<2x13x13x32xf32> to vector<2x8x8x32xf32>
    %123 = vector.shape_cast %122 : vector<2x8x8x32xf32> to vector<128x32xf32>
    %124 = arith.truncf %123 : vector<128x32xf32> to vector<128x32xbf16>
    %c17 = arith.constant 17 : index
    %c0_55 = arith.constant 0 : index
    %c0_56 = arith.constant 0 : index
    %125 = vector.load %arg2[%c17, %c0_55, %c0_56] : memref<36x32x64xbf16, #tpu.memory_space<vmem>>, vector<1x32x64xbf16>
    %126 = vector.shape_cast %125 : vector<1x32x64xbf16> to vector<32x64xbf16>
    %cst_57 = arith.constant dense<0.000000e+00> : vector<128x64xf32>
    %127 = tpu.matmul %124, %126, %cst_57 {dimension_numbers = #tpu.dot_dimension_numbers<[1], [0], [0], [1], [0, 0, 1, 1], [], []>} : vector<128x32xbf16>, vector<32x64xbf16>, vector<128x64xf32> -> vector<128x64xf32>
    %128 = arith.addf %121, %127 : vector<128x64xf32>
    %129 = vector.extract_strided_slice %1 {offsets = [0, 3, 0, 0], sizes = [2, 8, 8, 32], strides = [1, 1, 1, 1]} : vector<2x13x13x32xf32> to vector<2x8x8x32xf32>
    %130 = vector.shape_cast %129 : vector<2x8x8x32xf32> to vector<128x32xf32>
    %131 = arith.truncf %130 : vector<128x32xf32> to vector<128x32xbf16>
    %c18 = arith.constant 18 : index
    %c0_58 = arith.constant 0 : index
    %c0_59 = arith.constant 0 : index
    %132 = vector.load %arg2[%c18, %c0_58, %c0_59] : memref<36x32x64xbf16, #tpu.memory_space<vmem>>, vector<1x32x64xbf16>
    %133 = vector.shape_cast %132 : vector<1x32x64xbf16> to vector<32x64xbf16>
    %cst_60 = arith.constant dense<0.000000e+00> : vector<128x64xf32>
    %134 = tpu.matmul %131, %133, %cst_60 {dimension_numbers = #tpu.dot_dimension_numbers<[1], [0], [0], [1], [0, 0, 1, 1], [], []>} : vector<128x32xbf16>, vector<32x64xbf16>, vector<128x64xf32> -> vector<128x64xf32>
    %135 = arith.addf %128, %134 : vector<128x64xf32>
    %136 = vector.extract_strided_slice %1 {offsets = [0, 3, 1, 0], sizes = [2, 8, 8, 32], strides = [1, 1, 1, 1]} : vector<2x13x13x32xf32> to vector<2x8x8x32xf32>
    %137 = vector.shape_cast %136 : vector<2x8x8x32xf32> to vector<128x32xf32>
    %138 = arith.truncf %137 : vector<128x32xf32> to vector<128x32xbf16>
    %c19 = arith.constant 19 : index
    %c0_61 = arith.constant 0 : index
    %c0_62 = arith.constant 0 : index
    %139 = vector.load %arg2[%c19, %c0_61, %c0_62] : memref<36x32x64xbf16, #tpu.memory_space<vmem>>, vector<1x32x64xbf16>
    %140 = vector.shape_cast %139 : vector<1x32x64xbf16> to vector<32x64xbf16>
    %cst_63 = arith.constant dense<0.000000e+00> : vector<128x64xf32>
    %141 = tpu.matmul %138, %140, %cst_63 {dimension_numbers = #tpu.dot_dimension_numbers<[1], [0], [0], [1], [0, 0, 1, 1], [], []>} : vector<128x32xbf16>, vector<32x64xbf16>, vector<128x64xf32> -> vector<128x64xf32>
    %142 = arith.addf %135, %141 : vector<128x64xf32>
    %143 = vector.extract_strided_slice %1 {offsets = [0, 3, 2, 0], sizes = [2, 8, 8, 32], strides = [1, 1, 1, 1]} : vector<2x13x13x32xf32> to vector<2x8x8x32xf32>
    %144 = vector.shape_cast %143 : vector<2x8x8x32xf32> to vector<128x32xf32>
    %145 = arith.truncf %144 : vector<128x32xf32> to vector<128x32xbf16>
    %c20 = arith.constant 20 : index
    %c0_64 = arith.constant 0 : index
    %c0_65 = arith.constant 0 : index
    %146 = vector.load %arg2[%c20, %c0_64, %c0_65] : memref<36x32x64xbf16, #tpu.memory_space<vmem>>, vector<1x32x64xbf16>
    %147 = vector.shape_cast %146 : vector<1x32x64xbf16> to vector<32x64xbf16>
    %cst_66 = arith.constant dense<0.000000e+00> : vector<128x64xf32>
    %148 = tpu.matmul %145, %147, %cst_66 {dimension_numbers = #tpu.dot_dimension_numbers<[1], [0], [0], [1], [0, 0, 1, 1], [], []>} : vector<128x32xbf16>, vector<32x64xbf16>, vector<128x64xf32> -> vector<128x64xf32>
    %149 = arith.addf %142, %148 : vector<128x64xf32>
    %150 = vector.extract_strided_slice %1 {offsets = [0, 3, 3, 0], sizes = [2, 8, 8, 32], strides = [1, 1, 1, 1]} : vector<2x13x13x32xf32> to vector<2x8x8x32xf32>
    %151 = vector.shape_cast %150 : vector<2x8x8x32xf32> to vector<128x32xf32>
    %152 = arith.truncf %151 : vector<128x32xf32> to vector<128x32xbf16>
    %c21 = arith.constant 21 : index
    %c0_67 = arith.constant 0 : index
    %c0_68 = arith.constant 0 : index
    %153 = vector.load %arg2[%c21, %c0_67, %c0_68] : memref<36x32x64xbf16, #tpu.memory_space<vmem>>, vector<1x32x64xbf16>
    %154 = vector.shape_cast %153 : vector<1x32x64xbf16> to vector<32x64xbf16>
    %cst_69 = arith.constant dense<0.000000e+00> : vector<128x64xf32>
    %155 = tpu.matmul %152, %154, %cst_69 {dimension_numbers = #tpu.dot_dimension_numbers<[1], [0], [0], [1], [0, 0, 1, 1], [], []>} : vector<128x32xbf16>, vector<32x64xbf16>, vector<128x64xf32> -> vector<128x64xf32>
    %156 = arith.addf %149, %155 : vector<128x64xf32>
    %157 = vector.extract_strided_slice %1 {offsets = [0, 3, 4, 0], sizes = [2, 8, 8, 32], strides = [1, 1, 1, 1]} : vector<2x13x13x32xf32> to vector<2x8x8x32xf32>
    %158 = vector.shape_cast %157 : vector<2x8x8x32xf32> to vector<128x32xf32>
    %159 = arith.truncf %158 : vector<128x32xf32> to vector<128x32xbf16>
    %c22 = arith.constant 22 : index
    %c0_70 = arith.constant 0 : index
    %c0_71 = arith.constant 0 : index
    %160 = vector.load %arg2[%c22, %c0_70, %c0_71] : memref<36x32x64xbf16, #tpu.memory_space<vmem>>, vector<1x32x64xbf16>
    %161 = vector.shape_cast %160 : vector<1x32x64xbf16> to vector<32x64xbf16>
    %cst_72 = arith.constant dense<0.000000e+00> : vector<128x64xf32>
    %162 = tpu.matmul %159, %161, %cst_72 {dimension_numbers = #tpu.dot_dimension_numbers<[1], [0], [0], [1], [0, 0, 1, 1], [], []>} : vector<128x32xbf16>, vector<32x64xbf16>, vector<128x64xf32> -> vector<128x64xf32>
    %163 = arith.addf %156, %162 : vector<128x64xf32>
    %164 = vector.extract_strided_slice %1 {offsets = [0, 3, 5, 0], sizes = [2, 8, 8, 32], strides = [1, 1, 1, 1]} : vector<2x13x13x32xf32> to vector<2x8x8x32xf32>
    %165 = vector.shape_cast %164 : vector<2x8x8x32xf32> to vector<128x32xf32>
    %166 = arith.truncf %165 : vector<128x32xf32> to vector<128x32xbf16>
    %c23 = arith.constant 23 : index
    %c0_73 = arith.constant 0 : index
    %c0_74 = arith.constant 0 : index
    %167 = vector.load %arg2[%c23, %c0_73, %c0_74] : memref<36x32x64xbf16, #tpu.memory_space<vmem>>, vector<1x32x64xbf16>
    %168 = vector.shape_cast %167 : vector<1x32x64xbf16> to vector<32x64xbf16>
    %cst_75 = arith.constant dense<0.000000e+00> : vector<128x64xf32>
    %169 = tpu.matmul %166, %168, %cst_75 {dimension_numbers = #tpu.dot_dimension_numbers<[1], [0], [0], [1], [0, 0, 1, 1], [], []>} : vector<128x32xbf16>, vector<32x64xbf16>, vector<128x64xf32> -> vector<128x64xf32>
    %170 = arith.addf %163, %169 : vector<128x64xf32>
    %171 = vector.extract_strided_slice %1 {offsets = [0, 4, 0, 0], sizes = [2, 8, 8, 32], strides = [1, 1, 1, 1]} : vector<2x13x13x32xf32> to vector<2x8x8x32xf32>
    %172 = vector.shape_cast %171 : vector<2x8x8x32xf32> to vector<128x32xf32>
    %173 = arith.truncf %172 : vector<128x32xf32> to vector<128x32xbf16>
    %c24 = arith.constant 24 : index
    %c0_76 = arith.constant 0 : index
    %c0_77 = arith.constant 0 : index
    %174 = vector.load %arg2[%c24, %c0_76, %c0_77] : memref<36x32x64xbf16, #tpu.memory_space<vmem>>, vector<1x32x64xbf16>
    %175 = vector.shape_cast %174 : vector<1x32x64xbf16> to vector<32x64xbf16>
    %cst_78 = arith.constant dense<0.000000e+00> : vector<128x64xf32>
    %176 = tpu.matmul %173, %175, %cst_78 {dimension_numbers = #tpu.dot_dimension_numbers<[1], [0], [0], [1], [0, 0, 1, 1], [], []>} : vector<128x32xbf16>, vector<32x64xbf16>, vector<128x64xf32> -> vector<128x64xf32>
    %177 = arith.addf %170, %176 : vector<128x64xf32>
    %178 = vector.extract_strided_slice %1 {offsets = [0, 4, 1, 0], sizes = [2, 8, 8, 32], strides = [1, 1, 1, 1]} : vector<2x13x13x32xf32> to vector<2x8x8x32xf32>
    %179 = vector.shape_cast %178 : vector<2x8x8x32xf32> to vector<128x32xf32>
    %180 = arith.truncf %179 : vector<128x32xf32> to vector<128x32xbf16>
    %c25 = arith.constant 25 : index
    %c0_79 = arith.constant 0 : index
    %c0_80 = arith.constant 0 : index
    %181 = vector.load %arg2[%c25, %c0_79, %c0_80] : memref<36x32x64xbf16, #tpu.memory_space<vmem>>, vector<1x32x64xbf16>
    %182 = vector.shape_cast %181 : vector<1x32x64xbf16> to vector<32x64xbf16>
    %cst_81 = arith.constant dense<0.000000e+00> : vector<128x64xf32>
    %183 = tpu.matmul %180, %182, %cst_81 {dimension_numbers = #tpu.dot_dimension_numbers<[1], [0], [0], [1], [0, 0, 1, 1], [], []>} : vector<128x32xbf16>, vector<32x64xbf16>, vector<128x64xf32> -> vector<128x64xf32>
    %184 = arith.addf %177, %183 : vector<128x64xf32>
    %185 = vector.extract_strided_slice %1 {offsets = [0, 4, 2, 0], sizes = [2, 8, 8, 32], strides = [1, 1, 1, 1]} : vector<2x13x13x32xf32> to vector<2x8x8x32xf32>
    %186 = vector.shape_cast %185 : vector<2x8x8x32xf32> to vector<128x32xf32>
    %187 = arith.truncf %186 : vector<128x32xf32> to vector<128x32xbf16>
    %c26 = arith.constant 26 : index
    %c0_82 = arith.constant 0 : index
    %c0_83 = arith.constant 0 : index
    %188 = vector.load %arg2[%c26, %c0_82, %c0_83] : memref<36x32x64xbf16, #tpu.memory_space<vmem>>, vector<1x32x64xbf16>
    %189 = vector.shape_cast %188 : vector<1x32x64xbf16> to vector<32x64xbf16>
    %cst_84 = arith.constant dense<0.000000e+00> : vector<128x64xf32>
    %190 = tpu.matmul %187, %189, %cst_84 {dimension_numbers = #tpu.dot_dimension_numbers<[1], [0], [0], [1], [0, 0, 1, 1], [], []>} : vector<128x32xbf16>, vector<32x64xbf16>, vector<128x64xf32> -> vector<128x64xf32>
    %191 = arith.addf %184, %190 : vector<128x64xf32>
    %192 = vector.extract_strided_slice %1 {offsets = [0, 4, 3, 0], sizes = [2, 8, 8, 32], strides = [1, 1, 1, 1]} : vector<2x13x13x32xf32> to vector<2x8x8x32xf32>
    %193 = vector.shape_cast %192 : vector<2x8x8x32xf32> to vector<128x32xf32>
    %194 = arith.truncf %193 : vector<128x32xf32> to vector<128x32xbf16>
    %c27 = arith.constant 27 : index
    %c0_85 = arith.constant 0 : index
    %c0_86 = arith.constant 0 : index
    %195 = vector.load %arg2[%c27, %c0_85, %c0_86] : memref<36x32x64xbf16, #tpu.memory_space<vmem>>, vector<1x32x64xbf16>
    %196 = vector.shape_cast %195 : vector<1x32x64xbf16> to vector<32x64xbf16>
    %cst_87 = arith.constant dense<0.000000e+00> : vector<128x64xf32>
    %197 = tpu.matmul %194, %196, %cst_87 {dimension_numbers = #tpu.dot_dimension_numbers<[1], [0], [0], [1], [0, 0, 1, 1], [], []>} : vector<128x32xbf16>, vector<32x64xbf16>, vector<128x64xf32> -> vector<128x64xf32>
    %198 = arith.addf %191, %197 : vector<128x64xf32>
    %199 = vector.extract_strided_slice %1 {offsets = [0, 4, 4, 0], sizes = [2, 8, 8, 32], strides = [1, 1, 1, 1]} : vector<2x13x13x32xf32> to vector<2x8x8x32xf32>
    %200 = vector.shape_cast %199 : vector<2x8x8x32xf32> to vector<128x32xf32>
    %201 = arith.truncf %200 : vector<128x32xf32> to vector<128x32xbf16>
    %c28 = arith.constant 28 : index
    %c0_88 = arith.constant 0 : index
    %c0_89 = arith.constant 0 : index
    %202 = vector.load %arg2[%c28, %c0_88, %c0_89] : memref<36x32x64xbf16, #tpu.memory_space<vmem>>, vector<1x32x64xbf16>
    %203 = vector.shape_cast %202 : vector<1x32x64xbf16> to vector<32x64xbf16>
    %cst_90 = arith.constant dense<0.000000e+00> : vector<128x64xf32>
    %204 = tpu.matmul %201, %203, %cst_90 {dimension_numbers = #tpu.dot_dimension_numbers<[1], [0], [0], [1], [0, 0, 1, 1], [], []>} : vector<128x32xbf16>, vector<32x64xbf16>, vector<128x64xf32> -> vector<128x64xf32>
    %205 = arith.addf %198, %204 : vector<128x64xf32>
    %206 = vector.extract_strided_slice %1 {offsets = [0, 4, 5, 0], sizes = [2, 8, 8, 32], strides = [1, 1, 1, 1]} : vector<2x13x13x32xf32> to vector<2x8x8x32xf32>
    %207 = vector.shape_cast %206 : vector<2x8x8x32xf32> to vector<128x32xf32>
    %208 = arith.truncf %207 : vector<128x32xf32> to vector<128x32xbf16>
    %c29 = arith.constant 29 : index
    %c0_91 = arith.constant 0 : index
    %c0_92 = arith.constant 0 : index
    %209 = vector.load %arg2[%c29, %c0_91, %c0_92] : memref<36x32x64xbf16, #tpu.memory_space<vmem>>, vector<1x32x64xbf16>
    %210 = vector.shape_cast %209 : vector<1x32x64xbf16> to vector<32x64xbf16>
    %cst_93 = arith.constant dense<0.000000e+00> : vector<128x64xf32>
    %211 = tpu.matmul %208, %210, %cst_93 {dimension_numbers = #tpu.dot_dimension_numbers<[1], [0], [0], [1], [0, 0, 1, 1], [], []>} : vector<128x32xbf16>, vector<32x64xbf16>, vector<128x64xf32> -> vector<128x64xf32>
    %212 = arith.addf %205, %211 : vector<128x64xf32>
    %213 = vector.extract_strided_slice %1 {offsets = [0, 5, 0, 0], sizes = [2, 8, 8, 32], strides = [1, 1, 1, 1]} : vector<2x13x13x32xf32> to vector<2x8x8x32xf32>
    %214 = vector.shape_cast %213 : vector<2x8x8x32xf32> to vector<128x32xf32>
    %215 = arith.truncf %214 : vector<128x32xf32> to vector<128x32xbf16>
    %c30 = arith.constant 30 : index
    %c0_94 = arith.constant 0 : index
    %c0_95 = arith.constant 0 : index
    %216 = vector.load %arg2[%c30, %c0_94, %c0_95] : memref<36x32x64xbf16, #tpu.memory_space<vmem>>, vector<1x32x64xbf16>
    %217 = vector.shape_cast %216 : vector<1x32x64xbf16> to vector<32x64xbf16>
    %cst_96 = arith.constant dense<0.000000e+00> : vector<128x64xf32>
    %218 = tpu.matmul %215, %217, %cst_96 {dimension_numbers = #tpu.dot_dimension_numbers<[1], [0], [0], [1], [0, 0, 1, 1], [], []>} : vector<128x32xbf16>, vector<32x64xbf16>, vector<128x64xf32> -> vector<128x64xf32>
    %219 = arith.addf %212, %218 : vector<128x64xf32>
    %220 = vector.extract_strided_slice %1 {offsets = [0, 5, 1, 0], sizes = [2, 8, 8, 32], strides = [1, 1, 1, 1]} : vector<2x13x13x32xf32> to vector<2x8x8x32xf32>
    %221 = vector.shape_cast %220 : vector<2x8x8x32xf32> to vector<128x32xf32>
    %222 = arith.truncf %221 : vector<128x32xf32> to vector<128x32xbf16>
    %c31 = arith.constant 31 : index
    %c0_97 = arith.constant 0 : index
    %c0_98 = arith.constant 0 : index
    %223 = vector.load %arg2[%c31, %c0_97, %c0_98] : memref<36x32x64xbf16, #tpu.memory_space<vmem>>, vector<1x32x64xbf16>
    %224 = vector.shape_cast %223 : vector<1x32x64xbf16> to vector<32x64xbf16>
    %cst_99 = arith.constant dense<0.000000e+00> : vector<128x64xf32>
    %225 = tpu.matmul %222, %224, %cst_99 {dimension_numbers = #tpu.dot_dimension_numbers<[1], [0], [0], [1], [0, 0, 1, 1], [], []>} : vector<128x32xbf16>, vector<32x64xbf16>, vector<128x64xf32> -> vector<128x64xf32>
    %226 = arith.addf %219, %225 : vector<128x64xf32>
    %227 = vector.extract_strided_slice %1 {offsets = [0, 5, 2, 0], sizes = [2, 8, 8, 32], strides = [1, 1, 1, 1]} : vector<2x13x13x32xf32> to vector<2x8x8x32xf32>
    %228 = vector.shape_cast %227 : vector<2x8x8x32xf32> to vector<128x32xf32>
    %229 = arith.truncf %228 : vector<128x32xf32> to vector<128x32xbf16>
    %c32 = arith.constant 32 : index
    %c0_100 = arith.constant 0 : index
    %c0_101 = arith.constant 0 : index
    %230 = vector.load %arg2[%c32, %c0_100, %c0_101] : memref<36x32x64xbf16, #tpu.memory_space<vmem>>, vector<1x32x64xbf16>
    %231 = vector.shape_cast %230 : vector<1x32x64xbf16> to vector<32x64xbf16>
    %cst_102 = arith.constant dense<0.000000e+00> : vector<128x64xf32>
    %232 = tpu.matmul %229, %231, %cst_102 {dimension_numbers = #tpu.dot_dimension_numbers<[1], [0], [0], [1], [0, 0, 1, 1], [], []>} : vector<128x32xbf16>, vector<32x64xbf16>, vector<128x64xf32> -> vector<128x64xf32>
    %233 = arith.addf %226, %232 : vector<128x64xf32>
    %234 = vector.extract_strided_slice %1 {offsets = [0, 5, 3, 0], sizes = [2, 8, 8, 32], strides = [1, 1, 1, 1]} : vector<2x13x13x32xf32> to vector<2x8x8x32xf32>
    %235 = vector.shape_cast %234 : vector<2x8x8x32xf32> to vector<128x32xf32>
    %236 = arith.truncf %235 : vector<128x32xf32> to vector<128x32xbf16>
    %c33 = arith.constant 33 : index
    %c0_103 = arith.constant 0 : index
    %c0_104 = arith.constant 0 : index
    %237 = vector.load %arg2[%c33, %c0_103, %c0_104] : memref<36x32x64xbf16, #tpu.memory_space<vmem>>, vector<1x32x64xbf16>
    %238 = vector.shape_cast %237 : vector<1x32x64xbf16> to vector<32x64xbf16>
    %cst_105 = arith.constant dense<0.000000e+00> : vector<128x64xf32>
    %239 = tpu.matmul %236, %238, %cst_105 {dimension_numbers = #tpu.dot_dimension_numbers<[1], [0], [0], [1], [0, 0, 1, 1], [], []>} : vector<128x32xbf16>, vector<32x64xbf16>, vector<128x64xf32> -> vector<128x64xf32>
    %240 = arith.addf %233, %239 : vector<128x64xf32>
    %241 = vector.extract_strided_slice %1 {offsets = [0, 5, 4, 0], sizes = [2, 8, 8, 32], strides = [1, 1, 1, 1]} : vector<2x13x13x32xf32> to vector<2x8x8x32xf32>
    %242 = vector.shape_cast %241 : vector<2x8x8x32xf32> to vector<128x32xf32>
    %243 = arith.truncf %242 : vector<128x32xf32> to vector<128x32xbf16>
    %c34 = arith.constant 34 : index
    %c0_106 = arith.constant 0 : index
    %c0_107 = arith.constant 0 : index
    %244 = vector.load %arg2[%c34, %c0_106, %c0_107] : memref<36x32x64xbf16, #tpu.memory_space<vmem>>, vector<1x32x64xbf16>
    %245 = vector.shape_cast %244 : vector<1x32x64xbf16> to vector<32x64xbf16>
    %cst_108 = arith.constant dense<0.000000e+00> : vector<128x64xf32>
    %246 = tpu.matmul %243, %245, %cst_108 {dimension_numbers = #tpu.dot_dimension_numbers<[1], [0], [0], [1], [0, 0, 1, 1], [], []>} : vector<128x32xbf16>, vector<32x64xbf16>, vector<128x64xf32> -> vector<128x64xf32>
    %247 = arith.addf %240, %246 : vector<128x64xf32>
    %248 = vector.extract_strided_slice %1 {offsets = [0, 5, 5, 0], sizes = [2, 8, 8, 32], strides = [1, 1, 1, 1]} : vector<2x13x13x32xf32> to vector<2x8x8x32xf32>
    %249 = vector.shape_cast %248 : vector<2x8x8x32xf32> to vector<128x32xf32>
    %250 = arith.truncf %249 : vector<128x32xf32> to vector<128x32xbf16>
    %c35 = arith.constant 35 : index
    %c0_109 = arith.constant 0 : index
    %c0_110 = arith.constant 0 : index
    %251 = vector.load %arg2[%c35, %c0_109, %c0_110] : memref<36x32x64xbf16, #tpu.memory_space<vmem>>, vector<1x32x64xbf16>
    %252 = vector.shape_cast %251 : vector<1x32x64xbf16> to vector<32x64xbf16>
    %cst_111 = arith.constant dense<0.000000e+00> : vector<128x64xf32>
    %253 = tpu.matmul %250, %252, %cst_111 {dimension_numbers = #tpu.dot_dimension_numbers<[1], [0], [0], [1], [0, 0, 1, 1], [], []>} : vector<128x32xbf16>, vector<32x64xbf16>, vector<128x64xf32> -> vector<128x64xf32>
    %254 = arith.addf %247, %253 : vector<128x64xf32>
    %cst_112 = arith.constant 0.000000e+00 : f32
    %255 = vector.broadcast %cst_112 : f32 to vector<128x64xf32>
    %256 = arith.maximumf %254, %255 : vector<128x64xf32>
    %c0_113 = arith.constant 0 : index
    %c0_114 = arith.constant 0 : index
    %257 = vector.load %arg3[%c0_113, %c0_114] : memref<64x4xf32, #tpu.memory_space<vmem>>, vector<64x4xf32>
    %cst_115 = arith.constant dense<0.000000e+00> : vector<128x4xf32>
    %258 = tpu.matmul %256, %257, %cst_115 {dimension_numbers = #tpu.dot_dimension_numbers<[1], [0], [0], [1], [0, 0, 1, 1], [], []>} : vector<128x64xf32>, vector<64x4xf32>, vector<128x4xf32> -> vector<128x4xf32>
    %c0_116 = arith.constant 0 : index
    %c0_117 = arith.constant 0 : index
    %259 = vector.load %arg4[%c0_116, %c0_117] : memref<1x4xf32, #tpu.memory_space<vmem>>, vector<1x4xf32>
    %260 = vector.broadcast %259 : vector<1x4xf32> to vector<128x4xf32>
    %261 = arith.addf %258, %260 : vector<128x4xf32>
    %cst_118 = arith.constant 0.000000e+00 : f32
    %262 = vector.broadcast %cst_118 : f32 to vector<128x4xf32>
    %263 = arith.maximumf %261, %262 : vector<128x4xf32>
    %264 = vector.shape_cast %263 : vector<128x4xf32> to vector<2x64x4xf32>
    %265 = tpu.iota {dimensions = array<i32: 2>} : vector<2x64x4xi32>
    %c3_i32 = arith.constant 3 : i32
    %266 = vector.broadcast %c3_i32 : i32 to vector<2x64x4xi32>
    %267 = arith.cmpi slt, %265, %266 : vector<2x64x4xi32>
    %268 = arith.mulf %264, %264 : vector<2x64x4xf32>
    %cst_119 = arith.constant 0.000000e+00 : f32
    %269 = vector.broadcast %cst_119 : f32 to vector<2x64x4xf32>
    %270 = arith.select %267, %268, %269 : vector<2x64x4xi1>, vector<2x64x4xf32>
    %cst_120 = arith.constant dense<0.000000e+00> : vector<2x64xf32>
    %271 = vector.multi_reduction <add>, %270, %cst_120 [2] : vector<2x64x4xf32> to vector<2x64xf32>
    %272 = vector.shape_cast %271 : vector<2x64xf32> to vector<2x64x1xf32>
    %cst_121 = arith.constant 1.000000e-24 : f32
    %273 = vector.broadcast %cst_121 : f32 to vector<2x64x1xf32>
    %274 = arith.addf %272, %273 : vector<2x64x1xf32>
    %275 = math.rsqrt %274 : vector<2x64x1xf32>
    %c3_i32_122 = arith.constant 3 : i32
    %276 = vector.broadcast %c3_i32_122 : i32 to vector<2x64x4xi32>
    %277 = arith.cmpi eq, %265, %276 : vector<2x64x4xi32>
    %cst_123 = arith.constant 0.000000e+00 : f32
    %278 = vector.broadcast %cst_123 : f32 to vector<2x64x4xf32>
    %279 = arith.select %277, %264, %278 : vector<2x64x4xi1>, vector<2x64x4xf32>
    %cst_124 = arith.constant dense<0.000000e+00> : vector<2x64xf32>
    %280 = vector.multi_reduction <add>, %279, %cst_124 [2] : vector<2x64x4xf32> to vector<2x64xf32>
    %281 = vector.shape_cast %280 : vector<2x64xf32> to vector<2x64x1xf32>
    %cst_125 = arith.constant dense<0xFF800000> : vector<2x1xf32>
    %282 = vector.multi_reduction <maximumf>, %281, %cst_125 [1] : vector<2x64x1xf32> to vector<2x1xf32>
    %283 = vector.shape_cast %282 : vector<2x1xf32> to vector<2x1x1xf32>
    %284 = vector.broadcast %283 : vector<2x1x1xf32> to vector<2x64x1xf32>
    %285 = arith.subf %281, %284 : vector<2x64x1xf32>
    %286 = math.exp %285 : vector<2x64x1xf32>
    %cst_126 = arith.constant dense<0.000000e+00> : vector<2x1xf32>
    %287 = vector.multi_reduction <add>, %286, %cst_126 [1] : vector<2x64x1xf32> to vector<2x1xf32>
    %288 = vector.shape_cast %287 : vector<2x1xf32> to vector<2x1x1xf32>
    %289 = tpu.reciprocal %288 {approx = true} : vector<2x1x1xf32> -> vector<2x1x1xf32>
    %290 = vector.broadcast %289 : vector<2x1x1xf32> to vector<2x64x1xf32>
    %291 = arith.mulf %286, %290 : vector<2x64x1xf32>
    %292 = arith.mulf %275, %291 : vector<2x64x1xf32>
    %293 = vector.broadcast %292 : vector<2x64x1xf32> to vector<2x64x4xf32>
    %294 = arith.mulf %264, %293 : vector<2x64x4xf32>
    %295 = tpu.iota {dimensions = array<i32: 1>} : vector<1x8xi32>
    %cst_127 = arith.constant 0.000000e+00 : f32
    %296 = vector.broadcast %cst_127 : f32 to vector<2x8xf32>
    %c0_128 = arith.constant 0 : index
    %c0_129 = arith.constant 0 : index
    %c0_130 = arith.constant 0 : index
    %297 = vector.load %arg5[%c0_128, %c0_129, %c0_130] : memref<3x64x4xf32, #tpu.memory_space<vmem>>, vector<1x64x4xf32>
    %298 = vector.shape_cast %297 : vector<1x64x4xf32> to vector<64x4xf32>
    %299 = vector.shape_cast %298 : vector<64x4xf32> to vector<1x64x4xf32>
    %300 = vector.broadcast %299 : vector<1x64x4xf32> to vector<2x64x4xf32>
    %301 = arith.mulf %294, %300 : vector<2x64x4xf32>
    %cst_131 = arith.constant dense<0.000000e+00> : vector<2x64xf32>
    %302 = vector.multi_reduction <add>, %301, %cst_131 [2] : vector<2x64x4xf32> to vector<2x64xf32>
    %cst_132 = arith.constant dense<0.000000e+00> : vector<2xf32>
    %303 = vector.multi_reduction <add>, %302, %cst_132 [1] : vector<2x64xf32> to vector<2xf32>
    %304 = vector.shape_cast %303 : vector<2xf32> to vector<2x1xf32>
    %c0_i32 = arith.constant 0 : i32
    %305 = vector.broadcast %c0_i32 : i32 to vector<1x8xi32>
    %306 = arith.cmpi eq, %295, %305 : vector<1x8xi32>
    %cst_133 = arith.constant 0.000000e+00 : f32
    %307 = vector.shape_cast %306 : vector<1x8xi1> to vector<1x8xi1>
    %308 = vector.broadcast %307 : vector<1x8xi1> to vector<2x8xi1>
    %309 = vector.shape_cast %304 : vector<2x1xf32> to vector<2x1xf32>
    %310 = vector.broadcast %309 : vector<2x1xf32> to vector<2x8xf32>
    %311 = vector.broadcast %cst_133 : f32 to vector<2x8xf32>
    %312 = arith.select %308, %310, %311 : vector<2x8xi1>, vector<2x8xf32>
    %313 = arith.addf %296, %312 : vector<2x8xf32>
    %c1_134 = arith.constant 1 : index
    %c0_135 = arith.constant 0 : index
    %c0_136 = arith.constant 0 : index
    %314 = vector.load %arg5[%c1_134, %c0_135, %c0_136] : memref<3x64x4xf32, #tpu.memory_space<vmem>>, vector<1x64x4xf32>
    %315 = vector.shape_cast %314 : vector<1x64x4xf32> to vector<64x4xf32>
    %316 = vector.shape_cast %315 : vector<64x4xf32> to vector<1x64x4xf32>
    %317 = vector.broadcast %316 : vector<1x64x4xf32> to vector<2x64x4xf32>
    %318 = arith.mulf %294, %317 : vector<2x64x4xf32>
    %cst_137 = arith.constant dense<0.000000e+00> : vector<2x64xf32>
    %319 = vector.multi_reduction <add>, %318, %cst_137 [2] : vector<2x64x4xf32> to vector<2x64xf32>
    %cst_138 = arith.constant dense<0.000000e+00> : vector<2xf32>
    %320 = vector.multi_reduction <add>, %319, %cst_138 [1] : vector<2x64xf32> to vector<2xf32>
    %321 = vector.shape_cast %320 : vector<2xf32> to vector<2x1xf32>
    %c1_i32 = arith.constant 1 : i32
    %322 = vector.broadcast %c1_i32 : i32 to vector<1x8xi32>
    %323 = arith.cmpi eq, %295, %322 : vector<1x8xi32>
    %cst_139 = arith.constant 0.000000e+00 : f32
    %324 = vector.shape_cast %323 : vector<1x8xi1> to vector<1x8xi1>
    %325 = vector.broadcast %324 : vector<1x8xi1> to vector<2x8xi1>
    %326 = vector.shape_cast %321 : vector<2x1xf32> to vector<2x1xf32>
    %327 = vector.broadcast %326 : vector<2x1xf32> to vector<2x8xf32>
    %328 = vector.broadcast %cst_139 : f32 to vector<2x8xf32>
    %329 = arith.select %325, %327, %328 : vector<2x8xi1>, vector<2x8xf32>
    %330 = arith.addf %313, %329 : vector<2x8xf32>
    %c2_140 = arith.constant 2 : index
    %c0_141 = arith.constant 0 : index
    %c0_142 = arith.constant 0 : index
    %331 = vector.load %arg5[%c2_140, %c0_141, %c0_142] : memref<3x64x4xf32, #tpu.memory_space<vmem>>, vector<1x64x4xf32>
    %332 = vector.shape_cast %331 : vector<1x64x4xf32> to vector<64x4xf32>
    %333 = vector.shape_cast %332 : vector<64x4xf32> to vector<1x64x4xf32>
    %334 = vector.broadcast %333 : vector<1x64x4xf32> to vector<2x64x4xf32>
    %335 = arith.mulf %294, %334 : vector<2x64x4xf32>
    %cst_143 = arith.constant dense<0.000000e+00> : vector<2x64xf32>
    %336 = vector.multi_reduction <add>, %335, %cst_143 [2] : vector<2x64x4xf32> to vector<2x64xf32>
    %cst_144 = arith.constant dense<0.000000e+00> : vector<2xf32>
    %337 = vector.multi_reduction <add>, %336, %cst_144 [1] : vector<2x64xf32> to vector<2xf32>
    %338 = vector.shape_cast %337 : vector<2xf32> to vector<2x1xf32>
    %c2_i32 = arith.constant 2 : i32
    %339 = vector.broadcast %c2_i32 : i32 to vector<1x8xi32>
    %340 = arith.cmpi eq, %295, %339 : vector<1x8xi32>
    %cst_145 = arith.constant 0.000000e+00 : f32
    %341 = vector.shape_cast %340 : vector<1x8xi1> to vector<1x8xi1>
    %342 = vector.broadcast %341 : vector<1x8xi1> to vector<2x8xi1>
    %343 = vector.shape_cast %338 : vector<2x1xf32> to vector<2x1xf32>
    %344 = vector.broadcast %343 : vector<2x1xf32> to vector<2x8xf32>
    %345 = vector.broadcast %cst_145 : f32 to vector<2x8xf32>
    %346 = arith.select %342, %344, %345 : vector<2x8xi1>, vector<2x8xf32>
    %347 = arith.addf %330, %346 : vector<2x8xf32>
    %c0_146 = arith.constant 0 : index
    %c0_147 = arith.constant 0 : index
    %348 = vector.load %arg6[%c0_146, %c0_147] : memref<1x8xf32, #tpu.memory_space<vmem>>, vector<1x8xf32>
    %349 = vector.broadcast %348 : vector<1x8xf32> to vector<2x8xf32>
    %350 = arith.addf %347, %349 : vector<2x8xf32>
    %cst_148 = arith.constant 0.000000e+00 : f32
    %351 = vector.broadcast %cst_148 : f32 to vector<2x8xf32>
    %352 = arith.maximumf %350, %351 : vector<2x8xf32>
    %c0_149 = arith.constant 0 : index
    %c0_150 = arith.constant 0 : index
    %c0_151 = arith.constant 0 : index
    %353 = vector.load %arg7[%c0_149, %c0_150, %c0_151] : memref<1x2x8xf32, #tpu.memory_space<vmem>>, vector<1x2x8xf32>
    %354 = vector.shape_cast %353 : vector<1x2x8xf32> to vector<2x8xf32>
    %355 = vector.shape_cast %352 : vector<2x8xf32> to vector<1x2x8xf32>
    tpu.vector_store %arg7[%c0_149, %c0_150, %c0_151], %355 {strides = array<i32>} : memref<1x2x8xf32, #tpu.memory_space<vmem>>, vector<1x2x8xf32>,
    return
  }
  func.func @transform_0(%arg0: i32) -> (i32, i32, i32, i32) {
    %c0_i32 = arith.constant 0 : i32
    %c0_i32_0 = arith.constant 0 : i32
    %c0_i32_1 = arith.constant 0 : i32
    %c0_i32_2 = arith.constant 0 : i32
    return %arg0, %c0_i32, %c0_i32_0, %c0_i32_1 : i32, i32, i32, i32
  }
  func.func @transform_1(%arg0: i32) -> (i32, i32, i32) {
    %c0_i32 = arith.constant 0 : i32
    %c0_i32_0 = arith.constant 0 : i32
    %c0_i32_1 = arith.constant 0 : i32
    %c0_i32_2 = arith.constant 0 : i32
    return %c0_i32, %c0_i32_0, %c0_i32_1 : i32, i32, i32
  }
  func.func @transform_2(%arg0: i32) -> (i32, i32) {
    %c0_i32 = arith.constant 0 : i32
    %c0_i32_0 = arith.constant 0 : i32
    %c0_i32_1 = arith.constant 0 : i32
    return %c0_i32, %c0_i32_0 : i32, i32
  }
  func.func @transform_3(%arg0: i32) -> (i32, i32) {
    %c0_i32 = arith.constant 0 : i32
    %c0_i32_0 = arith.constant 0 : i32
    %c0_i32_1 = arith.constant 0 : i32
    return %c0_i32, %c0_i32_0 : i32, i32
  }
  func.func @transform_4(%arg0: i32) -> (i32, i32, i32) {
    %c0_i32 = arith.constant 0 : i32
    %c0_i32_0 = arith.constant 0 : i32
    %c0_i32_1 = arith.constant 0 : i32
    %c0_i32_2 = arith.constant 0 : i32
    return %c0_i32, %c0_i32_0, %c0_i32_1 : i32, i32, i32
  }
  func.func @transform_5(%arg0: i32) -> (i32, i32) {
    %c0_i32 = arith.constant 0 : i32
    %c0_i32_0 = arith.constant 0 : i32
    %c0_i32_1 = arith.constant 0 : i32
    return %c0_i32, %c0_i32_0 : i32, i32
  }
  func.func @transform_6(%arg0: i32) -> (i32, i32, i32) {
    %c0_i32 = arith.constant 0 : i32
    %c0_i32_0 = arith.constant 0 : i32
    %c0_i32_1 = arith.constant 0 : i32
    return %arg0, %c0_i32, %c0_i32_0 : i32, i32, i32
  }
}

</mosaic_0001>

<llo_original>
// kernel: tpu_custom_call.1
$region0: #{tpu_custom_call.1}
  #allocation0 [shape = 'u32[]', space=smem, size = 0x4, offset = 0x4, fixed_abs, tag = 'smem constant byte address 0x4 - core index']
  #allocation1 [shape = 'u32[144,128]{1,0:T(1,128)}', space=vmem, size = 0x12000, scoped, tag = 'internal scratch']
  %s0 = inlined_call_operand.vmem [shape: bf16[4,13,13,32], index: 0, kind: input, shape index: {}]
  %s1 = inlined_call_operand.vmem [shape: bf16[36,32,64], index: 1, kind: input, shape index: {}]
  %s2 = inlined_call_operand.vmem [shape: f32[64,4], index: 2, kind: input, shape index: {}]
  %s3 = inlined_call_operand.vmem [shape: f32[1,4], index: 3, kind: input, shape index: {}]
  %s4 = inlined_call_operand.vmem [shape: f32[3,64,4], index: 4, kind: input, shape index: {}]
  %s5 = inlined_call_operand.vmem [shape: f32[1,8], index: 5, kind: input, shape index: {}]
  %s6 = inlined_call_operand.hbm [shape: f32[2,2,8], index: 6, kind: output, shape index: {}]
  %s7 = sld [smem:[#allocation0]]
  $region57: #{tpu_custom_call.1} parent=0
    _
  %s9 = ssub.s32 1, %s7
  %s10 = scalar_select 0, %s9, %s7
  $region1: #{tpu_custom_call.1} parent=0
    #allocation2 [shape = 'u8[2048]{0}', space=vmem, size = 0x800, scoped, tag = 'output window, operand 0']
    #allocation3 [shape = 's32[2]{0}', space=sflag, size = 0x8, scoped, tag = 'scoped memory for tpu_custom_call.1']
    %11 = vsyncpa [#allocation3], 0
    %s12 = scalar_lea.sflag [#allocation3], 1
    %13 = vsyncpa %s12, 0
    loop: start=0, step=1, limit=4
    $region2: #{tpu_custom_call.1} parent=1 // loop_pre_header
      _
    $region3: #{tpu_custom_call.1} parent=1 // loop_header
      %s15 = sphi 0, %s19
      %p16 = scmp.ge.s32.totalorder %s15, 4
      %s25 = sphi 0, %s27
      %s28 = sphi 0, %s25
      %s29 = sphi 0, %s28
      %s45 = sphi 0, %s29
      %s49 = sphi 0, %s49
      %s51 = sphi 0, %s49
      %s52 = sphi 0, %s51
      %s66 = sphi 0, %s52
      %s70 = sphi 0, %s70
      %s72 = sphi 0, %s70
      %s73 = sphi 0, %s72
      %s87 = sphi 0, %s73
      %s91 = sphi 0, %s91
      %s93 = sphi 0, %s91
      %s94 = sphi 0, %s93
      %s108 = sphi 0, %s94
      %s112 = sphi 0, %s112
      %s114 = sphi 0, %s112
      %s115 = sphi 0, %s114
      %s129 = sphi 0, %s115
      %s133 = sphi 0, %s133
      %s135 = sphi 0, %s133
      %s136 = sphi 0, %s135
      %s150 = sphi 0, %s136
      %s156 = sphi 0, %s158
      %s159 = sphi 0, %s156
      %s160 = sphi 0, %s159
      %s176 = sphi 0, %s160
    $region4: #{tpu_custom_call.1} parent=1 // loop_header_branch
      %18 = sbr.rel (%p16) target = $region8
    $region5: #{tpu_custom_call.1} parent=1 // loop_body
      %s20 = ssub.s32 %s15, 1
      %s21 = ssub.s32 %s15, 2
      %s22 = sadd.s32 %s15, 1
      %s23 = ssub.s32 %s15, %s22
      %p24 = scmp.eq.s32.totalorder %s23, 0
      %s26 = sadd.s32 %s25, 1
      %s27 = scalar_select %p24, %s25, %s26
      %p30 = pneg %p24
      %p31 = scmp.eq.s32.totalorder %s15, 1
      %p32 = por %p30, %p31
      %p33 = scmp.ne.s32.totalorder %s25, %s28
      %p34 = scmp.eq.s32.totalorder %s15, 0
      %p35 = por %p33, %p34
      %p36 = scmp.ne.s32.totalorder %s25, %s28
      %p37 = scmp.eq.s32.totalorder %s20, 1
      %p38 = por %p36, %p37
      %p39 = scmp.ne.s32.totalorder %s28, %s29
      %p40 = scmp.eq.s32.totalorder %s20, 0
      %p41 = por %p39, %p40
      %p42 = scmp.ne.s32.totalorder %s28, %s29
      %p43 = scmp.eq.s32.totalorder %s21, 1
      %p44 = por %p42, %p43
      %p46 = scmp.ne.s32.totalorder %s29, %s45
      %p47 = scmp.eq.s32.totalorder %s21, 0
      %p48 = por %p46, %p47
      %s50 = sadd.s32 %s49, 1
      %p53 = scmp.eq.s32.totalorder %s15, 1
      %p54 = scmp.ne.s32.totalorder %s49, %s51
      %p55 = scmp.eq.s32.totalorder %s15, 0
      %p56 = por %p54, %p55
      %p57 = scmp.ne.s32.totalorder %s49, %s51
      %p58 = scmp.eq.s32.totalorder %s20, 1
      %p59 = por %p57, %p58
      %p60 = scmp.ne.s32.totalorder %s51, %s52
      %p61 = scmp.eq.s32.totalorder %s20, 0
      %p62 = por %p60, %p61
      %p63 = scmp.ne.s32.totalorder %s51, %s52
      %p64 = scmp.eq.s32.totalorder %s21, 1
      %p65 = por %p63, %p64
      %p67 = scmp.ne.s32.totalorder %s52, %s66
      %p68 = scmp.eq.s32.totalorder %s21, 0
      %p69 = por %p67, %p68
      %s71 = sadd.s32 %s70, 1
      %p74 = scmp.eq.s32.totalorder %s15, 1
      %p75 = scmp.ne.s32.totalorder %s70, %s72
      %p76 = scmp.eq.s32.totalorder %s15, 0
      %p77 = por %p75, %p76
      %p78 = scmp.ne.s32.totalorder %s70, %s72
      %p79 = scmp.eq.s32.totalorder %s20, 1
      %p80 = por %p78, %p79
      %p81 = scmp.ne.s32.totalorder %s72, %s73
      %p82 = scmp.eq.s32.totalorder %s20, 0
      %p83 = por %p81, %p82
      %p84 = scmp.ne.s32.totalorder %s72, %s73
      %p85 = scmp.eq.s32.totalorder %s21, 1
      %p86 = por %p84, %p85
      %p88 = scmp.ne.s32.totalorder %s73, %s87
      %p89 = scmp.eq.s32.totalorder %s21, 0
      %p90 = por %p88, %p89
      %s92 = sadd.s32 %s91, 1
      %p95 = scmp.eq.s32.totalorder %s15, 1
      %p96 = scmp.ne.s32.totalorder %s91, %s93
      %p97 = scmp.eq.s32.totalorder %s15, 0
      %p98 = por %p96, %p97
      %p99 = scmp.ne.s32.totalorder %s91, %s93
      %p100 = scmp.eq.s32.totalorder %s20, 1
      %p101 = por %p99, %p100
      %p102 = scmp.ne.s32.totalorder %s93, %s94
      %p103 = scmp.eq.s32.totalorder %s20, 0
      %p104 = por %p102, %p103
      %p105 = scmp.ne.s32.totalorder %s93, %s94
      %p106 = scmp.eq.s32.totalorder %s21, 1
      %p107 = por %p105, %p106
      %p109 = scmp.ne.s32.totalorder %s94, %s108
      %p110 = scmp.eq.s32.totalorder %s21, 0
      %p111 = por %p109, %p110
      %s113 = sadd.s32 %s112, 1
      %p116 = scmp.eq.s32.totalorder %s15, 1
      %p117 = scmp.ne.s32.totalorder %s112, %s114
      %p118 = scmp.eq.s32.totalorder %s15, 0
      %p119 = por %p117, %p118
      %p120 = scmp.ne.s32.totalorder %s112, %s114
      %p121 = scmp.eq.s32.totalorder %s20, 1
      %p122 = por %p120, %p121
      %p123 = scmp.ne.s32.totalorder %s114, %s115
      %p124 = scmp.eq.s32.totalorder %s20, 0
      %p125 = por %p123, %p124
      %p126 = scmp.ne.s32.totalorder %s114, %s115
      %p127 = scmp.eq.s32.totalorder %s21, 1
      %p128 = por %p126, %p127
      %p130 = scmp.ne.s32.totalorder %s115, %s129
      %p131 = scmp.eq.s32.totalorder %s21, 0
      %p132 = por %p130, %p131
      %s134 = sadd.s32 %s133, 1
      %p137 = scmp.eq.s32.totalorder %s15, 1
      %p138 = scmp.ne.s32.totalorder %s133, %s135
      %p139 = scmp.eq.s32.totalorder %s15, 0
      %p140 = por %p138, %p139
      %p141 = scmp.ne.s32.totalorder %s133, %s135
      %p142 = scmp.eq.s32.totalorder %s20, 1
      %p143 = por %p141, %p142
      %p144 = scmp.ne.s32.totalorder %s135, %s136
      %p145 = scmp.eq.s32.totalorder %s20, 0
      %p146 = por %p144, %p145
      %p147 = scmp.ne.s32.totalorder %s135, %s136
      %p148 = scmp.eq.s32.totalorder %s21, 1
      %p149 = por %p147, %p148
      %p151 = scmp.ne.s32.totalorder %s136, %s150
      %p152 = scmp.eq.s32.totalorder %s21, 0
      %p153 = por %p151, %p152
      %s154 = ssub.s32 %s15, %s22
      %p155 = scmp.eq.s32.totalorder %s154, 0
      %s157 = sadd.s32 %s156, 1
      %s158 = scalar_select %p155, %s156, %s157
      %p161 = pneg %p155
      %p162 = scmp.eq.s32.totalorder %s15, 1
      %p163 = por %p161, %p162
      %p164 = scmp.ne.s32.totalorder %s156, %s159
      %p165 = scmp.eq.s32.totalorder %s15, 0
      %p166 = por %p164, %p165
      %p167 = scmp.ne.s32.totalorder %s156, %s159
      %p168 = scmp.eq.s32.totalorder %s20, 1
      %p169 = por %p167, %p168
      %p170 = scmp.ne.s32.totalorder %s159, %s160
      %p171 = scmp.eq.s32.totalorder %s20, 0
      %p172 = por %p170, %p171
      %p173 = scmp.ne.s32.totalorder %s159, %s160
      %p174 = scmp.eq.s32.totalorder %s21, 1
      %p175 = por %p173, %p174
      %p177 = scmp.ne.s32.totalorder %s160, %s176
      %p178 = scmp.eq.s32.totalorder %s21, 0
      %p179 = por %p177, %p178
      %p180 = scmp.le.s32.totalorder 1, %s15
      %p181 = scmp.lt.s32.totalorder %s15, 3
      %p182 = pnand %p180, %p181
      %p183 = pneg %p182
      // Predicated region
      $region9: #{tpu_custom_call.1} parent=5 // pred_check
        _
      $region10: #{tpu_custom_call.1} parent=5 // pred_check_branch
        %185 = sbr.rel (%p182) target = $region12
      $region11: #{tpu_custom_call.1} parent=5 // pred_region
        %s186 = ssub.s32 %s15, 1
        // Predicated region
        $region13: #{tpu_custom_call.1} parent=11 // pred_check
          %p187 = pneg %p62
        $region14: #{tpu_custom_call.1} parent=11 // pred_check_branch
          %189 = sbr.rel (%p187) target = $region16
        $region15: #{tpu_custom_call.1} parent=11 // pred_region
          _
        $region16: #{tpu_custom_call.1} parent=11 // pred_fallthru
          _
        // Predicated region
        $region17: #{tpu_custom_call.1} parent=11 // pred_check
          %p190 = pneg %p83
        $region18: #{tpu_custom_call.1} parent=11 // pred_check_branch
          %192 = sbr.rel (%p190) target = $region20
        $region19: #{tpu_custom_call.1} parent=11 // pred_region
          _
        $region20: #{tpu_custom_call.1} parent=11 // pred_fallthru
          _
        // Predicated region
        $region21: #{tpu_custom_call.1} parent=11 // pred_check
          %p193 = pneg %p104
        $region22: #{tpu_custom_call.1} parent=11 // pred_check_branch
          %195 = sbr.rel (%p193) target = $region24
        $region23: #{tpu_custom_call.1} parent=11 // pred_region
          _
        $region24: #{tpu_custom_call.1} parent=11 // pred_fallthru
          _
        // Predicated region
        $region25: #{tpu_custom_call.1} parent=11 // pred_check
          %p196 = pneg %p125
        $region26: #{tpu_custom_call.1} parent=11 // pred_check_branch
          %198 = sbr.rel (%p196) target = $region28
        $region27: #{tpu_custom_call.1} parent=11 // pred_region
          _
        $region28: #{tpu_custom_call.1} parent=11 // pred_fallthru
          _
        // Predicated region
        $region29: #{tpu_custom_call.1} parent=11 // pred_check
          %p199 = pneg %p146
        $region30: #{tpu_custom_call.1} parent=11 // pred_check_branch
          %201 = sbr.rel (%p199) target = $region32
        $region31: #{tpu_custom_call.1} parent=11 // pred_region
          _
        $region32: #{tpu_custom_call.1} parent=11 // pred_fallthru
          _
      $region12: #{tpu_custom_call.1} parent=5 // pred_fallthru
        _
      %p202 = scmp.lt.s32.totalorder %s15, 2
      // Predicated region
      $region33: #{tpu_custom_call.1} parent=5 // pred_check
        %p203 = pneg %p202
      $region34: #{tpu_custom_call.1} parent=5 // pred_check_branch
        %205 = sbr.rel (%p203) target = $region36
      $region35: #{tpu_custom_call.1} parent=5 // pred_region
        // Predicated region
        $region37: #{tpu_custom_call.1} parent=35 // pred_check
          %p206 = pneg %p35
        $region38: #{tpu_custom_call.1} parent=35 // pred_check_branch
          %208 = sbr.rel (%p206) target = $region40
        $region39: #{tpu_custom_call.1} parent=35 // pred_region
          %s209 = smul.u32 2, %s15
          %p210 = scmp.lt.s32.totalorder %s209, 3
          %s211 = scalar_select %p210, %s209, 3
          %s212 = smul.addr %s211, 26
          %s213 = smul.addr %s212, 4
          %s214 = scalar_lea.vmem %s0, %s213
          %s215 = smul.u32 2, %s15
        $region40: #{tpu_custom_call.1} parent=35 // pred_fallthru
          _
      $region36: #{tpu_custom_call.1} parent=5 // pred_fallthru
        _
      %p216 = scmp.le.s32.totalorder 1, %s15
      %p217 = scmp.lt.s32.totalorder %s15, 3
      %p218 = pnand %p216, %p217
      %p219 = pneg %p218
      // Predicated region
      $region41: #{tpu_custom_call.1} parent=5 // pred_check
        _
      $region42: #{tpu_custom_call.1} parent=5 // pred_check_branch
        %221 = sbr.rel (%p218) target = $region44
      $region43: #{tpu_custom_call.1} parent=5 // pred_region
        %s222 = ssub.s32 %s15, 1
        %s223 = smul.u32 2, %s20
        %p224 = scmp.lt.s32.totalorder %s223, 3
        %s225 = scalar_select %p224, %s223, 3
        %s226 = smul.addr %s225, 26
        %s227 = smul.addr %s226, 4
        %s228 = scalar_lea.vmem %s0, %s227
        %p229 = pneg %p41
        %p230 = pneg %p38
        %p231 = pneg %p62
        %p232 = pneg %p59
        %p233 = pneg %p83
        %p234 = pneg %p80
        %p235 = pneg %p104
        %p236 = pneg %p101
        %p237 = pneg %p125
        %p238 = pneg %p122
        %p239 = pneg %p146
        %p240 = pneg %p143
        %p241 = pneg %p172
        %p242 = pneg %p169
        %s243 = sand.u32 %s159, 1
        %s244 = scalar_lea.sflag [#allocation3], %s243
        %s245 = sand.u32 %s159, 1
        %s246 = smul.addr %s245, 2
        %s247 = scalar_lea.vmem [#allocation2], %s246
        %s248 = smul.u32 2, %s20
        %p249 = scmp.lt.s32.totalorder %s248, 3
        %s250 = scalar_select %p249, %s248, 3
        %s251 = smul.addr %s250, 26
        %s252 = smul.addr %s251, 4
        %s253 = scalar_lea.vmem %s0, %s252
        %s254 = smul.u32 2, %s20
        %v256 = vld [vmem:[%s253] sm:$0xf]
        %v257 = vld [vmem:[%s253 + $0x4] sm:$0x7]
        %v258 = vld [vmem:[%s253 + $0x8] sm:$0xf]
        %v259 = vld [vmem:[%s253 + $0xc] sm:$0x7]
        %v260 = vld [vmem:[%s253 + $0x10] sm:$0xf]
        %v261 = vld [vmem:[%s253 + $0x14] sm:$0x7]
        %v262 = vld [vmem:[%s253 + $0x18] sm:$0xf]
        %v263 = vld [vmem:[%s253 + $0x1c] sm:$0x7]
        %v264 = vld [vmem:[%s253 + $0x20] sm:$0xf]
        %v265 = vld [vmem:[%s253 + $0x24] sm:$0x7]
        %v266 = vld [vmem:[%s253 + $0x28] sm:$0xf]
        %v267 = vld [vmem:[%s253 + $0x2c] sm:$0x7]
        %v268 = vld [vmem:[%s253 + $0x30] sm:$0xf]
        %v269 = vld [vmem:[%s253 + $0x34] sm:$0x7]
        %v270 = vld [vmem:[%s253 + $0x38] sm:$0xf]
        %v271 = vld [vmem:[%s253 + $0x3c] sm:$0x7]
        %v272 = vld [vmem:[%s253 + $0x40] sm:$0xf]
        %v273 = vld [vmem:[%s253 + $0x44] sm:$0x7]
        %v274 = vld [vmem:[%s253 + $0x48] sm:$0xf]
        %v275 = vld [vmem:[%s253 + $0x4c] sm:$0x7]
        %v276 = vld [vmem:[%s253 + $0x50] sm:$0xf]
        %v277 = vld [vmem:[%s253 + $0x54] sm:$0x7]
        %v278 = vld [vmem:[%s253 + $0x58] sm:$0xf]
        %v279 = vld [vmem:[%s253 + $0x5c] sm:$0x7]
        %v280 = vld [vmem:[%s253 + $0x60] sm:$0xf]
        %v281 = vld [vmem:[%s253 + $0x64] sm:$0x7]
        %v282 = vld [vmem:[%s253 + $0x68] sm:$0xf]
        %v283 = vld [vmem:[%s253 + $0x6c] sm:$0x7]
        %v284 = vld [vmem:[%s253 + $0x70] sm:$0xf]
        %v285 = vld [vmem:[%s253 + $0x74] sm:$0x7]
        %v286 = vld [vmem:[%s253 + $0x78] sm:$0xf]
        %v287 = vld [vmem:[%s253 + $0x7c] sm:$0x7]
        %v288 = vld [vmem:[%s253 + $0x80] sm:$0xf]
        %v289 = vld [vmem:[%s253 + $0x84] sm:$0x7]
        %v290 = vld [vmem:[%s253 + $0x88] sm:$0xf]
        %v291 = vld [vmem:[%s253 + $0x8c] sm:$0x7]
        %v292 = vld [vmem:[%s253 + $0x90] sm:$0xf]
        %v293 = vld [vmem:[%s253 + $0x94] sm:$0x7]
        %v294 = vld [vmem:[%s253 + $0x98] sm:$0xf]
        %v295 = vld [vmem:[%s253 + $0x9c] sm:$0x7]
        %v296 = vld [vmem:[%s253 + $0xa0] sm:$0xf]
        %v297 = vld [vmem:[%s253 + $0xa4] sm:$0x7]
        %v298 = vld [vmem:[%s253 + $0xa8] sm:$0xf]
        %v299 = vld [vmem:[%s253 + $0xac] sm:$0x7]
        %v300 = vld [vmem:[%s253 + $0xb0] sm:$0xf]
        %v301 = vld [vmem:[%s253 + $0xb4] sm:$0x7]
        %v302 = vld [vmem:[%s253 + $0xb8] sm:$0xf]
        %v303 = vld [vmem:[%s253 + $0xbc] sm:$0x7]
        %v304 = vld [vmem:[%s253 + $0xc0] sm:$0xf]
        %v305 = vld [vmem:[%s253 + $0xc4] sm:$0x7]
        %v306 = vld [vmem:[%s253 + $0xc8] sm:$0xf]
        %v307 = vld [vmem:[%s253 + $0xcc] sm:$0x7]
        %v308 = vunpack.c.l.bf16 %v256
        %v309 = vunpack.c.l.bf16 %v257
        %v310 = vunpack.c.l.bf16 %v258
        %v311 = vunpack.c.l.bf16 %v259
        %v312 = vunpack.c.l.bf16 %v260
        %v313 = vunpack.c.l.bf16 %v261
        %v314 = vunpack.c.l.bf16 %v262
        %v315 = vunpack.c.l.bf16 %v263
        %v316 = vunpack.c.l.bf16 %v264
        %v317 = vunpack.c.l.bf16 %v265
        %v318 = vunpack.c.l.bf16 %v266
        %v319 = vunpack.c.l.bf16 %v267
        %v320 = vunpack.c.l.bf16 %v268
        %v321 = vunpack.c.l.bf16 %v269
        %v322 = vunpack.c.l.bf16 %v270
        %v323 = vunpack.c.l.bf16 %v271
        %v324 = vunpack.c.l.bf16 %v272
        %v325 = vunpack.c.l.bf16 %v273
        %v326 = vunpack.c.l.bf16 %v274
        %v327 = vunpack.c.l.bf16 %v275
        %v328 = vunpack.c.l.bf16 %v276
        %v329 = vunpack.c.l.bf16 %v277
        %v330 = vunpack.c.l.bf16 %v278
        %v331 = vunpack.c.l.bf16 %v279
        %v332 = vunpack.c.l.bf16 %v280
        %v333 = vunpack.c.l.bf16 %v281
        %v334 = vunpack.c.l.bf16 %v282
        %v335 = vunpack.c.l.bf16 %v283
        %v336 = vunpack.c.l.bf16 %v284
        %v337 = vunpack.c.l.bf16 %v285
        %v338 = vunpack.c.l.bf16 %v286
        %v339 = vunpack.c.l.bf16 %v287
        %v340 = vunpack.c.l.bf16 %v288
        %v341 = vunpack.c.l.bf16 %v289
        %v342 = vunpack.c.l.bf16 %v290
        %v343 = vunpack.c.l.bf16 %v291
        %v344 = vunpack.c.l.bf16 %v292
        %v345 = vunpack.c.l.bf16 %v293
        %v346 = vunpack.c.l.bf16 %v294
        %v347 = vunpack.c.l.bf16 %v295
        %v348 = vunpack.c.l.bf16 %v296
        %v349 = vunpack.c.l.bf16 %v297
        %v350 = vunpack.c.l.bf16 %v298
        %v351 = vunpack.c.l.bf16 %v299
        %v352 = vunpack.c.l.bf16 %v300
        %v353 = vunpack.c.l.bf16 %v301
        %v354 = vunpack.c.l.bf16 %v302
        %v355 = vunpack.c.l.bf16 %v303
        %v356 = vunpack.c.l.bf16 %v304
        %v357 = vunpack.c.l.bf16 %v305
        %v358 = vunpack.c.l.bf16 %v306
        %v359 = vunpack.c.l.bf16 %v307
        %v360 = vpack.c.bf16 %v310, %v308
        %v361 = vpack.c.bf16 %v314, %v312
        %v362 = vpack.c.bf16 %v318, %v316
        %v363 = vpack.c.bf16 %v322, %v320
        %v364 = vpack.c.bf16 %v336, %v334
        %v365 = vpack.c.bf16 %v340, %v338
        %v366 = vpack.c.bf16 %v344, %v342
        %v367 = vpack.c.bf16 %v348, %v346
        %v368 = vld [vmem:[%s1] sm:$0xf]
        %v369 = vld [vmem:[%s1 + $0x4] sm:$0xf]
        %v370 = vld [vmem:[%s1 + $0x8] sm:$0xf]
        %v371 = vld [vmem:[%s1 + $0xc] sm:$0xf]
        %vm404 = vcmask 1046528
        %v405 = vrot.slane %v308, 1
        %v406 = vrot.slane %v309, 1
        %v407 = vsel %vm404, %v405, %v406
        %v408 = vrot.slane %v310, 1
        %v409 = vrot.slane %v311, 1
        %v410 = vsel %vm404, %v408, %v409
        %v411 = vrot.slane %v312, 1
        %v412 = vrot.slane %v313, 1
        %v413 = vsel %vm404, %v411, %v412
        %v414 = vrot.slane %v314, 1
        %v415 = vrot.slane %v315, 1
        %v416 = vsel %vm404, %v414, %v415
        %v417 = vrot.slane %v316, 1
        %v418 = vrot.slane %v317, 1
        %v419 = vsel %vm404, %v417, %v418
        %v420 = vrot.slane %v318, 1
        %v421 = vrot.slane %v319, 1
        %v422 = vsel %vm404, %v420, %v421
        %v423 = vrot.slane %v320, 1
        %v424 = vrot.slane %v321, 1
        %v425 = vsel %vm404, %v423, %v424
        %v426 = vrot.slane %v322, 1
        %v427 = vrot.slane %v323, 1
        %v428 = vsel %vm404, %v426, %v427
        %v429 = vrot.slane %v334, 1
        %v430 = vrot.slane %v335, 1
        %v431 = vsel %vm404, %v429, %v430
        %v432 = vrot.slane %v336, 1
        %v433 = vrot.slane %v337, 1
        %v434 = vsel %vm404, %v432, %v433
        %v435 = vrot.slane %v338, 1
        %v436 = vrot.slane %v339, 1
        %v437 = vsel %vm404, %v435, %v436
        %v438 = vrot.slane %v340, 1
        %v439 = vrot.slane %v341, 1
        %v440 = vsel %vm404, %v438, %v439
        %v441 = vrot.slane %v342, 1
        %v442 = vrot.slane %v343, 1
        %v443 = vsel %vm404, %v441, %v442
        %v444 = vrot.slane %v344, 1
        %v445 = vrot.slane %v345, 1
        %v446 = vsel %vm404, %v444, %v445
        %v447 = vrot.slane %v346, 1
        %v448 = vrot.slane %v347, 1
        %v449 = vsel %vm404, %v447, %v448
        %v450 = vrot.slane %v348, 1
        %v451 = vrot.slane %v349, 1
        %v452 = vsel %vm404, %v450, %v451
        %v469 = vpack.c.bf16 %v410, %v407
        %v470 = vpack.c.bf16 %v416, %v413
        %v471 = vpack.c.bf16 %v422, %v419
        %v472 = vpack.c.bf16 %v428, %v425
        %v473 = vpack.c.bf16 %v434, %v431
        %v474 = vpack.c.bf16 %v440, %v437
        %v475 = vpack.c.bf16 %v446, %v443
        %v476 = vpack.c.bf16 %v452, %v449
        %s477 = scalar_lea.vmem %s1, 16
        %v478 = vld [vmem:[%s477] sm:$0xf]
        %v479 = vld [vmem:[%s477 + $0x4] sm:$0xf]
        %v480 = vld [vmem:[%s477 + $0x8] sm:$0xf]
        %v481 = vld [vmem:[%s477 + $0xc] sm:$0xf]
        %v486 = vunpack.c.l.b16 %v478
        %v487 = vunpack.c.l.b16 %v479
        %v488 = vunpack.c.l.b16 %v480
        %v489 = vunpack.c.l.b16 %v481
        %v490 = vpack.c.b16 %v487, %v486
        %v491 = vpack.c.b16 %v489, %v488
        %vm494 = vcmask 261120
        %v496 = vsel %vm494, %v469, 0
        %v499 = vsel %vm494, %v470, 0
        %v502 = vsel %vm494, %v471, 0
        %v505 = vsel %vm494, %v472, 0
        %v508 = vsel %vm494, %v473, 0
        %v511 = vsel %vm494, %v474, 0
        %v514 = vsel %vm494, %v475, 0
        %v517 = vsel %vm494, %v476, 0
        %519 = vmatprep.subr.bf16.mxu0 0
        %520 = vmatpush1.bf16.msra.mxu0 0
        %521 = vmatprep.subr.bf16.mxu0 0
        %522 = vmatpush1.bf16.msra.mxu0 0
        %523 = vmatprep.subr.bf16.mxu0 0
        %524 = vmatpush1.bf16.msra.mxu0 0
        %525 = vmatprep.subr.bf16.mxu0 0
        %526 = vmatpush1.bf16.msra.mxu0 0
        %527 = vmatprep.subr.bf16.mxu0 0
        %528 = vmatpush1.bf16.msra.mxu0 0
        %529 = vmatprep.subr.bf16.mxu0 0
        %530 = vmatpush1.bf16.msra.mxu0 0
        %531 = vmatprep.subr.bf16.mxu0 0
        %532 = vmatpush1.bf16.msra.mxu0 %v491
        %533 = vmatprep.subr.bf16.mxu0 0
        %534 = vmatpush1.bf16.msra.mxu0 %v490
        %535 = vmatprep.subr.bf16.mxu0 0
        %536 = vmatpush2.bf16.msra.mxu0 0
        %537 = vmatprep.subr.bf16.mxu0 0
        %538 = vmatpush2.bf16.msra.mxu0 0
        %539 = vmatprep.subr.bf16.mxu0 0
        %540 = vmatpush2.bf16.msra.mxu0 0
        %541 = vmatprep.subr.bf16.mxu0 0
        %542 = vmatpush2.bf16.msra.mxu0 0
        %543 = vmatprep.subr.bf16.mxu0 0
        %544 = vmatpush2.bf16.msra.mxu0 0
        %545 = vmatprep.subr.bf16.mxu0 0
        %546 = vmatpush2.bf16.msra.mxu0 0
        %547 = vmatprep.subr.bf16.mxu0 0
        %548 = vmatpush2.bf16.msra.mxu0 0
        %549 = vmatprep.subr.bf16.mxu0 0
        %550 = vmatpush2.bf16.msra.mxu0 0
        %551 = vmatprep.mubr.bf16.mxu0 0
        %552 = vmatmul.mubr.bf16.gmra.mxu0 %v496
        %v553 = vpop.f32.mrf.mxu0
        %v554 = vadd.f32 0.0, %v553
        %v555 = vpop.f32.mrf.mxu0
        %v556 = vpop.f32.mrf.mxu0
        %v557 = vadd.f32 0.0, %v556
        %v558 = vpop.f32.mrf.mxu0
        %559 = vmatprep.mubr.bf16.mxu0 0
        %560 = vmatmul.mubr.bf16.gmra.mxu0 %v499
        %v561 = vpop.f32.mrf.mxu0
        %v562 = vadd.f32 0.0, %v561
        %v563 = vpop.f32.mrf.mxu0
        %v564 = vpop.f32.mrf.mxu0
        %v565 = vadd.f32 0.0, %v564
        %v566 = vpop.f32.mrf.mxu0
        %567 = vmatprep.mubr.bf16.mxu0 0
        %568 = vmatmul.mubr.bf16.gmra.mxu0 %v502
        %v569 = vpop.f32.mrf.mxu0
        %v570 = vadd.f32 0.0, %v569
        %v571 = vpop.f32.mrf.mxu0
        %v572 = vpop.f32.mrf.mxu0
        %v573 = vadd.f32 0.0, %v572
        %v574 = vpop.f32.mrf.mxu0
        %575 = vmatprep.mubr.bf16.mxu0 0
        %576 = vmatmul.mubr.bf16.gmra.mxu0 %v505
        %v577 = vpop.f32.mrf.mxu0
        %v578 = vadd.f32 0.0, %v577
        %v579 = vpop.f32.mrf.mxu0
        %v580 = vpop.f32.mrf.mxu0
        %v581 = vadd.f32 0.0, %v580
        %v582 = vpop.f32.mrf.mxu0
        %583 = vmatprep.mubr.bf16.mxu0 0
        %584 = vmatmul.mubr.bf16.gmra.mxu0 %v508
        %v585 = vpop.f32.mrf.mxu0
        %v586 = vadd.f32 0.0, %v585
        %v587 = vpop.f32.mrf.mxu0
        %v588 = vpop.f32.mrf.mxu0
        %v589 = vadd.f32 0.0, %v588
        %v590 = vpop.f32.mrf.mxu0
        %591 = vmatprep.mubr.bf16.mxu0 0
        %592 = vmatmul.mubr.bf16.gmra.mxu0 %v511
        %v593 = vpop.f32.mrf.mxu0
        %v594 = vadd.f32 0.0, %v593
        %v595 = vpop.f32.mrf.mxu0
        %v596 = vpop.f32.mrf.mxu0
        %v597 = vadd.f32 0.0, %v596
        %v598 = vpop.f32.mrf.mxu0
        %599 = vmatprep.mubr.bf16.mxu0 0
        %600 = vmatmul.mubr.bf16.gmra.mxu0 %v514
        %v601 = vpop.f32.mrf.mxu0
        %v602 = vadd.f32 0.0, %v601
        %v603 = vpop.f32.mrf.mxu0
        %v604 = vpop.f32.mrf.mxu0
        %v605 = vadd.f32 0.0, %v604
        %v606 = vpop.f32.mrf.mxu0
        %607 = vmatprep.mubr.bf16.mxu0 0
        %608 = vmatmul.mubr.bf16.gmra.mxu0 %v517
        %v609 = vpop.f32.mrf.mxu0
        %v610 = vadd.f32 0.0, %v609
        %v611 = vpop.f32.mrf.mxu0
        %v612 = vpop.f32.mrf.mxu0
        %v613 = vadd.f32 0.0, %v612
        %v614 = vpop.f32.mrf.mxu0
        %615 = vdwg.mxu0
        %v620 = vunpack.c.l.b16 %v368
        %v621 = vunpack.c.l.b16 %v369
        %v622 = vunpack.c.l.b16 %v370
        %v623 = vunpack.c.l.b16 %v371
        %v624 = vpack.c.b16 %v621, %v620
        %v625 = vpack.c.b16 %v623, %v622
        %v629 = vsel %vm494, %v360, 0
        %v632 = vsel %vm494, %v361, 0
        %v635 = vsel %vm494, %v362, 0
        %v638 = vsel %vm494, %v363, 0
        %v641 = vsel %vm494, %v364, 0
        %v644 = vsel %vm494, %v365, 0
        %v647 = vsel %vm494, %v366, 0
        %v650 = vsel %vm494, %v367, 0
        %652 = vmatprep.subr.bf16.mxu0 0
        %653 = vmatpush1.bf16.msra.mxu0 0
        %654 = vmatprep.subr.bf16.mxu0 0
        %655 = vmatpush1.bf16.msra.mxu0 0
        %656 = vmatprep.subr.bf16.mxu0 0
        %657 = vmatpush1.bf16.msra.mxu0 0
        %658 = vmatprep.subr.bf16.mxu0 0
        %659 = vmatpush1.bf16.msra.mxu0 0
        %660 = vmatprep.subr.bf16.mxu0 0
        %661 = vmatpush1.bf16.msra.mxu0 0
        %662 = vmatprep.subr.bf16.mxu0 0
        %663 = vmatpush1.bf16.msra.mxu0 0
        %664 = vmatprep.subr.bf16.mxu0 0
        %665 = vmatpush1.bf16.msra.mxu0 %v625
        %666 = vmatprep.subr.bf16.mxu0 0
        %667 = vmatpush1.bf16.msra.mxu0 %v624
        %668 = vmatprep.subr.bf16.mxu0 0
        %669 = vmatpush2.bf16.msra.mxu0 0
        %670 = vmatprep.subr.bf16.mxu0 0
        %671 = vmatpush2.bf16.msra.mxu0 0
        %672 = vmatprep.subr.bf16.mxu0 0
        %673 = vmatpush2.bf16.msra.mxu0 0
        %674 = vmatprep.subr.bf16.mxu0 0
        %675 = vmatpush2.bf16.msra.mxu0 0
        %676 = vmatprep.subr.bf16.mxu0 0
        %677 = vmatpush2.bf16.msra.mxu0 0
        %678 = vmatprep.subr.bf16.mxu0 0
        %679 = vmatpush2.bf16.msra.mxu0 0
        %680 = vmatprep.subr.bf16.mxu0 0
        %681 = vmatpush2.bf16.msra.mxu0 0
        %682 = vmatprep.subr.bf16.mxu0 0
        %683 = vmatpush2.bf16.msra.mxu0 0
        %684 = vmatprep.mubr.bf16.mxu0 0
        %685 = vmatmul.mubr.bf16.gmra.mxu0 %v629
        %v686 = vpop.f32.mrf.mxu0
        %v687 = vadd.f32 %v554, %v686
        %v688 = vpop.f32.mrf.mxu0
        %v689 = vpop.f32.mrf.mxu0
        %v690 = vadd.f32 %v557, %v689
        %v691 = vpop.f32.mrf.mxu0
        %692 = vmatprep.mubr.bf16.mxu0 0
        %693 = vmatmul.mubr.bf16.gmra.mxu0 %v632
        %v694 = vpop.f32.mrf.mxu0
        %v695 = vadd.f32 %v562, %v694
        %v696 = vpop.f32.mrf.mxu0
        %v697 = vpop.f32.mrf.mxu0
        %v698 = vadd.f32 %v565, %v697
        %v699 = vpop.f32.mrf.mxu0
        %700 = vmatprep.mubr.bf16.mxu0 0
        %701 = vmatmul.mubr.bf16.gmra.mxu0 %v635
        %v702 = vpop.f32.mrf.mxu0
        %v703 = vadd.f32 %v570, %v702
        %v704 = vpop.f32.mrf.mxu0
        %v705 = vpop.f32.mrf.mxu0
        %v706 = vadd.f32 %v573, %v705
        %v707 = vpop.f32.mrf.mxu0
        %708 = vmatprep.mubr.bf16.mxu0 0
        %709 = vmatmul.mubr.bf16.gmra.mxu0 %v638
        %v710 = vpop.f32.mrf.mxu0
        %v711 = vadd.f32 %v578, %v710
        %v712 = vpop.f32.mrf.mxu0
        %v713 = vpop.f32.mrf.mxu0
        %v714 = vadd.f32 %v581, %v713
        %v715 = vpop.f32.mrf.mxu0
        %716 = vmatprep.mubr.bf16.mxu0 0
        %717 = vmatmul.mubr.bf16.gmra.mxu0 %v641
        %v718 = vpop.f32.mrf.mxu0
        %v719 = vadd.f32 %v586, %v718
        %v720 = vpop.f32.mrf.mxu0
        %v721 = vpop.f32.mrf.mxu0
        %v722 = vadd.f32 %v589, %v721
        %v723 = vpop.f32.mrf.mxu0
        %724 = vmatprep.mubr.bf16.mxu0 0
        %725 = vmatmul.mubr.bf16.gmra.mxu0 %v644
        %v726 = vpop.f32.mrf.mxu0
        %v727 = vadd.f32 %v594, %v726
        %v728 = vpop.f32.mrf.mxu0
        %v729 = vpop.f32.mrf.mxu0
        %v730 = vadd.f32 %v597, %v729
        %v731 = vpop.f32.mrf.mxu0
        %732 = vmatprep.mubr.bf16.mxu0 0
        %733 = vmatmul.mubr.bf16.gmra.mxu0 %v647
        %v734 = vpop.f32.mrf.mxu0
        %v735 = vadd.f32 %v602, %v734
        %v736 = vpop.f32.mrf.mxu0
        %v737 = vpop.f32.mrf.mxu0
        %v738 = vadd.f32 %v605, %v737
        %v739 = vpop.f32.mrf.mxu0
        %740 = vmatprep.mubr.bf16.mxu0 0
        %741 = vmatmul.mubr.bf16.gmra.mxu0 %v650
        %v742 = vpop.f32.mrf.mxu0
        %v743 = vadd.f32 %v610, %v742
        %v744 = vpop.f32.mrf.mxu0
        %v745 = vpop.f32.mrf.mxu0
        %v746 = vadd.f32 %v613, %v745
        %v747 = vpop.f32.mrf.mxu0
        %748 = vdwg.mxu0
        %vm749 = vcmask 1045504
        %v750 = vrot.slane %v308, 2
        %v751 = vrot.slane %v309, 2
        %v752 = vsel %vm749, %v750, %v751
        %v753 = vrot.slane %v310, 2
        %v754 = vrot.slane %v311, 2
        %v755 = vsel %vm749, %v753, %v754
        %v756 = vrot.slane %v312, 2
        %v757 = vrot.slane %v313, 2
        %v758 = vsel %vm749, %v756, %v757
        %v759 = vrot.slane %v314, 2
        %v760 = vrot.slane %v315, 2
        %v761 = vsel %vm749, %v759, %v760
        %v762 = vrot.slane %v316, 2
        %v763 = vrot.slane %v317, 2
        %v764 = vsel %vm749, %v762, %v763
        %v765 = vrot.slane %v318, 2
        %v766 = vrot.slane %v319, 2
        %v767 = vsel %vm749, %v765, %v766
        %v768 = vrot.slane %v320, 2
        %v769 = vrot.slane %v321, 2
        %v770 = vsel %vm749, %v768, %v769
        %v771 = vrot.slane %v322, 2
        %v772 = vrot.slane %v323, 2
        %v773 = vsel %vm749, %v771, %v772
        %v774 = vrot.slane %v334, 2
        %v775 = vrot.slane %v335, 2
        %v776 = vsel %vm749, %v774, %v775
        %v777 = vrot.slane %v336, 2
        %v778 = vrot.slane %v337, 2
        %v779 = vsel %vm749, %v777, %v778
        %v780 = vrot.slane %v338, 2
        %v781 = vrot.slane %v339, 2
        %v782 = vsel %vm749, %v780, %v781
        %v783 = vrot.slane %v340, 2
        %v784 = vrot.slane %v341, 2
        %v785 = vsel %vm749, %v783, %v784
        %v786 = vrot.slane %v342, 2
        %v787 = vrot.slane %v343, 2
        %v788 = vsel %vm749, %v786, %v787
        %v789 = vrot.slane %v344, 2
        %v790 = vrot.slane %v345, 2
        %v791 = vsel %vm749, %v789, %v790
        %v792 = vrot.slane %v346, 2
        %v793 = vrot.slane %v347, 2
        %v794 = vsel %vm749, %v792, %v793
        %v795 = vrot.slane %v348, 2
        %v796 = vrot.slane %v349, 2
        %v797 = vsel %vm749, %v795, %v796
        %v814 = vpack.c.bf16 %v755, %v752
        %v815 = vpack.c.bf16 %v761, %v758
        %v816 = vpack.c.bf16 %v767, %v764
        %v817 = vpack.c.bf16 %v773, %v770
        %v818 = vpack.c.bf16 %v779, %v776
        %v819 = vpack.c.bf16 %v785, %v782
        %v820 = vpack.c.bf16 %v791, %v788
        %v821 = vpack.c.bf16 %v797, %v794
        %s822 = scalar_lea.vmem %s1, 32
        %v823 = vld [vmem:[%s822] sm:$0xf]
        %v824 = vld [vmem:[%s822 + $0x4] sm:$0xf]
        %v825 = vld [vmem:[%s822 + $0x8] sm:$0xf]
        %v826 = vld [vmem:[%s822 + $0xc] sm:$0xf]
        %v831 = vunpack.c.l.b16 %v823
        %v832 = vunpack.c.l.b16 %v824
        %v833 = vunpack.c.l.b16 %v825
        %v834 = vunpack.c.l.b16 %v826
        %v835 = vpack.c.b16 %v832, %v831
        %v836 = vpack.c.b16 %v834, %v833
        %v840 = vsel %vm494, %v814, 0
        %v843 = vsel %vm494, %v815, 0
        %v846 = vsel %vm494, %v816, 0
        %v849 = vsel %vm494, %v817, 0
        %v852 = vsel %vm494, %v818, 0
        %v855 = vsel %vm494, %v819, 0
        %v858 = vsel %vm494, %v820, 0
        %v861 = vsel %vm494, %v821, 0
        %863 = vmatprep.subr.bf16.mxu0 0
        %864 = vmatpush1.bf16.msra.mxu0 0
        %865 = vmatprep.subr.bf16.mxu0 0
        %866 = vmatpush1.bf16.msra.mxu0 0
        %867 = vmatprep.subr.bf16.mxu0 0
        %868 = vmatpush1.bf16.msra.mxu0 0
        %869 = vmatprep.subr.bf16.mxu0 0
        %870 = vmatpush1.bf16.msra.mxu0 0
        %871 = vmatprep.subr.bf16.mxu0 0
        %872 = vmatpush1.bf16.msra.mxu0 0
        %873 = vmatprep.subr.bf16.mxu0 0
        %874 = vmatpush1.bf16.msra.mxu0 0
        %875 = vmatprep.subr.bf16.mxu0 0
        %876 = vmatpush1.bf16.msra.mxu0 %v836
        %877 = vmatprep.subr.bf16.mxu0 0
        %878 = vmatpush1.bf16.msra.mxu0 %v835
        %879 = vmatprep.subr.bf16.mxu0 0
        %880 = vmatpush2.bf16.msra.mxu0 0
        %881 = vmatprep.subr.bf16.mxu0 0
        %882 = vmatpush2.bf16.msra.mxu0 0
        %883 = vmatprep.subr.bf16.mxu0 0
        %884 = vmatpush2.bf16.msra.mxu0 0
        %885 = vmatprep.subr.bf16.mxu0 0
        %886 = vmatpush2.bf16.msra.mxu0 0
        %887 = vmatprep.subr.bf16.mxu0 0
        %888 = vmatpush2.bf16.msra.mxu0 0
        %889 = vmatprep.subr.bf16.mxu0 0
        %890 = vmatpush2.bf16.msra.mxu0 0
        %891 = vmatprep.subr.bf16.mxu0 0
        %892 = vmatpush2.bf16.msra.mxu0 0
        %893 = vmatprep.subr.bf16.mxu0 0
        %894 = vmatpush2.bf16.msra.mxu0 0
        %895 = vmatprep.mubr.bf16.mxu0 0
        %896 = vmatmul.mubr.bf16.gmra.mxu0 %v840
        %v897 = vpop.f32.mrf.mxu0
        %v898 = vadd.f32 0.0, %v897
        %v899 = vpop.f32.mrf.mxu0
        %v900 = vpop.f32.mrf.mxu0
        %v901 = vadd.f32 0.0, %v900
        %v902 = vpop.f32.mrf.mxu0
        %903 = vmatprep.mubr.bf16.mxu0 0
        %904 = vmatmul.mubr.bf16.gmra.mxu0 %v843
        %v905 = vpop.f32.mrf.mxu0
        %v906 = vadd.f32 0.0, %v905
        %v907 = vpop.f32.mrf.mxu0
        %v908 = vpop.f32.mrf.mxu0
        %v909 = vadd.f32 0.0, %v908
        %v910 = vpop.f32.mrf.mxu0
        %911 = vmatprep.mubr.bf16.mxu0 0
        %912 = vmatmul.mubr.bf16.gmra.mxu0 %v846
        %v913 = vpop.f32.mrf.mxu0
        %v914 = vadd.f32 0.0, %v913
        %v915 = vpop.f32.mrf.mxu0
        %v916 = vpop.f32.mrf.mxu0
        %v917 = vadd.f32 0.0, %v916
        %v918 = vpop.f32.mrf.mxu0
        %919 = vmatprep.mubr.bf16.mxu0 0
        %920 = vmatmul.mubr.bf16.gmra.mxu0 %v849
        %v921 = vpop.f32.mrf.mxu0
        %v922 = vadd.f32 0.0, %v921
        %v923 = vpop.f32.mrf.mxu0
        %v924 = vpop.f32.mrf.mxu0
        %v925 = vadd.f32 0.0, %v924
        %v926 = vpop.f32.mrf.mxu0
        %927 = vmatprep.mubr.bf16.mxu0 0
        %928 = vmatmul.mubr.bf16.gmra.mxu0 %v852
        %v929 = vpop.f32.mrf.mxu0
        %v930 = vadd.f32 0.0, %v929
        %v931 = vpop.f32.mrf.mxu0
        %v932 = vpop.f32.mrf.mxu0
        %v933 = vadd.f32 0.0, %v932
        %v934 = vpop.f32.mrf.mxu0
        %935 = vmatprep.mubr.bf16.mxu0 0
        %936 = vmatmul.mubr.bf16.gmra.mxu0 %v855
        %v937 = vpop.f32.mrf.mxu0
        %v938 = vadd.f32 0.0, %v937
        %v939 = vpop.f32.mrf.mxu0
        %v940 = vpop.f32.mrf.mxu0
        %v941 = vadd.f32 0.0, %v940
        %v942 = vpop.f32.mrf.mxu0
        %943 = vmatprep.mubr.bf16.mxu0 0
        %944 = vmatmul.mubr.bf16.gmra.mxu0 %v858
        %v945 = vpop.f32.mrf.mxu0
        %v946 = vadd.f32 0.0, %v945
        %v947 = vpop.f32.mrf.mxu0
        %v948 = vpop.f32.mrf.mxu0
        %v949 = vadd.f32 0.0, %v948
        %v950 = vpop.f32.mrf.mxu0
        %951 = vmatprep.mubr.bf16.mxu0 0
        %952 = vmatmul.mubr.bf16.gmra.mxu0 %v861
        %v953 = vpop.f32.mrf.mxu0
        %v954 = vadd.f32 0.0, %v953
        %v955 = vpop.f32.mrf.mxu0
        %v956 = vpop.f32.mrf.mxu0
        %v957 = vadd.f32 0.0, %v956
        %v958 = vpop.f32.mrf.mxu0
        %959 = vdwg.mxu0
        %v960 = vadd.f32 %v687, %v898
        %v961 = vadd.f32 %v690, %v901
        %v962 = vadd.f32 %v695, %v906
        %v963 = vadd.f32 %v698, %v909
        %v964 = vadd.f32 %v703, %v914
        %v965 = vadd.f32 %v706, %v917
        %v966 = vadd.f32 %v711, %v922
        %v967 = vadd.f32 %v714, %v925
        %v968 = vadd.f32 %v719, %v930
        %v969 = vadd.f32 %v722, %v933
        %v970 = vadd.f32 %v727, %v938
        %v971 = vadd.f32 %v730, %v941
        %v972 = vadd.f32 %v735, %v946
        %v973 = vadd.f32 %v738, %v949
        %v974 = vadd.f32 %v743, %v954
        %v975 = vadd.f32 %v746, %v957
        %vm976 = vcmask 1044480
        %v977 = vrot.slane %v308, 3
        %v978 = vrot.slane %v309, 3
        %v979 = vsel %vm976, %v977, %v978
        %v980 = vrot.slane %v310, 3
        %v981 = vrot.slane %v311, 3
        %v982 = vsel %vm976, %v980, %v981
        %v983 = vrot.slane %v312, 3
        %v984 = vrot.slane %v313, 3
        %v985 = vsel %vm976, %v983, %v984
        %v986 = vrot.slane %v314, 3
        %v987 = vrot.slane %v315, 3
        %v988 = vsel %vm976, %v986, %v987
        %v989 = vrot.slane %v316, 3
        %v990 = vrot.slane %v317, 3
        %v991 = vsel %vm976, %v989, %v990
        %v992 = vrot.slane %v318, 3
        %v993 = vrot.slane %v319, 3
        %v994 = vsel %vm976, %v992, %v993
        %v995 = vrot.slane %v320, 3
        %v996 = vrot.slane %v321, 3
        %v997 = vsel %vm976, %v995, %v996
        %v998 = vrot.slane %v322, 3
        %v999 = vrot.slane %v323, 3
        %v1000 = vsel %vm976, %v998, %v999
        %v1001 = vrot.slane %v334, 3
        %v1002 = vrot.slane %v335, 3
        %v1003 = vsel %vm976, %v1001, %v1002
        %v1004 = vrot.slane %v336, 3
        %v1005 = vrot.slane %v337, 3
        %v1006 = vsel %vm976, %v1004, %v1005
        %v1007 = vrot.slane %v338, 3
        %v1008 = vrot.slane %v339, 3
        %v1009 = vsel %vm976, %v1007, %v1008
        %v1010 = vrot.slane %v340, 3
        %v1011 = vrot.slane %v341, 3
        %v1012 = vsel %vm976, %v1010, %v1011
        %v1013 = vrot.slane %v342, 3
        %v1014 = vrot.slane %v343, 3
        %v1015 = vsel %vm976, %v1013, %v1014
        %v1016 = vrot.slane %v344, 3
        %v1017 = vrot.slane %v345, 3
        %v1018 = vsel %vm976, %v1016, %v1017
        %v1019 = vrot.slane %v346, 3
        %v1020 = vrot.slane %v347, 3
        %v1021 = vsel %vm976, %v1019, %v1020
        %v1022 = vrot.slane %v348, 3
        %v1023 = vrot.slane %v349, 3
        %v1024 = vsel %vm976, %v1022, %v1023
        %v1041 = vpack.c.bf16 %v982, %v979
        %v1042 = vpack.c.bf16 %v988, %v985
        %v1043 = vpack.c.bf16 %v994, %v991
        %v1044 = vpack.c.bf16 %v1000, %v997
        %v1045 = vpack.c.bf16 %v1006, %v1003
        %v1046 = vpack.c.bf16 %v1012, %v1009
        %v1047 = vpack.c.bf16 %v1018, %v1015
        %v1048 = vpack.c.bf16 %v1024, %v1021
        %s1049 = scalar_lea.vmem %s1, 48
        %v1050 = vld [vmem:[%s1049] sm:$0xf]
        %v1051 = vld [vmem:[%s1049 + $0x4] sm:$0xf]
        %v1052 = vld [vmem:[%s1049 + $0x8] sm:$0xf]
        %v1053 = vld [vmem:[%s1049 + $0xc] sm:$0xf]
        %v1058 = vunpack.c.l.b16 %v1050
        %v1059 = vunpack.c.l.b16 %v1051
        %v1060 = vunpack.c.l.b16 %v1052
        %v1061 = vunpack.c.l.b16 %v1053
        %v1062 = vpack.c.b16 %v1059, %v1058
        %v1063 = vpack.c.b16 %v1061, %v1060
        %v1067 = vsel %vm494, %v1041, 0
        %v1070 = vsel %vm494, %v1042, 0
        %v1073 = vsel %vm494, %v1043, 0
        %v1076 = vsel %vm494, %v1044, 0
        %v1079 = vsel %vm494, %v1045, 0
        %v1082 = vsel %vm494, %v1046, 0
        %v1085 = vsel %vm494, %v1047, 0
        %v1088 = vsel %vm494, %v1048, 0
        %1090 = vmatprep.subr.bf16.mxu0 0
        %1091 = vmatpush1.bf16.msra.mxu0 0
        %1092 = vmatprep.subr.bf16.mxu0 0
        %1093 = vmatpush1.bf16.msra.mxu0 0
        %1094 = vmatprep.subr.bf16.mxu0 0
        %1095 = vmatpush1.bf16.msra.mxu0 0
        %1096 = vmatprep.subr.bf16.mxu0 0
        %1097 = vmatpush1.bf16.msra.mxu0 0
        %1098 = vmatprep.subr.bf16.mxu0 0
        %1099 = vmatpush1.bf16.msra.mxu0 0
        %1100 = vmatprep.subr.bf16.mxu0 0
        %1101 = vmatpush1.bf16.msra.mxu0 0
        %1102 = vmatprep.subr.bf16.mxu0 0
        %1103 = vmatpush1.bf16.msra.mxu0 %v1063
        %1104 = vmatprep.subr.bf16.mxu0 0
        %1105 = vmatpush1.bf16.msra.mxu0 %v1062
        %1106 = vmatprep.subr.bf16.mxu0 0
        %1107 = vmatpush2.bf16.msra.mxu0 0
        %1108 = vmatprep.subr.bf16.mxu0 0
        %1109 = vmatpush2.bf16.msra.mxu0 0
        %1110 = vmatprep.subr.bf16.mxu0 0
        %1111 = vmatpush2.bf16.msra.mxu0 0
        %1112 = vmatprep.subr.bf16.mxu0 0
        %1113 = vmatpush2.bf16.msra.mxu0 0
        %1114 = vmatprep.subr.bf16.mxu0 0
        %1115 = vmatpush2.bf16.msra.mxu0 0
        %1116 = vmatprep.subr.bf16.mxu0 0
        %1117 = vmatpush2.bf16.msra.mxu0 0
        %1118 = vmatprep.subr.bf16.mxu0 0
        %1119 = vmatpush2.bf16.msra.mxu0 0
        %1120 = vmatprep.subr.bf16.mxu0 0
        %1121 = vmatpush2.bf16.msra.mxu0 0
        %1122 = vmatprep.mubr.bf16.mxu0 0
        %1123 = vmatmul.mubr.bf16.gmra.mxu0 %v1067
        %v1124 = vpop.f32.mrf.mxu0
        %v1125 = vadd.f32 0.0, %v1124
        %v1126 = vpop.f32.mrf.mxu0
        %v1127 = vpop.f32.mrf.mxu0
        %v1128 = vadd.f32 0.0, %v1127
        %v1129 = vpop.f32.mrf.mxu0
        %1130 = vmatprep.mubr.bf16.mxu0 0
        %1131 = vmatmul.mubr.bf16.gmra.mxu0 %v1070
        %v1132 = vpop.f32.mrf.mxu0
        %v1133 = vadd.f32 0.0, %v1132
        %v1134 = vpop.f32.mrf.mxu0
        %v1135 = vpop.f32.mrf.mxu0
        %v1136 = vadd.f32 0.0, %v1135
        %v1137 = vpop.f32.mrf.mxu0
        %1138 = vmatprep.mubr.bf16.mxu0 0
        %1139 = vmatmul.mubr.bf16.gmra.mxu0 %v1073
        %v1140 = vpop.f32.mrf.mxu0
        %v1141 = vadd.f32 0.0, %v1140
        %v1142 = vpop.f32.mrf.mxu0
        %v1143 = vpop.f32.mrf.mxu0
        %v1144 = vadd.f32 0.0, %v1143
        %v1145 = vpop.f32.mrf.mxu0
        %1146 = vmatprep.mubr.bf16.mxu0 0
        %1147 = vmatmul.mubr.bf16.gmra.mxu0 %v1076
        %v1148 = vpop.f32.mrf.mxu0
        %v1149 = vadd.f32 0.0, %v1148
        %v1150 = vpop.f32.mrf.mxu0
        %v1151 = vpop.f32.mrf.mxu0
        %v1152 = vadd.f32 0.0, %v1151
        %v1153 = vpop.f32.mrf.mxu0
        %1154 = vmatprep.mubr.bf16.mxu0 0
        %1155 = vmatmul.mubr.bf16.gmra.mxu0 %v1079
        %v1156 = vpop.f32.mrf.mxu0
        %v1157 = vadd.f32 0.0, %v1156
        %v1158 = vpop.f32.mrf.mxu0
        %v1159 = vpop.f32.mrf.mxu0
        %v1160 = vadd.f32 0.0, %v1159
        %v1161 = vpop.f32.mrf.mxu0
        %1162 = vmatprep.mubr.bf16.mxu0 0
        %1163 = vmatmul.mubr.bf16.gmra.mxu0 %v1082
        %v1164 = vpop.f32.mrf.mxu0
        %v1165 = vadd.f32 0.0, %v1164
        %v1166 = vpop.f32.mrf.mxu0
        %v1167 = vpop.f32.mrf.mxu0
        %v1168 = vadd.f32 0.0, %v1167
        %v1169 = vpop.f32.mrf.mxu0
        %1170 = vmatprep.mubr.bf16.mxu0 0
        %1171 = vmatmul.mubr.bf16.gmra.mxu0 %v1085
        %v1172 = vpop.f32.mrf.mxu0
        %v1173 = vadd.f32 0.0, %v1172
        %v1174 = vpop.f32.mrf.mxu0
        %v1175 = vpop.f32.mrf.mxu0
        %v1176 = vadd.f32 0.0, %v1175
        %v1177 = vpop.f32.mrf.mxu0
        %1178 = vmatprep.mubr.bf16.mxu0 0
        %1179 = vmatmul.mubr.bf16.gmra.mxu0 %v1088
        %v1180 = vpop.f32.mrf.mxu0
        %v1181 = vadd.f32 0.0, %v1180
        %v1182 = vpop.f32.mrf.mxu0
        %v1183 = vpop.f32.mrf.mxu0
        %v1184 = vadd.f32 0.0, %v1183
        %v1185 = vpop.f32.mrf.mxu0
        %1186 = vdwg.mxu0
        %v1187 = vadd.f32 %v960, %v1125
        %v1188 = vadd.f32 %v961, %v1128
        %v1189 = vadd.f32 %v962, %v1133
        %v1190 = vadd.f32 %v963, %v1136
        %v1191 = vadd.f32 %v964, %v1141
        %v1192 = vadd.f32 %v965, %v1144
        %v1193 = vadd.f32 %v966, %v1149
        %v1194 = vadd.f32 %v967, %v1152
        %v1195 = vadd.f32 %v968, %v1157
        %v1196 = vadd.f32 %v969, %v1160
        %v1197 = vadd.f32 %v970, %v1165
        %v1198 = vadd.f32 %v971, %v1168
        %v1199 = vadd.f32 %v972, %v1173
        %v1200 = vadd.f32 %v973, %v1176
        %v1201 = vadd.f32 %v974, %v1181
        %v1202 = vadd.f32 %v975, %v1184
        %vm1203 = vcmask 1043456
        %v1204 = vrot.slane %v308, 4
        %v1205 = vrot.slane %v309, 4
        %v1206 = vsel %vm1203, %v1204, %v1205
        %v1207 = vrot.slane %v310, 4
        %v1208 = vrot.slane %v311, 4
        %v1209 = vsel %vm1203, %v1207, %v1208
        %v1210 = vrot.slane %v312, 4
        %v1211 = vrot.slane %v313, 4
        %v1212 = vsel %vm1203, %v1210, %v1211
        %v1213 = vrot.slane %v314, 4
        %v1214 = vrot.slane %v315, 4
        %v1215 = vsel %vm1203, %v1213, %v1214
        %v1216 = vrot.slane %v316, 4
        %v1217 = vrot.slane %v317, 4
        %v1218 = vsel %vm1203, %v1216, %v1217
        %v1219 = vrot.slane %v318, 4
        %v1220 = vrot.slane %v319, 4
        %v1221 = vsel %vm1203, %v1219, %v1220
        %v1222 = vrot.slane %v320, 4
        %v1223 = vrot.slane %v321, 4
        %v1224 = vsel %vm1203, %v1222, %v1223
        %v1225 = vrot.slane %v322, 4
        %v1226 = vrot.slane %v323, 4
        %v1227 = vsel %vm1203, %v1225, %v1226
        %v1228 = vrot.slane %v334, 4
        %v1229 = vrot.slane %v335, 4
        %v1230 = vsel %vm1203, %v1228, %v1229
        %v1231 = vrot.slane %v336, 4
        %v1232 = vrot.slane %v337, 4
        %v1233 = vsel %vm1203, %v1231, %v1232
        %v1234 = vrot.slane %v338, 4
        %v1235 = vrot.slane %v339, 4
        %v1236 = vsel %vm1203, %v1234, %v1235
        %v1237 = vrot.slane %v340, 4
        %v1238 = vrot.slane %v341, 4
        %v1239 = vsel %vm1203, %v1237, %v1238
        %v1240 = vrot.slane %v342, 4
        %v1241 = vrot.slane %v343, 4
        %v1242 = vsel %vm1203, %v1240, %v1241
        %v1243 = vrot.slane %v344, 4
        %v1244 = vrot.slane %v345, 4
        %v1245 = vsel %vm1203, %v1243, %v1244
        %v1246 = vrot.slane %v346, 4
        %v1247 = vrot.slane %v347, 4
        %v1248 = vsel %vm1203, %v1246, %v1247
        %v1249 = vrot.slane %v348, 4
        %v1250 = vrot.slane %v349, 4
        %v1251 = vsel %vm1203, %v1249, %v1250
        %v1268 = vpack.c.bf16 %v1209, %v1206
        %v1269 = vpack.c.bf16 %v1215, %v1212
        %v1270 = vpack.c.bf16 %v1221, %v1218
        %v1271 = vpack.c.bf16 %v1227, %v1224
        %v1272 = vpack.c.bf16 %v1233, %v1230
        %v1273 = vpack.c.bf16 %v1239, %v1236
        %v1274 = vpack.c.bf16 %v1245, %v1242
        %v1275 = vpack.c.bf16 %v1251, %v1248
        %s1276 = scalar_lea.vmem %s1, 64
        %v1277 = vld [vmem:[%s1276] sm:$0xf]
        %v1278 = vld [vmem:[%s1276 + $0x4] sm:$0xf]
        %v1279 = vld [vmem:[%s1276 + $0x8] sm:$0xf]
        %v1280 = vld [vmem:[%s1276 + $0xc] sm:$0xf]
        %v1285 = vunpack.c.l.b16 %v1277
        %v1286 = vunpack.c.l.b16 %v1278
        %v1287 = vunpack.c.l.b16 %v1279
        %v1288 = vunpack.c.l.b16 %v1280
        %v1289 = vpack.c.b16 %v1286, %v1285
        %v1290 = vpack.c.b16 %v1288, %v1287
        %v1294 = vsel %vm494, %v1268, 0
        %v1297 = vsel %vm494, %v1269, 0
        %v1300 = vsel %vm494, %v1270, 0
        %v1303 = vsel %vm494, %v1271, 0
        %v1306 = vsel %vm494, %v1272, 0
        %v1309 = vsel %vm494, %v1273, 0
        %v1312 = vsel %vm494, %v1274, 0
        %v1315 = vsel %vm494, %v1275, 0
        %1317 = vmatprep.subr.bf16.mxu0 0
        %1318 = vmatpush1.bf16.msra.mxu0 0
        %1319 = vmatprep.subr.bf16.mxu0 0
        %1320 = vmatpush1.bf16.msra.mxu0 0
        %1321 = vmatprep.subr.bf16.mxu0 0
        %1322 = vmatpush1.bf16.msra.mxu0 0
        %1323 = vmatprep.subr.bf16.mxu0 0
        %1324 = vmatpush1.bf16.msra.mxu0 0
        %1325 = vmatprep.subr.bf16.mxu0 0
        %1326 = vmatpush1.bf16.msra.mxu0 0
        %1327 = vmatprep.subr.bf16.mxu0 0
        %1328 = vmatpush1.bf16.msra.mxu0 0
        %1329 = vmatprep.subr.bf16.mxu0 0
        %1330 = vmatpush1.bf16.msra.mxu0 %v1290
        %1331 = vmatprep.subr.bf16.mxu0 0
        %1332 = vmatpush1.bf16.msra.mxu0 %v1289
        %1333 = vmatprep.subr.bf16.mxu0 0
        %1334 = vmatpush2.bf16.msra.mxu0 0
        %1335 = vmatprep.subr.bf16.mxu0 0
        %1336 = vmatpush2.bf16.msra.mxu0 0
        %1337 = vmatprep.subr.bf16.mxu0 0
        %1338 = vmatpush2.bf16.msra.mxu0 0
        %1339 = vmatprep.subr.bf16.mxu0 0
        %1340 = vmatpush2.bf16.msra.mxu0 0
        %1341 = vmatprep.subr.bf16.mxu0 0
        %1342 = vmatpush2.bf16.msra.mxu0 0
        %1343 = vmatprep.subr.bf16.mxu0 0
        %1344 = vmatpush2.bf16.msra.mxu0 0
        %1345 = vmatprep.subr.bf16.mxu0 0
        %1346 = vmatpush2.bf16.msra.mxu0 0
        %1347 = vmatprep.subr.bf16.mxu0 0
        %1348 = vmatpush2.bf16.msra.mxu0 0
        %1349 = vmatprep.mubr.bf16.mxu0 0
        %1350 = vmatmul.mubr.bf16.gmra.mxu0 %v1294
        %v1351 = vpop.f32.mrf.mxu0
        %v1352 = vadd.f32 0.0, %v1351
        %v1353 = vpop.f32.mrf.mxu0
        %v1354 = vpop.f32.mrf.mxu0
        %v1355 = vadd.f32 0.0, %v1354
        %v1356 = vpop.f32.mrf.mxu0
        %1357 = vmatprep.mubr.bf16.mxu0 0
        %1358 = vmatmul.mubr.bf16.gmra.mxu0 %v1297
        %v1359 = vpop.f32.mrf.mxu0
        %v1360 = vadd.f32 0.0, %v1359
        %v1361 = vpop.f32.mrf.mxu0
        %v1362 = vpop.f32.mrf.mxu0
        %v1363 = vadd.f32 0.0, %v1362
        %v1364 = vpop.f32.mrf.mxu0
        %1365 = vmatprep.mubr.bf16.mxu0 0
        %1366 = vmatmul.mubr.bf16.gmra.mxu0 %v1300
        %v1367 = vpop.f32.mrf.mxu0
        %v1368 = vadd.f32 0.0, %v1367
        %v1369 = vpop.f32.mrf.mxu0
        %v1370 = vpop.f32.mrf.mxu0
        %v1371 = vadd.f32 0.0, %v1370
        %v1372 = vpop.f32.mrf.mxu0
        %1373 = vmatprep.mubr.bf16.mxu0 0
        %1374 = vmatmul.mubr.bf16.gmra.mxu0 %v1303
        %v1375 = vpop.f32.mrf.mxu0
        %v1376 = vadd.f32 0.0, %v1375
        %v1377 = vpop.f32.mrf.mxu0
        %v1378 = vpop.f32.mrf.mxu0
        %v1379 = vadd.f32 0.0, %v1378
        %v1380 = vpop.f32.mrf.mxu0
        %1381 = vmatprep.mubr.bf16.mxu0 0
        %1382 = vmatmul.mubr.bf16.gmra.mxu0 %v1306
        %v1383 = vpop.f32.mrf.mxu0
        %v1384 = vadd.f32 0.0, %v1383
        %v1385 = vpop.f32.mrf.mxu0
        %v1386 = vpop.f32.mrf.mxu0
        %v1387 = vadd.f32 0.0, %v1386
        %v1388 = vpop.f32.mrf.mxu0
        %1389 = vmatprep.mubr.bf16.mxu0 0
        %1390 = vmatmul.mubr.bf16.gmra.mxu0 %v1309
        %v1391 = vpop.f32.mrf.mxu0
        %v1392 = vadd.f32 0.0, %v1391
        %v1393 = vpop.f32.mrf.mxu0
        %v1394 = vpop.f32.mrf.mxu0
        %v1395 = vadd.f32 0.0, %v1394
        %v1396 = vpop.f32.mrf.mxu0
        %1397 = vmatprep.mubr.bf16.mxu0 0
        %1398 = vmatmul.mubr.bf16.gmra.mxu0 %v1312
        %v1399 = vpop.f32.mrf.mxu0
        %v1400 = vadd.f32 0.0, %v1399
        %v1401 = vpop.f32.mrf.mxu0
        %v1402 = vpop.f32.mrf.mxu0
        %v1403 = vadd.f32 0.0, %v1402
        %v1404 = vpop.f32.mrf.mxu0
        %1405 = vmatprep.mubr.bf16.mxu0 0
        %1406 = vmatmul.mubr.bf16.gmra.mxu0 %v1315
        %v1407 = vpop.f32.mrf.mxu0
        %v1408 = vadd.f32 0.0, %v1407
        %v1409 = vpop.f32.mrf.mxu0
        %v1410 = vpop.f32.mrf.mxu0
        %v1411 = vadd.f32 0.0, %v1410
        %v1412 = vpop.f32.mrf.mxu0
        %1413 = vdwg.mxu0
        %v1414 = vadd.f32 %v1187, %v1352
        %v1415 = vadd.f32 %v1188, %v1355
        %v1416 = vadd.f32 %v1189, %v1360
        %v1417 = vadd.f32 %v1190, %v1363
        %v1418 = vadd.f32 %v1191, %v1368
        %v1419 = vadd.f32 %v1192, %v1371
        %v1420 = vadd.f32 %v1193, %v1376
        %v1421 = vadd.f32 %v1194, %v1379
        %v1422 = vadd.f32 %v1195, %v1384
        %v1423 = vadd.f32 %v1196, %v1387
        %v1424 = vadd.f32 %v1197, %v1392
        %v1425 = vadd.f32 %v1198, %v1395
        %v1426 = vadd.f32 %v1199, %v1400
        %v1427 = vadd.f32 %v1200, %v1403
        %v1428 = vadd.f32 %v1201, %v1408
        %v1429 = vadd.f32 %v1202, %v1411
        %vm1430 = vcmask 1042432
        %v1431 = vrot.slane %v308, 5
        %v1432 = vrot.slane %v309, 5
        %v1433 = vsel %vm1430, %v1431, %v1432
        %v1434 = vrot.slane %v310, 5
        %v1435 = vrot.slane %v311, 5
        %v1436 = vsel %vm1430, %v1434, %v1435
        %v1437 = vrot.slane %v312, 5
        %v1438 = vrot.slane %v313, 5
        %v1439 = vsel %vm1430, %v1437, %v1438
        %v1440 = vrot.slane %v314, 5
        %v1441 = vrot.slane %v315, 5
        %v1442 = vsel %vm1430, %v1440, %v1441
        %v1443 = vrot.slane %v316, 5
        %v1444 = vrot.slane %v317, 5
        %v1445 = vsel %vm1430, %v1443, %v1444
        %v1446 = vrot.slane %v318, 5
        %v1447 = vrot.slane %v319, 5
        %v1448 = vsel %vm1430, %v1446, %v1447
        %v1449 = vrot.slane %v320, 5
        %v1450 = vrot.slane %v321, 5
        %v1451 = vsel %vm1430, %v1449, %v1450
        %v1452 = vrot.slane %v322, 5
        %v1453 = vrot.slane %v323, 5
        %v1454 = vsel %vm1430, %v1452, %v1453
        %v1455 = vrot.slane %v334, 5
        %v1456 = vrot.slane %v335, 5
        %v1457 = vsel %vm1430, %v1455, %v1456
        %v1458 = vrot.slane %v336, 5
        %v1459 = vrot.slane %v337, 5
        %v1460 = vsel %vm1430, %v1458, %v1459
        %v1461 = vrot.slane %v338, 5
        %v1462 = vrot.slane %v339, 5
        %v1463 = vsel %vm1430, %v1461, %v1462
        %v1464 = vrot.slane %v340, 5
        %v1465 = vrot.slane %v341, 5
        %v1466 = vsel %vm1430, %v1464, %v1465
        %v1467 = vrot.slane %v342, 5
        %v1468 = vrot.slane %v343, 5
        %v1469 = vsel %vm1430, %v1467, %v1468
        %v1470 = vrot.slane %v344, 5
        %v1471 = vrot.slane %v345, 5
        %v1472 = vsel %vm1430, %v1470, %v1471
        %v1473 = vrot.slane %v346, 5
        %v1474 = vrot.slane %v347, 5
        %v1475 = vsel %vm1430, %v1473, %v1474
        %v1476 = vrot.slane %v348, 5
        %v1477 = vrot.slane %v349, 5
        %v1478 = vsel %vm1430, %v1476, %v1477
        %v1495 = vpack.c.bf16 %v1436, %v1433
        %v1496 = vpack.c.bf16 %v1442, %v1439
        %v1497 = vpack.c.bf16 %v1448, %v1445
        %v1498 = vpack.c.bf16 %v1454, %v1451
        %v1499 = vpack.c.bf16 %v1460, %v1457
        %v1500 = vpack.c.bf16 %v1466, %v1463
        %v1501 = vpack.c.bf16 %v1472, %v1469
        %v1502 = vpack.c.bf16 %v1478, %v1475
        %s1503 = scalar_lea.vmem %s1, 80
        %v1504 = vld [vmem:[%s1503] sm:$0xf]
        %v1505 = vld [vmem:[%s1503 + $0x4] sm:$0xf]
        %v1506 = vld [vmem:[%s1503 + $0x8] sm:$0xf]
        %v1507 = vld [vmem:[%s1503 + $0xc] sm:$0xf]
        %v1512 = vunpack.c.l.b16 %v1504
        %v1513 = vunpack.c.l.b16 %v1505
        %v1514 = vunpack.c.l.b16 %v1506
        %v1515 = vunpack.c.l.b16 %v1507
        %v1516 = vpack.c.b16 %v1513, %v1512
        %v1517 = vpack.c.b16 %v1515, %v1514
        %v1521 = vsel %vm494, %v1495, 0
        %v1524 = vsel %vm494, %v1496, 0
        %v1527 = vsel %vm494, %v1497, 0
        %v1530 = vsel %vm494, %v1498, 0
        %v1533 = vsel %vm494, %v1499, 0
        %v1536 = vsel %vm494, %v1500, 0
        %v1539 = vsel %vm494, %v1501, 0
        %v1542 = vsel %vm494, %v1502, 0
        %1544 = vmatprep.subr.bf16.mxu0 0
        %1545 = vmatpush1.bf16.msra.mxu0 0
        %1546 = vmatprep.subr.bf16.mxu0 0
        %1547 = vmatpush1.bf16.msra.mxu0 0
        %1548 = vmatprep.subr.bf16.mxu0 0
        %1549 = vmatpush1.bf16.msra.mxu0 0
        %1550 = vmatprep.subr.bf16.mxu0 0
        %1551 = vmatpush1.bf16.msra.mxu0 0
        %1552 = vmatprep.subr.bf16.mxu0 0
        %1553 = vmatpush1.bf16.msra.mxu0 0
        %1554 = vmatprep.subr.bf16.mxu0 0
        %1555 = vmatpush1.bf16.msra.mxu0 0
        %1556 = vmatprep.subr.bf16.mxu0 0
        %1557 = vmatpush1.bf16.msra.mxu0 %v1517
        %1558 = vmatprep.subr.bf16.mxu0 0
        %1559 = vmatpush1.bf16.msra.mxu0 %v1516
        %1560 = vmatprep.subr.bf16.mxu0 0
        %1561 = vmatpush2.bf16.msra.mxu0 0
        %1562 = vmatprep.subr.bf16.mxu0 0
        %1563 = vmatpush2.bf16.msra.mxu0 0
        %1564 = vmatprep.subr.bf16.mxu0 0
        %1565 = vmatpush2.bf16.msra.mxu0 0
        %1566 = vmatprep.subr.bf16.mxu0 0
        %1567 = vmatpush2.bf16.msra.mxu0 0
        %1568 = vmatprep.subr.bf16.mxu0 0
        %1569 = vmatpush2.bf16.msra.mxu0 0
        %1570 = vmatprep.subr.bf16.mxu0 0
        %1571 = vmatpush2.bf16.msra.mxu0 0
        %1572 = vmatprep.subr.bf16.mxu0 0
        %1573 = vmatpush2.bf16.msra.mxu0 0
        %1574 = vmatprep.subr.bf16.mxu0 0
        %1575 = vmatpush2.bf16.msra.mxu0 0
        %1576 = vmatprep.mubr.bf16.mxu0 0
        %1577 = vmatmul.mubr.bf16.gmra.mxu0 %v1521
        %v1578 = vpop.f32.mrf.mxu0
        %v1579 = vadd.f32 0.0, %v1578
        %v1580 = vpop.f32.mrf.mxu0
        %v1581 = vpop.f32.mrf.mxu0
        %v1582 = vadd.f32 0.0, %v1581
        %v1583 = vpop.f32.mrf.mxu0
        %1584 = vmatprep.mubr.bf16.mxu0 0
        %1585 = vmatmul.mubr.bf16.gmra.mxu0 %v1524
        %v1586 = vpop.f32.mrf.mxu0
        %v1587 = vadd.f32 0.0, %v1586
        %v1588 = vpop.f32.mrf.mxu0
        %v1589 = vpop.f32.mrf.mxu0
        %v1590 = vadd.f32 0.0, %v1589
        %v1591 = vpop.f32.mrf.mxu0
        %1592 = vmatprep.mubr.bf16.mxu0 0
        %1593 = vmatmul.mubr.bf16.gmra.mxu0 %v1527
        %v1594 = vpop.f32.mrf.mxu0
        %v1595 = vadd.f32 0.0, %v1594
        %v1596 = vpop.f32.mrf.mxu0
        %v1597 = vpop.f32.mrf.mxu0
        %v1598 = vadd.f32 0.0, %v1597
        %v1599 = vpop.f32.mrf.mxu0
        %1600 = vmatprep.mubr.bf16.mxu0 0
        %1601 = vmatmul.mubr.bf16.gmra.mxu0 %v1530
        %v1602 = vpop.f32.mrf.mxu0
        %v1603 = vadd.f32 0.0, %v1602
        %v1604 = vpop.f32.mrf.mxu0
        %v1605 = vpop.f32.mrf.mxu0
        %v1606 = vadd.f32 0.0, %v1605
        %v1607 = vpop.f32.mrf.mxu0
        %1608 = vmatprep.mubr.bf16.mxu0 0
        %1609 = vmatmul.mubr.bf16.gmra.mxu0 %v1533
        %v1610 = vpop.f32.mrf.mxu0
        %v1611 = vadd.f32 0.0, %v1610
        %v1612 = vpop.f32.mrf.mxu0
        %v1613 = vpop.f32.mrf.mxu0
        %v1614 = vadd.f32 0.0, %v1613
        %v1615 = vpop.f32.mrf.mxu0
        %1616 = vmatprep.mubr.bf16.mxu0 0
        %1617 = vmatmul.mubr.bf16.gmra.mxu0 %v1536
        %v1618 = vpop.f32.mrf.mxu0
        %v1619 = vadd.f32 0.0, %v1618
        %v1620 = vpop.f32.mrf.mxu0
        %v1621 = vpop.f32.mrf.mxu0
        %v1622 = vadd.f32 0.0, %v1621
        %v1623 = vpop.f32.mrf.mxu0
        %1624 = vmatprep.mubr.bf16.mxu0 0
        %1625 = vmatmul.mubr.bf16.gmra.mxu0 %v1539
        %v1626 = vpop.f32.mrf.mxu0
        %v1627 = vadd.f32 0.0, %v1626
        %v1628 = vpop.f32.mrf.mxu0
        %v1629 = vpop.f32.mrf.mxu0
        %v1630 = vadd.f32 0.0, %v1629
        %v1631 = vpop.f32.mrf.mxu0
        %1632 = vmatprep.mubr.bf16.mxu0 0
        %1633 = vmatmul.mubr.bf16.gmra.mxu0 %v1542
        %v1634 = vpop.f32.mrf.mxu0
        %v1635 = vadd.f32 0.0, %v1634
        %v1636 = vpop.f32.mrf.mxu0
        %v1637 = vpop.f32.mrf.mxu0
        %v1638 = vadd.f32 0.0, %v1637
        %v1639 = vpop.f32.mrf.mxu0
        %1640 = vdwg.mxu0
        %v1641 = vadd.f32 %v1414, %v1579
        %v1642 = vadd.f32 %v1415, %v1582
        %v1643 = vadd.f32 %v1416, %v1587
        %v1644 = vadd.f32 %v1417, %v1590
        %v1645 = vadd.f32 %v1418, %v1595
        %v1646 = vadd.f32 %v1419, %v1598
        %v1647 = vadd.f32 %v1420, %v1603
        %v1648 = vadd.f32 %v1421, %v1606
        %v1649 = vadd.f32 %v1422, %v1611
        %v1650 = vadd.f32 %v1423, %v1614
        %v1651 = vadd.f32 %v1424, %v1619
        %v1652 = vadd.f32 %v1425, %v1622
        %v1653 = vadd.f32 %v1426, %v1627
        %v1654 = vadd.f32 %v1427, %v1630
        %v1655 = vadd.f32 %v1428, %v1635
        %v1656 = vadd.f32 %v1429, %v1638
        %v1657 = vpack.c.bf16 %v312, %v310
        %v1658 = vpack.c.bf16 %v316, %v314
        %v1659 = vpack.c.bf16 %v320, %v318
        %v1660 = vpack.c.bf16 %v324, %v322
        %v1661 = vpack.c.bf16 %v338, %v336
        %v1662 = vpack.c.bf16 %v342, %v340
        %v1663 = vpack.c.bf16 %v346, %v344
        %v1664 = vpack.c.bf16 %v350, %v348
        %s1665 = scalar_lea.vmem %s1, 96
        %v1666 = vld [vmem:[%s1665] sm:$0xf]
        %v1667 = vld [vmem:[%s1665 + $0x4] sm:$0xf]
        %v1668 = vld [vmem:[%s1665 + $0x8] sm:$0xf]
        %v1669 = vld [vmem:[%s1665 + $0xc] sm:$0xf]
        %v1674 = vunpack.c.l.b16 %v1666
        %v1675 = vunpack.c.l.b16 %v1667
        %v1676 = vunpack.c.l.b16 %v1668
        %v1677 = vunpack.c.l.b16 %v1669
        %v1678 = vpack.c.b16 %v1675, %v1674
        %v1679 = vpack.c.b16 %v1677, %v1676
        %v1683 = vsel %vm494, %v1657, 0
        %v1686 = vsel %vm494, %v1658, 0
        %v1689 = vsel %vm494, %v1659, 0
        %v1692 = vsel %vm494, %v1660, 0
        %v1695 = vsel %vm494, %v1661, 0
        %v1698 = vsel %vm494, %v1662, 0
        %v1701 = vsel %vm494, %v1663, 0
        %v1704 = vsel %vm494, %v1664, 0
        %1706 = vmatprep.subr.bf16.mxu0 0
        %1707 = vmatpush1.bf16.msra.mxu0 0
        %1708 = vmatprep.subr.bf16.mxu0 0
        %1709 = vmatpush1.bf16.msra.mxu0 0
        %1710 = vmatprep.subr.bf16.mxu0 0
        %1711 = vmatpush1.bf16.msra.mxu0 0
        %1712 = vmatprep.subr.bf16.mxu0 0
        %1713 = vmatpush1.bf16.msra.mxu0 0
        %1714 = vmatprep.subr.bf16.mxu0 0
        %1715 = vmatpush1.bf16.msra.mxu0 0
        %1716 = vmatprep.subr.bf16.mxu0 0
        %1717 = vmatpush1.bf16.msra.mxu0 0
        %1718 = vmatprep.subr.bf16.mxu0 0
        %1719 = vmatpush1.bf16.msra.mxu0 %v1679
        %1720 = vmatprep.subr.bf16.mxu0 0
        %1721 = vmatpush1.bf16.msra.mxu0 %v1678
        %1722 = vmatprep.subr.bf16.mxu0 0
        %1723 = vmatpush2.bf16.msra.mxu0 0
        %1724 = vmatprep.subr.bf16.mxu0 0
        %1725 = vmatpush2.bf16.msra.mxu0 0
        %1726 = vmatprep.subr.bf16.mxu0 0
        %1727 = vmatpush2.bf16.msra.mxu0 0
        %1728 = vmatprep.subr.bf16.mxu0 0
        %1729 = vmatpush2.bf16.msra.mxu0 0
        %1730 = vmatprep.subr.bf16.mxu0 0
        %1731 = vmatpush2.bf16.msra.mxu0 0
        %1732 = vmatprep.subr.bf16.mxu0 0
        %1733 = vmatpush2.bf16.msra.mxu0 0
        %1734 = vmatprep.subr.bf16.mxu0 0
        %1735 = vmatpush2.bf16.msra.mxu0 0
        %1736 = vmatprep.subr.bf16.mxu0 0
        %1737 = vmatpush2.bf16.msra.mxu0 0
        %1738 = vmatprep.mubr.bf16.mxu0 0
        %1739 = vmatmul.mubr.bf16.gmra.mxu0 %v1683
        %v1740 = vpop.f32.mrf.mxu0
        %v1741 = vadd.f32 0.0, %v1740
        %v1742 = vpop.f32.mrf.mxu0
        %v1743 = vpop.f32.mrf.mxu0
        %v1744 = vadd.f32 0.0, %v1743
        %v1745 = vpop.f32.mrf.mxu0
        %1746 = vmatprep.mubr.bf16.mxu0 0
        %1747 = vmatmul.mubr.bf16.gmra.mxu0 %v1686
        %v1748 = vpop.f32.mrf.mxu0
        %v1749 = vadd.f32 0.0, %v1748
        %v1750 = vpop.f32.mrf.mxu0
        %v1751 = vpop.f32.mrf.mxu0
        %v1752 = vadd.f32 0.0, %v1751
        %v1753 = vpop.f32.mrf.mxu0
        %1754 = vmatprep.mubr.bf16.mxu0 0
        %1755 = vmatmul.mubr.bf16.gmra.mxu0 %v1689
        %v1756 = vpop.f32.mrf.mxu0
        %v1757 = vadd.f32 0.0, %v1756
        %v1758 = vpop.f32.mrf.mxu0
        %v1759 = vpop.f32.mrf.mxu0
        %v1760 = vadd.f32 0.0, %v1759
        %v1761 = vpop.f32.mrf.mxu0
        %1762 = vmatprep.mubr.bf16.mxu0 0
        %1763 = vmatmul.mubr.bf16.gmra.mxu0 %v1692
        %v1764 = vpop.f32.mrf.mxu0
        %v1765 = vadd.f32 0.0, %v1764
        %v1766 = vpop.f32.mrf.mxu0
        %v1767 = vpop.f32.mrf.mxu0
        %v1768 = vadd.f32 0.0, %v1767
        %v1769 = vpop.f32.mrf.mxu0
        %1770 = vmatprep.mubr.bf16.mxu0 0
        %1771 = vmatmul.mubr.bf16.gmra.mxu0 %v1695
        %v1772 = vpop.f32.mrf.mxu0
        %v1773 = vadd.f32 0.0, %v1772
        %v1774 = vpop.f32.mrf.mxu0
        %v1775 = vpop.f32.mrf.mxu0
        %v1776 = vadd.f32 0.0, %v1775
        %v1777 = vpop.f32.mrf.mxu0
        %1778 = vmatprep.mubr.bf16.mxu0 0
        %1779 = vmatmul.mubr.bf16.gmra.mxu0 %v1698
        %v1780 = vpop.f32.mrf.mxu0
        %v1781 = vadd.f32 0.0, %v1780
        %v1782 = vpop.f32.mrf.mxu0
        %v1783 = vpop.f32.mrf.mxu0
        %v1784 = vadd.f32 0.0, %v1783
        %v1785 = vpop.f32.mrf.mxu0
        %1786 = vmatprep.mubr.bf16.mxu0 0
        %1787 = vmatmul.mubr.bf16.gmra.mxu0 %v1701
        %v1788 = vpop.f32.mrf.mxu0
        %v1789 = vadd.f32 0.0, %v1788
        %v1790 = vpop.f32.mrf.mxu0
        %v1791 = vpop.f32.mrf.mxu0
        %v1792 = vadd.f32 0.0, %v1791
        %v1793 = vpop.f32.mrf.mxu0
        %1794 = vmatprep.mubr.bf16.mxu0 0
        %1795 = vmatmul.mubr.bf16.gmra.mxu0 %v1704
        %v1796 = vpop.f32.mrf.mxu0
        %v1797 = vadd.f32 0.0, %v1796
        %v1798 = vpop.f32.mrf.mxu0
        %v1799 = vpop.f32.mrf.mxu0
        %v1800 = vadd.f32 0.0, %v1799
        %v1801 = vpop.f32.mrf.mxu0
        %1802 = vdwg.mxu0
        %v1803 = vadd.f32 %v1641, %v1741
        %v1804 = vadd.f32 %v1642, %v1744
        %v1805 = vadd.f32 %v1643, %v1749
        %v1806 = vadd.f32 %v1644, %v1752
        %v1807 = vadd.f32 %v1645, %v1757
        %v1808 = vadd.f32 %v1646, %v1760
        %v1809 = vadd.f32 %v1647, %v1765
        %v1810 = vadd.f32 %v1648, %v1768
        %v1811 = vadd.f32 %v1649, %v1773
        %v1812 = vadd.f32 %v1650, %v1776
        %v1813 = vadd.f32 %v1651, %v1781
        %v1814 = vadd.f32 %v1652, %v1784
        %v1815 = vadd.f32 %v1653, %v1789
        %v1816 = vadd.f32 %v1654, %v1792
        %v1817 = vadd.f32 %v1655, %v1797
        %v1818 = vadd.f32 %v1656, %v1800
        %v1823 = vrot.slane %v324, 1
        %v1824 = vrot.slane %v325, 1
        %v1825 = vsel %vm404, %v1823, %v1824
        %v1826 = vrot.slane %v350, 1
        %v1827 = vrot.slane %v351, 1
        %v1828 = vsel %vm404, %v1826, %v1827
        %v1831 = vpack.c.bf16 %v413, %v410
        %v1832 = vpack.c.bf16 %v419, %v416
        %v1833 = vpack.c.bf16 %v425, %v422
        %v1834 = vpack.c.bf16 %v1825, %v428
        %v1835 = vpack.c.bf16 %v437, %v434
        %v1836 = vpack.c.bf16 %v443, %v440
        %v1837 = vpack.c.bf16 %v449, %v446
        %v1838 = vpack.c.bf16 %v1828, %v452
        %s1839 = scalar_lea.vmem %s1, 112
        %v1840 = vld [vmem:[%s1839] sm:$0xf]
        %v1841 = vld [vmem:[%s1839 + $0x4] sm:$0xf]
        %v1842 = vld [vmem:[%s1839 + $0x8] sm:$0xf]
        %v1843 = vld [vmem:[%s1839 + $0xc] sm:$0xf]
        %v1848 = vunpack.c.l.b16 %v1840
        %v1849 = vunpack.c.l.b16 %v1841
        %v1850 = vunpack.c.l.b16 %v1842
        %v1851 = vunpack.c.l.b16 %v1843
        %v1852 = vpack.c.b16 %v1849, %v1848
        %v1853 = vpack.c.b16 %v1851, %v1850
        %v1857 = vsel %vm494, %v1831, 0
        %v1860 = vsel %vm494, %v1832, 0
        %v1863 = vsel %vm494, %v1833, 0
        %v1866 = vsel %vm494, %v1834, 0
        %v1869 = vsel %vm494, %v1835, 0
        %v1872 = vsel %vm494, %v1836, 0
        %v1875 = vsel %vm494, %v1837, 0
        %v1878 = vsel %vm494, %v1838, 0
        %1880 = vmatprep.subr.bf16.mxu0 0
        %1881 = vmatpush1.bf16.msra.mxu0 0
        %1882 = vmatprep.subr.bf16.mxu0 0
        %1883 = vmatpush1.bf16.msra.mxu0 0
        %1884 = vmatprep.subr.bf16.mxu0 0
        %1885 = vmatpush1.bf16.msra.mxu0 0
        %1886 = vmatprep.subr.bf16.mxu0 0
        %1887 = vmatpush1.bf16.msra.mxu0 0
        %1888 = vmatprep.subr.bf16.mxu0 0
        %1889 = vmatpush1.bf16.msra.mxu0 0
        %1890 = vmatprep.subr.bf16.mxu0 0
        %1891 = vmatpush1.bf16.msra.mxu0 0
        %1892 = vmatprep.subr.bf16.mxu0 0
        %1893 = vmatpush1.bf16.msra.mxu0 %v1853
        %1894 = vmatprep.subr.bf16.mxu0 0
        %1895 = vmatpush1.bf16.msra.mxu0 %v1852
        %1896 = vmatprep.subr.bf16.mxu0 0
        %1897 = vmatpush2.bf16.msra.mxu0 0
        %1898 = vmatprep.subr.bf16.mxu0 0
        %1899 = vmatpush2.bf16.msra.mxu0 0
        %1900 = vmatprep.subr.bf16.mxu0 0
        %1901 = vmatpush2.bf16.msra.mxu0 0
        %1902 = vmatprep.subr.bf16.mxu0 0
        %1903 = vmatpush2.bf16.msra.mxu0 0
        %1904 = vmatprep.subr.bf16.mxu0 0
        %1905 = vmatpush2.bf16.msra.mxu0 0
        %1906 = vmatprep.subr.bf16.mxu0 0
        %1907 = vmatpush2.bf16.msra.mxu0 0
        %1908 = vmatprep.subr.bf16.mxu0 0
        %1909 = vmatpush2.bf16.msra.mxu0 0
        %1910 = vmatprep.subr.bf16.mxu0 0
        %1911 = vmatpush2.bf16.msra.mxu0 0
        %1912 = vmatprep.mubr.bf16.mxu0 0
        %1913 = vmatmul.mubr.bf16.gmra.mxu0 %v1857
        %v1914 = vpop.f32.mrf.mxu0
        %v1915 = vadd.f32 0.0, %v1914
        %v1916 = vpop.f32.mrf.mxu0
        %v1917 = vpop.f32.mrf.mxu0
        %v1918 = vadd.f32 0.0, %v1917
        %v1919 = vpop.f32.mrf.mxu0
        %1920 = vmatprep.mubr.bf16.mxu0 0
        %1921 = vmatmul.mubr.bf16.gmra.mxu0 %v1860
        %v1922 = vpop.f32.mrf.mxu0
        %v1923 = vadd.f32 0.0, %v1922
        %v1924 = vpop.f32.mrf.mxu0
        %v1925 = vpop.f32.mrf.mxu0
        %v1926 = vadd.f32 0.0, %v1925
        %v1927 = vpop.f32.mrf.mxu0
        %1928 = vmatprep.mubr.bf16.mxu0 0
        %1929 = vmatmul.mubr.bf16.gmra.mxu0 %v1863
        %v1930 = vpop.f32.mrf.mxu0
        %v1931 = vadd.f32 0.0, %v1930
        %v1932 = vpop.f32.mrf.mxu0
        %v1933 = vpop.f32.mrf.mxu0
        %v1934 = vadd.f32 0.0, %v1933
        %v1935 = vpop.f32.mrf.mxu0
        %1936 = vmatprep.mubr.bf16.mxu0 0
        %1937 = vmatmul.mubr.bf16.gmra.mxu0 %v1866
        %v1938 = vpop.f32.mrf.mxu0
        %v1939 = vadd.f32 0.0, %v1938
        %v1940 = vpop.f32.mrf.mxu0
        %v1941 = vpop.f32.mrf.mxu0
        %v1942 = vadd.f32 0.0, %v1941
        %v1943 = vpop.f32.mrf.mxu0
        %1944 = vmatprep.mubr.bf16.mxu0 0
        %1945 = vmatmul.mubr.bf16.gmra.mxu0 %v1869
        %v1946 = vpop.f32.mrf.mxu0
        %v1947 = vadd.f32 0.0, %v1946
        %v1948 = vpop.f32.mrf.mxu0
        %v1949 = vpop.f32.mrf.mxu0
        %v1950 = vadd.f32 0.0, %v1949
        %v1951 = vpop.f32.mrf.mxu0
        %1952 = vmatprep.mubr.bf16.mxu0 0
        %1953 = vmatmul.mubr.bf16.gmra.mxu0 %v1872
        %v1954 = vpop.f32.mrf.mxu0
        %v1955 = vadd.f32 0.0, %v1954
        %v1956 = vpop.f32.mrf.mxu0
        %v1957 = vpop.f32.mrf.mxu0
        %v1958 = vadd.f32 0.0, %v1957
        %v1959 = vpop.f32.mrf.mxu0
        %1960 = vmatprep.mubr.bf16.mxu0 0
        %1961 = vmatmul.mubr.bf16.gmra.mxu0 %v1875
        %v1962 = vpop.f32.mrf.mxu0
        %v1963 = vadd.f32 0.0, %v1962
        %v1964 = vpop.f32.mrf.mxu0
        %v1965 = vpop.f32.mrf.mxu0
        %v1966 = vadd.f32 0.0, %v1965
        %v1967 = vpop.f32.mrf.mxu0
        %1968 = vmatprep.mubr.bf16.mxu0 0
        %1969 = vmatmul.mubr.bf16.gmra.mxu0 %v1878
        %v1970 = vpop.f32.mrf.mxu0
        %v1971 = vadd.f32 0.0, %v1970
        %v1972 = vpop.f32.mrf.mxu0
        %v1973 = vpop.f32.mrf.mxu0
        %v1974 = vadd.f32 0.0, %v1973
        %v1975 = vpop.f32.mrf.mxu0
        %1976 = vdwg.mxu0
        %v1977 = vadd.f32 %v1803, %v1915
        %v1978 = vadd.f32 %v1804, %v1918
        %v1979 = vadd.f32 %v1805, %v1923
        %v1980 = vadd.f32 %v1806, %v1926
        %v1981 = vadd.f32 %v1807, %v1931
        %v1982 = vadd.f32 %v1808, %v1934
        %v1983 = vadd.f32 %v1809, %v1939
        %v1984 = vadd.f32 %v1810, %v1942
        %v1985 = vadd.f32 %v1811, %v1947
        %v1986 = vadd.f32 %v1812, %v1950
        %v1987 = vadd.f32 %v1813, %v1955
        %v1988 = vadd.f32 %v1814, %v1958
        %v1989 = vadd.f32 %v1815, %v1963
        %v1990 = vadd.f32 %v1816, %v1966
        %v1991 = vadd.f32 %v1817, %v1971
        %v1992 = vadd.f32 %v1818, %v1974
        %v1993 = vrot.slane %v324, 2
        %v1994 = vrot.slane %v325, 2
        %v1995 = vsel %vm749, %v1993, %v1994
        %v1996 = vrot.slane %v350, 2
        %v1997 = vrot.slane %v351, 2
        %v1998 = vsel %vm749, %v1996, %v1997
        %v2001 = vpack.c.bf16 %v758, %v755
        %v2002 = vpack.c.bf16 %v764, %v761
        %v2003 = vpack.c.bf16 %v770, %v767
        %v2004 = vpack.c.bf16 %v1995, %v773
        %v2005 = vpack.c.bf16 %v782, %v779
        %v2006 = vpack.c.bf16 %v788, %v785
        %v2007 = vpack.c.bf16 %v794, %v791
        %v2008 = vpack.c.bf16 %v1998, %v797
        %s2009 = scalar_lea.vmem %s1, 128
        %v2010 = vld [vmem:[%s2009] sm:$0xf]
        %v2011 = vld [vmem:[%s2009 + $0x4] sm:$0xf]
        %v2012 = vld [vmem:[%s2009 + $0x8] sm:$0xf]
        %v2013 = vld [vmem:[%s2009 + $0xc] sm:$0xf]
        %v2018 = vunpack.c.l.b16 %v2010
        %v2019 = vunpack.c.l.b16 %v2011
        %v2020 = vunpack.c.l.b16 %v2012
        %v2021 = vunpack.c.l.b16 %v2013
        %v2022 = vpack.c.b16 %v2019, %v2018
        %v2023 = vpack.c.b16 %v2021, %v2020
        %v2027 = vsel %vm494, %v2001, 0
        %v2030 = vsel %vm494, %v2002, 0
        %v2033 = vsel %vm494, %v2003, 0
        %v2036 = vsel %vm494, %v2004, 0
        %v2039 = vsel %vm494, %v2005, 0
        %v2042 = vsel %vm494, %v2006, 0
        %v2045 = vsel %vm494, %v2007, 0
        %v2048 = vsel %vm494, %v2008, 0
        %2050 = vmatprep.subr.bf16.mxu0 0
        %2051 = vmatpush1.bf16.msra.mxu0 0
        %2052 = vmatprep.subr.bf16.mxu0 0
        %2053 = vmatpush1.bf16.msra.mxu0 0
        %2054 = vmatprep.subr.bf16.mxu0 0
        %2055 = vmatpush1.bf16.msra.mxu0 0
        %2056 = vmatprep.subr.bf16.mxu0 0
        %2057 = vmatpush1.bf16.msra.mxu0 0
        %2058 = vmatprep.subr.bf16.mxu0 0
        %2059 = vmatpush1.bf16.msra.mxu0 0
        %2060 = vmatprep.subr.bf16.mxu0 0
        %2061 = vmatpush1.bf16.msra.mxu0 0
        %2062 = vmatprep.subr.bf16.mxu0 0
        %2063 = vmatpush1.bf16.msra.mxu0 %v2023
        %2064 = vmatprep.subr.bf16.mxu0 0
        %2065 = vmatpush1.bf16.msra.mxu0 %v2022
        %2066 = vmatprep.subr.bf16.mxu0 0
        %2067 = vmatpush2.bf16.msra.mxu0 0
        %2068 = vmatprep.subr.bf16.mxu0 0
        %2069 = vmatpush2.bf16.msra.mxu0 0
        %2070 = vmatprep.subr.bf16.mxu0 0
        %2071 = vmatpush2.bf16.msra.mxu0 0
        %2072 = vmatprep.subr.bf16.mxu0 0
        %2073 = vmatpush2.bf16.msra.mxu0 0
        %2074 = vmatprep.subr.bf16.mxu0 0
        %2075 = vmatpush2.bf16.msra.mxu0 0
        %2076 = vmatprep.subr.bf16.mxu0 0
        %2077 = vmatpush2.bf16.msra.mxu0 0
        %2078 = vmatprep.subr.bf16.mxu0 0
        %2079 = vmatpush2.bf16.msra.mxu0 0
        %2080 = vmatprep.subr.bf16.mxu0 0
        %2081 = vmatpush2.bf16.msra.mxu0 0
        %2082 = vmatprep.mubr.bf16.mxu0 0
        %2083 = vmatmul.mubr.bf16.gmra.mxu0 %v2027
        %v2084 = vpop.f32.mrf.mxu0
        %v2085 = vadd.f32 0.0, %v2084
        %v2086 = vpop.f32.mrf.mxu0
        %v2087 = vpop.f32.mrf.mxu0
        %v2088 = vadd.f32 0.0, %v2087
        %v2089 = vpop.f32.mrf.mxu0
        %2090 = vmatprep.mubr.bf16.mxu0 0
        %2091 = vmatmul.mubr.bf16.gmra.mxu0 %v2030
        %v2092 = vpop.f32.mrf.mxu0
        %v2093 = vadd.f32 0.0, %v2092
        %v2094 = vpop.f32.mrf.mxu0
        %v2095 = vpop.f32.mrf.mxu0
        %v2096 = vadd.f32 0.0, %v2095
        %v2097 = vpop.f32.mrf.mxu0
        %2098 = vmatprep.mubr.bf16.mxu0 0
        %2099 = vmatmul.mubr.bf16.gmra.mxu0 %v2033
        %v2100 = vpop.f32.mrf.mxu0
        %v2101 = vadd.f32 0.0, %v2100
        %v2102 = vpop.f32.mrf.mxu0
        %v2103 = vpop.f32.mrf.mxu0
        %v2104 = vadd.f32 0.0, %v2103
        %v2105 = vpop.f32.mrf.mxu0
        %2106 = vmatprep.mubr.bf16.mxu0 0
        %2107 = vmatmul.mubr.bf16.gmra.mxu0 %v2036
        %v2108 = vpop.f32.mrf.mxu0
        %v2109 = vadd.f32 0.0, %v2108
        %v2110 = vpop.f32.mrf.mxu0
        %v2111 = vpop.f32.mrf.mxu0
        %v2112 = vadd.f32 0.0, %v2111
        %v2113 = vpop.f32.mrf.mxu0
        %2114 = vmatprep.mubr.bf16.mxu0 0
        %2115 = vmatmul.mubr.bf16.gmra.mxu0 %v2039
        %v2116 = vpop.f32.mrf.mxu0
        %v2117 = vadd.f32 0.0, %v2116
        %v2118 = vpop.f32.mrf.mxu0
        %v2119 = vpop.f32.mrf.mxu0
        %v2120 = vadd.f32 0.0, %v2119
        %v2121 = vpop.f32.mrf.mxu0
        %2122 = vmatprep.mubr.bf16.mxu0 0
        %2123 = vmatmul.mubr.bf16.gmra.mxu0 %v2042
        %v2124 = vpop.f32.mrf.mxu0
        %v2125 = vadd.f32 0.0, %v2124
        %v2126 = vpop.f32.mrf.mxu0
        %v2127 = vpop.f32.mrf.mxu0
        %v2128 = vadd.f32 0.0, %v2127
        %v2129 = vpop.f32.mrf.mxu0
        %2130 = vmatprep.mubr.bf16.mxu0 0
        %2131 = vmatmul.mubr.bf16.gmra.mxu0 %v2045
        %v2132 = vpop.f32.mrf.mxu0
        %v2133 = vadd.f32 0.0, %v2132
        %v2134 = vpop.f32.mrf.mxu0
        %v2135 = vpop.f32.mrf.mxu0
        %v2136 = vadd.f32 0.0, %v2135
        %v2137 = vpop.f32.mrf.mxu0
        %2138 = vmatprep.mubr.bf16.mxu0 0
        %2139 = vmatmul.mubr.bf16.gmra.mxu0 %v2048
        %v2140 = vpop.f32.mrf.mxu0
        %v2141 = vadd.f32 0.0, %v2140
        %v2142 = vpop.f32.mrf.mxu0
        %v2143 = vpop.f32.mrf.mxu0
        %v2144 = vadd.f32 0.0, %v2143
        %v2145 = vpop.f32.mrf.mxu0
        %2146 = vdwg.mxu0
        %v2147 = vadd.f32 %v1977, %v2085
        %v2148 = vadd.f32 %v1978, %v2088
        %v2149 = vadd.f32 %v1979, %v2093
        %v2150 = vadd.f32 %v1980, %v2096
        %v2151 = vadd.f32 %v1981, %v2101
        %v2152 = vadd.f32 %v1982, %v2104
        %v2153 = vadd.f32 %v1983, %v2109
        %v2154 = vadd.f32 %v1984, %v2112
        %v2155 = vadd.f32 %v1985, %v2117
        %v2156 = vadd.f32 %v1986, %v2120
        %v2157 = vadd.f32 %v1987, %v2125
        %v2158 = vadd.f32 %v1988, %v2128
        %v2159 = vadd.f32 %v1989, %v2133
        %v2160 = vadd.f32 %v1990, %v2136
        %v2161 = vadd.f32 %v1991, %v2141
        %v2162 = vadd.f32 %v1992, %v2144
        %v2163 = vrot.slane %v324, 3
        %v2164 = vrot.slane %v325, 3
        %v2165 = vsel %vm976, %v2163, %v2164
        %v2166 = vrot.slane %v350, 3
        %v2167 = vrot.slane %v351, 3
        %v2168 = vsel %vm976, %v2166, %v2167
        %v2171 = vpack.c.bf16 %v985, %v982
        %v2172 = vpack.c.bf16 %v991, %v988
        %v2173 = vpack.c.bf16 %v997, %v994
        %v2174 = vpack.c.bf16 %v2165, %v1000
        %v2175 = vpack.c.bf16 %v1009, %v1006
        %v2176 = vpack.c.bf16 %v1015, %v1012
        %v2177 = vpack.c.bf16 %v1021, %v1018
        %v2178 = vpack.c.bf16 %v2168, %v1024
        %s2179 = scalar_lea.vmem %s1, 144
        %v2180 = vld [vmem:[%s2179] sm:$0xf]
        %v2181 = vld [vmem:[%s2179 + $0x4] sm:$0xf]
        %v2182 = vld [vmem:[%s2179 + $0x8] sm:$0xf]
        %v2183 = vld [vmem:[%s2179 + $0xc] sm:$0xf]
        %v2188 = vunpack.c.l.b16 %v2180
        %v2189 = vunpack.c.l.b16 %v2181
        %v2190 = vunpack.c.l.b16 %v2182
        %v2191 = vunpack.c.l.b16 %v2183
        %v2192 = vpack.c.b16 %v2189, %v2188
        %v2193 = vpack.c.b16 %v2191, %v2190
        %v2197 = vsel %vm494, %v2171, 0
        %v2200 = vsel %vm494, %v2172, 0
        %v2203 = vsel %vm494, %v2173, 0
        %v2206 = vsel %vm494, %v2174, 0
        %v2209 = vsel %vm494, %v2175, 0
        %v2212 = vsel %vm494, %v2176, 0
        %v2215 = vsel %vm494, %v2177, 0
        %v2218 = vsel %vm494, %v2178, 0
        %2220 = vmatprep.subr.bf16.mxu0 0
        %2221 = vmatpush1.bf16.msra.mxu0 0
        %2222 = vmatprep.subr.bf16.mxu0 0
        %2223 = vmatpush1.bf16.msra.mxu0 0
        %2224 = vmatprep.subr.bf16.mxu0 0
        %2225 = vmatpush1.bf16.msra.mxu0 0
        %2226 = vmatprep.subr.bf16.mxu0 0
        %2227 = vmatpush1.bf16.msra.mxu0 0
        %2228 = vmatprep.subr.bf16.mxu0 0
        %2229 = vmatpush1.bf16.msra.mxu0 0
        %2230 = vmatprep.subr.bf16.mxu0 0
        %2231 = vmatpush1.bf16.msra.mxu0 0
        %2232 = vmatprep.subr.bf16.mxu0 0
        %2233 = vmatpush1.bf16.msra.mxu0 %v2193
        %2234 = vmatprep.subr.bf16.mxu0 0
        %2235 = vmatpush1.bf16.msra.mxu0 %v2192
        %2236 = vmatprep.subr.bf16.mxu0 0
        %2237 = vmatpush2.bf16.msra.mxu0 0
        %2238 = vmatprep.subr.bf16.mxu0 0
        %2239 = vmatpush2.bf16.msra.mxu0 0
        %2240 = vmatprep.subr.bf16.mxu0 0
        %2241 = vmatpush2.bf16.msra.mxu0 0
        %2242 = vmatprep.subr.bf16.mxu0 0
        %2243 = vmatpush2.bf16.msra.mxu0 0
        %2244 = vmatprep.subr.bf16.mxu0 0
        %2245 = vmatpush2.bf16.msra.mxu0 0
        %2246 = vmatprep.subr.bf16.mxu0 0
        %2247 = vmatpush2.bf16.msra.mxu0 0
        %2248 = vmatprep.subr.bf16.mxu0 0
        %2249 = vmatpush2.bf16.msra.mxu0 0
        %2250 = vmatprep.subr.bf16.mxu0 0
        %2251 = vmatpush2.bf16.msra.mxu0 0
        %2252 = vmatprep.mubr.bf16.mxu0 0
        %2253 = vmatmul.mubr.bf16.gmra.mxu0 %v2197
        %v2254 = vpop.f32.mrf.mxu0
        %v2255 = vadd.f32 0.0, %v2254
        %v2256 = vpop.f32.mrf.mxu0
        %v2257 = vpop.f32.mrf.mxu0
        %v2258 = vadd.f32 0.0, %v2257
        %v2259 = vpop.f32.mrf.mxu0
        %2260 = vmatprep.mubr.bf16.mxu0 0
        %2261 = vmatmul.mubr.bf16.gmra.mxu0 %v2200
        %v2262 = vpop.f32.mrf.mxu0
        %v2263 = vadd.f32 0.0, %v2262
        %v2264 = vpop.f32.mrf.mxu0
        %v2265 = vpop.f32.mrf.mxu0
        %v2266 = vadd.f32 0.0, %v2265
        %v2267 = vpop.f32.mrf.mxu0
        %2268 = vmatprep.mubr.bf16.mxu0 0
        %2269 = vmatmul.mubr.bf16.gmra.mxu0 %v2203
        %v2270 = vpop.f32.mrf.mxu0
        %v2271 = vadd.f32 0.0, %v2270
        %v2272 = vpop.f32.mrf.mxu0
        %v2273 = vpop.f32.mrf.mxu0
        %v2274 = vadd.f32 0.0, %v2273
        %v2275 = vpop.f32.mrf.mxu0
        %2276 = vmatprep.mubr.bf16.mxu0 0
        %2277 = vmatmul.mubr.bf16.gmra.mxu0 %v2206
        %v2278 = vpop.f32.mrf.mxu0
        %v2279 = vadd.f32 0.0, %v2278
        %v2280 = vpop.f32.mrf.mxu0
        %v2281 = vpop.f32.mrf.mxu0
        %v2282 = vadd.f32 0.0, %v2281
        %v2283 = vpop.f32.mrf.mxu0
        %2284 = vmatprep.mubr.bf16.mxu0 0
        %2285 = vmatmul.mubr.bf16.gmra.mxu0 %v2209
        %v2286 = vpop.f32.mrf.mxu0
        %v2287 = vadd.f32 0.0, %v2286
        %v2288 = vpop.f32.mrf.mxu0
        %v2289 = vpop.f32.mrf.mxu0
        %v2290 = vadd.f32 0.0, %v2289
        %v2291 = vpop.f32.mrf.mxu0
        %2292 = vmatprep.mubr.bf16.mxu0 0
        %2293 = vmatmul.mubr.bf16.gmra.mxu0 %v2212
        %v2294 = vpop.f32.mrf.mxu0
        %v2295 = vadd.f32 0.0, %v2294
        %v2296 = vpop.f32.mrf.mxu0
        %v2297 = vpop.f32.mrf.mxu0
        %v2298 = vadd.f32 0.0, %v2297
        %v2299 = vpop.f32.mrf.mxu0
        %2300 = vmatprep.mubr.bf16.mxu0 0
        %2301 = vmatmul.mubr.bf16.gmra.mxu0 %v2215
        %v2302 = vpop.f32.mrf.mxu0
        %v2303 = vadd.f32 0.0, %v2302
        %v2304 = vpop.f32.mrf.mxu0
        %v2305 = vpop.f32.mrf.mxu0
        %v2306 = vadd.f32 0.0, %v2305
        %v2307 = vpop.f32.mrf.mxu0
        %2308 = vmatprep.mubr.bf16.mxu0 0
        %2309 = vmatmul.mubr.bf16.gmra.mxu0 %v2218
        %v2310 = vpop.f32.mrf.mxu0
        %v2311 = vadd.f32 0.0, %v2310
        %v2312 = vpop.f32.mrf.mxu0
        %v2313 = vpop.f32.mrf.mxu0
        %v2314 = vadd.f32 0.0, %v2313
        %v2315 = vpop.f32.mrf.mxu0
        %2316 = vdwg.mxu0
        %v2317 = vadd.f32 %v2147, %v2255
        %v2318 = vadd.f32 %v2148, %v2258
        %v2319 = vadd.f32 %v2149, %v2263
        %v2320 = vadd.f32 %v2150, %v2266
        %v2321 = vadd.f32 %v2151, %v2271
        %v2322 = vadd.f32 %v2152, %v2274
        %v2323 = vadd.f32 %v2153, %v2279
        %v2324 = vadd.f32 %v2154, %v2282
        %v2325 = vadd.f32 %v2155, %v2287
        %v2326 = vadd.f32 %v2156, %v2290
        %v2327 = vadd.f32 %v2157, %v2295
        %v2328 = vadd.f32 %v2158, %v2298
        %v2329 = vadd.f32 %v2159, %v2303
        %v2330 = vadd.f32 %v2160, %v2306
        %v2331 = vadd.f32 %v2161, %v2311
        %v2332 = vadd.f32 %v2162, %v2314
        %v2333 = vrot.slane %v324, 4
        %v2334 = vrot.slane %v325, 4
        %v2335 = vsel %vm1203, %v2333, %v2334
        %v2336 = vrot.slane %v350, 4
        %v2337 = vrot.slane %v351, 4
        %v2338 = vsel %vm1203, %v2336, %v2337
        %v2341 = vpack.c.bf16 %v1212, %v1209
        %v2342 = vpack.c.bf16 %v1218, %v1215
        %v2343 = vpack.c.bf16 %v1224, %v1221
        %v2344 = vpack.c.bf16 %v2335, %v1227
        %v2345 = vpack.c.bf16 %v1236, %v1233
        %v2346 = vpack.c.bf16 %v1242, %v1239
        %v2347 = vpack.c.bf16 %v1248, %v1245
        %v2348 = vpack.c.bf16 %v2338, %v1251
        %s2349 = scalar_lea.vmem %s1, 160
        %v2350 = vld [vmem:[%s2349] sm:$0xf]
        %v2351 = vld [vmem:[%s2349 + $0x4] sm:$0xf]
        %v2352 = vld [vmem:[%s2349 + $0x8] sm:$0xf]
        %v2353 = vld [vmem:[%s2349 + $0xc] sm:$0xf]
        %v2358 = vunpack.c.l.b16 %v2350
        %v2359 = vunpack.c.l.b16 %v2351
        %v2360 = vunpack.c.l.b16 %v2352
        %v2361 = vunpack.c.l.b16 %v2353
        %v2362 = vpack.c.b16 %v2359, %v2358
        %v2363 = vpack.c.b16 %v2361, %v2360
        %v2367 = vsel %vm494, %v2341, 0
        %v2370 = vsel %vm494, %v2342, 0
        %v2373 = vsel %vm494, %v2343, 0
        %v2376 = vsel %vm494, %v2344, 0
        %v2379 = vsel %vm494, %v2345, 0
        %v2382 = vsel %vm494, %v2346, 0
        %v2385 = vsel %vm494, %v2347, 0
        %v2388 = vsel %vm494, %v2348, 0
        %2390 = vmatprep.subr.bf16.mxu0 0
        %2391 = vmatpush1.bf16.msra.mxu0 0
        %2392 = vmatprep.subr.bf16.mxu0 0
        %2393 = vmatpush1.bf16.msra.mxu0 0
        %2394 = vmatprep.subr.bf16.mxu0 0
        %2395 = vmatpush1.bf16.msra.mxu0 0
        %2396 = vmatprep.subr.bf16.mxu0 0
        %2397 = vmatpush1.bf16.msra.mxu0 0
        %2398 = vmatprep.subr.bf16.mxu0 0
        %2399 = vmatpush1.bf16.msra.mxu0 0
        %2400 = vmatprep.subr.bf16.mxu0 0
        %2401 = vmatpush1.bf16.msra.mxu0 0
        %2402 = vmatprep.subr.bf16.mxu0 0
        %2403 = vmatpush1.bf16.msra.mxu0 %v2363
        %2404 = vmatprep.subr.bf16.mxu0 0
        %2405 = vmatpush1.bf16.msra.mxu0 %v2362
        %2406 = vmatprep.subr.bf16.mxu0 0
        %2407 = vmatpush2.bf16.msra.mxu0 0
        %2408 = vmatprep.subr.bf16.mxu0 0
        %2409 = vmatpush2.bf16.msra.mxu0 0
        %2410 = vmatprep.subr.bf16.mxu0 0
        %2411 = vmatpush2.bf16.msra.mxu0 0
        %2412 = vmatprep.subr.bf16.mxu0 0
        %2413 = vmatpush2.bf16.msra.mxu0 0
        %2414 = vmatprep.subr.bf16.mxu0 0
        %2415 = vmatpush2.bf16.msra.mxu0 0
        %2416 = vmatprep.subr.bf16.mxu0 0
        %2417 = vmatpush2.bf16.msra.mxu0 0
        %2418 = vmatprep.subr.bf16.mxu0 0
        %2419 = vmatpush2.bf16.msra.mxu0 0
        %2420 = vmatprep.subr.bf16.mxu0 0
        %2421 = vmatpush2.bf16.msra.mxu0 0
        %2422 = vmatprep.mubr.bf16.mxu0 0
        %2423 = vmatmul.mubr.bf16.gmra.mxu0 %v2367
        %v2424 = vpop.f32.mrf.mxu0
        %v2425 = vadd.f32 0.0, %v2424
        %v2426 = vpop.f32.mrf.mxu0
        %v2427 = vpop.f32.mrf.mxu0
        %v2428 = vadd.f32 0.0, %v2427
        %v2429 = vpop.f32.mrf.mxu0
        %2430 = vmatprep.mubr.bf16.mxu0 0
        %2431 = vmatmul.mubr.bf16.gmra.mxu0 %v2370
        %v2432 = vpop.f32.mrf.mxu0
        %v2433 = vadd.f32 0.0, %v2432
        %v2434 = vpop.f32.mrf.mxu0
        %v2435 = vpop.f32.mrf.mxu0
        %v2436 = vadd.f32 0.0, %v2435
        %v2437 = vpop.f32.mrf.mxu0
        %2438 = vmatprep.mubr.bf16.mxu0 0
        %2439 = vmatmul.mubr.bf16.gmra.mxu0 %v2373
        %v2440 = vpop.f32.mrf.mxu0
        %v2441 = vadd.f32 0.0, %v2440
        %v2442 = vpop.f32.mrf.mxu0
        %v2443 = vpop.f32.mrf.mxu0
        %v2444 = vadd.f32 0.0, %v2443
        %v2445 = vpop.f32.mrf.mxu0
        %2446 = vmatprep.mubr.bf16.mxu0 0
        %2447 = vmatmul.mubr.bf16.gmra.mxu0 %v2376
        %v2448 = vpop.f32.mrf.mxu0
        %v2449 = vadd.f32 0.0, %v2448
        %v2450 = vpop.f32.mrf.mxu0
        %v2451 = vpop.f32.mrf.mxu0
        %v2452 = vadd.f32 0.0, %v2451
        %v2453 = vpop.f32.mrf.mxu0
        %2454 = vmatprep.mubr.bf16.mxu0 0
        %2455 = vmatmul.mubr.bf16.gmra.mxu0 %v2379
        %v2456 = vpop.f32.mrf.mxu0
        %v2457 = vadd.f32 0.0, %v2456
        %v2458 = vpop.f32.mrf.mxu0
        %v2459 = vpop.f32.mrf.mxu0
        %v2460 = vadd.f32 0.0, %v2459
        %v2461 = vpop.f32.mrf.mxu0
        %2462 = vmatprep.mubr.bf16.mxu0 0
        %2463 = vmatmul.mubr.bf16.gmra.mxu0 %v2382
        %v2464 = vpop.f32.mrf.mxu0
        %v2465 = vadd.f32 0.0, %v2464
        %v2466 = vpop.f32.mrf.mxu0
        %v2467 = vpop.f32.mrf.mxu0
        %v2468 = vadd.f32 0.0, %v2467
        %v2469 = vpop.f32.mrf.mxu0
        %2470 = vmatprep.mubr.bf16.mxu0 0
        %2471 = vmatmul.mubr.bf16.gmra.mxu0 %v2385
        %v2472 = vpop.f32.mrf.mxu0
        %v2473 = vadd.f32 0.0, %v2472
        %v2474 = vpop.f32.mrf.mxu0
        %v2475 = vpop.f32.mrf.mxu0
        %v2476 = vadd.f32 0.0, %v2475
        %v2477 = vpop.f32.mrf.mxu0
        %2478 = vmatprep.mubr.bf16.mxu0 0
        %2479 = vmatmul.mubr.bf16.gmra.mxu0 %v2388
        %v2480 = vpop.f32.mrf.mxu0
        %v2481 = vadd.f32 0.0, %v2480
        %v2482 = vpop.f32.mrf.mxu0
        %v2483 = vpop.f32.mrf.mxu0
        %v2484 = vadd.f32 0.0, %v2483
        %v2485 = vpop.f32.mrf.mxu0
        %2486 = vdwg.mxu0
        %v2487 = vadd.f32 %v2317, %v2425
        %v2488 = vadd.f32 %v2318, %v2428
        %v2489 = vadd.f32 %v2319, %v2433
        %v2490 = vadd.f32 %v2320, %v2436
        %v2491 = vadd.f32 %v2321, %v2441
        %v2492 = vadd.f32 %v2322, %v2444
        %v2493 = vadd.f32 %v2323, %v2449
        %v2494 = vadd.f32 %v2324, %v2452
        %v2495 = vadd.f32 %v2325, %v2457
        %v2496 = vadd.f32 %v2326, %v2460
        %v2497 = vadd.f32 %v2327, %v2465
        %v2498 = vadd.f32 %v2328, %v2468
        %v2499 = vadd.f32 %v2329, %v2473
        %v2500 = vadd.f32 %v2330, %v2476
        %v2501 = vadd.f32 %v2331, %v2481
        %v2502 = vadd.f32 %v2332, %v2484
        %v2503 = vrot.slane %v324, 5
        %v2504 = vrot.slane %v325, 5
        %v2505 = vsel %vm1430, %v2503, %v2504
        %v2506 = vrot.slane %v350, 5
        %v2507 = vrot.slane %v351, 5
        %v2508 = vsel %vm1430, %v2506, %v2507
        %v2511 = vpack.c.bf16 %v1439, %v1436
        %v2512 = vpack.c.bf16 %v1445, %v1442
        %v2513 = vpack.c.bf16 %v1451, %v1448
        %v2514 = vpack.c.bf16 %v2505, %v1454
        %v2515 = vpack.c.bf16 %v1463, %v1460
        %v2516 = vpack.c.bf16 %v1469, %v1466
        %v2517 = vpack.c.bf16 %v1475, %v1472
        %v2518 = vpack.c.bf16 %v2508, %v1478
        %s2519 = scalar_lea.vmem %s1, 176
        %v2520 = vld [vmem:[%s2519] sm:$0xf]
        %v2521 = vld [vmem:[%s2519 + $0x4] sm:$0xf]
        %v2522 = vld [vmem:[%s2519 + $0x8] sm:$0xf]
        %v2523 = vld [vmem:[%s2519 + $0xc] sm:$0xf]
        %v2528 = vunpack.c.l.b16 %v2520
        %v2529 = vunpack.c.l.b16 %v2521
        %v2530 = vunpack.c.l.b16 %v2522
        %v2531 = vunpack.c.l.b16 %v2523
        %v2532 = vpack.c.b16 %v2529, %v2528
        %v2533 = vpack.c.b16 %v2531, %v2530
        %v2537 = vsel %vm494, %v2511, 0
        %v2540 = vsel %vm494, %v2512, 0
        %v2543 = vsel %vm494, %v2513, 0
        %v2546 = vsel %vm494, %v2514, 0
        %v2549 = vsel %vm494, %v2515, 0
        %v2552 = vsel %vm494, %v2516, 0
        %v2555 = vsel %vm494, %v2517, 0
        %v2558 = vsel %vm494, %v2518, 0
        %2560 = vmatprep.subr.bf16.mxu0 0
        %2561 = vmatpush1.bf16.msra.mxu0 0
        %2562 = vmatprep.subr.bf16.mxu0 0
        %2563 = vmatpush1.bf16.msra.mxu0 0
        %2564 = vmatprep.subr.bf16.mxu0 0
        %2565 = vmatpush1.bf16.msra.mxu0 0
        %2566 = vmatprep.subr.bf16.mxu0 0
        %2567 = vmatpush1.bf16.msra.mxu0 0
        %2568 = vmatprep.subr.bf16.mxu0 0
        %2569 = vmatpush1.bf16.msra.mxu0 0
        %2570 = vmatprep.subr.bf16.mxu0 0
        %2571 = vmatpush1.bf16.msra.mxu0 0
        %2572 = vmatprep.subr.bf16.mxu0 0
        %2573 = vmatpush1.bf16.msra.mxu0 %v2533
        %2574 = vmatprep.subr.bf16.mxu0 0
        %2575 = vmatpush1.bf16.msra.mxu0 %v2532
        %2576 = vmatprep.subr.bf16.mxu0 0
        %2577 = vmatpush2.bf16.msra.mxu0 0
        %2578 = vmatprep.subr.bf16.mxu0 0
        %2579 = vmatpush2.bf16.msra.mxu0 0
        %2580 = vmatprep.subr.bf16.mxu0 0
        %2581 = vmatpush2.bf16.msra.mxu0 0
        %2582 = vmatprep.subr.bf16.mxu0 0
        %2583 = vmatpush2.bf16.msra.mxu0 0
        %2584 = vmatprep.subr.bf16.mxu0 0
        %2585 = vmatpush2.bf16.msra.mxu0 0
        %2586 = vmatprep.subr.bf16.mxu0 0
        %2587 = vmatpush2.bf16.msra.mxu0 0
        %2588 = vmatprep.subr.bf16.mxu0 0
        %2589 = vmatpush2.bf16.msra.mxu0 0
        %2590 = vmatprep.subr.bf16.mxu0 0
        %2591 = vmatpush2.bf16.msra.mxu0 0
        %2592 = vmatprep.mubr.bf16.mxu0 0
        %2593 = vmatmul.mubr.bf16.gmra.mxu0 %v2537
        %v2594 = vpop.f32.mrf.mxu0
        %v2595 = vadd.f32 0.0, %v2594
        %v2596 = vpop.f32.mrf.mxu0
        %v2597 = vpop.f32.mrf.mxu0
        %v2598 = vadd.f32 0.0, %v2597
        %v2599 = vpop.f32.mrf.mxu0
        %2600 = vmatprep.mubr.bf16.mxu0 0
        %2601 = vmatmul.mubr.bf16.gmra.mxu0 %v2540
        %v2602 = vpop.f32.mrf.mxu0
        %v2603 = vadd.f32 0.0, %v2602
        %v2604 = vpop.f32.mrf.mxu0
        %v2605 = vpop.f32.mrf.mxu0
        %v2606 = vadd.f32 0.0, %v2605
        %v2607 = vpop.f32.mrf.mxu0
        %2608 = vmatprep.mubr.bf16.mxu0 0
        %2609 = vmatmul.mubr.bf16.gmra.mxu0 %v2543
        %v2610 = vpop.f32.mrf.mxu0
        %v2611 = vadd.f32 0.0, %v2610
        %v2612 = vpop.f32.mrf.mxu0
        %v2613 = vpop.f32.mrf.mxu0
        %v2614 = vadd.f32 0.0, %v2613
        %v2615 = vpop.f32.mrf.mxu0
        %2616 = vmatprep.mubr.bf16.mxu0 0
        %2617 = vmatmul.mubr.bf16.gmra.mxu0 %v2546
        %v2618 = vpop.f32.mrf.mxu0
        %v2619 = vadd.f32 0.0, %v2618
        %v2620 = vpop.f32.mrf.mxu0
        %v2621 = vpop.f32.mrf.mxu0
        %v2622 = vadd.f32 0.0, %v2621
        %v2623 = vpop.f32.mrf.mxu0
        %2624 = vmatprep.mubr.bf16.mxu0 0
        %2625 = vmatmul.mubr.bf16.gmra.mxu0 %v2549
        %v2626 = vpop.f32.mrf.mxu0
        %v2627 = vadd.f32 0.0, %v2626
        %v2628 = vpop.f32.mrf.mxu0
        %v2629 = vpop.f32.mrf.mxu0
        %v2630 = vadd.f32 0.0, %v2629
        %v2631 = vpop.f32.mrf.mxu0
        %2632 = vmatprep.mubr.bf16.mxu0 0
        %2633 = vmatmul.mubr.bf16.gmra.mxu0 %v2552
        %v2634 = vpop.f32.mrf.mxu0
        %v2635 = vadd.f32 0.0, %v2634
        %v2636 = vpop.f32.mrf.mxu0
        %v2637 = vpop.f32.mrf.mxu0
        %v2638 = vadd.f32 0.0, %v2637
        %v2639 = vpop.f32.mrf.mxu0
        %2640 = vmatprep.mubr.bf16.mxu0 0
        %2641 = vmatmul.mubr.bf16.gmra.mxu0 %v2555
        %v2642 = vpop.f32.mrf.mxu0
        %v2643 = vadd.f32 0.0, %v2642
        %v2644 = vpop.f32.mrf.mxu0
        %v2645 = vpop.f32.mrf.mxu0
        %v2646 = vadd.f32 0.0, %v2645
        %v2647 = vpop.f32.mrf.mxu0
        %2648 = vmatprep.mubr.bf16.mxu0 0
        %2649 = vmatmul.mubr.bf16.gmra.mxu0 %v2558
        %v2650 = vpop.f32.mrf.mxu0
        %v2651 = vadd.f32 0.0, %v2650
        %v2652 = vpop.f32.mrf.mxu0
        %v2653 = vpop.f32.mrf.mxu0
        %v2654 = vadd.f32 0.0, %v2653
        %v2655 = vpop.f32.mrf.mxu0
        %2656 = vdwg.mxu0
        %v2657 = vadd.f32 %v2487, %v2595
        %v2658 = vadd.f32 %v2488, %v2598
        %v2659 = vadd.f32 %v2489, %v2603
        %v2660 = vadd.f32 %v2490, %v2606
        %v2661 = vadd.f32 %v2491, %v2611
        %v2662 = vadd.f32 %v2492, %v2614
        %v2663 = vadd.f32 %v2493, %v2619
        %v2664 = vadd.f32 %v2494, %v2622
        %v2665 = vadd.f32 %v2495, %v2627
        %v2666 = vadd.f32 %v2496, %v2630
        %v2667 = vadd.f32 %v2497, %v2635
        %v2668 = vadd.f32 %v2498, %v2638
        %v2669 = vadd.f32 %v2499, %v2643
        %v2670 = vadd.f32 %v2500, %v2646
        %v2671 = vadd.f32 %v2501, %v2651
        %v2672 = vadd.f32 %v2502, %v2654
        %v2673 = vpack.c.bf16 %v326, %v324
        %v2674 = vpack.c.bf16 %v352, %v350
        %s2675 = scalar_lea.vmem %s1, 192
        %v2676 = vld [vmem:[%s2675] sm:$0xf]
        %v2677 = vld [vmem:[%s2675 + $0x4] sm:$0xf]
        %v2678 = vld [vmem:[%s2675 + $0x8] sm:$0xf]
        %v2679 = vld [vmem:[%s2675 + $0xc] sm:$0xf]
        %v2684 = vunpack.c.l.b16 %v2676
        %v2685 = vunpack.c.l.b16 %v2677
        %v2686 = vunpack.c.l.b16 %v2678
        %v2687 = vunpack.c.l.b16 %v2679
        %v2688 = vpack.c.b16 %v2685, %v2684
        %v2689 = vpack.c.b16 %v2687, %v2686
        %v2693 = vsel %vm494, %v2673, 0
        %v2696 = vsel %vm494, %v2674, 0
        %2698 = vmatprep.subr.bf16.mxu0 0
        %2699 = vmatpush1.bf16.msra.mxu0 0
        %2700 = vmatprep.subr.bf16.mxu0 0
        %2701 = vmatpush1.bf16.msra.mxu0 0
        %2702 = vmatprep.subr.bf16.mxu0 0
        %2703 = vmatpush1.bf16.msra.mxu0 0
        %2704 = vmatprep.subr.bf16.mxu0 0
        %2705 = vmatpush1.bf16.msra.mxu0 0
        %2706 = vmatprep.subr.bf16.mxu0 0
        %2707 = vmatpush1.bf16.msra.mxu0 0
        %2708 = vmatprep.subr.bf16.mxu0 0
        %2709 = vmatpush1.bf16.msra.mxu0 0
        %2710 = vmatprep.subr.bf16.mxu0 0
        %2711 = vmatpush1.bf16.msra.mxu0 %v2689
        %2712 = vmatprep.subr.bf16.mxu0 0
        %2713 = vmatpush1.bf16.msra.mxu0 %v2688
        %2714 = vmatprep.subr.bf16.mxu0 0
        %2715 = vmatpush2.bf16.msra.mxu0 0
        %2716 = vmatprep.subr.bf16.mxu0 0
        %2717 = vmatpush2.bf16.msra.mxu0 0
        %2718 = vmatprep.subr.bf16.mxu0 0
        %2719 = vmatpush2.bf16.msra.mxu0 0
        %2720 = vmatprep.subr.bf16.mxu0 0
        %2721 = vmatpush2.bf16.msra.mxu0 0
        %2722 = vmatprep.subr.bf16.mxu0 0
        %2723 = vmatpush2.bf16.msra.mxu0 0
        %2724 = vmatprep.subr.bf16.mxu0 0
        %2725 = vmatpush2.bf16.msra.mxu0 0
        %2726 = vmatprep.subr.bf16.mxu0 0
        %2727 = vmatpush2.bf16.msra.mxu0 0
        %2728 = vmatprep.subr.bf16.mxu0 0
        %2729 = vmatpush2.bf16.msra.mxu0 0
        %2730 = vmatprep.mubr.bf16.mxu0 0
        %2731 = vmatmul.mubr.bf16.gmra.mxu0 %v632
        %v2732 = vpop.f32.mrf.mxu0
        %v2733 = vadd.f32 0.0, %v2732
        %v2734 = vpop.f32.mrf.mxu0
        %v2735 = vpop.f32.mrf.mxu0
        %v2736 = vadd.f32 0.0, %v2735
        %v2737 = vpop.f32.mrf.mxu0
        %2738 = vmatprep.mubr.bf16.mxu0 0
        %2739 = vmatmul.mubr.bf16.gmra.mxu0 %v635
        %v2740 = vpop.f32.mrf.mxu0
        %v2741 = vadd.f32 0.0, %v2740
        %v2742 = vpop.f32.mrf.mxu0
        %v2743 = vpop.f32.mrf.mxu0
        %v2744 = vadd.f32 0.0, %v2743
        %v2745 = vpop.f32.mrf.mxu0
        %2746 = vmatprep.mubr.bf16.mxu0 0
        %2747 = vmatmul.mubr.bf16.gmra.mxu0 %v638
        %v2748 = vpop.f32.mrf.mxu0
        %v2749 = vadd.f32 0.0, %v2748
        %v2750 = vpop.f32.mrf.mxu0
        %v2751 = vpop.f32.mrf.mxu0
        %v2752 = vadd.f32 0.0, %v2751
        %v2753 = vpop.f32.mrf.mxu0
        %2754 = vmatprep.mubr.bf16.mxu0 0
        %2755 = vmatmul.mubr.bf16.gmra.mxu0 %v2693
        %v2756 = vpop.f32.mrf.mxu0
        %v2757 = vadd.f32 0.0, %v2756
        %v2758 = vpop.f32.mrf.mxu0
        %v2759 = vpop.f32.mrf.mxu0
        %v2760 = vadd.f32 0.0, %v2759
        %v2761 = vpop.f32.mrf.mxu0
        %2762 = vmatprep.mubr.bf16.mxu0 0
        %2763 = vmatmul.mubr.bf16.gmra.mxu0 %v644
        %v2764 = vpop.f32.mrf.mxu0
        %v2765 = vadd.f32 0.0, %v2764
        %v2766 = vpop.f32.mrf.mxu0
        %v2767 = vpop.f32.mrf.mxu0
        %v2768 = vadd.f32 0.0, %v2767
        %v2769 = vpop.f32.mrf.mxu0
        %2770 = vmatprep.mubr.bf16.mxu0 0
        %2771 = vmatmul.mubr.bf16.gmra.mxu0 %v647
        %v2772 = vpop.f32.mrf.mxu0
        %v2773 = vadd.f32 0.0, %v2772
        %v2774 = vpop.f32.mrf.mxu0
        %v2775 = vpop.f32.mrf.mxu0
        %v2776 = vadd.f32 0.0, %v2775
        %v2777 = vpop.f32.mrf.mxu0
        %2778 = vmatprep.mubr.bf16.mxu0 0
        %2779 = vmatmul.mubr.bf16.gmra.mxu0 %v650
        %v2780 = vpop.f32.mrf.mxu0
        %v2781 = vadd.f32 0.0, %v2780
        %v2782 = vpop.f32.mrf.mxu0
        %v2783 = vpop.f32.mrf.mxu0
        %v2784 = vadd.f32 0.0, %v2783
        %v2785 = vpop.f32.mrf.mxu0
        %2786 = vmatprep.mubr.bf16.mxu0 0
        %2787 = vmatmul.mubr.bf16.gmra.mxu0 %v2696
        %v2788 = vpop.f32.mrf.mxu0
        %v2789 = vadd.f32 0.0, %v2788
        %v2790 = vpop.f32.mrf.mxu0
        %v2791 = vpop.f32.mrf.mxu0
        %v2792 = vadd.f32 0.0, %v2791
        %v2793 = vpop.f32.mrf.mxu0
        %2794 = vdwg.mxu0
        %v2795 = vadd.f32 %v2657, %v2733
        %v2796 = vadd.f32 %v2658, %v2736
        %v2797 = vadd.f32 %v2659, %v2741
        %v2798 = vadd.f32 %v2660, %v2744
        %v2799 = vadd.f32 %v2661, %v2749
        %v2800 = vadd.f32 %v2662, %v2752
        %v2801 = vadd.f32 %v2663, %v2757
        %v2802 = vadd.f32 %v2664, %v2760
        %v2803 = vadd.f32 %v2665, %v2765
        %v2804 = vadd.f32 %v2666, %v2768
        %v2805 = vadd.f32 %v2667, %v2773
        %v2806 = vadd.f32 %v2668, %v2776
        %v2807 = vadd.f32 %v2669, %v2781
        %v2808 = vadd.f32 %v2670, %v2784
        %v2809 = vadd.f32 %v2671, %v2789
        %v2810 = vadd.f32 %v2672, %v2792
        %v2815 = vrot.slane %v326, 1
        %v2816 = vrot.slane %v327, 1
        %v2817 = vsel %vm404, %v2815, %v2816
        %v2818 = vrot.slane %v352, 1
        %v2819 = vrot.slane %v353, 1
        %v2820 = vsel %vm404, %v2818, %v2819
        %v2823 = vpack.c.bf16 %v2817, %v1825
        %v2824 = vpack.c.bf16 %v2820, %v1828
        %s2825 = scalar_lea.vmem %s1, 208
        %v2826 = vld [vmem:[%s2825] sm:$0xf]
        %v2827 = vld [vmem:[%s2825 + $0x4] sm:$0xf]
        %v2828 = vld [vmem:[%s2825 + $0x8] sm:$0xf]
        %v2829 = vld [vmem:[%s2825 + $0xc] sm:$0xf]
        %v2834 = vunpack.c.l.b16 %v2826
        %v2835 = vunpack.c.l.b16 %v2827
        %v2836 = vunpack.c.l.b16 %v2828
        %v2837 = vunpack.c.l.b16 %v2829
        %v2838 = vpack.c.b16 %v2835, %v2834
        %v2839 = vpack.c.b16 %v2837, %v2836
        %v2843 = vsel %vm494, %v2823, 0
        %v2846 = vsel %vm494, %v2824, 0
        %2848 = vmatprep.subr.bf16.mxu0 0
        %2849 = vmatpush1.bf16.msra.mxu0 0
        %2850 = vmatprep.subr.bf16.mxu0 0
        %2851 = vmatpush1.bf16.msra.mxu0 0
        %2852 = vmatprep.subr.bf16.mxu0 0
        %2853 = vmatpush1.bf16.msra.mxu0 0
        %2854 = vmatprep.subr.bf16.mxu0 0
        %2855 = vmatpush1.bf16.msra.mxu0 0
        %2856 = vmatprep.subr.bf16.mxu0 0
        %2857 = vmatpush1.bf16.msra.mxu0 0
        %2858 = vmatprep.subr.bf16.mxu0 0
        %2859 = vmatpush1.bf16.msra.mxu0 0
        %2860 = vmatprep.subr.bf16.mxu0 0
        %2861 = vmatpush1.bf16.msra.mxu0 %v2839
        %2862 = vmatprep.subr.bf16.mxu0 0
        %2863 = vmatpush1.bf16.msra.mxu0 %v2838
        %2864 = vmatprep.subr.bf16.mxu0 0
        %2865 = vmatpush2.bf16.msra.mxu0 0
        %2866 = vmatprep.subr.bf16.mxu0 0
        %2867 = vmatpush2.bf16.msra.mxu0 0
        %2868 = vmatprep.subr.bf16.mxu0 0
        %2869 = vmatpush2.bf16.msra.mxu0 0
        %2870 = vmatprep.subr.bf16.mxu0 0
        %2871 = vmatpush2.bf16.msra.mxu0 0
        %2872 = vmatprep.subr.bf16.mxu0 0
        %2873 = vmatpush2.bf16.msra.mxu0 0
        %2874 = vmatprep.subr.bf16.mxu0 0
        %2875 = vmatpush2.bf16.msra.mxu0 0
        %2876 = vmatprep.subr.bf16.mxu0 0
        %2877 = vmatpush2.bf16.msra.mxu0 0
        %2878 = vmatprep.subr.bf16.mxu0 0
        %2879 = vmatpush2.bf16.msra.mxu0 0
        %2880 = vmatprep.mubr.bf16.mxu0 0
        %2881 = vmatmul.mubr.bf16.gmra.mxu0 %v499
        %v2882 = vpop.f32.mrf.mxu0
        %v2883 = vadd.f32 0.0, %v2882
        %v2884 = vpop.f32.mrf.mxu0
        %v2885 = vpop.f32.mrf.mxu0
        %v2886 = vadd.f32 0.0, %v2885
        %v2887 = vpop.f32.mrf.mxu0
        %2888 = vmatprep.mubr.bf16.mxu0 0
        %2889 = vmatmul.mubr.bf16.gmra.mxu0 %v502
        %v2890 = vpop.f32.mrf.mxu0
        %v2891 = vadd.f32 0.0, %v2890
        %v2892 = vpop.f32.mrf.mxu0
        %v2893 = vpop.f32.mrf.mxu0
        %v2894 = vadd.f32 0.0, %v2893
        %v2895 = vpop.f32.mrf.mxu0
        %2896 = vmatprep.mubr.bf16.mxu0 0
        %2897 = vmatmul.mubr.bf16.gmra.mxu0 %v505
        %v2898 = vpop.f32.mrf.mxu0
        %v2899 = vadd.f32 0.0, %v2898
        %v2900 = vpop.f32.mrf.mxu0
        %v2901 = vpop.f32.mrf.mxu0
        %v2902 = vadd.f32 0.0, %v2901
        %v2903 = vpop.f32.mrf.mxu0
        %2904 = vmatprep.mubr.bf16.mxu0 0
        %2905 = vmatmul.mubr.bf16.gmra.mxu0 %v2843
        %v2906 = vpop.f32.mrf.mxu0
        %v2907 = vadd.f32 0.0, %v2906
        %v2908 = vpop.f32.mrf.mxu0
        %v2909 = vpop.f32.mrf.mxu0
        %v2910 = vadd.f32 0.0, %v2909
        %v2911 = vpop.f32.mrf.mxu0
        %2912 = vmatprep.mubr.bf16.mxu0 0
        %2913 = vmatmul.mubr.bf16.gmra.mxu0 %v511
        %v2914 = vpop.f32.mrf.mxu0
        %v2915 = vadd.f32 0.0, %v2914
        %v2916 = vpop.f32.mrf.mxu0
        %v2917 = vpop.f32.mrf.mxu0
        %v2918 = vadd.f32 0.0, %v2917
        %v2919 = vpop.f32.mrf.mxu0
        %2920 = vmatprep.mubr.bf16.mxu0 0
        %2921 = vmatmul.mubr.bf16.gmra.mxu0 %v514
        %v2922 = vpop.f32.mrf.mxu0
        %v2923 = vadd.f32 0.0, %v2922
        %v2924 = vpop.f32.mrf.mxu0
        %v2925 = vpop.f32.mrf.mxu0
        %v2926 = vadd.f32 0.0, %v2925
        %v2927 = vpop.f32.mrf.mxu0
        %2928 = vmatprep.mubr.bf16.mxu0 0
        %2929 = vmatmul.mubr.bf16.gmra.mxu0 %v517
        %v2930 = vpop.f32.mrf.mxu0
        %v2931 = vadd.f32 0.0, %v2930
        %v2932 = vpop.f32.mrf.mxu0
        %v2933 = vpop.f32.mrf.mxu0
        %v2934 = vadd.f32 0.0, %v2933
        %v2935 = vpop.f32.mrf.mxu0
        %2936 = vmatprep.mubr.bf16.mxu0 0
        %2937 = vmatmul.mubr.bf16.gmra.mxu0 %v2846
        %v2938 = vpop.f32.mrf.mxu0
        %v2939 = vadd.f32 0.0, %v2938
        %v2940 = vpop.f32.mrf.mxu0
        %v2941 = vpop.f32.mrf.mxu0
        %v2942 = vadd.f32 0.0, %v2941
        %v2943 = vpop.f32.mrf.mxu0
        %2944 = vdwg.mxu0
        %v2945 = vadd.f32 %v2795, %v2883
        %v2946 = vadd.f32 %v2796, %v2886
        %v2947 = vadd.f32 %v2797, %v2891
        %v2948 = vadd.f32 %v2798, %v2894
        %v2949 = vadd.f32 %v2799, %v2899
        %v2950 = vadd.f32 %v2800, %v2902
        %v2951 = vadd.f32 %v2801, %v2907
        %v2952 = vadd.f32 %v2802, %v2910
        %v2953 = vadd.f32 %v2803, %v2915
        %v2954 = vadd.f32 %v2804, %v2918
        %v2955 = vadd.f32 %v2805, %v2923
        %v2956 = vadd.f32 %v2806, %v2926
        %v2957 = vadd.f32 %v2807, %v2931
        %v2958 = vadd.f32 %v2808, %v2934
        %v2959 = vadd.f32 %v2809, %v2939
        %v2960 = vadd.f32 %v2810, %v2942
        %v2961 = vrot.slane %v326, 2
        %v2962 = vrot.slane %v327, 2
        %v2963 = vsel %vm749, %v2961, %v2962
        %v2964 = vrot.slane %v352, 2
        %v2965 = vrot.slane %v353, 2
        %v2966 = vsel %vm749, %v2964, %v2965
        %v2969 = vpack.c.bf16 %v2963, %v1995
        %v2970 = vpack.c.bf16 %v2966, %v1998
        %s2971 = scalar_lea.vmem %s1, 224
        %v2972 = vld [vmem:[%s2971] sm:$0xf]
        %v2973 = vld [vmem:[%s2971 + $0x4] sm:$0xf]
        %v2974 = vld [vmem:[%s2971 + $0x8] sm:$0xf]
        %v2975 = vld [vmem:[%s2971 + $0xc] sm:$0xf]
        %v2980 = vunpack.c.l.b16 %v2972
        %v2981 = vunpack.c.l.b16 %v2973
        %v2982 = vunpack.c.l.b16 %v2974
        %v2983 = vunpack.c.l.b16 %v2975
        %v2984 = vpack.c.b16 %v2981, %v2980
        %v2985 = vpack.c.b16 %v2983, %v2982
        %v2989 = vsel %vm494, %v2969, 0
        %v2992 = vsel %vm494, %v2970, 0
        %2994 = vmatprep.subr.bf16.mxu0 0
        %2995 = vmatpush1.bf16.msra.mxu0 0
        %2996 = vmatprep.subr.bf16.mxu0 0
        %2997 = vmatpush1.bf16.msra.mxu0 0
        %2998 = vmatprep.subr.bf16.mxu0 0
        %2999 = vmatpush1.bf16.msra.mxu0 0
        %3000 = vmatprep.subr.bf16.mxu0 0
        %3001 = vmatpush1.bf16.msra.mxu0 0
        %3002 = vmatprep.subr.bf16.mxu0 0
        %3003 = vmatpush1.bf16.msra.mxu0 0
        %3004 = vmatprep.subr.bf16.mxu0 0
        %3005 = vmatpush1.bf16.msra.mxu0 0
        %3006 = vmatprep.subr.bf16.mxu0 0
        %3007 = vmatpush1.bf16.msra.mxu0 %v2985
        %3008 = vmatprep.subr.bf16.mxu0 0
        %3009 = vmatpush1.bf16.msra.mxu0 %v2984
        %3010 = vmatprep.subr.bf16.mxu0 0
        %3011 = vmatpush2.bf16.msra.mxu0 0
        %3012 = vmatprep.subr.bf16.mxu0 0
        %3013 = vmatpush2.bf16.msra.mxu0 0
        %3014 = vmatprep.subr.bf16.mxu0 0
        %3015 = vmatpush2.bf16.msra.mxu0 0
        %3016 = vmatprep.subr.bf16.mxu0 0
        %3017 = vmatpush2.bf16.msra.mxu0 0
        %3018 = vmatprep.subr.bf16.mxu0 0
        %3019 = vmatpush2.bf16.msra.mxu0 0
        %3020 = vmatprep.subr.bf16.mxu0 0
        %3021 = vmatpush2.bf16.msra.mxu0 0
        %3022 = vmatprep.subr.bf16.mxu0 0
        %3023 = vmatpush2.bf16.msra.mxu0 0
        %3024 = vmatprep.subr.bf16.mxu0 0
        %3025 = vmatpush2.bf16.msra.mxu0 0
        %3026 = vmatprep.mubr.bf16.mxu0 0
        %3027 = vmatmul.mubr.bf16.gmra.mxu0 %v843
        %v3028 = vpop.f32.mrf.mxu0
        %v3029 = vadd.f32 0.0, %v3028
        %v3030 = vpop.f32.mrf.mxu0
        %v3031 = vpop.f32.mrf.mxu0
        %v3032 = vadd.f32 0.0, %v3031
        %v3033 = vpop.f32.mrf.mxu0
        %3034 = vmatprep.mubr.bf16.mxu0 0
        %3035 = vmatmul.mubr.bf16.gmra.mxu0 %v846
        %v3036 = vpop.f32.mrf.mxu0
        %v3037 = vadd.f32 0.0, %v3036
        %v3038 = vpop.f32.mrf.mxu0
        %v3039 = vpop.f32.mrf.mxu0
        %v3040 = vadd.f32 0.0, %v3039
        %v3041 = vpop.f32.mrf.mxu0
        %3042 = vmatprep.mubr.bf16.mxu0 0
        %3043 = vmatmul.mubr.bf16.gmra.mxu0 %v849
        %v3044 = vpop.f32.mrf.mxu0
        %v3045 = vadd.f32 0.0, %v3044
        %v3046 = vpop.f32.mrf.mxu0
        %v3047 = vpop.f32.mrf.mxu0
        %v3048 = vadd.f32 0.0, %v3047
        %v3049 = vpop.f32.mrf.mxu0
        %3050 = vmatprep.mubr.bf16.mxu0 0
        %3051 = vmatmul.mubr.bf16.gmra.mxu0 %v2989
        %v3052 = vpop.f32.mrf.mxu0
        %v3053 = vadd.f32 0.0, %v3052
        %v3054 = vpop.f32.mrf.mxu0
        %v3055 = vpop.f32.mrf.mxu0
        %v3056 = vadd.f32 0.0, %v3055
        %v3057 = vpop.f32.mrf.mxu0
        %3058 = vmatprep.mubr.bf16.mxu0 0
        %3059 = vmatmul.mubr.bf16.gmra.mxu0 %v855
        %v3060 = vpop.f32.mrf.mxu0
        %v3061 = vadd.f32 0.0, %v3060
        %v3062 = vpop.f32.mrf.mxu0
        %v3063 = vpop.f32.mrf.mxu0
        %v3064 = vadd.f32 0.0, %v3063
        %v3065 = vpop.f32.mrf.mxu0
        %3066 = vmatprep.mubr.bf16.mxu0 0
        %3067 = vmatmul.mubr.bf16.gmra.mxu0 %v858
        %v3068 = vpop.f32.mrf.mxu0
        %v3069 = vadd.f32 0.0, %v3068
        %v3070 = vpop.f32.mrf.mxu0
        %v3071 = vpop.f32.mrf.mxu0
        %v3072 = vadd.f32 0.0, %v3071
        %v3073 = vpop.f32.mrf.mxu0
        %3074 = vmatprep.mubr.bf16.mxu0 0
        %3075 = vmatmul.mubr.bf16.gmra.mxu0 %v861
        %v3076 = vpop.f32.mrf.mxu0
        %v3077 = vadd.f32 0.0, %v3076
        %v3078 = vpop.f32.mrf.mxu0
        %v3079 = vpop.f32.mrf.mxu0
        %v3080 = vadd.f32 0.0, %v3079
        %v3081 = vpop.f32.mrf.mxu0
        %3082 = vmatprep.mubr.bf16.mxu0 0
        %3083 = vmatmul.mubr.bf16.gmra.mxu0 %v2992
        %v3084 = vpop.f32.mrf.mxu0
        %v3085 = vadd.f32 0.0, %v3084
        %v3086 = vpop.f32.mrf.mxu0
        %v3087 = vpop.f32.mrf.mxu0
        %v3088 = vadd.f32 0.0, %v3087
        %v3089 = vpop.f32.mrf.mxu0
        %3090 = vdwg.mxu0
        %v3091 = vadd.f32 %v2945, %v3029
        %v3092 = vadd.f32 %v2946, %v3032
        %v3093 = vadd.f32 %v2947, %v3037
        %v3094 = vadd.f32 %v2948, %v3040
        %v3095 = vadd.f32 %v2949, %v3045
        %v3096 = vadd.f32 %v2950, %v3048
        %v3097 = vadd.f32 %v2951, %v3053
        %v3098 = vadd.f32 %v2952, %v3056
        %v3099 = vadd.f32 %v2953, %v3061
        %v3100 = vadd.f32 %v2954, %v3064
        %v3101 = vadd.f32 %v2955, %v3069
        %v3102 = vadd.f32 %v2956, %v3072
        %v3103 = vadd.f32 %v2957, %v3077
        %v3104 = vadd.f32 %v2958, %v3080
        %v3105 = vadd.f32 %v2959, %v3085
        %v3106 = vadd.f32 %v2960, %v3088
        %v3107 = vrot.slane %v326, 3
        %v3108 = vrot.slane %v327, 3
        %v3109 = vsel %vm976, %v3107, %v3108
        %v3110 = vrot.slane %v352, 3
        %v3111 = vrot.slane %v353, 3
        %v3112 = vsel %vm976, %v3110, %v3111
        %v3115 = vpack.c.bf16 %v3109, %v2165
        %v3116 = vpack.c.bf16 %v3112, %v2168
        %s3117 = scalar_lea.vmem %s1, 240
        %v3118 = vld [vmem:[%s3117] sm:$0xf]
        %v3119 = vld [vmem:[%s3117 + $0x4] sm:$0xf]
        %v3120 = vld [vmem:[%s3117 + $0x8] sm:$0xf]
        %v3121 = vld [vmem:[%s3117 + $0xc] sm:$0xf]
        %v3126 = vunpack.c.l.b16 %v3118
        %v3127 = vunpack.c.l.b16 %v3119
        %v3128 = vunpack.c.l.b16 %v3120
        %v3129 = vunpack.c.l.b16 %v3121
        %v3130 = vpack.c.b16 %v3127, %v3126
        %v3131 = vpack.c.b16 %v3129, %v3128
        %v3135 = vsel %vm494, %v3115, 0
        %v3138 = vsel %vm494, %v3116, 0
        %3140 = vmatprep.subr.bf16.mxu0 0
        %3141 = vmatpush1.bf16.msra.mxu0 0
        %3142 = vmatprep.subr.bf16.mxu0 0
        %3143 = vmatpush1.bf16.msra.mxu0 0
        %3144 = vmatprep.subr.bf16.mxu0 0
        %3145 = vmatpush1.bf16.msra.mxu0 0
        %3146 = vmatprep.subr.bf16.mxu0 0
        %3147 = vmatpush1.bf16.msra.mxu0 0
        %3148 = vmatprep.subr.bf16.mxu0 0
        %3149 = vmatpush1.bf16.msra.mxu0 0
        %3150 = vmatprep.subr.bf16.mxu0 0
        %3151 = vmatpush1.bf16.msra.mxu0 0
        %3152 = vmatprep.subr.bf16.mxu0 0
        %3153 = vmatpush1.bf16.msra.mxu0 %v3131
        %3154 = vmatprep.subr.bf16.mxu0 0
        %3155 = vmatpush1.bf16.msra.mxu0 %v3130
        %3156 = vmatprep.subr.bf16.mxu0 0
        %3157 = vmatpush2.bf16.msra.mxu0 0
        %3158 = vmatprep.subr.bf16.mxu0 0
        %3159 = vmatpush2.bf16.msra.mxu0 0
        %3160 = vmatprep.subr.bf16.mxu0 0
        %3161 = vmatpush2.bf16.msra.mxu0 0
        %3162 = vmatprep.subr.bf16.mxu0 0
        %3163 = vmatpush2.bf16.msra.mxu0 0
        %3164 = vmatprep.subr.bf16.mxu0 0
        %3165 = vmatpush2.bf16.msra.mxu0 0
        %3166 = vmatprep.subr.bf16.mxu0 0
        %3167 = vmatpush2.bf16.msra.mxu0 0
        %3168 = vmatprep.subr.bf16.mxu0 0
        %3169 = vmatpush2.bf16.msra.mxu0 0
        %3170 = vmatprep.subr.bf16.mxu0 0
        %3171 = vmatpush2.bf16.msra.mxu0 0
        %3172 = vmatprep.mubr.bf16.mxu0 0
        %3173 = vmatmul.mubr.bf16.gmra.mxu0 %v1070
        %v3174 = vpop.f32.mrf.mxu0
        %v3175 = vadd.f32 0.0, %v3174
        %v3176 = vpop.f32.mrf.mxu0
        %v3177 = vpop.f32.mrf.mxu0
        %v3178 = vadd.f32 0.0, %v3177
        %v3179 = vpop.f32.mrf.mxu0
        %3180 = vmatprep.mubr.bf16.mxu0 0
        %3181 = vmatmul.mubr.bf16.gmra.mxu0 %v1073
        %v3182 = vpop.f32.mrf.mxu0
        %v3183 = vadd.f32 0.0, %v3182
        %v3184 = vpop.f32.mrf.mxu0
        %v3185 = vpop.f32.mrf.mxu0
        %v3186 = vadd.f32 0.0, %v3185
        %v3187 = vpop.f32.mrf.mxu0
        %3188 = vmatprep.mubr.bf16.mxu0 0
        %3189 = vmatmul.mubr.bf16.gmra.mxu0 %v1076
        %v3190 = vpop.f32.mrf.mxu0
        %v3191 = vadd.f32 0.0, %v3190
        %v3192 = vpop.f32.mrf.mxu0
        %v3193 = vpop.f32.mrf.mxu0
        %v3194 = vadd.f32 0.0, %v3193
        %v3195 = vpop.f32.mrf.mxu0
        %3196 = vmatprep.mubr.bf16.mxu0 0
        %3197 = vmatmul.mubr.bf16.gmra.mxu0 %v3135
        %v3198 = vpop.f32.mrf.mxu0
        %v3199 = vadd.f32 0.0, %v3198
        %v3200 = vpop.f32.mrf.mxu0
        %v3201 = vpop.f32.mrf.mxu0
        %v3202 = vadd.f32 0.0, %v3201
        %v3203 = vpop.f32.mrf.mxu0
        %3204 = vmatprep.mubr.bf16.mxu0 0
        %3205 = vmatmul.mubr.bf16.gmra.mxu0 %v1082
        %v3206 = vpop.f32.mrf.mxu0
        %v3207 = vadd.f32 0.0, %v3206
        %v3208 = vpop.f32.mrf.mxu0
        %v3209 = vpop.f32.mrf.mxu0
        %v3210 = vadd.f32 0.0, %v3209
        %v3211 = vpop.f32.mrf.mxu0
        %3212 = vmatprep.mubr.bf16.mxu0 0
        %3213 = vmatmul.mubr.bf16.gmra.mxu0 %v1085
        %v3214 = vpop.f32.mrf.mxu0
        %v3215 = vadd.f32 0.0, %v3214
        %v3216 = vpop.f32.mrf.mxu0
        %v3217 = vpop.f32.mrf.mxu0
        %v3218 = vadd.f32 0.0, %v3217
        %v3219 = vpop.f32.mrf.mxu0
        %3220 = vmatprep.mubr.bf16.mxu0 0
        %3221 = vmatmul.mubr.bf16.gmra.mxu0 %v1088
        %v3222 = vpop.f32.mrf.mxu0
        %v3223 = vadd.f32 0.0, %v3222
        %v3224 = vpop.f32.mrf.mxu0
        %v3225 = vpop.f32.mrf.mxu0
        %v3226 = vadd.f32 0.0, %v3225
        %v3227 = vpop.f32.mrf.mxu0
        %3228 = vmatprep.mubr.bf16.mxu0 0
        %3229 = vmatmul.mubr.bf16.gmra.mxu0 %v3138
        %v3230 = vpop.f32.mrf.mxu0
        %v3231 = vadd.f32 0.0, %v3230
        %v3232 = vpop.f32.mrf.mxu0
        %v3233 = vpop.f32.mrf.mxu0
        %v3234 = vadd.f32 0.0, %v3233
        %v3235 = vpop.f32.mrf.mxu0
        %3236 = vdwg.mxu0
        %v3237 = vadd.f32 %v3091, %v3175
        %v3238 = vadd.f32 %v3092, %v3178
        %v3239 = vadd.f32 %v3093, %v3183
        %v3240 = vadd.f32 %v3094, %v3186
        %v3241 = vadd.f32 %v3095, %v3191
        %v3242 = vadd.f32 %v3096, %v3194
        %v3243 = vadd.f32 %v3097, %v3199
        %v3244 = vadd.f32 %v3098, %v3202
        %v3245 = vadd.f32 %v3099, %v3207
        %v3246 = vadd.f32 %v3100, %v3210
        %v3247 = vadd.f32 %v3101, %v3215
        %v3248 = vadd.f32 %v3102, %v3218
        %v3249 = vadd.f32 %v3103, %v3223
        %v3250 = vadd.f32 %v3104, %v3226
        %v3251 = vadd.f32 %v3105, %v3231
        %v3252 = vadd.f32 %v3106, %v3234
        %v3253 = vrot.slane %v326, 4
        %v3254 = vrot.slane %v327, 4
        %v3255 = vsel %vm1203, %v3253, %v3254
        %v3256 = vrot.slane %v352, 4
        %v3257 = vrot.slane %v353, 4
        %v3258 = vsel %vm1203, %v3256, %v3257
        %v3261 = vpack.c.bf16 %v3255, %v2335
        %v3262 = vpack.c.bf16 %v3258, %v2338
        %s3263 = scalar_lea.vmem %s1, 256
        %v3264 = vld [vmem:[%s3263] sm:$0xf]
        %v3265 = vld [vmem:[%s3263 + $0x4] sm:$0xf]
        %v3266 = vld [vmem:[%s3263 + $0x8] sm:$0xf]
        %v3267 = vld [vmem:[%s3263 + $0xc] sm:$0xf]
        %v3272 = vunpack.c.l.b16 %v3264
        %v3273 = vunpack.c.l.b16 %v3265
        %v3274 = vunpack.c.l.b16 %v3266
        %v3275 = vunpack.c.l.b16 %v3267
        %v3276 = vpack.c.b16 %v3273, %v3272
        %v3277 = vpack.c.b16 %v3275, %v3274
        %v3281 = vsel %vm494, %v3261, 0
        %v3284 = vsel %vm494, %v3262, 0
        %3286 = vmatprep.subr.bf16.mxu0 0
        %3287 = vmatpush1.bf16.msra.mxu0 0
        %3288 = vmatprep.subr.bf16.mxu0 0
        %3289 = vmatpush1.bf16.msra.mxu0 0
        %3290 = vmatprep.subr.bf16.mxu0 0
        %3291 = vmatpush1.bf16.msra.mxu0 0
        %3292 = vmatprep.subr.bf16.mxu0 0
        %3293 = vmatpush1.bf16.msra.mxu0 0
        %3294 = vmatprep.subr.bf16.mxu0 0
        %3295 = vmatpush1.bf16.msra.mxu0 0
        %3296 = vmatprep.subr.bf16.mxu0 0
        %3297 = vmatpush1.bf16.msra.mxu0 0
        %3298 = vmatprep.subr.bf16.mxu0 0
        %3299 = vmatpush1.bf16.msra.mxu0 %v3277
        %3300 = vmatprep.subr.bf16.mxu0 0
        %3301 = vmatpush1.bf16.msra.mxu0 %v3276
        %3302 = vmatprep.subr.bf16.mxu0 0
        %3303 = vmatpush2.bf16.msra.mxu0 0
        %3304 = vmatprep.subr.bf16.mxu0 0
        %3305 = vmatpush2.bf16.msra.mxu0 0
        %3306 = vmatprep.subr.bf16.mxu0 0
        %3307 = vmatpush2.bf16.msra.mxu0 0
        %3308 = vmatprep.subr.bf16.mxu0 0
        %3309 = vmatpush2.bf16.msra.mxu0 0
        %3310 = vmatprep.subr.bf16.mxu0 0
        %3311 = vmatpush2.bf16.msra.mxu0 0
        %3312 = vmatprep.subr.bf16.mxu0 0
        %3313 = vmatpush2.bf16.msra.mxu0 0
        %3314 = vmatprep.subr.bf16.mxu0 0
        %3315 = vmatpush2.bf16.msra.mxu0 0
        %3316 = vmatprep.subr.bf16.mxu0 0
        %3317 = vmatpush2.bf16.msra.mxu0 0
        %3318 = vmatprep.mubr.bf16.mxu0 0
        %3319 = vmatmul.mubr.bf16.gmra.mxu0 %v1297
        %v3320 = vpop.f32.mrf.mxu0
        %v3321 = vadd.f32 0.0, %v3320
        %v3322 = vpop.f32.mrf.mxu0
        %v3323 = vpop.f32.mrf.mxu0
        %v3324 = vadd.f32 0.0, %v3323
        %v3325 = vpop.f32.mrf.mxu0
        %3326 = vmatprep.mubr.bf16.mxu0 0
        %3327 = vmatmul.mubr.bf16.gmra.mxu0 %v1300
        %v3328 = vpop.f32.mrf.mxu0
        %v3329 = vadd.f32 0.0, %v3328
        %v3330 = vpop.f32.mrf.mxu0
        %v3331 = vpop.f32.mrf.mxu0
        %v3332 = vadd.f32 0.0, %v3331
        %v3333 = vpop.f32.mrf.mxu0
        %3334 = vmatprep.mubr.bf16.mxu0 0
        %3335 = vmatmul.mubr.bf16.gmra.mxu0 %v1303
        %v3336 = vpop.f32.mrf.mxu0
        %v3337 = vadd.f32 0.0, %v3336
        %v3338 = vpop.f32.mrf.mxu0
        %v3339 = vpop.f32.mrf.mxu0
        %v3340 = vadd.f32 0.0, %v3339
        %v3341 = vpop.f32.mrf.mxu0
        %3342 = vmatprep.mubr.bf16.mxu0 0
        %3343 = vmatmul.mubr.bf16.gmra.mxu0 %v3281
        %v3344 = vpop.f32.mrf.mxu0
        %v3345 = vadd.f32 0.0, %v3344
        %v3346 = vpop.f32.mrf.mxu0
        %v3347 = vpop.f32.mrf.mxu0
        %v3348 = vadd.f32 0.0, %v3347
        %v3349 = vpop.f32.mrf.mxu0
        %3350 = vmatprep.mubr.bf16.mxu0 0
        %3351 = vmatmul.mubr.bf16.gmra.mxu0 %v1309
        %v3352 = vpop.f32.mrf.mxu0
        %v3353 = vadd.f32 0.0, %v3352
        %v3354 = vpop.f32.mrf.mxu0
        %v3355 = vpop.f32.mrf.mxu0
        %v3356 = vadd.f32 0.0, %v3355
        %v3357 = vpop.f32.mrf.mxu0
        %3358 = vmatprep.mubr.bf16.mxu0 0
        %3359 = vmatmul.mubr.bf16.gmra.mxu0 %v1312
        %v3360 = vpop.f32.mrf.mxu0
        %v3361 = vadd.f32 0.0, %v3360
        %v3362 = vpop.f32.mrf.mxu0
        %v3363 = vpop.f32.mrf.mxu0
        %v3364 = vadd.f32 0.0, %v3363
        %v3365 = vpop.f32.mrf.mxu0
        %3366 = vmatprep.mubr.bf16.mxu0 0
        %3367 = vmatmul.mubr.bf16.gmra.mxu0 %v1315
        %v3368 = vpop.f32.mrf.mxu0
        %v3369 = vadd.f32 0.0, %v3368
        %v3370 = vpop.f32.mrf.mxu0
        %v3371 = vpop.f32.mrf.mxu0
        %v3372 = vadd.f32 0.0, %v3371
        %v3373 = vpop.f32.mrf.mxu0
        %3374 = vmatprep.mubr.bf16.mxu0 0
        %3375 = vmatmul.mubr.bf16.gmra.mxu0 %v3284
        %v3376 = vpop.f32.mrf.mxu0
        %v3377 = vadd.f32 0.0, %v3376
        %v3378 = vpop.f32.mrf.mxu0
        %v3379 = vpop.f32.mrf.mxu0
        %v3380 = vadd.f32 0.0, %v3379
        %v3381 = vpop.f32.mrf.mxu0
        %3382 = vdwg.mxu0
        %v3383 = vadd.f32 %v3237, %v3321
        %v3384 = vadd.f32 %v3238, %v3324
        %v3385 = vadd.f32 %v3239, %v3329
        %v3386 = vadd.f32 %v3240, %v3332
        %v3387 = vadd.f32 %v3241, %v3337
        %v3388 = vadd.f32 %v3242, %v3340
        %v3389 = vadd.f32 %v3243, %v3345
        %v3390 = vadd.f32 %v3244, %v3348
        %v3391 = vadd.f32 %v3245, %v3353
        %v3392 = vadd.f32 %v3246, %v3356
        %v3393 = vadd.f32 %v3247, %v3361
        %v3394 = vadd.f32 %v3248, %v3364
        %v3395 = vadd.f32 %v3249, %v3369
        %v3396 = vadd.f32 %v3250, %v3372
        %v3397 = vadd.f32 %v3251, %v3377
        %v3398 = vadd.f32 %v3252, %v3380
        %v3399 = vrot.slane %v326, 5
        %v3400 = vrot.slane %v327, 5
        %v3401 = vsel %vm1430, %v3399, %v3400
        %v3402 = vrot.slane %v352, 5
        %v3403 = vrot.slane %v353, 5
        %v3404 = vsel %vm1430, %v3402, %v3403
        %v3407 = vpack.c.bf16 %v3401, %v2505
        %v3408 = vpack.c.bf16 %v3404, %v2508
        %s3409 = scalar_lea.vmem %s1, 272
        %v3410 = vld [vmem:[%s3409] sm:$0xf]
        %v3411 = vld [vmem:[%s3409 + $0x4] sm:$0xf]
        %v3412 = vld [vmem:[%s3409 + $0x8] sm:$0xf]
        %v3413 = vld [vmem:[%s3409 + $0xc] sm:$0xf]
        %v3418 = vunpack.c.l.b16 %v3410
        %v3419 = vunpack.c.l.b16 %v3411
        %v3420 = vunpack.c.l.b16 %v3412
        %v3421 = vunpack.c.l.b16 %v3413
        %v3422 = vpack.c.b16 %v3419, %v3418
        %v3423 = vpack.c.b16 %v3421, %v3420
        %v3427 = vsel %vm494, %v3407, 0
        %v3430 = vsel %vm494, %v3408, 0
        %3432 = vmatprep.subr.bf16.mxu0 0
        %3433 = vmatpush1.bf16.msra.mxu0 0
        %3434 = vmatprep.subr.bf16.mxu0 0
        %3435 = vmatpush1.bf16.msra.mxu0 0
        %3436 = vmatprep.subr.bf16.mxu0 0
        %3437 = vmatpush1.bf16.msra.mxu0 0
        %3438 = vmatprep.subr.bf16.mxu0 0
        %3439 = vmatpush1.bf16.msra.mxu0 0
        %3440 = vmatprep.subr.bf16.mxu0 0
        %3441 = vmatpush1.bf16.msra.mxu0 0
        %3442 = vmatprep.subr.bf16.mxu0 0
        %3443 = vmatpush1.bf16.msra.mxu0 0
        %3444 = vmatprep.subr.bf16.mxu0 0
        %3445 = vmatpush1.bf16.msra.mxu0 %v3423
        %3446 = vmatprep.subr.bf16.mxu0 0
        %3447 = vmatpush1.bf16.msra.mxu0 %v3422
        %3448 = vmatprep.subr.bf16.mxu0 0
        %3449 = vmatpush2.bf16.msra.mxu0 0
        %3450 = vmatprep.subr.bf16.mxu0 0
        %3451 = vmatpush2.bf16.msra.mxu0 0
        %3452 = vmatprep.subr.bf16.mxu0 0
        %3453 = vmatpush2.bf16.msra.mxu0 0
        %3454 = vmatprep.subr.bf16.mxu0 0
        %3455 = vmatpush2.bf16.msra.mxu0 0
        %3456 = vmatprep.subr.bf16.mxu0 0
        %3457 = vmatpush2.bf16.msra.mxu0 0
        %3458 = vmatprep.subr.bf16.mxu0 0
        %3459 = vmatpush2.bf16.msra.mxu0 0
        %3460 = vmatprep.subr.bf16.mxu0 0
        %3461 = vmatpush2.bf16.msra.mxu0 0
        %3462 = vmatprep.subr.bf16.mxu0 0
        %3463 = vmatpush2.bf16.msra.mxu0 0
        %3464 = vmatprep.mubr.bf16.mxu0 0
        %3465 = vmatmul.mubr.bf16.gmra.mxu0 %v1524
        %v3466 = vpop.f32.mrf.mxu0
        %v3467 = vadd.f32 0.0, %v3466
        %v3468 = vpop.f32.mrf.mxu0
        %v3469 = vpop.f32.mrf.mxu0
        %v3470 = vadd.f32 0.0, %v3469
        %v3471 = vpop.f32.mrf.mxu0
        %3472 = vmatprep.mubr.bf16.mxu0 0
        %3473 = vmatmul.mubr.bf16.gmra.mxu0 %v1527
        %v3474 = vpop.f32.mrf.mxu0
        %v3475 = vadd.f32 0.0, %v3474
        %v3476 = vpop.f32.mrf.mxu0
        %v3477 = vpop.f32.mrf.mxu0
        %v3478 = vadd.f32 0.0, %v3477
        %v3479 = vpop.f32.mrf.mxu0
        %3480 = vmatprep.mubr.bf16.mxu0 0
        %3481 = vmatmul.mubr.bf16.gmra.mxu0 %v1530
        %v3482 = vpop.f32.mrf.mxu0
        %v3483 = vadd.f32 0.0, %v3482
        %v3484 = vpop.f32.mrf.mxu0
        %v3485 = vpop.f32.mrf.mxu0
        %v3486 = vadd.f32 0.0, %v3485
        %v3487 = vpop.f32.mrf.mxu0
        %3488 = vmatprep.mubr.bf16.mxu0 0
        %3489 = vmatmul.mubr.bf16.gmra.mxu0 %v3427
        %v3490 = vpop.f32.mrf.mxu0
        %v3491 = vadd.f32 0.0, %v3490
        %v3492 = vpop.f32.mrf.mxu0
        %v3493 = vpop.f32.mrf.mxu0
        %v3494 = vadd.f32 0.0, %v3493
        %v3495 = vpop.f32.mrf.mxu0
        %3496 = vmatprep.mubr.bf16.mxu0 0
        %3497 = vmatmul.mubr.bf16.gmra.mxu0 %v1536
        %v3498 = vpop.f32.mrf.mxu0
        %v3499 = vadd.f32 0.0, %v3498
        %v3500 = vpop.f32.mrf.mxu0
        %v3501 = vpop.f32.mrf.mxu0
        %v3502 = vadd.f32 0.0, %v3501
        %v3503 = vpop.f32.mrf.mxu0
        %3504 = vmatprep.mubr.bf16.mxu0 0
        %3505 = vmatmul.mubr.bf16.gmra.mxu0 %v1539
        %v3506 = vpop.f32.mrf.mxu0
        %v3507 = vadd.f32 0.0, %v3506
        %v3508 = vpop.f32.mrf.mxu0
        %v3509 = vpop.f32.mrf.mxu0
        %v3510 = vadd.f32 0.0, %v3509
        %v3511 = vpop.f32.mrf.mxu0
        %3512 = vmatprep.mubr.bf16.mxu0 0
        %3513 = vmatmul.mubr.bf16.gmra.mxu0 %v1542
        %v3514 = vpop.f32.mrf.mxu0
        %v3515 = vadd.f32 0.0, %v3514
        %v3516 = vpop.f32.mrf.mxu0
        %v3517 = vpop.f32.mrf.mxu0
        %v3518 = vadd.f32 0.0, %v3517
        %v3519 = vpop.f32.mrf.mxu0
        %3520 = vmatprep.mubr.bf16.mxu0 0
        %3521 = vmatmul.mubr.bf16.gmra.mxu0 %v3430
        %v3522 = vpop.f32.mrf.mxu0
        %v3523 = vadd.f32 0.0, %v3522
        %v3524 = vpop.f32.mrf.mxu0
        %v3525 = vpop.f32.mrf.mxu0
        %v3526 = vadd.f32 0.0, %v3525
        %v3527 = vpop.f32.mrf.mxu0
        %3528 = vdwg.mxu0
        %v3529 = vadd.f32 %v3383, %v3467
        %v3530 = vadd.f32 %v3384, %v3470
        %v3531 = vadd.f32 %v3385, %v3475
        %v3532 = vadd.f32 %v3386, %v3478
        %v3533 = vadd.f32 %v3387, %v3483
        %v3534 = vadd.f32 %v3388, %v3486
        %v3535 = vadd.f32 %v3389, %v3491
        %v3536 = vadd.f32 %v3390, %v3494
        %v3537 = vadd.f32 %v3391, %v3499
        %v3538 = vadd.f32 %v3392, %v3502
        %v3539 = vadd.f32 %v3393, %v3507
        %v3540 = vadd.f32 %v3394, %v3510
        %v3541 = vadd.f32 %v3395, %v3515
        %v3542 = vadd.f32 %v3396, %v3518
        %v3543 = vadd.f32 %v3397, %v3523
        %v3544 = vadd.f32 %v3398, %v3526
        %v3545 = vpack.c.bf16 %v328, %v326
        %v3546 = vpack.c.bf16 %v354, %v352
        %s3547 = scalar_lea.vmem %s1, 288
        %v3548 = vld [vmem:[%s3547] sm:$0xf]
        %v3549 = vld [vmem:[%s3547 + $0x4] sm:$0xf]
        %v3550 = vld [vmem:[%s3547 + $0x8] sm:$0xf]
        %v3551 = vld [vmem:[%s3547 + $0xc] sm:$0xf]
        %v3556 = vunpack.c.l.b16 %v3548
        %v3557 = vunpack.c.l.b16 %v3549
        %v3558 = vunpack.c.l.b16 %v3550
        %v3559 = vunpack.c.l.b16 %v3551
        %v3560 = vpack.c.b16 %v3557, %v3556
        %v3561 = vpack.c.b16 %v3559, %v3558
        %v3565 = vsel %vm494, %v3545, 0
        %v3568 = vsel %vm494, %v3546, 0
        %3570 = vmatprep.subr.bf16.mxu0 0
        %3571 = vmatpush1.bf16.msra.mxu0 0
        %3572 = vmatprep.subr.bf16.mxu0 0
        %3573 = vmatpush1.bf16.msra.mxu0 0
        %3574 = vmatprep.subr.bf16.mxu0 0
        %3575 = vmatpush1.bf16.msra.mxu0 0
        %3576 = vmatprep.subr.bf16.mxu0 0
        %3577 = vmatpush1.bf16.msra.mxu0 0
        %3578 = vmatprep.subr.bf16.mxu0 0
        %3579 = vmatpush1.bf16.msra.mxu0 0
        %3580 = vmatprep.subr.bf16.mxu0 0
        %3581 = vmatpush1.bf16.msra.mxu0 0
        %3582 = vmatprep.subr.bf16.mxu0 0
        %3583 = vmatpush1.bf16.msra.mxu0 %v3561
        %3584 = vmatprep.subr.bf16.mxu0 0
        %3585 = vmatpush1.bf16.msra.mxu0 %v3560
        %3586 = vmatprep.subr.bf16.mxu0 0
        %3587 = vmatpush2.bf16.msra.mxu0 0
        %3588 = vmatprep.subr.bf16.mxu0 0
        %3589 = vmatpush2.bf16.msra.mxu0 0
        %3590 = vmatprep.subr.bf16.mxu0 0
        %3591 = vmatpush2.bf16.msra.mxu0 0
        %3592 = vmatprep.subr.bf16.mxu0 0
        %3593 = vmatpush2.bf16.msra.mxu0 0
        %3594 = vmatprep.subr.bf16.mxu0 0
        %3595 = vmatpush2.bf16.msra.mxu0 0
        %3596 = vmatprep.subr.bf16.mxu0 0
        %3597 = vmatpush2.bf16.msra.mxu0 0
        %3598 = vmatprep.subr.bf16.mxu0 0
        %3599 = vmatpush2.bf16.msra.mxu0 0
        %3600 = vmatprep.subr.bf16.mxu0 0
        %3601 = vmatpush2.bf16.msra.mxu0 0
        %3602 = vmatprep.mubr.bf16.mxu0 0
        %3603 = vmatmul.mubr.bf16.gmra.mxu0 %v1686
        %v3604 = vpop.f32.mrf.mxu0
        %v3605 = vadd.f32 0.0, %v3604
        %v3606 = vpop.f32.mrf.mxu0
        %v3607 = vpop.f32.mrf.mxu0
        %v3608 = vadd.f32 0.0, %v3607
        %v3609 = vpop.f32.mrf.mxu0
        %3610 = vmatprep.mubr.bf16.mxu0 0
        %3611 = vmatmul.mubr.bf16.gmra.mxu0 %v1689
        %v3612 = vpop.f32.mrf.mxu0
        %v3613 = vadd.f32 0.0, %v3612
        %v3614 = vpop.f32.mrf.mxu0
        %v3615 = vpop.f32.mrf.mxu0
        %v3616 = vadd.f32 0.0, %v3615
        %v3617 = vpop.f32.mrf.mxu0
        %3618 = vmatprep.mubr.bf16.mxu0 0
        %3619 = vmatmul.mubr.bf16.gmra.mxu0 %v1692
        %v3620 = vpop.f32.mrf.mxu0
        %v3621 = vadd.f32 0.0, %v3620
        %v3622 = vpop.f32.mrf.mxu0
        %v3623 = vpop.f32.mrf.mxu0
        %v3624 = vadd.f32 0.0, %v3623
        %v3625 = vpop.f32.mrf.mxu0
        %3626 = vmatprep.mubr.bf16.mxu0 0
        %3627 = vmatmul.mubr.bf16.gmra.mxu0 %v3565
        %v3628 = vpop.f32.mrf.mxu0
        %v3629 = vadd.f32 0.0, %v3628
        %v3630 = vpop.f32.mrf.mxu0
        %v3631 = vpop.f32.mrf.mxu0
        %v3632 = vadd.f32 0.0, %v3631
        %v3633 = vpop.f32.mrf.mxu0
        %3634 = vmatprep.mubr.bf16.mxu0 0
        %3635 = vmatmul.mubr.bf16.gmra.mxu0 %v1698
        %v3636 = vpop.f32.mrf.mxu0
        %v3637 = vadd.f32 0.0, %v3636
        %v3638 = vpop.f32.mrf.mxu0
        %v3639 = vpop.f32.mrf.mxu0
        %v3640 = vadd.f32 0.0, %v3639
        %v3641 = vpop.f32.mrf.mxu0
        %3642 = vmatprep.mubr.bf16.mxu0 0
        %3643 = vmatmul.mubr.bf16.gmra.mxu0 %v1701
        %v3644 = vpop.f32.mrf.mxu0
        %v3645 = vadd.f32 0.0, %v3644
        %v3646 = vpop.f32.mrf.mxu0
        %v3647 = vpop.f32.mrf.mxu0
        %v3648 = vadd.f32 0.0, %v3647
        %v3649 = vpop.f32.mrf.mxu0
        %3650 = vmatprep.mubr.bf16.mxu0 0
        %3651 = vmatmul.mubr.bf16.gmra.mxu0 %v1704
        %v3652 = vpop.f32.mrf.mxu0
        %v3653 = vadd.f32 0.0, %v3652
        %v3654 = vpop.f32.mrf.mxu0
        %v3655 = vpop.f32.mrf.mxu0
        %v3656 = vadd.f32 0.0, %v3655
        %v3657 = vpop.f32.mrf.mxu0
        %3658 = vmatprep.mubr.bf16.mxu0 0
        %3659 = vmatmul.mubr.bf16.gmra.mxu0 %v3568
        %v3660 = vpop.f32.mrf.mxu0
        %v3661 = vadd.f32 0.0, %v3660
        %v3662 = vpop.f32.mrf.mxu0
        %v3663 = vpop.f32.mrf.mxu0
        %v3664 = vadd.f32 0.0, %v3663
        %v3665 = vpop.f32.mrf.mxu0
        %3666 = vdwg.mxu0
        %v3667 = vadd.f32 %v3529, %v3605
        %v3668 = vadd.f32 %v3530, %v3608
        %v3669 = vadd.f32 %v3531, %v3613
        %v3670 = vadd.f32 %v3532, %v3616
        %v3671 = vadd.f32 %v3533, %v3621
        %v3672 = vadd.f32 %v3534, %v3624
        %v3673 = vadd.f32 %v3535, %v3629
        %v3674 = vadd.f32 %v3536, %v3632
        %v3675 = vadd.f32 %v3537, %v3637
        %v3676 = vadd.f32 %v3538, %v3640
        %v3677 = vadd.f32 %v3539, %v3645
        %v3678 = vadd.f32 %v3540, %v3648
        %v3679 = vadd.f32 %v3541, %v3653
        %v3680 = vadd.f32 %v3542, %v3656
        %v3681 = vadd.f32 %v3543, %v3661
        %v3682 = vadd.f32 %v3544, %v3664
        %v3687 = vrot.slane %v328, 1
        %v3688 = vrot.slane %v329, 1
        %v3689 = vsel %vm404, %v3687, %v3688
        %v3690 = vrot.slane %v354, 1
        %v3691 = vrot.slane %v355, 1
        %v3692 = vsel %vm404, %v3690, %v3691
        %v3695 = vpack.c.bf16 %v3689, %v2817
        %v3696 = vpack.c.bf16 %v3692, %v2820
        %s3697 = scalar_lea.vmem %s1, 304
        %v3698 = vld [vmem:[%s3697] sm:$0xf]
        %v3699 = vld [vmem:[%s3697 + $0x4] sm:$0xf]
        %v3700 = vld [vmem:[%s3697 + $0x8] sm:$0xf]
        %v3701 = vld [vmem:[%s3697 + $0xc] sm:$0xf]
        %v3706 = vunpack.c.l.b16 %v3698
        %v3707 = vunpack.c.l.b16 %v3699
        %v3708 = vunpack.c.l.b16 %v3700
        %v3709 = vunpack.c.l.b16 %v3701
        %v3710 = vpack.c.b16 %v3707, %v3706
        %v3711 = vpack.c.b16 %v3709, %v3708
        %v3715 = vsel %vm494, %v3695, 0
        %v3718 = vsel %vm494, %v3696, 0
        %3720 = vmatprep.subr.bf16.mxu0 0
        %3721 = vmatpush1.bf16.msra.mxu0 0
        %3722 = vmatprep.subr.bf16.mxu0 0
        %3723 = vmatpush1.bf16.msra.mxu0 0
        %3724 = vmatprep.subr.bf16.mxu0 0
        %3725 = vmatpush1.bf16.msra.mxu0 0
        %3726 = vmatprep.subr.bf16.mxu0 0
        %3727 = vmatpush1.bf16.msra.mxu0 0
        %3728 = vmatprep.subr.bf16.mxu0 0
        %3729 = vmatpush1.bf16.msra.mxu0 0
        %3730 = vmatprep.subr.bf16.mxu0 0
        %3731 = vmatpush1.bf16.msra.mxu0 0
        %3732 = vmatprep.subr.bf16.mxu0 0
        %3733 = vmatpush1.bf16.msra.mxu0 %v3711
        %3734 = vmatprep.subr.bf16.mxu0 0
        %3735 = vmatpush1.bf16.msra.mxu0 %v3710
        %3736 = vmatprep.subr.bf16.mxu0 0
        %3737 = vmatpush2.bf16.msra.mxu0 0
        %3738 = vmatprep.subr.bf16.mxu0 0
        %3739 = vmatpush2.bf16.msra.mxu0 0
        %3740 = vmatprep.subr.bf16.mxu0 0
        %3741 = vmatpush2.bf16.msra.mxu0 0
        %3742 = vmatprep.subr.bf16.mxu0 0
        %3743 = vmatpush2.bf16.msra.mxu0 0
        %3744 = vmatprep.subr.bf16.mxu0 0
        %3745 = vmatpush2.bf16.msra.mxu0 0
        %3746 = vmatprep.subr.bf16.mxu0 0
        %3747 = vmatpush2.bf16.msra.mxu0 0
        %3748 = vmatprep.subr.bf16.mxu0 0
        %3749 = vmatpush2.bf16.msra.mxu0 0
        %3750 = vmatprep.subr.bf16.mxu0 0
        %3751 = vmatpush2.bf16.msra.mxu0 0
        %3752 = vmatprep.mubr.bf16.mxu0 0
        %3753 = vmatmul.mubr.bf16.gmra.mxu0 %v1860
        %v3754 = vpop.f32.mrf.mxu0
        %v3755 = vadd.f32 0.0, %v3754
        %v3756 = vpop.f32.mrf.mxu0
        %v3757 = vpop.f32.mrf.mxu0
        %v3758 = vadd.f32 0.0, %v3757
        %v3759 = vpop.f32.mrf.mxu0
        %3760 = vmatprep.mubr.bf16.mxu0 0
        %3761 = vmatmul.mubr.bf16.gmra.mxu0 %v1863
        %v3762 = vpop.f32.mrf.mxu0
        %v3763 = vadd.f32 0.0, %v3762
        %v3764 = vpop.f32.mrf.mxu0
        %v3765 = vpop.f32.mrf.mxu0
        %v3766 = vadd.f32 0.0, %v3765
        %v3767 = vpop.f32.mrf.mxu0
        %3768 = vmatprep.mubr.bf16.mxu0 0
        %3769 = vmatmul.mubr.bf16.gmra.mxu0 %v1866
        %v3770 = vpop.f32.mrf.mxu0
        %v3771 = vadd.f32 0.0, %v3770
        %v3772 = vpop.f32.mrf.mxu0
        %v3773 = vpop.f32.mrf.mxu0
        %v3774 = vadd.f32 0.0, %v3773
        %v3775 = vpop.f32.mrf.mxu0
        %3776 = vmatprep.mubr.bf16.mxu0 0
        %3777 = vmatmul.mubr.bf16.gmra.mxu0 %v3715
        %v3778 = vpop.f32.mrf.mxu0
        %v3779 = vadd.f32 0.0, %v3778
        %v3780 = vpop.f32.mrf.mxu0
        %v3781 = vpop.f32.mrf.mxu0
        %v3782 = vadd.f32 0.0, %v3781
        %v3783 = vpop.f32.mrf.mxu0
        %3784 = vmatprep.mubr.bf16.mxu0 0
        %3785 = vmatmul.mubr.bf16.gmra.mxu0 %v1872
        %v3786 = vpop.f32.mrf.mxu0
        %v3787 = vadd.f32 0.0, %v3786
        %v3788 = vpop.f32.mrf.mxu0
        %v3789 = vpop.f32.mrf.mxu0
        %v3790 = vadd.f32 0.0, %v3789
        %v3791 = vpop.f32.mrf.mxu0
        %3792 = vmatprep.mubr.bf16.mxu0 0
        %3793 = vmatmul.mubr.bf16.gmra.mxu0 %v1875
        %v3794 = vpop.f32.mrf.mxu0
        %v3795 = vadd.f32 0.0, %v3794
        %v3796 = vpop.f32.mrf.mxu0
        %v3797 = vpop.f32.mrf.mxu0
        %v3798 = vadd.f32 0.0, %v3797
        %v3799 = vpop.f32.mrf.mxu0
        %3800 = vmatprep.mubr.bf16.mxu0 0
        %3801 = vmatmul.mubr.bf16.gmra.mxu0 %v1878
        %v3802 = vpop.f32.mrf.mxu0
        %v3803 = vadd.f32 0.0, %v3802
        %v3804 = vpop.f32.mrf.mxu0
        %v3805 = vpop.f32.mrf.mxu0
        %v3806 = vadd.f32 0.0, %v3805
        %v3807 = vpop.f32.mrf.mxu0
        %3808 = vmatprep.mubr.bf16.mxu0 0
        %3809 = vmatmul.mubr.bf16.gmra.mxu0 %v3718
        %v3810 = vpop.f32.mrf.mxu0
        %v3811 = vadd.f32 0.0, %v3810
        %v3812 = vpop.f32.mrf.mxu0
        %v3813 = vpop.f32.mrf.mxu0
        %v3814 = vadd.f32 0.0, %v3813
        %v3815 = vpop.f32.mrf.mxu0
        %3816 = vdwg.mxu0
        %v3817 = vadd.f32 %v3667, %v3755
        %v3818 = vadd.f32 %v3668, %v3758
        %v3819 = vadd.f32 %v3669, %v3763
        %v3820 = vadd.f32 %v3670, %v3766
        %v3821 = vadd.f32 %v3671, %v3771
        %v3822 = vadd.f32 %v3672, %v3774
        %v3823 = vadd.f32 %v3673, %v3779
        %v3824 = vadd.f32 %v3674, %v3782
        %v3825 = vadd.f32 %v3675, %v3787
        %v3826 = vadd.f32 %v3676, %v3790
        %v3827 = vadd.f32 %v3677, %v3795
        %v3828 = vadd.f32 %v3678, %v3798
        %v3829 = vadd.f32 %v3679, %v3803
        %v3830 = vadd.f32 %v3680, %v3806
        %v3831 = vadd.f32 %v3681, %v3811
        %v3832 = vadd.f32 %v3682, %v3814
        %v3833 = vrot.slane %v328, 2
        %v3834 = vrot.slane %v329, 2
        %v3835 = vsel %vm749, %v3833, %v3834
        %v3836 = vrot.slane %v354, 2
        %v3837 = vrot.slane %v355, 2
        %v3838 = vsel %vm749, %v3836, %v3837
        %v3841 = vpack.c.bf16 %v3835, %v2963
        %v3842 = vpack.c.bf16 %v3838, %v2966
        %s3843 = scalar_lea.vmem %s1, 320
        %v3844 = vld [vmem:[%s3843] sm:$0xf]
        %v3845 = vld [vmem:[%s3843 + $0x4] sm:$0xf]
        %v3846 = vld [vmem:[%s3843 + $0x8] sm:$0xf]
        %v3847 = vld [vmem:[%s3843 + $0xc] sm:$0xf]
        %v3852 = vunpack.c.l.b16 %v3844
        %v3853 = vunpack.c.l.b16 %v3845
        %v3854 = vunpack.c.l.b16 %v3846
        %v3855 = vunpack.c.l.b16 %v3847
        %v3856 = vpack.c.b16 %v3853, %v3852
        %v3857 = vpack.c.b16 %v3855, %v3854
        %v3861 = vsel %vm494, %v3841, 0
        %v3864 = vsel %vm494, %v3842, 0
        %3866 = vmatprep.subr.bf16.mxu0 0
        %3867 = vmatpush1.bf16.msra.mxu0 0
        %3868 = vmatprep.subr.bf16.mxu0 0
        %3869 = vmatpush1.bf16.msra.mxu0 0
        %3870 = vmatprep.subr.bf16.mxu0 0
        %3871 = vmatpush1.bf16.msra.mxu0 0
        %3872 = vmatprep.subr.bf16.mxu0 0
        %3873 = vmatpush1.bf16.msra.mxu0 0
        %3874 = vmatprep.subr.bf16.mxu0 0
        %3875 = vmatpush1.bf16.msra.mxu0 0
        %3876 = vmatprep.subr.bf16.mxu0 0
        %3877 = vmatpush1.bf16.msra.mxu0 0
        %3878 = vmatprep.subr.bf16.mxu0 0
        %3879 = vmatpush1.bf16.msra.mxu0 %v3857
        %3880 = vmatprep.subr.bf16.mxu0 0
        %3881 = vmatpush1.bf16.msra.mxu0 %v3856
        %3882 = vmatprep.subr.bf16.mxu0 0
        %3883 = vmatpush2.bf16.msra.mxu0 0
        %3884 = vmatprep.subr.bf16.mxu0 0
        %3885 = vmatpush2.bf16.msra.mxu0 0
        %3886 = vmatprep.subr.bf16.mxu0 0
        %3887 = vmatpush2.bf16.msra.mxu0 0
        %3888 = vmatprep.subr.bf16.mxu0 0
        %3889 = vmatpush2.bf16.msra.mxu0 0
        %3890 = vmatprep.subr.bf16.mxu0 0
        %3891 = vmatpush2.bf16.msra.mxu0 0
        %3892 = vmatprep.subr.bf16.mxu0 0
        %3893 = vmatpush2.bf16.msra.mxu0 0
        %3894 = vmatprep.subr.bf16.mxu0 0
        %3895 = vmatpush2.bf16.msra.mxu0 0
        %3896 = vmatprep.subr.bf16.mxu0 0
        %3897 = vmatpush2.bf16.msra.mxu0 0
        %3898 = vmatprep.mubr.bf16.mxu0 0
        %3899 = vmatmul.mubr.bf16.gmra.mxu0 %v2030
        %v3900 = vpop.f32.mrf.mxu0
        %v3901 = vadd.f32 0.0, %v3900
        %v3902 = vpop.f32.mrf.mxu0
        %v3903 = vpop.f32.mrf.mxu0
        %v3904 = vadd.f32 0.0, %v3903
        %v3905 = vpop.f32.mrf.mxu0
        %3906 = vmatprep.mubr.bf16.mxu0 0
        %3907 = vmatmul.mubr.bf16.gmra.mxu0 %v2033
        %v3908 = vpop.f32.mrf.mxu0
        %v3909 = vadd.f32 0.0, %v3908
        %v3910 = vpop.f32.mrf.mxu0
        %v3911 = vpop.f32.mrf.mxu0
        %v3912 = vadd.f32 0.0, %v3911
        %v3913 = vpop.f32.mrf.mxu0
        %3914 = vmatprep.mubr.bf16.mxu0 0
        %3915 = vmatmul.mubr.bf16.gmra.mxu0 %v2036
        %v3916 = vpop.f32.mrf.mxu0
        %v3917 = vadd.f32 0.0, %v3916
        %v3918 = vpop.f32.mrf.mxu0
        %v3919 = vpop.f32.mrf.mxu0
        %v3920 = vadd.f32 0.0, %v3919
        %v3921 = vpop.f32.mrf.mxu0
        %3922 = vmatprep.mubr.bf16.mxu0 0
        %3923 = vmatmul.mubr.bf16.gmra.mxu0 %v3861
        %v3924 = vpop.f32.mrf.mxu0
        %v3925 = vadd.f32 0.0, %v3924
        %v3926 = vpop.f32.mrf.mxu0
        %v3927 = vpop.f32.mrf.mxu0
        %v3928 = vadd.f32 0.0, %v3927
        %v3929 = vpop.f32.mrf.mxu0
        %3930 = vmatprep.mubr.bf16.mxu0 0
        %3931 = vmatmul.mubr.bf16.gmra.mxu0 %v2042
        %v3932 = vpop.f32.mrf.mxu0
        %v3933 = vadd.f32 0.0, %v3932
        %v3934 = vpop.f32.mrf.mxu0
        %v3935 = vpop.f32.mrf.mxu0
        %v3936 = vadd.f32 0.0, %v3935
        %v3937 = vpop.f32.mrf.mxu0
        %3938 = vmatprep.mubr.bf16.mxu0 0
        %3939 = vmatmul.mubr.bf16.gmra.mxu0 %v2045
        %v3940 = vpop.f32.mrf.mxu0
        %v3941 = vadd.f32 0.0, %v3940
        %v3942 = vpop.f32.mrf.mxu0
        %v3943 = vpop.f32.mrf.mxu0
        %v3944 = vadd.f32 0.0, %v3943
        %v3945 = vpop.f32.mrf.mxu0
        %3946 = vmatprep.mubr.bf16.mxu0 0
        %3947 = vmatmul.mubr.bf16.gmra.mxu0 %v2048
        %v3948 = vpop.f32.mrf.mxu0
        %v3949 = vadd.f32 0.0, %v3948
        %v3950 = vpop.f32.mrf.mxu0
        %v3951 = vpop.f32.mrf.mxu0
        %v3952 = vadd.f32 0.0, %v3951
        %v3953 = vpop.f32.mrf.mxu0
        %3954 = vmatprep.mubr.bf16.mxu0 0
        %3955 = vmatmul.mubr.bf16.gmra.mxu0 %v3864
        %v3956 = vpop.f32.mrf.mxu0
        %v3957 = vadd.f32 0.0, %v3956
        %v3958 = vpop.f32.mrf.mxu0
        %v3959 = vpop.f32.mrf.mxu0
        %v3960 = vadd.f32 0.0, %v3959
        %v3961 = vpop.f32.mrf.mxu0
        %3962 = vdwg.mxu0
        %v3963 = vadd.f32 %v3817, %v3901
        %v3964 = vadd.f32 %v3818, %v3904
        %v3965 = vadd.f32 %v3819, %v3909
        %v3966 = vadd.f32 %v3820, %v3912
        %v3967 = vadd.f32 %v3821, %v3917
        %v3968 = vadd.f32 %v3822, %v3920
        %v3969 = vadd.f32 %v3823, %v3925
        %v3970 = vadd.f32 %v3824, %v3928
        %v3971 = vadd.f32 %v3825, %v3933
        %v3972 = vadd.f32 %v3826, %v3936
        %v3973 = vadd.f32 %v3827, %v3941
        %v3974 = vadd.f32 %v3828, %v3944
        %v3975 = vadd.f32 %v3829, %v3949
        %v3976 = vadd.f32 %v3830, %v3952
        %v3977 = vadd.f32 %v3831, %v3957
        %v3978 = vadd.f32 %v3832, %v3960
        %v3979 = vrot.slane %v328, 3
        %v3980 = vrot.slane %v329, 3
        %v3981 = vsel %vm976, %v3979, %v3980
        %v3982 = vrot.slane %v354, 3
        %v3983 = vrot.slane %v355, 3
        %v3984 = vsel %vm976, %v3982, %v3983
        %v3987 = vpack.c.bf16 %v3981, %v3109
        %v3988 = vpack.c.bf16 %v3984, %v3112
        %s3989 = scalar_lea.vmem %s1, 336
        %v3990 = vld [vmem:[%s3989] sm:$0xf]
        %v3991 = vld [vmem:[%s3989 + $0x4] sm:$0xf]
        %v3992 = vld [vmem:[%s3989 + $0x8] sm:$0xf]
        %v3993 = vld [vmem:[%s3989 + $0xc] sm:$0xf]
        %v3998 = vunpack.c.l.b16 %v3990
        %v3999 = vunpack.c.l.b16 %v3991
        %v4000 = vunpack.c.l.b16 %v3992
        %v4001 = vunpack.c.l.b16 %v3993
        %v4002 = vpack.c.b16 %v3999, %v3998
        %v4003 = vpack.c.b16 %v4001, %v4000
        %v4007 = vsel %vm494, %v3987, 0
        %v4010 = vsel %vm494, %v3988, 0
        %4012 = vmatprep.subr.bf16.mxu0 0
        %4013 = vmatpush1.bf16.msra.mxu0 0
        %4014 = vmatprep.subr.bf16.mxu0 0
        %4015 = vmatpush1.bf16.msra.mxu0 0
        %4016 = vmatprep.subr.bf16.mxu0 0
        %4017 = vmatpush1.bf16.msra.mxu0 0
        %4018 = vmatprep.subr.bf16.mxu0 0
        %4019 = vmatpush1.bf16.msra.mxu0 0
        %4020 = vmatprep.subr.bf16.mxu0 0
        %4021 = vmatpush1.bf16.msra.mxu0 0
        %4022 = vmatprep.subr.bf16.mxu0 0
        %4023 = vmatpush1.bf16.msra.mxu0 0
        %4024 = vmatprep.subr.bf16.mxu0 0
        %4025 = vmatpush1.bf16.msra.mxu0 %v4003
        %4026 = vmatprep.subr.bf16.mxu0 0
        %4027 = vmatpush1.bf16.msra.mxu0 %v4002
        %4028 = vmatprep.subr.bf16.mxu0 0
        %4029 = vmatpush2.bf16.msra.mxu0 0
        %4030 = vmatprep.subr.bf16.mxu0 0
        %4031 = vmatpush2.bf16.msra.mxu0 0
        %4032 = vmatprep.subr.bf16.mxu0 0
        %4033 = vmatpush2.bf16.msra.mxu0 0
        %4034 = vmatprep.subr.bf16.mxu0 0
        %4035 = vmatpush2.bf16.msra.mxu0 0
        %4036 = vmatprep.subr.bf16.mxu0 0
        %4037 = vmatpush2.bf16.msra.mxu0 0
        %4038 = vmatprep.subr.bf16.mxu0 0
        %4039 = vmatpush2.bf16.msra.mxu0 0
        %4040 = vmatprep.subr.bf16.mxu0 0
        %4041 = vmatpush2.bf16.msra.mxu0 0
        %4042 = vmatprep.subr.bf16.mxu0 0
        %4043 = vmatpush2.bf16.msra.mxu0 0
        %4044 = vmatprep.mubr.bf16.mxu0 0
        %4045 = vmatmul.mubr.bf16.gmra.mxu0 %v2200
        %v4046 = vpop.f32.mrf.mxu0
        %v4047 = vadd.f32 0.0, %v4046
        %v4048 = vpop.f32.mrf.mxu0
        %v4049 = vpop.f32.mrf.mxu0
        %v4050 = vadd.f32 0.0, %v4049
        %v4051 = vpop.f32.mrf.mxu0
        %4052 = vmatprep.mubr.bf16.mxu0 0
        %4053 = vmatmul.mubr.bf16.gmra.mxu0 %v2203
        %v4054 = vpop.f32.mrf.mxu0
        %v4055 = vadd.f32 0.0, %v4054
        %v4056 = vpop.f32.mrf.mxu0
        %v4057 = vpop.f32.mrf.mxu0
        %v4058 = vadd.f32 0.0, %v4057
        %v4059 = vpop.f32.mrf.mxu0
        %4060 = vmatprep.mubr.bf16.mxu0 0
        %4061 = vmatmul.mubr.bf16.gmra.mxu0 %v2206
        %v4062 = vpop.f32.mrf.mxu0
        %v4063 = vadd.f32 0.0, %v4062
        %v4064 = vpop.f32.mrf.mxu0
        %v4065 = vpop.f32.mrf.mxu0
        %v4066 = vadd.f32 0.0, %v4065
        %v4067 = vpop.f32.mrf.mxu0
        %4068 = vmatprep.mubr.bf16.mxu0 0
        %4069 = vmatmul.mubr.bf16.gmra.mxu0 %v4007
        %v4070 = vpop.f32.mrf.mxu0
        %v4071 = vadd.f32 0.0, %v4070
        %v4072 = vpop.f32.mrf.mxu0
        %v4073 = vpop.f32.mrf.mxu0
        %v4074 = vadd.f32 0.0, %v4073
        %v4075 = vpop.f32.mrf.mxu0
        %4076 = vmatprep.mubr.bf16.mxu0 0
        %4077 = vmatmul.mubr.bf16.gmra.mxu0 %v2212
        %v4078 = vpop.f32.mrf.mxu0
        %v4079 = vadd.f32 0.0, %v4078
        %v4080 = vpop.f32.mrf.mxu0
        %v4081 = vpop.f32.mrf.mxu0
        %v4082 = vadd.f32 0.0, %v4081
        %v4083 = vpop.f32.mrf.mxu0
        %4084 = vmatprep.mubr.bf16.mxu0 0
        %4085 = vmatmul.mubr.bf16.gmra.mxu0 %v2215
        %v4086 = vpop.f32.mrf.mxu0
        %v4087 = vadd.f32 0.0, %v4086
        %v4088 = vpop.f32.mrf.mxu0
        %v4089 = vpop.f32.mrf.mxu0
        %v4090 = vadd.f32 0.0, %v4089
        %v4091 = vpop.f32.mrf.mxu0
        %4092 = vmatprep.mubr.bf16.mxu0 0
        %4093 = vmatmul.mubr.bf16.gmra.mxu0 %v2218
        %v4094 = vpop.f32.mrf.mxu0
        %v4095 = vadd.f32 0.0, %v4094
        %v4096 = vpop.f32.mrf.mxu0
        %v4097 = vpop.f32.mrf.mxu0
        %v4098 = vadd.f32 0.0, %v4097
        %v4099 = vpop.f32.mrf.mxu0
        %4100 = vmatprep.mubr.bf16.mxu0 0
        %4101 = vmatmul.mubr.bf16.gmra.mxu0 %v4010
        %v4102 = vpop.f32.mrf.mxu0
        %v4103 = vadd.f32 0.0, %v4102
        %v4104 = vpop.f32.mrf.mxu0
        %v4105 = vpop.f32.mrf.mxu0
        %v4106 = vadd.f32 0.0, %v4105
        %v4107 = vpop.f32.mrf.mxu0
        %4108 = vdwg.mxu0
        %v4109 = vadd.f32 %v3963, %v4047
        %v4110 = vadd.f32 %v3964, %v4050
        %v4111 = vadd.f32 %v3965, %v4055
        %v4112 = vadd.f32 %v3966, %v4058
        %v4113 = vadd.f32 %v3967, %v4063
        %v4114 = vadd.f32 %v3968, %v4066
        %v4115 = vadd.f32 %v3969, %v4071
        %v4116 = vadd.f32 %v3970, %v4074
        %v4117 = vadd.f32 %v3971, %v4079
        %v4118 = vadd.f32 %v3972, %v4082
        %v4119 = vadd.f32 %v3973, %v4087
        %v4120 = vadd.f32 %v3974, %v4090
        %v4121 = vadd.f32 %v3975, %v4095
        %v4122 = vadd.f32 %v3976, %v4098
        %v4123 = vadd.f32 %v3977, %v4103
        %v4124 = vadd.f32 %v3978, %v4106
        %v4125 = vrot.slane %v328, 4
        %v4126 = vrot.slane %v329, 4
        %v4127 = vsel %vm1203, %v4125, %v4126
        %v4128 = vrot.slane %v354, 4
        %v4129 = vrot.slane %v355, 4
        %v4130 = vsel %vm1203, %v4128, %v4129
        %v4133 = vpack.c.bf16 %v4127, %v3255
        %v4134 = vpack.c.bf16 %v4130, %v3258
        %s4135 = scalar_lea.vmem %s1, 352
        %v4136 = vld [vmem:[%s4135] sm:$0xf]
        %v4137 = vld [vmem:[%s4135 + $0x4] sm:$0xf]
        %v4138 = vld [vmem:[%s4135 + $0x8] sm:$0xf]
        %v4139 = vld [vmem:[%s4135 + $0xc] sm:$0xf]
        %v4144 = vunpack.c.l.b16 %v4136
        %v4145 = vunpack.c.l.b16 %v4137
        %v4146 = vunpack.c.l.b16 %v4138
        %v4147 = vunpack.c.l.b16 %v4139
        %v4148 = vpack.c.b16 %v4145, %v4144
        %v4149 = vpack.c.b16 %v4147, %v4146
        %v4153 = vsel %vm494, %v4133, 0
        %v4156 = vsel %vm494, %v4134, 0
        %4158 = vmatprep.subr.bf16.mxu0 0
        %4159 = vmatpush1.bf16.msra.mxu0 0
        %4160 = vmatprep.subr.bf16.mxu0 0
        %4161 = vmatpush1.bf16.msra.mxu0 0
        %4162 = vmatprep.subr.bf16.mxu0 0
        %4163 = vmatpush1.bf16.msra.mxu0 0
        %4164 = vmatprep.subr.bf16.mxu0 0
        %4165 = vmatpush1.bf16.msra.mxu0 0
        %4166 = vmatprep.subr.bf16.mxu0 0
        %4167 = vmatpush1.bf16.msra.mxu0 0
        %4168 = vmatprep.subr.bf16.mxu0 0
        %4169 = vmatpush1.bf16.msra.mxu0 0
        %4170 = vmatprep.subr.bf16.mxu0 0
        %4171 = vmatpush1.bf16.msra.mxu0 %v4149
        %4172 = vmatprep.subr.bf16.mxu0 0
        %4173 = vmatpush1.bf16.msra.mxu0 %v4148
        %4174 = vmatprep.subr.bf16.mxu0 0
        %4175 = vmatpush2.bf16.msra.mxu0 0
        %4176 = vmatprep.subr.bf16.mxu0 0
        %4177 = vmatpush2.bf16.msra.mxu0 0
        %4178 = vmatprep.subr.bf16.mxu0 0
        %4179 = vmatpush2.bf16.msra.mxu0 0
        %4180 = vmatprep.subr.bf16.mxu0 0
        %4181 = vmatpush2.bf16.msra.mxu0 0
        %4182 = vmatprep.subr.bf16.mxu0 0
        %4183 = vmatpush2.bf16.msra.mxu0 0
        %4184 = vmatprep.subr.bf16.mxu0 0
        %4185 = vmatpush2.bf16.msra.mxu0 0
        %4186 = vmatprep.subr.bf16.mxu0 0
        %4187 = vmatpush2.bf16.msra.mxu0 0
        %4188 = vmatprep.subr.bf16.mxu0 0
        %4189 = vmatpush2.bf16.msra.mxu0 0
        %4190 = vmatprep.mubr.bf16.mxu0 0
        %4191 = vmatmul.mubr.bf16.gmra.mxu0 %v2370
        %v4192 = vpop.f32.mrf.mxu0
        %v4193 = vadd.f32 0.0, %v4192
        %v4194 = vpop.f32.mrf.mxu0
        %v4195 = vpop.f32.mrf.mxu0
        %v4196 = vadd.f32 0.0, %v4195
        %v4197 = vpop.f32.mrf.mxu0
        %4198 = vmatprep.mubr.bf16.mxu0 0
        %4199 = vmatmul.mubr.bf16.gmra.mxu0 %v2373
        %v4200 = vpop.f32.mrf.mxu0
        %v4201 = vadd.f32 0.0, %v4200
        %v4202 = vpop.f32.mrf.mxu0
        %v4203 = vpop.f32.mrf.mxu0
        %v4204 = vadd.f32 0.0, %v4203
        %v4205 = vpop.f32.mrf.mxu0
        %4206 = vmatprep.mubr.bf16.mxu0 0
        %4207 = vmatmul.mubr.bf16.gmra.mxu0 %v2376
        %v4208 = vpop.f32.mrf.mxu0
        %v4209 = vadd.f32 0.0, %v4208
        %v4210 = vpop.f32.mrf.mxu0
        %v4211 = vpop.f32.mrf.mxu0
        %v4212 = vadd.f32 0.0, %v4211
        %v4213 = vpop.f32.mrf.mxu0
        %4214 = vmatprep.mubr.bf16.mxu0 0
        %4215 = vmatmul.mubr.bf16.gmra.mxu0 %v4153
        %v4216 = vpop.f32.mrf.mxu0
        %v4217 = vadd.f32 0.0, %v4216
        %v4218 = vpop.f32.mrf.mxu0
        %v4219 = vpop.f32.mrf.mxu0
        %v4220 = vadd.f32 0.0, %v4219
        %v4221 = vpop.f32.mrf.mxu0
        %4222 = vmatprep.mubr.bf16.mxu0 0
        %4223 = vmatmul.mubr.bf16.gmra.mxu0 %v2382
        %v4224 = vpop.f32.mrf.mxu0
        %v4225 = vadd.f32 0.0, %v4224
        %v4226 = vpop.f32.mrf.mxu0
        %v4227 = vpop.f32.mrf.mxu0
        %v4228 = vadd.f32 0.0, %v4227
        %v4229 = vpop.f32.mrf.mxu0
        %4230 = vmatprep.mubr.bf16.mxu0 0
        %4231 = vmatmul.mubr.bf16.gmra.mxu0 %v2385
        %v4232 = vpop.f32.mrf.mxu0
        %v4233 = vadd.f32 0.0, %v4232
        %v4234 = vpop.f32.mrf.mxu0
        %v4235 = vpop.f32.mrf.mxu0
        %v4236 = vadd.f32 0.0, %v4235
        %v4237 = vpop.f32.mrf.mxu0
        %4238 = vmatprep.mubr.bf16.mxu0 0
        %4239 = vmatmul.mubr.bf16.gmra.mxu0 %v2388
        %v4240 = vpop.f32.mrf.mxu0
        %v4241 = vadd.f32 0.0, %v4240
        %v4242 = vpop.f32.mrf.mxu0
        %v4243 = vpop.f32.mrf.mxu0
        %v4244 = vadd.f32 0.0, %v4243
        %v4245 = vpop.f32.mrf.mxu0
        %4246 = vmatprep.mubr.bf16.mxu0 0
        %4247 = vmatmul.mubr.bf16.gmra.mxu0 %v4156
        %v4248 = vpop.f32.mrf.mxu0
        %v4249 = vadd.f32 0.0, %v4248
        %v4250 = vpop.f32.mrf.mxu0
        %v4251 = vpop.f32.mrf.mxu0
        %v4252 = vadd.f32 0.0, %v4251
        %v4253 = vpop.f32.mrf.mxu0
        %4254 = vdwg.mxu0
        %v4255 = vadd.f32 %v4109, %v4193
        %v4256 = vadd.f32 %v4110, %v4196
        %v4257 = vadd.f32 %v4111, %v4201
        %v4258 = vadd.f32 %v4112, %v4204
        %v4259 = vadd.f32 %v4113, %v4209
        %v4260 = vadd.f32 %v4114, %v4212
        %v4261 = vadd.f32 %v4115, %v4217
        %v4262 = vadd.f32 %v4116, %v4220
        %v4263 = vadd.f32 %v4117, %v4225
        %v4264 = vadd.f32 %v4118, %v4228
        %v4265 = vadd.f32 %v4119, %v4233
        %v4266 = vadd.f32 %v4120, %v4236
        %v4267 = vadd.f32 %v4121, %v4241
        %v4268 = vadd.f32 %v4122, %v4244
        %v4269 = vadd.f32 %v4123, %v4249
        %v4270 = vadd.f32 %v4124, %v4252
        %v4271 = vrot.slane %v328, 5
        %v4272 = vrot.slane %v329, 5
        %v4273 = vsel %vm1430, %v4271, %v4272
        %v4274 = vrot.slane %v354, 5
        %v4275 = vrot.slane %v355, 5
        %v4276 = vsel %vm1430, %v4274, %v4275
        %v4279 = vpack.c.bf16 %v4273, %v3401
        %v4280 = vpack.c.bf16 %v4276, %v3404
        %s4281 = scalar_lea.vmem %s1, 368
        %v4282 = vld [vmem:[%s4281] sm:$0xf]
        %v4283 = vld [vmem:[%s4281 + $0x4] sm:$0xf]
        %v4284 = vld [vmem:[%s4281 + $0x8] sm:$0xf]
        %v4285 = vld [vmem:[%s4281 + $0xc] sm:$0xf]
        %v4290 = vunpack.c.l.b16 %v4282
        %v4291 = vunpack.c.l.b16 %v4283
        %v4292 = vunpack.c.l.b16 %v4284
        %v4293 = vunpack.c.l.b16 %v4285
        %v4294 = vpack.c.b16 %v4291, %v4290
        %v4295 = vpack.c.b16 %v4293, %v4292
        %v4299 = vsel %vm494, %v4279, 0
        %v4302 = vsel %vm494, %v4280, 0
        %4304 = vmatprep.subr.bf16.mxu0 0
        %4305 = vmatpush1.bf16.msra.mxu0 0
        %4306 = vmatprep.subr.bf16.mxu0 0
        %4307 = vmatpush1.bf16.msra.mxu0 0
        %4308 = vmatprep.subr.bf16.mxu0 0
        %4309 = vmatpush1.bf16.msra.mxu0 0
        %4310 = vmatprep.subr.bf16.mxu0 0
        %4311 = vmatpush1.bf16.msra.mxu0 0
        %4312 = vmatprep.subr.bf16.mxu0 0
        %4313 = vmatpush1.bf16.msra.mxu0 0
        %4314 = vmatprep.subr.bf16.mxu0 0
        %4315 = vmatpush1.bf16.msra.mxu0 0
        %4316 = vmatprep.subr.bf16.mxu0 0
        %4317 = vmatpush1.bf16.msra.mxu0 %v4295
        %4318 = vmatprep.subr.bf16.mxu0 0
        %4319 = vmatpush1.bf16.msra.mxu0 %v4294
        %4320 = vmatprep.subr.bf16.mxu0 0
        %4321 = vmatpush2.bf16.msra.mxu0 0
        %4322 = vmatprep.subr.bf16.mxu0 0
        %4323 = vmatpush2.bf16.msra.mxu0 0
        %4324 = vmatprep.subr.bf16.mxu0 0
        %4325 = vmatpush2.bf16.msra.mxu0 0
        %4326 = vmatprep.subr.bf16.mxu0 0
        %4327 = vmatpush2.bf16.msra.mxu0 0
        %4328 = vmatprep.subr.bf16.mxu0 0
        %4329 = vmatpush2.bf16.msra.mxu0 0
        %4330 = vmatprep.subr.bf16.mxu0 0
        %4331 = vmatpush2.bf16.msra.mxu0 0
        %4332 = vmatprep.subr.bf16.mxu0 0
        %4333 = vmatpush2.bf16.msra.mxu0 0
        %4334 = vmatprep.subr.bf16.mxu0 0
        %4335 = vmatpush2.bf16.msra.mxu0 0
        %4336 = vmatprep.mubr.bf16.mxu0 0
        %4337 = vmatmul.mubr.bf16.gmra.mxu0 %v2540
        %v4338 = vpop.f32.mrf.mxu0
        %v4339 = vadd.f32 0.0, %v4338
        %v4340 = vpop.f32.mrf.mxu0
        %v4341 = vpop.f32.mrf.mxu0
        %v4342 = vadd.f32 0.0, %v4341
        %v4343 = vpop.f32.mrf.mxu0
        %4344 = vmatprep.mubr.bf16.mxu0 0
        %4345 = vmatmul.mubr.bf16.gmra.mxu0 %v2543
        %v4346 = vpop.f32.mrf.mxu0
        %v4347 = vadd.f32 0.0, %v4346
        %v4348 = vpop.f32.mrf.mxu0
        %v4349 = vpop.f32.mrf.mxu0
        %v4350 = vadd.f32 0.0, %v4349
        %v4351 = vpop.f32.mrf.mxu0
        %4352 = vmatprep.mubr.bf16.mxu0 0
        %4353 = vmatmul.mubr.bf16.gmra.mxu0 %v2546
        %v4354 = vpop.f32.mrf.mxu0
        %v4355 = vadd.f32 0.0, %v4354
        %v4356 = vpop.f32.mrf.mxu0
        %v4357 = vpop.f32.mrf.mxu0
        %v4358 = vadd.f32 0.0, %v4357
        %v4359 = vpop.f32.mrf.mxu0
        %4360 = vmatprep.mubr.bf16.mxu0 0
        %4361 = vmatmul.mubr.bf16.gmra.mxu0 %v4299
        %v4362 = vpop.f32.mrf.mxu0
        %v4363 = vadd.f32 0.0, %v4362
        %v4364 = vpop.f32.mrf.mxu0
        %v4365 = vpop.f32.mrf.mxu0
        %v4366 = vadd.f32 0.0, %v4365
        %v4367 = vpop.f32.mrf.mxu0
        %4368 = vmatprep.mubr.bf16.mxu0 0
        %4369 = vmatmul.mubr.bf16.gmra.mxu0 %v2552
        %v4370 = vpop.f32.mrf.mxu0
        %v4371 = vadd.f32 0.0, %v4370
        %v4372 = vpop.f32.mrf.mxu0
        %v4373 = vpop.f32.mrf.mxu0
        %v4374 = vadd.f32 0.0, %v4373
        %v4375 = vpop.f32.mrf.mxu0
        %4376 = vmatprep.mubr.bf16.mxu0 0
        %4377 = vmatmul.mubr.bf16.gmra.mxu0 %v2555
        %v4378 = vpop.f32.mrf.mxu0
        %v4379 = vadd.f32 0.0, %v4378
        %v4380 = vpop.f32.mrf.mxu0
        %v4381 = vpop.f32.mrf.mxu0
        %v4382 = vadd.f32 0.0, %v4381
        %v4383 = vpop.f32.mrf.mxu0
        %4384 = vmatprep.mubr.bf16.mxu0 0
        %4385 = vmatmul.mubr.bf16.gmra.mxu0 %v2558
        %v4386 = vpop.f32.mrf.mxu0
        %v4387 = vadd.f32 0.0, %v4386
        %v4388 = vpop.f32.mrf.mxu0
        %v4389 = vpop.f32.mrf.mxu0
        %v4390 = vadd.f32 0.0, %v4389
        %v4391 = vpop.f32.mrf.mxu0
        %4392 = vmatprep.mubr.bf16.mxu0 0
        %4393 = vmatmul.mubr.bf16.gmra.mxu0 %v4302
        %v4394 = vpop.f32.mrf.mxu0
        %v4395 = vadd.f32 0.0, %v4394
        %v4396 = vpop.f32.mrf.mxu0
        %v4397 = vpop.f32.mrf.mxu0
        %v4398 = vadd.f32 0.0, %v4397
        %v4399 = vpop.f32.mrf.mxu0
        %4400 = vdwg.mxu0
        %v4401 = vadd.f32 %v4255, %v4339
        %v4402 = vadd.f32 %v4256, %v4342
        %v4403 = vadd.f32 %v4257, %v4347
        %v4404 = vadd.f32 %v4258, %v4350
        %v4405 = vadd.f32 %v4259, %v4355
        %v4406 = vadd.f32 %v4260, %v4358
        %v4407 = vadd.f32 %v4261, %v4363
        %v4408 = vadd.f32 %v4262, %v4366
        %v4409 = vadd.f32 %v4263, %v4371
        %v4410 = vadd.f32 %v4264, %v4374
        %v4411 = vadd.f32 %v4265, %v4379
        %v4412 = vadd.f32 %v4266, %v4382
        %v4413 = vadd.f32 %v4267, %v4387
        %v4414 = vadd.f32 %v4268, %v4390
        %v4415 = vadd.f32 %v4269, %v4395
        %v4416 = vadd.f32 %v4270, %v4398
        %v4417 = vpack.c.bf16 %v330, %v328
        %v4418 = vpack.c.bf16 %v356, %v354
        %s4419 = scalar_lea.vmem %s1, 384
        %v4420 = vld [vmem:[%s4419] sm:$0xf]
        %v4421 = vld [vmem:[%s4419 + $0x4] sm:$0xf]
        %v4422 = vld [vmem:[%s4419 + $0x8] sm:$0xf]
        %v4423 = vld [vmem:[%s4419 + $0xc] sm:$0xf]
        %v4428 = vunpack.c.l.b16 %v4420
        %v4429 = vunpack.c.l.b16 %v4421
        %v4430 = vunpack.c.l.b16 %v4422
        %v4431 = vunpack.c.l.b16 %v4423
        %v4432 = vpack.c.b16 %v4429, %v4428
        %v4433 = vpack.c.b16 %v4431, %v4430
        %v4437 = vsel %vm494, %v4417, 0
        %v4440 = vsel %vm494, %v4418, 0
        %4442 = vmatprep.subr.bf16.mxu0 0
        %4443 = vmatpush1.bf16.msra.mxu0 0
        %4444 = vmatprep.subr.bf16.mxu0 0
        %4445 = vmatpush1.bf16.msra.mxu0 0
        %4446 = vmatprep.subr.bf16.mxu0 0
        %4447 = vmatpush1.bf16.msra.mxu0 0
        %4448 = vmatprep.subr.bf16.mxu0 0
        %4449 = vmatpush1.bf16.msra.mxu0 0
        %4450 = vmatprep.subr.bf16.mxu0 0
        %4451 = vmatpush1.bf16.msra.mxu0 0
        %4452 = vmatprep.subr.bf16.mxu0 0
        %4453 = vmatpush1.bf16.msra.mxu0 0
        %4454 = vmatprep.subr.bf16.mxu0 0
        %4455 = vmatpush1.bf16.msra.mxu0 %v4433
        %4456 = vmatprep.subr.bf16.mxu0 0
        %4457 = vmatpush1.bf16.msra.mxu0 %v4432
        %4458 = vmatprep.subr.bf16.mxu0 0
        %4459 = vmatpush2.bf16.msra.mxu0 0
        %4460 = vmatprep.subr.bf16.mxu0 0
        %4461 = vmatpush2.bf16.msra.mxu0 0
        %4462 = vmatprep.subr.bf16.mxu0 0
        %4463 = vmatpush2.bf16.msra.mxu0 0
        %4464 = vmatprep.subr.bf16.mxu0 0
        %4465 = vmatpush2.bf16.msra.mxu0 0
        %4466 = vmatprep.subr.bf16.mxu0 0
        %4467 = vmatpush2.bf16.msra.mxu0 0
        %4468 = vmatprep.subr.bf16.mxu0 0
        %4469 = vmatpush2.bf16.msra.mxu0 0
        %4470 = vmatprep.subr.bf16.mxu0 0
        %4471 = vmatpush2.bf16.msra.mxu0 0
        %4472 = vmatprep.subr.bf16.mxu0 0
        %4473 = vmatpush2.bf16.msra.mxu0 0
        %4474 = vmatprep.mubr.bf16.mxu0 0
        %4475 = vmatmul.mubr.bf16.gmra.mxu0 %v635
        %v4476 = vpop.f32.mrf.mxu0
        %v4477 = vadd.f32 0.0, %v4476
        %v4478 = vpop.f32.mrf.mxu0
        %v4479 = vpop.f32.mrf.mxu0
        %v4480 = vadd.f32 0.0, %v4479
        %v4481 = vpop.f32.mrf.mxu0
        %4482 = vmatprep.mubr.bf16.mxu0 0
        %4483 = vmatmul.mubr.bf16.gmra.mxu0 %v638
        %v4484 = vpop.f32.mrf.mxu0
        %v4485 = vadd.f32 0.0, %v4484
        %v4486 = vpop.f32.mrf.mxu0
        %v4487 = vpop.f32.mrf.mxu0
        %v4488 = vadd.f32 0.0, %v4487
        %v4489 = vpop.f32.mrf.mxu0
        %4490 = vmatprep.mubr.bf16.mxu0 0
        %4491 = vmatmul.mubr.bf16.gmra.mxu0 %v2693
        %v4492 = vpop.f32.mrf.mxu0
        %v4493 = vadd.f32 0.0, %v4492
        %v4494 = vpop.f32.mrf.mxu0
        %v4495 = vpop.f32.mrf.mxu0
        %v4496 = vadd.f32 0.0, %v4495
        %v4497 = vpop.f32.mrf.mxu0
        %4498 = vmatprep.mubr.bf16.mxu0 0
        %4499 = vmatmul.mubr.bf16.gmra.mxu0 %v4437
        %v4500 = vpop.f32.mrf.mxu0
        %v4501 = vadd.f32 0.0, %v4500
        %v4502 = vpop.f32.mrf.mxu0
        %v4503 = vpop.f32.mrf.mxu0
        %v4504 = vadd.f32 0.0, %v4503
        %v4505 = vpop.f32.mrf.mxu0
        %4506 = vmatprep.mubr.bf16.mxu0 0
        %4507 = vmatmul.mubr.bf16.gmra.mxu0 %v647
        %v4508 = vpop.f32.mrf.mxu0
        %v4509 = vadd.f32 0.0, %v4508
        %v4510 = vpop.f32.mrf.mxu0
        %v4511 = vpop.f32.mrf.mxu0
        %v4512 = vadd.f32 0.0, %v4511
        %v4513 = vpop.f32.mrf.mxu0
        %4514 = vmatprep.mubr.bf16.mxu0 0
        %4515 = vmatmul.mubr.bf16.gmra.mxu0 %v650
        %v4516 = vpop.f32.mrf.mxu0
        %v4517 = vadd.f32 0.0, %v4516
        %v4518 = vpop.f32.mrf.mxu0
        %v4519 = vpop.f32.mrf.mxu0
        %v4520 = vadd.f32 0.0, %v4519
        %v4521 = vpop.f32.mrf.mxu0
        %4522 = vmatprep.mubr.bf16.mxu0 0
        %4523 = vmatmul.mubr.bf16.gmra.mxu0 %v2696
        %v4524 = vpop.f32.mrf.mxu0
        %v4525 = vadd.f32 0.0, %v4524
        %v4526 = vpop.f32.mrf.mxu0
        %v4527 = vpop.f32.mrf.mxu0
        %v4528 = vadd.f32 0.0, %v4527
        %v4529 = vpop.f32.mrf.mxu0
        %4530 = vmatprep.mubr.bf16.mxu0 0
        %4531 = vmatmul.mubr.bf16.gmra.mxu0 %v4440
        %v4532 = vpop.f32.mrf.mxu0
        %v4533 = vadd.f32 0.0, %v4532
        %v4534 = vpop.f32.mrf.mxu0
        %v4535 = vpop.f32.mrf.mxu0
        %v4536 = vadd.f32 0.0, %v4535
        %v4537 = vpop.f32.mrf.mxu0
        %4538 = vdwg.mxu0
        %v4539 = vadd.f32 %v4401, %v4477
        %v4540 = vadd.f32 %v4402, %v4480
        %v4541 = vadd.f32 %v4403, %v4485
        %v4542 = vadd.f32 %v4404, %v4488
        %v4543 = vadd.f32 %v4405, %v4493
        %v4544 = vadd.f32 %v4406, %v4496
        %v4545 = vadd.f32 %v4407, %v4501
        %v4546 = vadd.f32 %v4408, %v4504
        %v4547 = vadd.f32 %v4409, %v4509
        %v4548 = vadd.f32 %v4410, %v4512
        %v4549 = vadd.f32 %v4411, %v4517
        %v4550 = vadd.f32 %v4412, %v4520
        %v4551 = vadd.f32 %v4413, %v4525
        %v4552 = vadd.f32 %v4414, %v4528
        %v4553 = vadd.f32 %v4415, %v4533
        %v4554 = vadd.f32 %v4416, %v4536
        %v4559 = vrot.slane %v330, 1
        %v4560 = vrot.slane %v331, 1
        %v4561 = vsel %vm404, %v4559, %v4560
        %v4562 = vrot.slane %v356, 1
        %v4563 = vrot.slane %v357, 1
        %v4564 = vsel %vm404, %v4562, %v4563
        %v4567 = vpack.c.bf16 %v4561, %v3689
        %v4568 = vpack.c.bf16 %v4564, %v3692
        %s4569 = scalar_lea.vmem %s1, 400
        %v4570 = vld [vmem:[%s4569] sm:$0xf]
        %v4571 = vld [vmem:[%s4569 + $0x4] sm:$0xf]
        %v4572 = vld [vmem:[%s4569 + $0x8] sm:$0xf]
        %v4573 = vld [vmem:[%s4569 + $0xc] sm:$0xf]
        %v4578 = vunpack.c.l.b16 %v4570
        %v4579 = vunpack.c.l.b16 %v4571
        %v4580 = vunpack.c.l.b16 %v4572
        %v4581 = vunpack.c.l.b16 %v4573
        %v4582 = vpack.c.b16 %v4579, %v4578
        %v4583 = vpack.c.b16 %v4581, %v4580
        %v4587 = vsel %vm494, %v4567, 0
        %v4590 = vsel %vm494, %v4568, 0
        %4592 = vmatprep.subr.bf16.mxu0 0
        %4593 = vmatpush1.bf16.msra.mxu0 0
        %4594 = vmatprep.subr.bf16.mxu0 0
        %4595 = vmatpush1.bf16.msra.mxu0 0
        %4596 = vmatprep.subr.bf16.mxu0 0
        %4597 = vmatpush1.bf16.msra.mxu0 0
        %4598 = vmatprep.subr.bf16.mxu0 0
        %4599 = vmatpush1.bf16.msra.mxu0 0
        %4600 = vmatprep.subr.bf16.mxu0 0
        %4601 = vmatpush1.bf16.msra.mxu0 0
        %4602 = vmatprep.subr.bf16.mxu0 0
        %4603 = vmatpush1.bf16.msra.mxu0 0
        %4604 = vmatprep.subr.bf16.mxu0 0
        %4605 = vmatpush1.bf16.msra.mxu0 %v4583
        %4606 = vmatprep.subr.bf16.mxu0 0
        %4607 = vmatpush1.bf16.msra.mxu0 %v4582
        %4608 = vmatprep.subr.bf16.mxu0 0
        %4609 = vmatpush2.bf16.msra.mxu0 0
        %4610 = vmatprep.subr.bf16.mxu0 0
        %4611 = vmatpush2.bf16.msra.mxu0 0
        %4612 = vmatprep.subr.bf16.mxu0 0
        %4613 = vmatpush2.bf16.msra.mxu0 0
        %4614 = vmatprep.subr.bf16.mxu0 0
        %4615 = vmatpush2.bf16.msra.mxu0 0
        %4616 = vmatprep.subr.bf16.mxu0 0
        %4617 = vmatpush2.bf16.msra.mxu0 0
        %4618 = vmatprep.subr.bf16.mxu0 0
        %4619 = vmatpush2.bf16.msra.mxu0 0
        %4620 = vmatprep.subr.bf16.mxu0 0
        %4621 = vmatpush2.bf16.msra.mxu0 0
        %4622 = vmatprep.subr.bf16.mxu0 0
        %4623 = vmatpush2.bf16.msra.mxu0 0
        %4624 = vmatprep.mubr.bf16.mxu0 0
        %4625 = vmatmul.mubr.bf16.gmra.mxu0 %v502
        %v4626 = vpop.f32.mrf.mxu0
        %v4627 = vadd.f32 0.0, %v4626
        %v4628 = vpop.f32.mrf.mxu0
        %v4629 = vpop.f32.mrf.mxu0
        %v4630 = vadd.f32 0.0, %v4629
        %v4631 = vpop.f32.mrf.mxu0
        %4632 = vmatprep.mubr.bf16.mxu0 0
        %4633 = vmatmul.mubr.bf16.gmra.mxu0 %v505
        %v4634 = vpop.f32.mrf.mxu0
        %v4635 = vadd.f32 0.0, %v4634
        %v4636 = vpop.f32.mrf.mxu0
        %v4637 = vpop.f32.mrf.mxu0
        %v4638 = vadd.f32 0.0, %v4637
        %v4639 = vpop.f32.mrf.mxu0
        %4640 = vmatprep.mubr.bf16.mxu0 0
        %4641 = vmatmul.mubr.bf16.gmra.mxu0 %v2843
        %v4642 = vpop.f32.mrf.mxu0
        %v4643 = vadd.f32 0.0, %v4642
        %v4644 = vpop.f32.mrf.mxu0
        %v4645 = vpop.f32.mrf.mxu0
        %v4646 = vadd.f32 0.0, %v4645
        %v4647 = vpop.f32.mrf.mxu0
        %4648 = vmatprep.mubr.bf16.mxu0 0
        %4649 = vmatmul.mubr.bf16.gmra.mxu0 %v4587
        %v4650 = vpop.f32.mrf.mxu0
        %v4651 = vadd.f32 0.0, %v4650
        %v4652 = vpop.f32.mrf.mxu0
        %v4653 = vpop.f32.mrf.mxu0
        %v4654 = vadd.f32 0.0, %v4653
        %v4655 = vpop.f32.mrf.mxu0
        %4656 = vmatprep.mubr.bf16.mxu0 0
        %4657 = vmatmul.mubr.bf16.gmra.mxu0 %v514
        %v4658 = vpop.f32.mrf.mxu0
        %v4659 = vadd.f32 0.0, %v4658
        %v4660 = vpop.f32.mrf.mxu0
        %v4661 = vpop.f32.mrf.mxu0
        %v4662 = vadd.f32 0.0, %v4661
        %v4663 = vpop.f32.mrf.mxu0
        %4664 = vmatprep.mubr.bf16.mxu0 0
        %4665 = vmatmul.mubr.bf16.gmra.mxu0 %v517
        %v4666 = vpop.f32.mrf.mxu0
        %v4667 = vadd.f32 0.0, %v4666
        %v4668 = vpop.f32.mrf.mxu0
        %v4669 = vpop.f32.mrf.mxu0
        %v4670 = vadd.f32 0.0, %v4669
        %v4671 = vpop.f32.mrf.mxu0
        %4672 = vmatprep.mubr.bf16.mxu0 0
        %4673 = vmatmul.mubr.bf16.gmra.mxu0 %v2846
        %v4674 = vpop.f32.mrf.mxu0
        %v4675 = vadd.f32 0.0, %v4674
        %v4676 = vpop.f32.mrf.mxu0
        %v4677 = vpop.f32.mrf.mxu0
        %v4678 = vadd.f32 0.0, %v4677
        %v4679 = vpop.f32.mrf.mxu0
        %4680 = vmatprep.mubr.bf16.mxu0 0
        %4681 = vmatmul.mubr.bf16.gmra.mxu0 %v4590
        %v4682 = vpop.f32.mrf.mxu0
        %v4683 = vadd.f32 0.0, %v4682
        %v4684 = vpop.f32.mrf.mxu0
        %v4685 = vpop.f32.mrf.mxu0
        %v4686 = vadd.f32 0.0, %v4685
        %v4687 = vpop.f32.mrf.mxu0
        %4688 = vdwg.mxu0
        %v4689 = vadd.f32 %v4539, %v4627
        %v4690 = vadd.f32 %v4540, %v4630
        %v4691 = vadd.f32 %v4541, %v4635
        %v4692 = vadd.f32 %v4542, %v4638
        %v4693 = vadd.f32 %v4543, %v4643
        %v4694 = vadd.f32 %v4544, %v4646
        %v4695 = vadd.f32 %v4545, %v4651
        %v4696 = vadd.f32 %v4546, %v4654
        %v4697 = vadd.f32 %v4547, %v4659
        %v4698 = vadd.f32 %v4548, %v4662
        %v4699 = vadd.f32 %v4549, %v4667
        %v4700 = vadd.f32 %v4550, %v4670
        %v4701 = vadd.f32 %v4551, %v4675
        %v4702 = vadd.f32 %v4552, %v4678
        %v4703 = vadd.f32 %v4553, %v4683
        %v4704 = vadd.f32 %v4554, %v4686
        %v4705 = vrot.slane %v330, 2
        %v4706 = vrot.slane %v331, 2
        %v4707 = vsel %vm749, %v4705, %v4706
        %v4708 = vrot.slane %v356, 2
        %v4709 = vrot.slane %v357, 2
        %v4710 = vsel %vm749, %v4708, %v4709
        %v4713 = vpack.c.bf16 %v4707, %v3835
        %v4714 = vpack.c.bf16 %v4710, %v3838
        %s4715 = scalar_lea.vmem %s1, 416
        %v4716 = vld [vmem:[%s4715] sm:$0xf]
        %v4717 = vld [vmem:[%s4715 + $0x4] sm:$0xf]
        %v4718 = vld [vmem:[%s4715 + $0x8] sm:$0xf]
        %v4719 = vld [vmem:[%s4715 + $0xc] sm:$0xf]
        %v4724 = vunpack.c.l.b16 %v4716
        %v4725 = vunpack.c.l.b16 %v4717
        %v4726 = vunpack.c.l.b16 %v4718
        %v4727 = vunpack.c.l.b16 %v4719
        %v4728 = vpack.c.b16 %v4725, %v4724
        %v4729 = vpack.c.b16 %v4727, %v4726
        %v4733 = vsel %vm494, %v4713, 0
        %v4736 = vsel %vm494, %v4714, 0
        %4738 = vmatprep.subr.bf16.mxu0 0
        %4739 = vmatpush1.bf16.msra.mxu0 0
        %4740 = vmatprep.subr.bf16.mxu0 0
        %4741 = vmatpush1.bf16.msra.mxu0 0
        %4742 = vmatprep.subr.bf16.mxu0 0
        %4743 = vmatpush1.bf16.msra.mxu0 0
        %4744 = vmatprep.subr.bf16.mxu0 0
        %4745 = vmatpush1.bf16.msra.mxu0 0
        %4746 = vmatprep.subr.bf16.mxu0 0
        %4747 = vmatpush1.bf16.msra.mxu0 0
        %4748 = vmatprep.subr.bf16.mxu0 0
        %4749 = vmatpush1.bf16.msra.mxu0 0
        %4750 = vmatprep.subr.bf16.mxu0 0
        %4751 = vmatpush1.bf16.msra.mxu0 %v4729
        %4752 = vmatprep.subr.bf16.mxu0 0
        %4753 = vmatpush1.bf16.msra.mxu0 %v4728
        %4754 = vmatprep.subr.bf16.mxu0 0
        %4755 = vmatpush2.bf16.msra.mxu0 0
        %4756 = vmatprep.subr.bf16.mxu0 0
        %4757 = vmatpush2.bf16.msra.mxu0 0
        %4758 = vmatprep.subr.bf16.mxu0 0
        %4759 = vmatpush2.bf16.msra.mxu0 0
        %4760 = vmatprep.subr.bf16.mxu0 0
        %4761 = vmatpush2.bf16.msra.mxu0 0
        %4762 = vmatprep.subr.bf16.mxu0 0
        %4763 = vmatpush2.bf16.msra.mxu0 0
        %4764 = vmatprep.subr.bf16.mxu0 0
        %4765 = vmatpush2.bf16.msra.mxu0 0
        %4766 = vmatprep.subr.bf16.mxu0 0
        %4767 = vmatpush2.bf16.msra.mxu0 0
        %4768 = vmatprep.subr.bf16.mxu0 0
        %4769 = vmatpush2.bf16.msra.mxu0 0
        %4770 = vmatprep.mubr.bf16.mxu0 0
        %4771 = vmatmul.mubr.bf16.gmra.mxu0 %v846
        %v4772 = vpop.f32.mrf.mxu0
        %v4773 = vadd.f32 0.0, %v4772
        %v4774 = vpop.f32.mrf.mxu0
        %v4775 = vpop.f32.mrf.mxu0
        %v4776 = vadd.f32 0.0, %v4775
        %v4777 = vpop.f32.mrf.mxu0
        %4778 = vmatprep.mubr.bf16.mxu0 0
        %4779 = vmatmul.mubr.bf16.gmra.mxu0 %v849
        %v4780 = vpop.f32.mrf.mxu0
        %v4781 = vadd.f32 0.0, %v4780
        %v4782 = vpop.f32.mrf.mxu0
        %v4783 = vpop.f32.mrf.mxu0
        %v4784 = vadd.f32 0.0, %v4783
        %v4785 = vpop.f32.mrf.mxu0
        %4786 = vmatprep.mubr.bf16.mxu0 0
        %4787 = vmatmul.mubr.bf16.gmra.mxu0 %v2989
        %v4788 = vpop.f32.mrf.mxu0
        %v4789 = vadd.f32 0.0, %v4788
        %v4790 = vpop.f32.mrf.mxu0
        %v4791 = vpop.f32.mrf.mxu0
        %v4792 = vadd.f32 0.0, %v4791
        %v4793 = vpop.f32.mrf.mxu0
        %4794 = vmatprep.mubr.bf16.mxu0 0
        %4795 = vmatmul.mubr.bf16.gmra.mxu0 %v4733
        %v4796 = vpop.f32.mrf.mxu0
        %v4797 = vadd.f32 0.0, %v4796
        %v4798 = vpop.f32.mrf.mxu0
        %v4799 = vpop.f32.mrf.mxu0
        %v4800 = vadd.f32 0.0, %v4799
        %v4801 = vpop.f32.mrf.mxu0
        %4802 = vmatprep.mubr.bf16.mxu0 0
        %4803 = vmatmul.mubr.bf16.gmra.mxu0 %v858
        %v4804 = vpop.f32.mrf.mxu0
        %v4805 = vadd.f32 0.0, %v4804
        %v4806 = vpop.f32.mrf.mxu0
        %v4807 = vpop.f32.mrf.mxu0
        %v4808 = vadd.f32 0.0, %v4807
        %v4809 = vpop.f32.mrf.mxu0
        %4810 = vmatprep.mubr.bf16.mxu0 0
        %4811 = vmatmul.mubr.bf16.gmra.mxu0 %v861
        %v4812 = vpop.f32.mrf.mxu0
        %v4813 = vadd.f32 0.0, %v4812
        %v4814 = vpop.f32.mrf.mxu0
        %v4815 = vpop.f32.mrf.mxu0
        %v4816 = vadd.f32 0.0, %v4815
        %v4817 = vpop.f32.mrf.mxu0
        %4818 = vmatprep.mubr.bf16.mxu0 0
        %4819 = vmatmul.mubr.bf16.gmra.mxu0 %v2992
        %v4820 = vpop.f32.mrf.mxu0
        %v4821 = vadd.f32 0.0, %v4820
        %v4822 = vpop.f32.mrf.mxu0
        %v4823 = vpop.f32.mrf.mxu0
        %v4824 = vadd.f32 0.0, %v4823
        %v4825 = vpop.f32.mrf.mxu0
        %4826 = vmatprep.mubr.bf16.mxu0 0
        %4827 = vmatmul.mubr.bf16.gmra.mxu0 %v4736
        %v4828 = vpop.f32.mrf.mxu0
        %v4829 = vadd.f32 0.0, %v4828
        %v4830 = vpop.f32.mrf.mxu0
        %v4831 = vpop.f32.mrf.mxu0
        %v4832 = vadd.f32 0.0, %v4831
        %v4833 = vpop.f32.mrf.mxu0
        %4834 = vdwg.mxu0
        %v4835 = vadd.f32 %v4689, %v4773
        %v4836 = vadd.f32 %v4690, %v4776
        %v4837 = vadd.f32 %v4691, %v4781
        %v4838 = vadd.f32 %v4692, %v4784
        %v4839 = vadd.f32 %v4693, %v4789
        %v4840 = vadd.f32 %v4694, %v4792
        %v4841 = vadd.f32 %v4695, %v4797
        %v4842 = vadd.f32 %v4696, %v4800
        %v4843 = vadd.f32 %v4697, %v4805
        %v4844 = vadd.f32 %v4698, %v4808
        %v4845 = vadd.f32 %v4699, %v4813
        %v4846 = vadd.f32 %v4700, %v4816
        %v4847 = vadd.f32 %v4701, %v4821
        %v4848 = vadd.f32 %v4702, %v4824
        %v4849 = vadd.f32 %v4703, %v4829
        %v4850 = vadd.f32 %v4704, %v4832
        %v4851 = vrot.slane %v330, 3
        %v4852 = vrot.slane %v331, 3
        %v4853 = vsel %vm976, %v4851, %v4852
        %v4854 = vrot.slane %v356, 3
        %v4855 = vrot.slane %v357, 3
        %v4856 = vsel %vm976, %v4854, %v4855
        %v4859 = vpack.c.bf16 %v4853, %v3981
        %v4860 = vpack.c.bf16 %v4856, %v3984
        %s4861 = scalar_lea.vmem %s1, 432
        %v4862 = vld [vmem:[%s4861] sm:$0xf]
        %v4863 = vld [vmem:[%s4861 + $0x4] sm:$0xf]
        %v4864 = vld [vmem:[%s4861 + $0x8] sm:$0xf]
        %v4865 = vld [vmem:[%s4861 + $0xc] sm:$0xf]
        %v4870 = vunpack.c.l.b16 %v4862
        %v4871 = vunpack.c.l.b16 %v4863
        %v4872 = vunpack.c.l.b16 %v4864
        %v4873 = vunpack.c.l.b16 %v4865
        %v4874 = vpack.c.b16 %v4871, %v4870
        %v4875 = vpack.c.b16 %v4873, %v4872
        %v4879 = vsel %vm494, %v4859, 0
        %v4882 = vsel %vm494, %v4860, 0
        %4884 = vmatprep.subr.bf16.mxu0 0
        %4885 = vmatpush1.bf16.msra.mxu0 0
        %4886 = vmatprep.subr.bf16.mxu0 0
        %4887 = vmatpush1.bf16.msra.mxu0 0
        %4888 = vmatprep.subr.bf16.mxu0 0
        %4889 = vmatpush1.bf16.msra.mxu0 0
        %4890 = vmatprep.subr.bf16.mxu0 0
        %4891 = vmatpush1.bf16.msra.mxu0 0
        %4892 = vmatprep.subr.bf16.mxu0 0
        %4893 = vmatpush1.bf16.msra.mxu0 0
        %4894 = vmatprep.subr.bf16.mxu0 0
        %4895 = vmatpush1.bf16.msra.mxu0 0
        %4896 = vmatprep.subr.bf16.mxu0 0
        %4897 = vmatpush1.bf16.msra.mxu0 %v4875
        %4898 = vmatprep.subr.bf16.mxu0 0
        %4899 = vmatpush1.bf16.msra.mxu0 %v4874
        %4900 = vmatprep.subr.bf16.mxu0 0
        %4901 = vmatpush2.bf16.msra.mxu0 0
        %4902 = vmatprep.subr.bf16.mxu0 0
        %4903 = vmatpush2.bf16.msra.mxu0 0
        %4904 = vmatprep.subr.bf16.mxu0 0
        %4905 = vmatpush2.bf16.msra.mxu0 0
        %4906 = vmatprep.subr.bf16.mxu0 0
        %4907 = vmatpush2.bf16.msra.mxu0 0
        %4908 = vmatprep.subr.bf16.mxu0 0
        %4909 = vmatpush2.bf16.msra.mxu0 0
        %4910 = vmatprep.subr.bf16.mxu0 0
        %4911 = vmatpush2.bf16.msra.mxu0 0
        %4912 = vmatprep.subr.bf16.mxu0 0
        %4913 = vmatpush2.bf16.msra.mxu0 0
        %4914 = vmatprep.subr.bf16.mxu0 0
        %4915 = vmatpush2.bf16.msra.mxu0 0
        %4916 = vmatprep.mubr.bf16.mxu0 0
        %4917 = vmatmul.mubr.bf16.gmra.mxu0 %v1073
        %v4918 = vpop.f32.mrf.mxu0
        %v4919 = vadd.f32 0.0, %v4918
        %v4920 = vpop.f32.mrf.mxu0
        %v4921 = vpop.f32.mrf.mxu0
        %v4922 = vadd.f32 0.0, %v4921
        %v4923 = vpop.f32.mrf.mxu0
        %4924 = vmatprep.mubr.bf16.mxu0 0
        %4925 = vmatmul.mubr.bf16.gmra.mxu0 %v1076
        %v4926 = vpop.f32.mrf.mxu0
        %v4927 = vadd.f32 0.0, %v4926
        %v4928 = vpop.f32.mrf.mxu0
        %v4929 = vpop.f32.mrf.mxu0
        %v4930 = vadd.f32 0.0, %v4929
        %v4931 = vpop.f32.mrf.mxu0
        %4932 = vmatprep.mubr.bf16.mxu0 0
        %4933 = vmatmul.mubr.bf16.gmra.mxu0 %v3135
        %v4934 = vpop.f32.mrf.mxu0
        %v4935 = vadd.f32 0.0, %v4934
        %v4936 = vpop.f32.mrf.mxu0
        %v4937 = vpop.f32.mrf.mxu0
        %v4938 = vadd.f32 0.0, %v4937
        %v4939 = vpop.f32.mrf.mxu0
        %4940 = vmatprep.mubr.bf16.mxu0 0
        %4941 = vmatmul.mubr.bf16.gmra.mxu0 %v4879
        %v4942 = vpop.f32.mrf.mxu0
        %v4943 = vadd.f32 0.0, %v4942
        %v4944 = vpop.f32.mrf.mxu0
        %v4945 = vpop.f32.mrf.mxu0
        %v4946 = vadd.f32 0.0, %v4945
        %v4947 = vpop.f32.mrf.mxu0
        %4948 = vmatprep.mubr.bf16.mxu0 0
        %4949 = vmatmul.mubr.bf16.gmra.mxu0 %v1085
        %v4950 = vpop.f32.mrf.mxu0
        %v4951 = vadd.f32 0.0, %v4950
        %v4952 = vpop.f32.mrf.mxu0
        %v4953 = vpop.f32.mrf.mxu0
        %v4954 = vadd.f32 0.0, %v4953
        %v4955 = vpop.f32.mrf.mxu0
        %4956 = vmatprep.mubr.bf16.mxu0 0
        %4957 = vmatmul.mubr.bf16.gmra.mxu0 %v1088
        %v4958 = vpop.f32.mrf.mxu0
        %v4959 = vadd.f32 0.0, %v4958
        %v4960 = vpop.f32.mrf.mxu0
        %v4961 = vpop.f32.mrf.mxu0
        %v4962 = vadd.f32 0.0, %v4961
        %v4963 = vpop.f32.mrf.mxu0
        %4964 = vmatprep.mubr.bf16.mxu0 0
        %4965 = vmatmul.mubr.bf16.gmra.mxu0 %v3138
        %v4966 = vpop.f32.mrf.mxu0
        %v4967 = vadd.f32 0.0, %v4966
        %v4968 = vpop.f32.mrf.mxu0
        %v4969 = vpop.f32.mrf.mxu0
        %v4970 = vadd.f32 0.0, %v4969
        %v4971 = vpop.f32.mrf.mxu0
        %4972 = vmatprep.mubr.bf16.mxu0 0
        %4973 = vmatmul.mubr.bf16.gmra.mxu0 %v4882
        %v4974 = vpop.f32.mrf.mxu0
        %v4975 = vadd.f32 0.0, %v4974
        %v4976 = vpop.f32.mrf.mxu0
        %v4977 = vpop.f32.mrf.mxu0
        %v4978 = vadd.f32 0.0, %v4977
        %v4979 = vpop.f32.mrf.mxu0
        %4980 = vdwg.mxu0
        %v4981 = vadd.f32 %v4835, %v4919
        %v4982 = vadd.f32 %v4836, %v4922
        %v4983 = vadd.f32 %v4837, %v4927
        %v4984 = vadd.f32 %v4838, %v4930
        %v4985 = vadd.f32 %v4839, %v4935
        %v4986 = vadd.f32 %v4840, %v4938
        %v4987 = vadd.f32 %v4841, %v4943
        %v4988 = vadd.f32 %v4842, %v4946
        %v4989 = vadd.f32 %v4843, %v4951
        %v4990 = vadd.f32 %v4844, %v4954
        %v4991 = vadd.f32 %v4845, %v4959
        %v4992 = vadd.f32 %v4846, %v4962
        %v4993 = vadd.f32 %v4847, %v4967
        %v4994 = vadd.f32 %v4848, %v4970
        %v4995 = vadd.f32 %v4849, %v4975
        %v4996 = vadd.f32 %v4850, %v4978
        %v4997 = vrot.slane %v330, 4
        %v4998 = vrot.slane %v331, 4
        %v4999 = vsel %vm1203, %v4997, %v4998
        %v5000 = vrot.slane %v356, 4
        %v5001 = vrot.slane %v357, 4
        %v5002 = vsel %vm1203, %v5000, %v5001
        %v5005 = vpack.c.bf16 %v4999, %v4127
        %v5006 = vpack.c.bf16 %v5002, %v4130
        %s5007 = scalar_lea.vmem %s1, 448
        %v5008 = vld [vmem:[%s5007] sm:$0xf]
        %v5009 = vld [vmem:[%s5007 + $0x4] sm:$0xf]
        %v5010 = vld [vmem:[%s5007 + $0x8] sm:$0xf]
        %v5011 = vld [vmem:[%s5007 + $0xc] sm:$0xf]
        %v5016 = vunpack.c.l.b16 %v5008
        %v5017 = vunpack.c.l.b16 %v5009
        %v5018 = vunpack.c.l.b16 %v5010
        %v5019 = vunpack.c.l.b16 %v5011
        %v5020 = vpack.c.b16 %v5017, %v5016
        %v5021 = vpack.c.b16 %v5019, %v5018
        %v5025 = vsel %vm494, %v5005, 0
        %v5028 = vsel %vm494, %v5006, 0
        %5030 = vmatprep.subr.bf16.mxu0 0
        %5031 = vmatpush1.bf16.msra.mxu0 0
        %5032 = vmatprep.subr.bf16.mxu0 0
        %5033 = vmatpush1.bf16.msra.mxu0 0
        %5034 = vmatprep.subr.bf16.mxu0 0
        %5035 = vmatpush1.bf16.msra.mxu0 0
        %5036 = vmatprep.subr.bf16.mxu0 0
        %5037 = vmatpush1.bf16.msra.mxu0 0
        %5038 = vmatprep.subr.bf16.mxu0 0
        %5039 = vmatpush1.bf16.msra.mxu0 0
        %5040 = vmatprep.subr.bf16.mxu0 0
        %5041 = vmatpush1.bf16.msra.mxu0 0
        %5042 = vmatprep.subr.bf16.mxu0 0
        %5043 = vmatpush1.bf16.msra.mxu0 %v5021
        %5044 = vmatprep.subr.bf16.mxu0 0
        %5045 = vmatpush1.bf16.msra.mxu0 %v5020
        %5046 = vmatprep.subr.bf16.mxu0 0
        %5047 = vmatpush2.bf16.msra.mxu0 0
        %5048 = vmatprep.subr.bf16.mxu0 0
        %5049 = vmatpush2.bf16.msra.mxu0 0
        %5050 = vmatprep.subr.bf16.mxu0 0
        %5051 = vmatpush2.bf16.msra.mxu0 0
        %5052 = vmatprep.subr.bf16.mxu0 0
        %5053 = vmatpush2.bf16.msra.mxu0 0
        %5054 = vmatprep.subr.bf16.mxu0 0
        %5055 = vmatpush2.bf16.msra.mxu0 0
        %5056 = vmatprep.subr.bf16.mxu0 0
        %5057 = vmatpush2.bf16.msra.mxu0 0
        %5058 = vmatprep.subr.bf16.mxu0 0
        %5059 = vmatpush2.bf16.msra.mxu0 0
        %5060 = vmatprep.subr.bf16.mxu0 0
        %5061 = vmatpush2.bf16.msra.mxu0 0
        %5062 = vmatprep.mubr.bf16.mxu0 0
        %5063 = vmatmul.mubr.bf16.gmra.mxu0 %v1300
        %v5064 = vpop.f32.mrf.mxu0
        %v5065 = vadd.f32 0.0, %v5064
        %v5066 = vpop.f32.mrf.mxu0
        %v5067 = vpop.f32.mrf.mxu0
        %v5068 = vadd.f32 0.0, %v5067
        %v5069 = vpop.f32.mrf.mxu0
        %5070 = vmatprep.mubr.bf16.mxu0 0
        %5071 = vmatmul.mubr.bf16.gmra.mxu0 %v1303
        %v5072 = vpop.f32.mrf.mxu0
        %v5073 = vadd.f32 0.0, %v5072
        %v5074 = vpop.f32.mrf.mxu0
        %v5075 = vpop.f32.mrf.mxu0
        %v5076 = vadd.f32 0.0, %v5075
        %v5077 = vpop.f32.mrf.mxu0
        %5078 = vmatprep.mubr.bf16.mxu0 0
        %5079 = vmatmul.mubr.bf16.gmra.mxu0 %v3281
        %v5080 = vpop.f32.mrf.mxu0
        %v5081 = vadd.f32 0.0, %v5080
        %v5082 = vpop.f32.mrf.mxu0
        %v5083 = vpop.f32.mrf.mxu0
        %v5084 = vadd.f32 0.0, %v5083
        %v5085 = vpop.f32.mrf.mxu0
        %5086 = vmatprep.mubr.bf16.mxu0 0
        %5087 = vmatmul.mubr.bf16.gmra.mxu0 %v5025
        %v5088 = vpop.f32.mrf.mxu0
        %v5089 = vadd.f32 0.0, %v5088
        %v5090 = vpop.f32.mrf.mxu0
        %v5091 = vpop.f32.mrf.mxu0
        %v5092 = vadd.f32 0.0, %v5091
        %v5093 = vpop.f32.mrf.mxu0
        %5094 = vmatprep.mubr.bf16.mxu0 0
        %5095 = vmatmul.mubr.bf16.gmra.mxu0 %v1312
        %v5096 = vpop.f32.mrf.mxu0
        %v5097 = vadd.f32 0.0, %v5096
        %v5098 = vpop.f32.mrf.mxu0
        %v5099 = vpop.f32.mrf.mxu0
        %v5100 = vadd.f32 0.0, %v5099
        %v5101 = vpop.f32.mrf.mxu0
        %5102 = vmatprep.mubr.bf16.mxu0 0
        %5103 = vmatmul.mubr.bf16.gmra.mxu0 %v1315
        %v5104 = vpop.f32.mrf.mxu0
        %v5105 = vadd.f32 0.0, %v5104
        %v5106 = vpop.f32.mrf.mxu0
        %v5107 = vpop.f32.mrf.mxu0
        %v5108 = vadd.f32 0.0, %v5107
        %v5109 = vpop.f32.mrf.mxu0
        %5110 = vmatprep.mubr.bf16.mxu0 0
        %5111 = vmatmul.mubr.bf16.gmra.mxu0 %v3284
        %v5112 = vpop.f32.mrf.mxu0
        %v5113 = vadd.f32 0.0, %v5112
        %v5114 = vpop.f32.mrf.mxu0
        %v5115 = vpop.f32.mrf.mxu0
        %v5116 = vadd.f32 0.0, %v5115
        %v5117 = vpop.f32.mrf.mxu0
        %5118 = vmatprep.mubr.bf16.mxu0 0
        %5119 = vmatmul.mubr.bf16.gmra.mxu0 %v5028
        %v5120 = vpop.f32.mrf.mxu0
        %v5121 = vadd.f32 0.0, %v5120
        %v5122 = vpop.f32.mrf.mxu0
        %v5123 = vpop.f32.mrf.mxu0
        %v5124 = vadd.f32 0.0, %v5123
        %v5125 = vpop.f32.mrf.mxu0
        %5126 = vdwg.mxu0
        %v5127 = vadd.f32 %v4981, %v5065
        %v5128 = vadd.f32 %v4982, %v5068
        %v5129 = vadd.f32 %v4983, %v5073
        %v5130 = vadd.f32 %v4984, %v5076
        %v5131 = vadd.f32 %v4985, %v5081
        %v5132 = vadd.f32 %v4986, %v5084
        %v5133 = vadd.f32 %v4987, %v5089
        %v5134 = vadd.f32 %v4988, %v5092
        %v5135 = vadd.f32 %v4989, %v5097
        %v5136 = vadd.f32 %v4990, %v5100
        %v5137 = vadd.f32 %v4991, %v5105
        %v5138 = vadd.f32 %v4992, %v5108
        %v5139 = vadd.f32 %v4993, %v5113
        %v5140 = vadd.f32 %v4994, %v5116
        %v5141 = vadd.f32 %v4995, %v5121
        %v5142 = vadd.f32 %v4996, %v5124
        %v5143 = vrot.slane %v330, 5
        %v5144 = vrot.slane %v331, 5
        %v5145 = vsel %vm1430, %v5143, %v5144
        %v5146 = vrot.slane %v356, 5
        %v5147 = vrot.slane %v357, 5
        %v5148 = vsel %vm1430, %v5146, %v5147
        %v5151 = vpack.c.bf16 %v5145, %v4273
        %v5152 = vpack.c.bf16 %v5148, %v4276
        %s5153 = scalar_lea.vmem %s1, 464
        %v5154 = vld [vmem:[%s5153] sm:$0xf]
        %v5155 = vld [vmem:[%s5153 + $0x4] sm:$0xf]
        %v5156 = vld [vmem:[%s5153 + $0x8] sm:$0xf]
        %v5157 = vld [vmem:[%s5153 + $0xc] sm:$0xf]
        %v5162 = vunpack.c.l.b16 %v5154
        %v5163 = vunpack.c.l.b16 %v5155
        %v5164 = vunpack.c.l.b16 %v5156
        %v5165 = vunpack.c.l.b16 %v5157
        %v5166 = vpack.c.b16 %v5163, %v5162
        %v5167 = vpack.c.b16 %v5165, %v5164
        %v5171 = vsel %vm494, %v5151, 0
        %v5174 = vsel %vm494, %v5152, 0
        %5176 = vmatprep.subr.bf16.mxu0 0
        %5177 = vmatpush1.bf16.msra.mxu0 0
        %5178 = vmatprep.subr.bf16.mxu0 0
        %5179 = vmatpush1.bf16.msra.mxu0 0
        %5180 = vmatprep.subr.bf16.mxu0 0
        %5181 = vmatpush1.bf16.msra.mxu0 0
        %5182 = vmatprep.subr.bf16.mxu0 0
        %5183 = vmatpush1.bf16.msra.mxu0 0
        %5184 = vmatprep.subr.bf16.mxu0 0
        %5185 = vmatpush1.bf16.msra.mxu0 0
        %5186 = vmatprep.subr.bf16.mxu0 0
        %5187 = vmatpush1.bf16.msra.mxu0 0
        %5188 = vmatprep.subr.bf16.mxu0 0
        %5189 = vmatpush1.bf16.msra.mxu0 %v5167
        %5190 = vmatprep.subr.bf16.mxu0 0
        %5191 = vmatpush1.bf16.msra.mxu0 %v5166
        %5192 = vmatprep.subr.bf16.mxu0 0
        %5193 = vmatpush2.bf16.msra.mxu0 0
        %5194 = vmatprep.subr.bf16.mxu0 0
        %5195 = vmatpush2.bf16.msra.mxu0 0
        %5196 = vmatprep.subr.bf16.mxu0 0
        %5197 = vmatpush2.bf16.msra.mxu0 0
        %5198 = vmatprep.subr.bf16.mxu0 0
        %5199 = vmatpush2.bf16.msra.mxu0 0
        %5200 = vmatprep.subr.bf16.mxu0 0
        %5201 = vmatpush2.bf16.msra.mxu0 0
        %5202 = vmatprep.subr.bf16.mxu0 0
        %5203 = vmatpush2.bf16.msra.mxu0 0
        %5204 = vmatprep.subr.bf16.mxu0 0
        %5205 = vmatpush2.bf16.msra.mxu0 0
        %5206 = vmatprep.subr.bf16.mxu0 0
        %5207 = vmatpush2.bf16.msra.mxu0 0
        %5208 = vmatprep.mubr.bf16.mxu0 0
        %5209 = vmatmul.mubr.bf16.gmra.mxu0 %v1527
        %v5210 = vpop.f32.mrf.mxu0
        %v5211 = vadd.f32 0.0, %v5210
        %v5212 = vpop.f32.mrf.mxu0
        %v5213 = vpop.f32.mrf.mxu0
        %v5214 = vadd.f32 0.0, %v5213
        %v5215 = vpop.f32.mrf.mxu0
        %5216 = vmatprep.mubr.bf16.mxu0 0
        %5217 = vmatmul.mubr.bf16.gmra.mxu0 %v1530
        %v5218 = vpop.f32.mrf.mxu0
        %v5219 = vadd.f32 0.0, %v5218
        %v5220 = vpop.f32.mrf.mxu0
        %v5221 = vpop.f32.mrf.mxu0
        %v5222 = vadd.f32 0.0, %v5221
        %v5223 = vpop.f32.mrf.mxu0
        %5224 = vmatprep.mubr.bf16.mxu0 0
        %5225 = vmatmul.mubr.bf16.gmra.mxu0 %v3427
        %v5226 = vpop.f32.mrf.mxu0
        %v5227 = vadd.f32 0.0, %v5226
        %v5228 = vpop.f32.mrf.mxu0
        %v5229 = vpop.f32.mrf.mxu0
        %v5230 = vadd.f32 0.0, %v5229
        %v5231 = vpop.f32.mrf.mxu0
        %5232 = vmatprep.mubr.bf16.mxu0 0
        %5233 = vmatmul.mubr.bf16.gmra.mxu0 %v5171
        %v5234 = vpop.f32.mrf.mxu0
        %v5235 = vadd.f32 0.0, %v5234
        %v5236 = vpop.f32.mrf.mxu0
        %v5237 = vpop.f32.mrf.mxu0
        %v5238 = vadd.f32 0.0, %v5237
        %v5239 = vpop.f32.mrf.mxu0
        %5240 = vmatprep.mubr.bf16.mxu0 0
        %5241 = vmatmul.mubr.bf16.gmra.mxu0 %v1539
        %v5242 = vpop.f32.mrf.mxu0
        %v5243 = vadd.f32 0.0, %v5242
        %v5244 = vpop.f32.mrf.mxu0
        %v5245 = vpop.f32.mrf.mxu0
        %v5246 = vadd.f32 0.0, %v5245
        %v5247 = vpop.f32.mrf.mxu0
        %5248 = vmatprep.mubr.bf16.mxu0 0
        %5249 = vmatmul.mubr.bf16.gmra.mxu0 %v1542
        %v5250 = vpop.f32.mrf.mxu0
        %v5251 = vadd.f32 0.0, %v5250
        %v5252 = vpop.f32.mrf.mxu0
        %v5253 = vpop.f32.mrf.mxu0
        %v5254 = vadd.f32 0.0, %v5253
        %v5255 = vpop.f32.mrf.mxu0
        %5256 = vmatprep.mubr.bf16.mxu0 0
        %5257 = vmatmul.mubr.bf16.gmra.mxu0 %v3430
        %v5258 = vpop.f32.mrf.mxu0
        %v5259 = vadd.f32 0.0, %v5258
        %v5260 = vpop.f32.mrf.mxu0
        %v5261 = vpop.f32.mrf.mxu0
        %v5262 = vadd.f32 0.0, %v5261
        %v5263 = vpop.f32.mrf.mxu0
        %5264 = vmatprep.mubr.bf16.mxu0 0
        %5265 = vmatmul.mubr.bf16.gmra.mxu0 %v5174
        %v5266 = vpop.f32.mrf.mxu0
        %v5267 = vadd.f32 0.0, %v5266
        %v5268 = vpop.f32.mrf.mxu0
        %v5269 = vpop.f32.mrf.mxu0
        %v5270 = vadd.f32 0.0, %v5269
        %v5271 = vpop.f32.mrf.mxu0
        %5272 = vdwg.mxu0
        %v5273 = vadd.f32 %v5127, %v5211
        %v5274 = vadd.f32 %v5128, %v5214
        %v5275 = vadd.f32 %v5129, %v5219
        %v5276 = vadd.f32 %v5130, %v5222
        %v5277 = vadd.f32 %v5131, %v5227
        %v5278 = vadd.f32 %v5132, %v5230
        %v5279 = vadd.f32 %v5133, %v5235
        %v5280 = vadd.f32 %v5134, %v5238
        %v5281 = vadd.f32 %v5135, %v5243
        %v5282 = vadd.f32 %v5136, %v5246
        %v5283 = vadd.f32 %v5137, %v5251
        %v5284 = vadd.f32 %v5138, %v5254
        %v5285 = vadd.f32 %v5139, %v5259
        %v5286 = vadd.f32 %v5140, %v5262
        %v5287 = vadd.f32 %v5141, %v5267
        %v5288 = vadd.f32 %v5142, %v5270
        %v5289 = vpack.c.bf16 %v332, %v330
        %v5290 = vpack.c.bf16 %v358, %v356
        %s5291 = scalar_lea.vmem %s1, 480
        %v5292 = vld [vmem:[%s5291] sm:$0xf]
        %v5293 = vld [vmem:[%s5291 + $0x4] sm:$0xf]
        %v5294 = vld [vmem:[%s5291 + $0x8] sm:$0xf]
        %v5295 = vld [vmem:[%s5291 + $0xc] sm:$0xf]
        %v5300 = vunpack.c.l.b16 %v5292
        %v5301 = vunpack.c.l.b16 %v5293
        %v5302 = vunpack.c.l.b16 %v5294
        %v5303 = vunpack.c.l.b16 %v5295
        %v5304 = vpack.c.b16 %v5301, %v5300
        %v5305 = vpack.c.b16 %v5303, %v5302
        %v5309 = vsel %vm494, %v5289, 0
        %v5312 = vsel %vm494, %v5290, 0
        %5314 = vmatprep.subr.bf16.mxu0 0
        %5315 = vmatpush1.bf16.msra.mxu0 0
        %5316 = vmatprep.subr.bf16.mxu0 0
        %5317 = vmatpush1.bf16.msra.mxu0 0
        %5318 = vmatprep.subr.bf16.mxu0 0
        %5319 = vmatpush1.bf16.msra.mxu0 0
        %5320 = vmatprep.subr.bf16.mxu0 0
        %5321 = vmatpush1.bf16.msra.mxu0 0
        %5322 = vmatprep.subr.bf16.mxu0 0
        %5323 = vmatpush1.bf16.msra.mxu0 0
        %5324 = vmatprep.subr.bf16.mxu0 0
        %5325 = vmatpush1.bf16.msra.mxu0 0
        %5326 = vmatprep.subr.bf16.mxu0 0
        %5327 = vmatpush1.bf16.msra.mxu0 %v5305
        %5328 = vmatprep.subr.bf16.mxu0 0
        %5329 = vmatpush1.bf16.msra.mxu0 %v5304
        %5330 = vmatprep.subr.bf16.mxu0 0
        %5331 = vmatpush2.bf16.msra.mxu0 0
        %5332 = vmatprep.subr.bf16.mxu0 0
        %5333 = vmatpush2.bf16.msra.mxu0 0
        %5334 = vmatprep.subr.bf16.mxu0 0
        %5335 = vmatpush2.bf16.msra.mxu0 0
        %5336 = vmatprep.subr.bf16.mxu0 0
        %5337 = vmatpush2.bf16.msra.mxu0 0
        %5338 = vmatprep.subr.bf16.mxu0 0
        %5339 = vmatpush2.bf16.msra.mxu0 0
        %5340 = vmatprep.subr.bf16.mxu0 0
        %5341 = vmatpush2.bf16.msra.mxu0 0
        %5342 = vmatprep.subr.bf16.mxu0 0
        %5343 = vmatpush2.bf16.msra.mxu0 0
        %5344 = vmatprep.subr.bf16.mxu0 0
        %5345 = vmatpush2.bf16.msra.mxu0 0
        %5346 = vmatprep.mubr.bf16.mxu0 0
        %5347 = vmatmul.mubr.bf16.gmra.mxu0 %v1689
        %v5348 = vpop.f32.mrf.mxu0
        %v5349 = vadd.f32 0.0, %v5348
        %v5350 = vpop.f32.mrf.mxu0
        %v5351 = vpop.f32.mrf.mxu0
        %v5352 = vadd.f32 0.0, %v5351
        %v5353 = vpop.f32.mrf.mxu0
        %5354 = vmatprep.mubr.bf16.mxu0 0
        %5355 = vmatmul.mubr.bf16.gmra.mxu0 %v1692
        %v5356 = vpop.f32.mrf.mxu0
        %v5357 = vadd.f32 0.0, %v5356
        %v5358 = vpop.f32.mrf.mxu0
        %v5359 = vpop.f32.mrf.mxu0
        %v5360 = vadd.f32 0.0, %v5359
        %v5361 = vpop.f32.mrf.mxu0
        %5362 = vmatprep.mubr.bf16.mxu0 0
        %5363 = vmatmul.mubr.bf16.gmra.mxu0 %v3565
        %v5364 = vpop.f32.mrf.mxu0
        %v5365 = vadd.f32 0.0, %v5364
        %v5366 = vpop.f32.mrf.mxu0
        %v5367 = vpop.f32.mrf.mxu0
        %v5368 = vadd.f32 0.0, %v5367
        %v5369 = vpop.f32.mrf.mxu0
        %5370 = vmatprep.mubr.bf16.mxu0 0
        %5371 = vmatmul.mubr.bf16.gmra.mxu0 %v5309
        %v5372 = vpop.f32.mrf.mxu0
        %v5373 = vadd.f32 0.0, %v5372
        %v5374 = vpop.f32.mrf.mxu0
        %v5375 = vpop.f32.mrf.mxu0
        %v5376 = vadd.f32 0.0, %v5375
        %v5377 = vpop.f32.mrf.mxu0
        %5378 = vmatprep.mubr.bf16.mxu0 0
        %5379 = vmatmul.mubr.bf16.gmra.mxu0 %v1701
        %v5380 = vpop.f32.mrf.mxu0
        %v5381 = vadd.f32 0.0, %v5380
        %v5382 = vpop.f32.mrf.mxu0
        %v5383 = vpop.f32.mrf.mxu0
        %v5384 = vadd.f32 0.0, %v5383
        %v5385 = vpop.f32.mrf.mxu0
        %5386 = vmatprep.mubr.bf16.mxu0 0
        %5387 = vmatmul.mubr.bf16.gmra.mxu0 %v1704
        %v5388 = vpop.f32.mrf.mxu0
        %v5389 = vadd.f32 0.0, %v5388
        %v5390 = vpop.f32.mrf.mxu0
        %v5391 = vpop.f32.mrf.mxu0
        %v5392 = vadd.f32 0.0, %v5391
        %v5393 = vpop.f32.mrf.mxu0
        %5394 = vmatprep.mubr.bf16.mxu0 0
        %5395 = vmatmul.mubr.bf16.gmra.mxu0 %v3568
        %v5396 = vpop.f32.mrf.mxu0
        %v5397 = vadd.f32 0.0, %v5396
        %v5398 = vpop.f32.mrf.mxu0
        %v5399 = vpop.f32.mrf.mxu0
        %v5400 = vadd.f32 0.0, %v5399
        %v5401 = vpop.f32.mrf.mxu0
        %5402 = vmatprep.mubr.bf16.mxu0 0
        %5403 = vmatmul.mubr.bf16.gmra.mxu0 %v5312
        %v5404 = vpop.f32.mrf.mxu0
        %v5405 = vadd.f32 0.0, %v5404
        %v5406 = vpop.f32.mrf.mxu0
        %v5407 = vpop.f32.mrf.mxu0
        %v5408 = vadd.f32 0.0, %v5407
        %v5409 = vpop.f32.mrf.mxu0
        %5410 = vdwg.mxu0
        %v5411 = vadd.f32 %v5273, %v5349
        %v5412 = vadd.f32 %v5274, %v5352
        %v5413 = vadd.f32 %v5275, %v5357
        %v5414 = vadd.f32 %v5276, %v5360
        %v5415 = vadd.f32 %v5277, %v5365
        %v5416 = vadd.f32 %v5278, %v5368
        %v5417 = vadd.f32 %v5279, %v5373
        %v5418 = vadd.f32 %v5280, %v5376
        %v5419 = vadd.f32 %v5281, %v5381
        %v5420 = vadd.f32 %v5282, %v5384
        %v5421 = vadd.f32 %v5283, %v5389
        %v5422 = vadd.f32 %v5284, %v5392
        %v5423 = vadd.f32 %v5285, %v5397
        %v5424 = vadd.f32 %v5286, %v5400
        %v5425 = vadd.f32 %v5287, %v5405
        %v5426 = vadd.f32 %v5288, %v5408
        %v5431 = vrot.slane %v332, 1
        %v5432 = vrot.slane %v333, 1
        %v5433 = vsel %vm404, %v5431, %v5432
        %v5434 = vrot.slane %v358, 1
        %v5435 = vrot.slane %v359, 1
        %v5436 = vsel %vm404, %v5434, %v5435
        %v5439 = vpack.c.bf16 %v5433, %v4561
        %v5440 = vpack.c.bf16 %v5436, %v4564
        %s5441 = scalar_lea.vmem %s1, 496
        %v5442 = vld [vmem:[%s5441] sm:$0xf]
        %v5443 = vld [vmem:[%s5441 + $0x4] sm:$0xf]
        %v5444 = vld [vmem:[%s5441 + $0x8] sm:$0xf]
        %v5445 = vld [vmem:[%s5441 + $0xc] sm:$0xf]
        %v5450 = vunpack.c.l.b16 %v5442
        %v5451 = vunpack.c.l.b16 %v5443
        %v5452 = vunpack.c.l.b16 %v5444
        %v5453 = vunpack.c.l.b16 %v5445
        %v5454 = vpack.c.b16 %v5451, %v5450
        %v5455 = vpack.c.b16 %v5453, %v5452
        %v5459 = vsel %vm494, %v5439, 0
        %v5462 = vsel %vm494, %v5440, 0
        %5464 = vmatprep.subr.bf16.mxu0 0
        %5465 = vmatpush1.bf16.msra.mxu0 0
        %5466 = vmatprep.subr.bf16.mxu0 0
        %5467 = vmatpush1.bf16.msra.mxu0 0
        %5468 = vmatprep.subr.bf16.mxu0 0
        %5469 = vmatpush1.bf16.msra.mxu0 0
        %5470 = vmatprep.subr.bf16.mxu0 0
        %5471 = vmatpush1.bf16.msra.mxu0 0
        %5472 = vmatprep.subr.bf16.mxu0 0
        %5473 = vmatpush1.bf16.msra.mxu0 0
        %5474 = vmatprep.subr.bf16.mxu0 0
        %5475 = vmatpush1.bf16.msra.mxu0 0
        %5476 = vmatprep.subr.bf16.mxu0 0
        %5477 = vmatpush1.bf16.msra.mxu0 %v5455
        %5478 = vmatprep.subr.bf16.mxu0 0
        %5479 = vmatpush1.bf16.msra.mxu0 %v5454
        %5480 = vmatprep.subr.bf16.mxu0 0
        %5481 = vmatpush2.bf16.msra.mxu0 0
        %5482 = vmatprep.subr.bf16.mxu0 0
        %5483 = vmatpush2.bf16.msra.mxu0 0
        %5484 = vmatprep.subr.bf16.mxu0 0
        %5485 = vmatpush2.bf16.msra.mxu0 0
        %5486 = vmatprep.subr.bf16.mxu0 0
        %5487 = vmatpush2.bf16.msra.mxu0 0
        %5488 = vmatprep.subr.bf16.mxu0 0
        %5489 = vmatpush2.bf16.msra.mxu0 0
        %5490 = vmatprep.subr.bf16.mxu0 0
        %5491 = vmatpush2.bf16.msra.mxu0 0
        %5492 = vmatprep.subr.bf16.mxu0 0
        %5493 = vmatpush2.bf16.msra.mxu0 0
        %5494 = vmatprep.subr.bf16.mxu0 0
        %5495 = vmatpush2.bf16.msra.mxu0 0
        %5496 = vmatprep.mubr.bf16.mxu0 0
        %5497 = vmatmul.mubr.bf16.gmra.mxu0 %v1863
        %v5498 = vpop.f32.mrf.mxu0
        %v5499 = vadd.f32 0.0, %v5498
        %v5500 = vpop.f32.mrf.mxu0
        %v5501 = vpop.f32.mrf.mxu0
        %v5502 = vadd.f32 0.0, %v5501
        %v5503 = vpop.f32.mrf.mxu0
        %5504 = vmatprep.mubr.bf16.mxu0 0
        %5505 = vmatmul.mubr.bf16.gmra.mxu0 %v1866
        %v5506 = vpop.f32.mrf.mxu0
        %v5507 = vadd.f32 0.0, %v5506
        %v5508 = vpop.f32.mrf.mxu0
        %v5509 = vpop.f32.mrf.mxu0
        %v5510 = vadd.f32 0.0, %v5509
        %v5511 = vpop.f32.mrf.mxu0
        %5512 = vmatprep.mubr.bf16.mxu0 0
        %5513 = vmatmul.mubr.bf16.gmra.mxu0 %v3715
        %v5514 = vpop.f32.mrf.mxu0
        %v5515 = vadd.f32 0.0, %v5514
        %v5516 = vpop.f32.mrf.mxu0
        %v5517 = vpop.f32.mrf.mxu0
        %v5518 = vadd.f32 0.0, %v5517
        %v5519 = vpop.f32.mrf.mxu0
        %5520 = vmatprep.mubr.bf16.mxu0 0
        %5521 = vmatmul.mubr.bf16.gmra.mxu0 %v5459
        %v5522 = vpop.f32.mrf.mxu0
        %v5523 = vadd.f32 0.0, %v5522
        %v5524 = vpop.f32.mrf.mxu0
        %v5525 = vpop.f32.mrf.mxu0
        %v5526 = vadd.f32 0.0, %v5525
        %v5527 = vpop.f32.mrf.mxu0
        %5528 = vmatprep.mubr.bf16.mxu0 0
        %5529 = vmatmul.mubr.bf16.gmra.mxu0 %v1875
        %v5530 = vpop.f32.mrf.mxu0
        %v5531 = vadd.f32 0.0, %v5530
        %v5532 = vpop.f32.mrf.mxu0
        %v5533 = vpop.f32.mrf.mxu0
        %v5534 = vadd.f32 0.0, %v5533
        %v5535 = vpop.f32.mrf.mxu0
        %5536 = vmatprep.mubr.bf16.mxu0 0
        %5537 = vmatmul.mubr.bf16.gmra.mxu0 %v1878
        %v5538 = vpop.f32.mrf.mxu0
        %v5539 = vadd.f32 0.0, %v5538
        %v5540 = vpop.f32.mrf.mxu0
        %v5541 = vpop.f32.mrf.mxu0
        %v5542 = vadd.f32 0.0, %v5541
        %v5543 = vpop.f32.mrf.mxu0
        %5544 = vmatprep.mubr.bf16.mxu0 0
        %5545 = vmatmul.mubr.bf16.gmra.mxu0 %v3718
        %v5546 = vpop.f32.mrf.mxu0
        %v5547 = vadd.f32 0.0, %v5546
        %v5548 = vpop.f32.mrf.mxu0
        %v5549 = vpop.f32.mrf.mxu0
        %v5550 = vadd.f32 0.0, %v5549
        %v5551 = vpop.f32.mrf.mxu0
        %5552 = vmatprep.mubr.bf16.mxu0 0
        %5553 = vmatmul.mubr.bf16.gmra.mxu0 %v5462
        %v5554 = vpop.f32.mrf.mxu0
        %v5555 = vadd.f32 0.0, %v5554
        %v5556 = vpop.f32.mrf.mxu0
        %v5557 = vpop.f32.mrf.mxu0
        %v5558 = vadd.f32 0.0, %v5557
        %v5559 = vpop.f32.mrf.mxu0
        %5560 = vdwg.mxu0
        %v5561 = vadd.f32 %v5411, %v5499
        %v5562 = vadd.f32 %v5412, %v5502
        %v5563 = vadd.f32 %v5413, %v5507
        %v5564 = vadd.f32 %v5414, %v5510
        %v5565 = vadd.f32 %v5415, %v5515
        %v5566 = vadd.f32 %v5416, %v5518
        %v5567 = vadd.f32 %v5417, %v5523
        %v5568 = vadd.f32 %v5418, %v5526
        %v5569 = vadd.f32 %v5419, %v5531
        %v5570 = vadd.f32 %v5420, %v5534
        %v5571 = vadd.f32 %v5421, %v5539
        %v5572 = vadd.f32 %v5422, %v5542
        %v5573 = vadd.f32 %v5423, %v5547
        %v5574 = vadd.f32 %v5424, %v5550
        %v5575 = vadd.f32 %v5425, %v5555
        %v5576 = vadd.f32 %v5426, %v5558
        %v5577 = vrot.slane %v332, 2
        %v5578 = vrot.slane %v333, 2
        %v5579 = vsel %vm749, %v5577, %v5578
        %v5580 = vrot.slane %v358, 2
        %v5581 = vrot.slane %v359, 2
        %v5582 = vsel %vm749, %v5580, %v5581
        %v5585 = vpack.c.bf16 %v5579, %v4707
        %v5586 = vpack.c.bf16 %v5582, %v4710
        %s5587 = scalar_lea.vmem %s1, 512
        %v5588 = vld [vmem:[%s5587] sm:$0xf]
        %v5589 = vld [vmem:[%s5587 + $0x4] sm:$0xf]
        %v5590 = vld [vmem:[%s5587 + $0x8] sm:$0xf]
        %v5591 = vld [vmem:[%s5587 + $0xc] sm:$0xf]
        %v5596 = vunpack.c.l.b16 %v5588
        %v5597 = vunpack.c.l.b16 %v5589
        %v5598 = vunpack.c.l.b16 %v5590
        %v5599 = vunpack.c.l.b16 %v5591
        %v5600 = vpack.c.b16 %v5597, %v5596
        %v5601 = vpack.c.b16 %v5599, %v5598
        %v5605 = vsel %vm494, %v5585, 0
        %v5608 = vsel %vm494, %v5586, 0
        %5610 = vmatprep.subr.bf16.mxu0 0
        %5611 = vmatpush1.bf16.msra.mxu0 0
        %5612 = vmatprep.subr.bf16.mxu0 0
        %5613 = vmatpush1.bf16.msra.mxu0 0
        %5614 = vmatprep.subr.bf16.mxu0 0
        %5615 = vmatpush1.bf16.msra.mxu0 0
        %5616 = vmatprep.subr.bf16.mxu0 0
        %5617 = vmatpush1.bf16.msra.mxu0 0
        %5618 = vmatprep.subr.bf16.mxu0 0
        %5619 = vmatpush1.bf16.msra.mxu0 0
        %5620 = vmatprep.subr.bf16.mxu0 0
        %5621 = vmatpush1.bf16.msra.mxu0 0
        %5622 = vmatprep.subr.bf16.mxu0 0
        %5623 = vmatpush1.bf16.msra.mxu0 %v5601
        %5624 = vmatprep.subr.bf16.mxu0 0
        %5625 = vmatpush1.bf16.msra.mxu0 %v5600
        %5626 = vmatprep.subr.bf16.mxu0 0
        %5627 = vmatpush2.bf16.msra.mxu0 0
        %5628 = vmatprep.subr.bf16.mxu0 0
        %5629 = vmatpush2.bf16.msra.mxu0 0
        %5630 = vmatprep.subr.bf16.mxu0 0
        %5631 = vmatpush2.bf16.msra.mxu0 0
        %5632 = vmatprep.subr.bf16.mxu0 0
        %5633 = vmatpush2.bf16.msra.mxu0 0
        %5634 = vmatprep.subr.bf16.mxu0 0
        %5635 = vmatpush2.bf16.msra.mxu0 0
        %5636 = vmatprep.subr.bf16.mxu0 0
        %5637 = vmatpush2.bf16.msra.mxu0 0
        %5638 = vmatprep.subr.bf16.mxu0 0
        %5639 = vmatpush2.bf16.msra.mxu0 0
        %5640 = vmatprep.subr.bf16.mxu0 0
        %5641 = vmatpush2.bf16.msra.mxu0 0
        %5642 = vmatprep.mubr.bf16.mxu0 0
        %5643 = vmatmul.mubr.bf16.gmra.mxu0 %v2033
        %v5644 = vpop.f32.mrf.mxu0
        %v5645 = vadd.f32 0.0, %v5644
        %v5646 = vpop.f32.mrf.mxu0
        %v5647 = vpop.f32.mrf.mxu0
        %v5648 = vadd.f32 0.0, %v5647
        %v5649 = vpop.f32.mrf.mxu0
        %5650 = vmatprep.mubr.bf16.mxu0 0
        %5651 = vmatmul.mubr.bf16.gmra.mxu0 %v2036
        %v5652 = vpop.f32.mrf.mxu0
        %v5653 = vadd.f32 0.0, %v5652
        %v5654 = vpop.f32.mrf.mxu0
        %v5655 = vpop.f32.mrf.mxu0
        %v5656 = vadd.f32 0.0, %v5655
        %v5657 = vpop.f32.mrf.mxu0
        %5658 = vmatprep.mubr.bf16.mxu0 0
        %5659 = vmatmul.mubr.bf16.gmra.mxu0 %v3861
        %v5660 = vpop.f32.mrf.mxu0
        %v5661 = vadd.f32 0.0, %v5660
        %v5662 = vpop.f32.mrf.mxu0
        %v5663 = vpop.f32.mrf.mxu0
        %v5664 = vadd.f32 0.0, %v5663
        %v5665 = vpop.f32.mrf.mxu0
        %5666 = vmatprep.mubr.bf16.mxu0 0
        %5667 = vmatmul.mubr.bf16.gmra.mxu0 %v5605
        %v5668 = vpop.f32.mrf.mxu0
        %v5669 = vadd.f32 0.0, %v5668
        %v5670 = vpop.f32.mrf.mxu0
        %v5671 = vpop.f32.mrf.mxu0
        %v5672 = vadd.f32 0.0, %v5671
        %v5673 = vpop.f32.mrf.mxu0
        %5674 = vmatprep.mubr.bf16.mxu0 0
        %5675 = vmatmul.mubr.bf16.gmra.mxu0 %v2045
        %v5676 = vpop.f32.mrf.mxu0
        %v5677 = vadd.f32 0.0, %v5676
        %v5678 = vpop.f32.mrf.mxu0
        %v5679 = vpop.f32.mrf.mxu0
        %v5680 = vadd.f32 0.0, %v5679
        %v5681 = vpop.f32.mrf.mxu0
        %5682 = vmatprep.mubr.bf16.mxu0 0
        %5683 = vmatmul.mubr.bf16.gmra.mxu0 %v2048
        %v5684 = vpop.f32.mrf.mxu0
        %v5685 = vadd.f32 0.0, %v5684
        %v5686 = vpop.f32.mrf.mxu0
        %v5687 = vpop.f32.mrf.mxu0
        %v5688 = vadd.f32 0.0, %v5687
        %v5689 = vpop.f32.mrf.mxu0
        %5690 = vmatprep.mubr.bf16.mxu0 0
        %5691 = vmatmul.mubr.bf16.gmra.mxu0 %v3864
        %v5692 = vpop.f32.mrf.mxu0
        %v5693 = vadd.f32 0.0, %v5692
        %v5694 = vpop.f32.mrf.mxu0
        %v5695 = vpop.f32.mrf.mxu0
        %v5696 = vadd.f32 0.0, %v5695
        %v5697 = vpop.f32.mrf.mxu0
        %5698 = vmatprep.mubr.bf16.mxu0 0
        %5699 = vmatmul.mubr.bf16.gmra.mxu0 %v5608
        %v5700 = vpop.f32.mrf.mxu0
        %v5701 = vadd.f32 0.0, %v5700
        %v5702 = vpop.f32.mrf.mxu0
        %v5703 = vpop.f32.mrf.mxu0
        %v5704 = vadd.f32 0.0, %v5703
        %v5705 = vpop.f32.mrf.mxu0
        %5706 = vdwg.mxu0
        %v5707 = vadd.f32 %v5561, %v5645
        %v5708 = vadd.f32 %v5562, %v5648
        %v5709 = vadd.f32 %v5563, %v5653
        %v5710 = vadd.f32 %v5564, %v5656
        %v5711 = vadd.f32 %v5565, %v5661
        %v5712 = vadd.f32 %v5566, %v5664
        %v5713 = vadd.f32 %v5567, %v5669
        %v5714 = vadd.f32 %v5568, %v5672
        %v5715 = vadd.f32 %v5569, %v5677
        %v5716 = vadd.f32 %v5570, %v5680
        %v5717 = vadd.f32 %v5571, %v5685
        %v5718 = vadd.f32 %v5572, %v5688
        %v5719 = vadd.f32 %v5573, %v5693
        %v5720 = vadd.f32 %v5574, %v5696
        %v5721 = vadd.f32 %v5575, %v5701
        %v5722 = vadd.f32 %v5576, %v5704
        %v5723 = vrot.slane %v332, 3
        %v5724 = vrot.slane %v333, 3
        %v5725 = vsel %vm976, %v5723, %v5724
        %v5726 = vrot.slane %v358, 3
        %v5727 = vrot.slane %v359, 3
        %v5728 = vsel %vm976, %v5726, %v5727
        %v5731 = vpack.c.bf16 %v5725, %v4853
        %v5732 = vpack.c.bf16 %v5728, %v4856
        %s5733 = scalar_lea.vmem %s1, 528
        %v5734 = vld [vmem:[%s5733] sm:$0xf]
        %v5735 = vld [vmem:[%s5733 + $0x4] sm:$0xf]
        %v5736 = vld [vmem:[%s5733 + $0x8] sm:$0xf]
        %v5737 = vld [vmem:[%s5733 + $0xc] sm:$0xf]
        %v5742 = vunpack.c.l.b16 %v5734
        %v5743 = vunpack.c.l.b16 %v5735
        %v5744 = vunpack.c.l.b16 %v5736
        %v5745 = vunpack.c.l.b16 %v5737
        %v5746 = vpack.c.b16 %v5743, %v5742
        %v5747 = vpack.c.b16 %v5745, %v5744
        %v5751 = vsel %vm494, %v5731, 0
        %v5754 = vsel %vm494, %v5732, 0
        %5756 = vmatprep.subr.bf16.mxu0 0
        %5757 = vmatpush1.bf16.msra.mxu0 0
        %5758 = vmatprep.subr.bf16.mxu0 0
        %5759 = vmatpush1.bf16.msra.mxu0 0
        %5760 = vmatprep.subr.bf16.mxu0 0
        %5761 = vmatpush1.bf16.msra.mxu0 0
        %5762 = vmatprep.subr.bf16.mxu0 0
        %5763 = vmatpush1.bf16.msra.mxu0 0
        %5764 = vmatprep.subr.bf16.mxu0 0
        %5765 = vmatpush1.bf16.msra.mxu0 0
        %5766 = vmatprep.subr.bf16.mxu0 0
        %5767 = vmatpush1.bf16.msra.mxu0 0
        %5768 = vmatprep.subr.bf16.mxu0 0
        %5769 = vmatpush1.bf16.msra.mxu0 %v5747
        %5770 = vmatprep.subr.bf16.mxu0 0
        %5771 = vmatpush1.bf16.msra.mxu0 %v5746
        %5772 = vmatprep.subr.bf16.mxu0 0
        %5773 = vmatpush2.bf16.msra.mxu0 0
        %5774 = vmatprep.subr.bf16.mxu0 0
        %5775 = vmatpush2.bf16.msra.mxu0 0
        %5776 = vmatprep.subr.bf16.mxu0 0
        %5777 = vmatpush2.bf16.msra.mxu0 0
        %5778 = vmatprep.subr.bf16.mxu0 0
        %5779 = vmatpush2.bf16.msra.mxu0 0
        %5780 = vmatprep.subr.bf16.mxu0 0
        %5781 = vmatpush2.bf16.msra.mxu0 0
        %5782 = vmatprep.subr.bf16.mxu0 0
        %5783 = vmatpush2.bf16.msra.mxu0 0
        %5784 = vmatprep.subr.bf16.mxu0 0
        %5785 = vmatpush2.bf16.msra.mxu0 0
        %5786 = vmatprep.subr.bf16.mxu0 0
        %5787 = vmatpush2.bf16.msra.mxu0 0
        %5788 = vmatprep.mubr.bf16.mxu0 0
        %5789 = vmatmul.mubr.bf16.gmra.mxu0 %v2203
        %v5790 = vpop.f32.mrf.mxu0
        %v5791 = vadd.f32 0.0, %v5790
        %v5792 = vpop.f32.mrf.mxu0
        %v5793 = vpop.f32.mrf.mxu0
        %v5794 = vadd.f32 0.0, %v5793
        %v5795 = vpop.f32.mrf.mxu0
        %5796 = vmatprep.mubr.bf16.mxu0 0
        %5797 = vmatmul.mubr.bf16.gmra.mxu0 %v2206
        %v5798 = vpop.f32.mrf.mxu0
        %v5799 = vadd.f32 0.0, %v5798
        %v5800 = vpop.f32.mrf.mxu0
        %v5801 = vpop.f32.mrf.mxu0
        %v5802 = vadd.f32 0.0, %v5801
        %v5803 = vpop.f32.mrf.mxu0
        %5804 = vmatprep.mubr.bf16.mxu0 0
        %5805 = vmatmul.mubr.bf16.gmra.mxu0 %v4007
        %v5806 = vpop.f32.mrf.mxu0
        %v5807 = vadd.f32 0.0, %v5806
        %v5808 = vpop.f32.mrf.mxu0
        %v5809 = vpop.f32.mrf.mxu0
        %v5810 = vadd.f32 0.0, %v5809
        %v5811 = vpop.f32.mrf.mxu0
        %5812 = vmatprep.mubr.bf16.mxu0 0
        %5813 = vmatmul.mubr.bf16.gmra.mxu0 %v5751
        %v5814 = vpop.f32.mrf.mxu0
        %v5815 = vadd.f32 0.0, %v5814
        %v5816 = vpop.f32.mrf.mxu0
        %v5817 = vpop.f32.mrf.mxu0
        %v5818 = vadd.f32 0.0, %v5817
        %v5819 = vpop.f32.mrf.mxu0
        %5820 = vmatprep.mubr.bf16.mxu0 0
        %5821 = vmatmul.mubr.bf16.gmra.mxu0 %v2215
        %v5822 = vpop.f32.mrf.mxu0
        %v5823 = vadd.f32 0.0, %v5822
        %v5824 = vpop.f32.mrf.mxu0
        %v5825 = vpop.f32.mrf.mxu0
        %v5826 = vadd.f32 0.0, %v5825
        %v5827 = vpop.f32.mrf.mxu0
        %5828 = vmatprep.mubr.bf16.mxu0 0
        %5829 = vmatmul.mubr.bf16.gmra.mxu0 %v2218
        %v5830 = vpop.f32.mrf.mxu0
        %v5831 = vadd.f32 0.0, %v5830
        %v5832 = vpop.f32.mrf.mxu0
        %v5833 = vpop.f32.mrf.mxu0
        %v5834 = vadd.f32 0.0, %v5833
        %v5835 = vpop.f32.mrf.mxu0
        %5836 = vmatprep.mubr.bf16.mxu0 0
        %5837 = vmatmul.mubr.bf16.gmra.mxu0 %v4010
        %v5838 = vpop.f32.mrf.mxu0
        %v5839 = vadd.f32 0.0, %v5838
        %v5840 = vpop.f32.mrf.mxu0
        %v5841 = vpop.f32.mrf.mxu0
        %v5842 = vadd.f32 0.0, %v5841
        %v5843 = vpop.f32.mrf.mxu0
        %5844 = vmatprep.mubr.bf16.mxu0 0
        %5845 = vmatmul.mubr.bf16.gmra.mxu0 %v5754
        %v5846 = vpop.f32.mrf.mxu0
        %v5847 = vadd.f32 0.0, %v5846
        %v5848 = vpop.f32.mrf.mxu0
        %v5849 = vpop.f32.mrf.mxu0
        %v5850 = vadd.f32 0.0, %v5849
        %v5851 = vpop.f32.mrf.mxu0
        %5852 = vdwg.mxu0
        %v5853 = vadd.f32 %v5707, %v5791
        %v5854 = vadd.f32 %v5708, %v5794
        %v5855 = vadd.f32 %v5709, %v5799
        %v5856 = vadd.f32 %v5710, %v5802
        %v5857 = vadd.f32 %v5711, %v5807
        %v5858 = vadd.f32 %v5712, %v5810
        %v5859 = vadd.f32 %v5713, %v5815
        %v5860 = vadd.f32 %v5714, %v5818
        %v5861 = vadd.f32 %v5715, %v5823
        %v5862 = vadd.f32 %v5716, %v5826
        %v5863 = vadd.f32 %v5717, %v5831
        %v5864 = vadd.f32 %v5718, %v5834
        %v5865 = vadd.f32 %v5719, %v5839
        %v5866 = vadd.f32 %v5720, %v5842
        %v5867 = vadd.f32 %v5721, %v5847
        %v5868 = vadd.f32 %v5722, %v5850
        %v5869 = vrot.slane %v332, 4
        %v5870 = vrot.slane %v333, 4
        %v5871 = vsel %vm1203, %v5869, %v5870
        %v5872 = vrot.slane %v358, 4
        %v5873 = vrot.slane %v359, 4
        %v5874 = vsel %vm1203, %v5872, %v5873
        %v5877 = vpack.c.bf16 %v5871, %v4999
        %v5878 = vpack.c.bf16 %v5874, %v5002
        %s5879 = scalar_lea.vmem %s1, 544
        %v5880 = vld [vmem:[%s5879] sm:$0xf]
        %v5881 = vld [vmem:[%s5879 + $0x4] sm:$0xf]
        %v5882 = vld [vmem:[%s5879 + $0x8] sm:$0xf]
        %v5883 = vld [vmem:[%s5879 + $0xc] sm:$0xf]
        %v5888 = vunpack.c.l.b16 %v5880
        %v5889 = vunpack.c.l.b16 %v5881
        %v5890 = vunpack.c.l.b16 %v5882
        %v5891 = vunpack.c.l.b16 %v5883
        %v5892 = vpack.c.b16 %v5889, %v5888
        %v5893 = vpack.c.b16 %v5891, %v5890
        %v5897 = vsel %vm494, %v5877, 0
        %v5900 = vsel %vm494, %v5878, 0
        %5902 = vmatprep.subr.bf16.mxu0 0
        %5903 = vmatpush1.bf16.msra.mxu0 0
        %5904 = vmatprep.subr.bf16.mxu0 0
        %5905 = vmatpush1.bf16.msra.mxu0 0
        %5906 = vmatprep.subr.bf16.mxu0 0
        %5907 = vmatpush1.bf16.msra.mxu0 0
        %5908 = vmatprep.subr.bf16.mxu0 0
        %5909 = vmatpush1.bf16.msra.mxu0 0
        %5910 = vmatprep.subr.bf16.mxu0 0
        %5911 = vmatpush1.bf16.msra.mxu0 0
        %5912 = vmatprep.subr.bf16.mxu0 0
        %5913 = vmatpush1.bf16.msra.mxu0 0
        %5914 = vmatprep.subr.bf16.mxu0 0
        %5915 = vmatpush1.bf16.msra.mxu0 %v5893
        %5916 = vmatprep.subr.bf16.mxu0 0
        %5917 = vmatpush1.bf16.msra.mxu0 %v5892
        %5918 = vmatprep.subr.bf16.mxu0 0
        %5919 = vmatpush2.bf16.msra.mxu0 0
        %5920 = vmatprep.subr.bf16.mxu0 0
        %5921 = vmatpush2.bf16.msra.mxu0 0
        %5922 = vmatprep.subr.bf16.mxu0 0
        %5923 = vmatpush2.bf16.msra.mxu0 0
        %5924 = vmatprep.subr.bf16.mxu0 0
        %5925 = vmatpush2.bf16.msra.mxu0 0
        %5926 = vmatprep.subr.bf16.mxu0 0
        %5927 = vmatpush2.bf16.msra.mxu0 0
        %5928 = vmatprep.subr.bf16.mxu0 0
        %5929 = vmatpush2.bf16.msra.mxu0 0
        %5930 = vmatprep.subr.bf16.mxu0 0
        %5931 = vmatpush2.bf16.msra.mxu0 0
        %5932 = vmatprep.subr.bf16.mxu0 0
        %5933 = vmatpush2.bf16.msra.mxu0 0
        %5934 = vmatprep.mubr.bf16.mxu0 0
        %5935 = vmatmul.mubr.bf16.gmra.mxu0 %v2373
        %v5936 = vpop.f32.mrf.mxu0
        %v5937 = vadd.f32 0.0, %v5936
        %v5938 = vpop.f32.mrf.mxu0
        %v5939 = vpop.f32.mrf.mxu0
        %v5940 = vadd.f32 0.0, %v5939
        %v5941 = vpop.f32.mrf.mxu0
        %5942 = vmatprep.mubr.bf16.mxu0 0
        %5943 = vmatmul.mubr.bf16.gmra.mxu0 %v2376
        %v5944 = vpop.f32.mrf.mxu0
        %v5945 = vadd.f32 0.0, %v5944
        %v5946 = vpop.f32.mrf.mxu0
        %v5947 = vpop.f32.mrf.mxu0
        %v5948 = vadd.f32 0.0, %v5947
        %v5949 = vpop.f32.mrf.mxu0
        %5950 = vmatprep.mubr.bf16.mxu0 0
        %5951 = vmatmul.mubr.bf16.gmra.mxu0 %v4153
        %v5952 = vpop.f32.mrf.mxu0
        %v5953 = vadd.f32 0.0, %v5952
        %v5954 = vpop.f32.mrf.mxu0
        %v5955 = vpop.f32.mrf.mxu0
        %v5956 = vadd.f32 0.0, %v5955
        %v5957 = vpop.f32.mrf.mxu0
        %5958 = vmatprep.mubr.bf16.mxu0 0
        %5959 = vmatmul.mubr.bf16.gmra.mxu0 %v5897
        %v5960 = vpop.f32.mrf.mxu0
        %v5961 = vadd.f32 0.0, %v5960
        %v5962 = vpop.f32.mrf.mxu0
        %v5963 = vpop.f32.mrf.mxu0
        %v5964 = vadd.f32 0.0, %v5963
        %v5965 = vpop.f32.mrf.mxu0
        %5966 = vmatprep.mubr.bf16.mxu0 0
        %5967 = vmatmul.mubr.bf16.gmra.mxu0 %v2385
        %v5968 = vpop.f32.mrf.mxu0
        %v5969 = vadd.f32 0.0, %v5968
        %v5970 = vpop.f32.mrf.mxu0
        %v5971 = vpop.f32.mrf.mxu0
        %v5972 = vadd.f32 0.0, %v5971
        %v5973 = vpop.f32.mrf.mxu0
        %5974 = vmatprep.mubr.bf16.mxu0 0
        %5975 = vmatmul.mubr.bf16.gmra.mxu0 %v2388
        %v5976 = vpop.f32.mrf.mxu0
        %v5977 = vadd.f32 0.0, %v5976
        %v5978 = vpop.f32.mrf.mxu0
        %v5979 = vpop.f32.mrf.mxu0
        %v5980 = vadd.f32 0.0, %v5979
        %v5981 = vpop.f32.mrf.mxu0
        %5982 = vmatprep.mubr.bf16.mxu0 0
        %5983 = vmatmul.mubr.bf16.gmra.mxu0 %v4156
        %v5984 = vpop.f32.mrf.mxu0
        %v5985 = vadd.f32 0.0, %v5984
        %v5986 = vpop.f32.mrf.mxu0
        %v5987 = vpop.f32.mrf.mxu0
        %v5988 = vadd.f32 0.0, %v5987
        %v5989 = vpop.f32.mrf.mxu0
        %5990 = vmatprep.mubr.bf16.mxu0 0
        %5991 = vmatmul.mubr.bf16.gmra.mxu0 %v5900
        %v5992 = vpop.f32.mrf.mxu0
        %v5993 = vadd.f32 0.0, %v5992
        %v5994 = vpop.f32.mrf.mxu0
        %v5995 = vpop.f32.mrf.mxu0
        %v5996 = vadd.f32 0.0, %v5995
        %v5997 = vpop.f32.mrf.mxu0
        %5998 = vdwg.mxu0
        %v5999 = vadd.f32 %v5853, %v5937
        %v6000 = vadd.f32 %v5854, %v5940
        %v6001 = vadd.f32 %v5855, %v5945
        %v6002 = vadd.f32 %v5856, %v5948
        %v6003 = vadd.f32 %v5857, %v5953
        %v6004 = vadd.f32 %v5858, %v5956
        %v6005 = vadd.f32 %v5859, %v5961
        %v6006 = vadd.f32 %v5860, %v5964
        %v6007 = vadd.f32 %v5861, %v5969
        %v6008 = vadd.f32 %v5862, %v5972
        %v6009 = vadd.f32 %v5863, %v5977
        %v6010 = vadd.f32 %v5864, %v5980
        %v6011 = vadd.f32 %v5865, %v5985
        %v6012 = vadd.f32 %v5866, %v5988
        %v6013 = vadd.f32 %v5867, %v5993
        %v6014 = vadd.f32 %v5868, %v5996
        %v6015 = vrot.slane %v332, 5
        %v6016 = vrot.slane %v333, 5
        %v6017 = vsel %vm1430, %v6015, %v6016
        %v6018 = vrot.slane %v358, 5
        %v6019 = vrot.slane %v359, 5
        %v6020 = vsel %vm1430, %v6018, %v6019
        %v6023 = vpack.c.bf16 %v6017, %v5145
        %v6024 = vpack.c.bf16 %v6020, %v5148
        %s6025 = scalar_lea.vmem %s1, 560
        %v6026 = vld [vmem:[%s6025] sm:$0xf]
        %v6027 = vld [vmem:[%s6025 + $0x4] sm:$0xf]
        %v6028 = vld [vmem:[%s6025 + $0x8] sm:$0xf]
        %v6029 = vld [vmem:[%s6025 + $0xc] sm:$0xf]
        %v6034 = vunpack.c.l.b16 %v6026
        %v6035 = vunpack.c.l.b16 %v6027
        %v6036 = vunpack.c.l.b16 %v6028
        %v6037 = vunpack.c.l.b16 %v6029
        %v6038 = vpack.c.b16 %v6035, %v6034
        %v6039 = vpack.c.b16 %v6037, %v6036
        %v6043 = vsel %vm494, %v6023, 0
        %v6046 = vsel %vm494, %v6024, 0
        %6048 = vmatprep.subr.bf16.mxu0 0
        %6049 = vmatpush1.bf16.msra.mxu0 0
        %6050 = vmatprep.subr.bf16.mxu0 0
        %6051 = vmatpush1.bf16.msra.mxu0 0
        %6052 = vmatprep.subr.bf16.mxu0 0
        %6053 = vmatpush1.bf16.msra.mxu0 0
        %6054 = vmatprep.subr.bf16.mxu0 0
        %6055 = vmatpush1.bf16.msra.mxu0 0
        %6056 = vmatprep.subr.bf16.mxu0 0
        %6057 = vmatpush1.bf16.msra.mxu0 0
        %6058 = vmatprep.subr.bf16.mxu0 0
        %6059 = vmatpush1.bf16.msra.mxu0 0
        %6060 = vmatprep.subr.bf16.mxu0 0
        %6061 = vmatpush1.bf16.msra.mxu0 %v6039
        %6062 = vmatprep.subr.bf16.mxu0 0
        %6063 = vmatpush1.bf16.msra.mxu0 %v6038
        %6064 = vmatprep.subr.bf16.mxu0 0
        %6065 = vmatpush2.bf16.msra.mxu0 0
        %6066 = vmatprep.subr.bf16.mxu0 0
        %6067 = vmatpush2.bf16.msra.mxu0 0
        %6068 = vmatprep.subr.bf16.mxu0 0
        %6069 = vmatpush2.bf16.msra.mxu0 0
        %6070 = vmatprep.subr.bf16.mxu0 0
        %6071 = vmatpush2.bf16.msra.mxu0 0
        %6072 = vmatprep.subr.bf16.mxu0 0
        %6073 = vmatpush2.bf16.msra.mxu0 0
        %6074 = vmatprep.subr.bf16.mxu0 0
        %6075 = vmatpush2.bf16.msra.mxu0 0
        %6076 = vmatprep.subr.bf16.mxu0 0
        %6077 = vmatpush2.bf16.msra.mxu0 0
        %6078 = vmatprep.subr.bf16.mxu0 0
        %6079 = vmatpush2.bf16.msra.mxu0 0
        %6080 = vmatprep.mubr.bf16.mxu0 0
        %6081 = vmatmul.mubr.bf16.gmra.mxu0 %v2543
        %v6082 = vpop.f32.mrf.mxu0
        %v6083 = vadd.f32 0.0, %v6082
        %v6084 = vpop.f32.mrf.mxu0
        %v6085 = vpop.f32.mrf.mxu0
        %v6086 = vadd.f32 0.0, %v6085
        %v6087 = vpop.f32.mrf.mxu0
        %6088 = vmatprep.mubr.bf16.mxu0 0
        %6089 = vmatmul.mubr.bf16.gmra.mxu0 %v2546
        %v6090 = vpop.f32.mrf.mxu0
        %v6091 = vadd.f32 0.0, %v6090
        %v6092 = vpop.f32.mrf.mxu0
        %v6093 = vpop.f32.mrf.mxu0
        %v6094 = vadd.f32 0.0, %v6093
        %v6095 = vpop.f32.mrf.mxu0
        %6096 = vmatprep.mubr.bf16.mxu0 0
        %6097 = vmatmul.mubr.bf16.gmra.mxu0 %v4299
        %v6098 = vpop.f32.mrf.mxu0
        %v6099 = vadd.f32 0.0, %v6098
        %v6100 = vpop.f32.mrf.mxu0
        %v6101 = vpop.f32.mrf.mxu0
        %v6102 = vadd.f32 0.0, %v6101
        %v6103 = vpop.f32.mrf.mxu0
        %6104 = vmatprep.mubr.bf16.mxu0 0
        %6105 = vmatmul.mubr.bf16.gmra.mxu0 %v6043
        %v6106 = vpop.f32.mrf.mxu0
        %v6107 = vadd.f32 0.0, %v6106
        %v6108 = vpop.f32.mrf.mxu0
        %v6109 = vpop.f32.mrf.mxu0
        %v6110 = vadd.f32 0.0, %v6109
        %v6111 = vpop.f32.mrf.mxu0
        %6112 = vmatprep.mubr.bf16.mxu0 0
        %6113 = vmatmul.mubr.bf16.gmra.mxu0 %v2555
        %v6114 = vpop.f32.mrf.mxu0
        %v6115 = vadd.f32 0.0, %v6114
        %v6116 = vpop.f32.mrf.mxu0
        %v6117 = vpop.f32.mrf.mxu0
        %v6118 = vadd.f32 0.0, %v6117
        %v6119 = vpop.f32.mrf.mxu0
        %6120 = vmatprep.mubr.bf16.mxu0 0
        %6121 = vmatmul.mubr.bf16.gmra.mxu0 %v2558
        %v6122 = vpop.f32.mrf.mxu0
        %v6123 = vadd.f32 0.0, %v6122
        %v6124 = vpop.f32.mrf.mxu0
        %v6125 = vpop.f32.mrf.mxu0
        %v6126 = vadd.f32 0.0, %v6125
        %v6127 = vpop.f32.mrf.mxu0
        %6128 = vmatprep.mubr.bf16.mxu0 0
        %6129 = vmatmul.mubr.bf16.gmra.mxu0 %v4302
        %v6130 = vpop.f32.mrf.mxu0
        %v6131 = vadd.f32 0.0, %v6130
        %v6132 = vpop.f32.mrf.mxu0
        %v6133 = vpop.f32.mrf.mxu0
        %v6134 = vadd.f32 0.0, %v6133
        %v6135 = vpop.f32.mrf.mxu0
        %6136 = vmatprep.mubr.bf16.mxu0 0
        %6137 = vmatmul.mubr.bf16.gmra.mxu0 %v6046
        %v6138 = vpop.f32.mrf.mxu0
        %v6139 = vadd.f32 0.0, %v6138
        %v6140 = vpop.f32.mrf.mxu0
        %v6141 = vpop.f32.mrf.mxu0
        %v6142 = vadd.f32 0.0, %v6141
        %v6143 = vpop.f32.mrf.mxu0
        %6144 = vdwg.mxu0
        %v6145 = vadd.f32 %v5999, %v6083
        %v6146 = vadd.f32 %v6000, %v6086
        %v6147 = vadd.f32 %v6001, %v6091
        %v6148 = vadd.f32 %v6002, %v6094
        %v6149 = vadd.f32 %v6003, %v6099
        %v6150 = vadd.f32 %v6004, %v6102
        %v6151 = vadd.f32 %v6005, %v6107
        %v6152 = vadd.f32 %v6006, %v6110
        %v6153 = vadd.f32 %v6007, %v6115
        %v6154 = vadd.f32 %v6008, %v6118
        %v6155 = vadd.f32 %v6009, %v6123
        %v6156 = vadd.f32 %v6010, %v6126
        %v6157 = vadd.f32 %v6011, %v6131
        %v6158 = vadd.f32 %v6012, %v6134
        %v6159 = vadd.f32 %v6013, %v6139
        %v6160 = vadd.f32 %v6014, %v6142
        %v6161 = vmax.f32 %v6145, 0.0
        %v6162 = vmax.f32 %v6146, 0.0
        %v6163 = vmax.f32 %v6147, 0.0
        %v6164 = vmax.f32 %v6148, 0.0
        %v6165 = vmax.f32 %v6149, 0.0
        %v6166 = vmax.f32 %v6150, 0.0
        %v6167 = vmax.f32 %v6151, 0.0
        %v6168 = vmax.f32 %v6152, 0.0
        %v6169 = vmax.f32 %v6153, 0.0
        %v6170 = vmax.f32 %v6154, 0.0
        %v6171 = vmax.f32 %v6155, 0.0
        %v6172 = vmax.f32 %v6156, 0.0
        %v6173 = vmax.f32 %v6157, 0.0
        %v6174 = vmax.f32 %v6158, 0.0
        %v6175 = vmax.f32 %v6159, 0.0
        %v6176 = vmax.f32 %v6160, 0.0
        %v6177 = vld [vmem:[%s2] sm:$0xff]
        %v6178 = vld [vmem:[%s2 + $0x8] sm:$0xff]
        %v6179 = vld [vmem:[%s2 + $0x10] sm:$0xff]
        %v6180 = vld [vmem:[%s2 + $0x18] sm:$0xff]
        %v6181 = vld [vmem:[%s2 + $0x20] sm:$0xff]
        %v6182 = vld [vmem:[%s2 + $0x28] sm:$0xff]
        %v6183 = vld [vmem:[%s2 + $0x30] sm:$0xff]
        %v6184 = vld [vmem:[%s2 + $0x38] sm:$0xff]
        %v6185 = vld [vmem:[%s3] sm:$0x1]
        %v6187 = vlaneseq
        %v6188 = vshrl.u32 %v6187, 7
        %v6189 = vsub.s32 0, %v6188
        %v6190 = vrot.slane %v6185, %v6189
        %vm6192 = vcmask 523264
        %v6194 = vsel %vm6192, %v6161, 0
        %v6197 = vsel %vm6192, %v6162, 0
        %v6200 = vsel %vm6192, %v6163, 0
        %v6203 = vsel %vm6192, %v6164, 0
        %v6206 = vsel %vm6192, %v6165, 0
        %v6209 = vsel %vm6192, %v6166, 0
        %v6212 = vsel %vm6192, %v6167, 0
        %v6215 = vsel %vm6192, %v6168, 0
        %v6218 = vsel %vm6192, %v6169, 0
        %v6221 = vsel %vm6192, %v6170, 0
        %v6224 = vsel %vm6192, %v6171, 0
        %v6227 = vsel %vm6192, %v6172, 0
        %v6230 = vsel %vm6192, %v6173, 0
        %v6233 = vsel %vm6192, %v6174, 0
        %v6236 = vsel %vm6192, %v6175, 0
        %v6239 = vsel %vm6192, %v6176, 0
        %6241 = vmatprep.subr.mxu0 0.0
        %6242 = vmatpush1.msra.mxu0 0.0
        %6243 = vmatprep.subr.mxu0 0.0
        %6244 = vmatpush1.msra.mxu0 0.0
        %6245 = vmatprep.subr.mxu0 0.0
        %6246 = vmatpush1.msra.mxu0 0.0
        %6247 = vmatprep.subr.mxu0 0.0
        %6248 = vmatpush1.msra.mxu0 0.0
        %6249 = vmatprep.subr.mxu0 0.0
        %6250 = vmatpush1.msra.mxu0 0.0
        %6251 = vmatprep.subr.mxu0 0.0
        %6252 = vmatpush1.msra.mxu0 0.0
        %6253 = vmatprep.subr.mxu0 0.0
        %6254 = vmatpush1.msra.mxu0 0.0
        %6255 = vmatprep.subr.mxu0 0.0
        %6256 = vmatpush1.msra.mxu0 0.0
        %6257 = vmatprep.subr.mxu0 0.0
        %6258 = vmatpush1.msra.mxu0 %v6184
        %6259 = vmatprep.subr.mxu0 0.0
        %6260 = vmatpush1.msra.mxu0 %v6183
        %6261 = vmatprep.subr.mxu0 0.0
        %6262 = vmatpush1.msra.mxu0 %v6182
        %6263 = vmatprep.subr.mxu0 0.0
        %6264 = vmatpush1.msra.mxu0 %v6181
        %6265 = vmatprep.subr.mxu0 0.0
        %6266 = vmatpush1.msra.mxu0 %v6180
        %6267 = vmatprep.subr.mxu0 0.0
        %6268 = vmatpush1.msra.mxu0 %v6179
        %6269 = vmatprep.subr.mxu0 0.0
        %6270 = vmatpush1.msra.mxu0 %v6178
        %6271 = vmatprep.subr.mxu0 0.0
        %6272 = vmatpush1.msra.mxu0 %v6177
        %6273 = vmatprep.subr.mxu0 0.0
        %6274 = vmatpush2.msra.mxu0 0.0
        %6275 = vmatprep.subr.mxu0 0.0
        %6276 = vmatpush2.msra.mxu0 0.0
        %6277 = vmatprep.subr.mxu0 0.0
        %6278 = vmatpush2.msra.mxu0 0.0
        %6279 = vmatprep.subr.mxu0 0.0
        %6280 = vmatpush2.msra.mxu0 0.0
        %6281 = vmatprep.subr.mxu0 0.0
        %6282 = vmatpush2.msra.mxu0 0.0
        %6283 = vmatprep.subr.mxu0 0.0
        %6284 = vmatpush2.msra.mxu0 0.0
        %6285 = vmatprep.subr.mxu0 0.0
        %6286 = vmatpush2.msra.mxu0 0.0
        %6287 = vmatprep.subr.mxu0 0.0
        %6288 = vmatpush2.msra.mxu0 0.0
        %6289 = vmatprep.subr.mxu0 0.0
        %6290 = vmatpush2.msra.mxu0 0.0
        %6291 = vmatprep.subr.mxu0 0.0
        %6292 = vmatpush2.msra.mxu0 0.0
        %6293 = vmatprep.subr.mxu0 0.0
        %6294 = vmatpush2.msra.mxu0 0.0
        %6295 = vmatprep.subr.mxu0 0.0
        %6296 = vmatpush2.msra.mxu0 0.0
        %6297 = vmatprep.subr.mxu0 0.0
        %6298 = vmatpush2.msra.mxu0 0.0
        %6299 = vmatprep.subr.mxu0 0.0
        %6300 = vmatpush2.msra.mxu0 0.0
        %6301 = vmatprep.subr.mxu0 0.0
        %6302 = vmatpush2.msra.mxu0 0.0
        %6303 = vmatprep.subr.mxu0 0.0
        %6304 = vmatpush2.msra.mxu0 0.0
        %6305 = vmatprep.mubr.f32.mxu0 0.0
        %6306 = vmatmul.mubr.f32.gmra.mxu0 %v6194
        %v6307 = vpop.f32.mrf.mxu0
        %v6308 = vadd.f32 %v6190, %v6307
        %v6309 = vpop.f32.mrf.mxu0
        %6310 = vmatprep.mubr.f32.mxu0 0.0
        %6311 = vmatmul.mubr.f32.gmra.mxu0 %v6197
        %v6312 = vpop.f32.mrf.mxu0
        %v6313 = vadd.f32 %v6190, %v6312
        %v6314 = vpop.f32.mrf.mxu0
        %6315 = vmatprep.mubr.f32.mxu0 0.0
        %6316 = vmatmul.mubr.f32.gmra.mxu0 %v6200
        %v6317 = vpop.f32.mrf.mxu0
        %v6318 = vadd.f32 %v6190, %v6317
        %v6319 = vpop.f32.mrf.mxu0
        %6320 = vmatprep.mubr.f32.mxu0 0.0
        %6321 = vmatmul.mubr.f32.gmra.mxu0 %v6203
        %v6322 = vpop.f32.mrf.mxu0
        %v6323 = vadd.f32 %v6190, %v6322
        %v6324 = vpop.f32.mrf.mxu0
        %6325 = vmatprep.mubr.f32.mxu0 0.0
        %6326 = vmatmul.mubr.f32.gmra.mxu0 %v6206
        %v6327 = vpop.f32.mrf.mxu0
        %v6328 = vadd.f32 %v6190, %v6327
        %v6329 = vpop.f32.mrf.mxu0
        %6330 = vmatprep.mubr.f32.mxu0 0.0
        %6331 = vmatmul.mubr.f32.gmra.mxu0 %v6209
        %v6332 = vpop.f32.mrf.mxu0
        %v6333 = vadd.f32 %v6190, %v6332
        %v6334 = vpop.f32.mrf.mxu0
        %6335 = vmatprep.mubr.f32.mxu0 0.0
        %6336 = vmatmul.mubr.f32.gmra.mxu0 %v6212
        %v6337 = vpop.f32.mrf.mxu0
        %v6338 = vadd.f32 %v6190, %v6337
        %v6339 = vpop.f32.mrf.mxu0
        %6340 = vmatprep.mubr.f32.mxu0 0.0
        %6341 = vmatmul.mubr.f32.gmra.mxu0 %v6215
        %v6342 = vpop.f32.mrf.mxu0
        %v6343 = vadd.f32 %v6190, %v6342
        %v6344 = vpop.f32.mrf.mxu0
        %6345 = vmatprep.mubr.f32.mxu0 0.0
        %6346 = vmatmul.mubr.f32.gmra.mxu0 %v6218
        %v6347 = vpop.f32.mrf.mxu0
        %v6348 = vadd.f32 %v6190, %v6347
        %v6349 = vpop.f32.mrf.mxu0
        %6350 = vmatprep.mubr.f32.mxu0 0.0
        %6351 = vmatmul.mubr.f32.gmra.mxu0 %v6221
        %v6352 = vpop.f32.mrf.mxu0
        %v6353 = vadd.f32 %v6190, %v6352
        %v6354 = vpop.f32.mrf.mxu0
        %6355 = vmatprep.mubr.f32.mxu0 0.0
        %6356 = vmatmul.mubr.f32.gmra.mxu0 %v6224
        %v6357 = vpop.f32.mrf.mxu0
        %v6358 = vadd.f32 %v6190, %v6357
        %v6359 = vpop.f32.mrf.mxu0
        %6360 = vmatprep.mubr.f32.mxu0 0.0
        %6361 = vmatmul.mubr.f32.gmra.mxu0 %v6227
        %v6362 = vpop.f32.mrf.mxu0
        %v6363 = vadd.f32 %v6190, %v6362
        %v6364 = vpop.f32.mrf.mxu0
        %6365 = vmatprep.mubr.f32.mxu0 0.0
        %6366 = vmatmul.mubr.f32.gmra.mxu0 %v6230
        %v6367 = vpop.f32.mrf.mxu0
        %v6368 = vadd.f32 %v6190, %v6367
        %v6369 = vpop.f32.mrf.mxu0
        %6370 = vmatprep.mubr.f32.mxu0 0.0
        %6371 = vmatmul.mubr.f32.gmra.mxu0 %v6233
        %v6372 = vpop.f32.mrf.mxu0
        %v6373 = vadd.f32 %v6190, %v6372
        %v6374 = vpop.f32.mrf.mxu0
        %6375 = vmatprep.mubr.f32.mxu0 0.0
        %6376 = vmatmul.mubr.f32.gmra.mxu0 %v6236
        %v6377 = vpop.f32.mrf.mxu0
        %v6378 = vadd.f32 %v6190, %v6377
        %v6379 = vpop.f32.mrf.mxu0
        %6380 = vmatprep.mubr.f32.mxu0 0.0
        %6381 = vmatmul.mubr.f32.gmra.mxu0 %v6239
        %v6382 = vpop.f32.mrf.mxu0
        %v6383 = vadd.f32 %v6190, %v6382
        %v6384 = vpop.f32.mrf.mxu0
        %6385 = vdwg.mxu0
        %v6386 = vmax.f32 %v6308, 0.0
        %v6387 = vmax.f32 %v6313, 0.0
        %v6388 = vmax.f32 %v6318, 0.0
        %v6389 = vmax.f32 %v6323, 0.0
        %v6390 = vmax.f32 %v6328, 0.0
        %v6391 = vmax.f32 %v6333, 0.0
        %v6392 = vmax.f32 %v6338, 0.0
        %v6393 = vmax.f32 %v6343, 0.0
        %v6394 = vmax.f32 %v6348, 0.0
        %v6395 = vmax.f32 %v6353, 0.0
        %v6396 = vmax.f32 %v6358, 0.0
        %v6397 = vmax.f32 %v6363, 0.0
        %v6398 = vmax.f32 %v6368, 0.0
        %v6399 = vmax.f32 %v6373, 0.0
        %v6400 = vmax.f32 %v6378, 0.0
        %v6401 = vmax.f32 %v6383, 0.0
        %v6402 = vlaneseq
        %v6403 = vand.u32 %v6402, 127
        %vm6404 = vcmp.lt.s32.totalorder %v6403, 3
        %v6405 = vmul.f32 %v6386, %v6386
        %v6406 = vmul.f32 %v6387, %v6387
        %v6407 = vmul.f32 %v6388, %v6388
        %v6408 = vmul.f32 %v6389, %v6389
        %v6409 = vmul.f32 %v6390, %v6390
        %v6410 = vmul.f32 %v6391, %v6391
        %v6411 = vmul.f32 %v6392, %v6392
        %v6412 = vmul.f32 %v6393, %v6393
        %v6413 = vmul.f32 %v6394, %v6394
        %v6414 = vmul.f32 %v6395, %v6395
        %v6415 = vmul.f32 %v6396, %v6396
        %v6416 = vmul.f32 %v6397, %v6397
        %v6417 = vmul.f32 %v6398, %v6398
        %v6418 = vmul.f32 %v6399, %v6399
        %v6419 = vmul.f32 %v6400, %v6400
        %v6420 = vmul.f32 %v6401, %v6401
        %v6421 = vsel %vm6404, %v6405, 0.0
        %v6422 = vsel %vm6404, %v6406, 0.0
        %v6423 = vsel %vm6404, %v6407, 0.0
        %v6424 = vsel %vm6404, %v6408, 0.0
        %v6425 = vsel %vm6404, %v6409, 0.0
        %v6426 = vsel %vm6404, %v6410, 0.0
        %v6427 = vsel %vm6404, %v6411, 0.0
        %v6428 = vsel %vm6404, %v6412, 0.0
        %v6429 = vsel %vm6404, %v6413, 0.0
        %v6430 = vsel %vm6404, %v6414, 0.0
        %v6431 = vsel %vm6404, %v6415, 0.0
        %v6432 = vsel %vm6404, %v6416, 0.0
        %v6433 = vsel %vm6404, %v6417, 0.0
        %v6434 = vsel %vm6404, %v6418, 0.0
        %v6435 = vsel %vm6404, %v6419, 0.0
        %v6436 = vsel %vm6404, %v6420, 0.0
        %vm6437 = vcmask 31744
        %v6438 = vsel %vm6437, %v6421, 0.0
        %6439 = vadd.xlane.f32.xlu0 %v6438
        %v6440 = vpop.xlane.xlu0 %6439
        %v6441 = vsel %vm6437, %v6422, 0.0
        %6442 = vadd.xlane.f32.xlu0 %v6441
        %v6443 = vpop.xlane.xlu0 %6442
        %v6444 = vsel %vm6437, %v6423, 0.0
        %6445 = vadd.xlane.f32.xlu0 %v6444
        %v6446 = vpop.xlane.xlu0 %6445
        %v6447 = vsel %vm6437, %v6424, 0.0
        %6448 = vadd.xlane.f32.xlu0 %v6447
        %v6449 = vpop.xlane.xlu0 %6448
        %v6450 = vsel %vm6437, %v6425, 0.0
        %6451 = vadd.xlane.f32.xlu0 %v6450
        %v6452 = vpop.xlane.xlu0 %6451
        %v6453 = vsel %vm6437, %v6426, 0.0
        %6454 = vadd.xlane.f32.xlu0 %v6453
        %v6455 = vpop.xlane.xlu0 %6454
        %v6456 = vsel %vm6437, %v6427, 0.0
        %6457 = vadd.xlane.f32.xlu0 %v6456
        %v6458 = vpop.xlane.xlu0 %6457
        %v6459 = vsel %vm6437, %v6428, 0.0
        %6460 = vadd.xlane.f32.xlu0 %v6459
        %v6461 = vpop.xlane.xlu0 %6460
        %v6462 = vsel %vm6437, %v6429, 0.0
        %6463 = vadd.xlane.f32.xlu0 %v6462
        %v6464 = vpop.xlane.xlu0 %6463
        %v6465 = vsel %vm6437, %v6430, 0.0
        %6466 = vadd.xlane.f32.xlu0 %v6465
        %v6467 = vpop.xlane.xlu0 %6466
        %v6468 = vsel %vm6437, %v6431, 0.0
        %6469 = vadd.xlane.f32.xlu0 %v6468
        %v6470 = vpop.xlane.xlu0 %6469
        %v6471 = vsel %vm6437, %v6432, 0.0
        %6472 = vadd.xlane.f32.xlu0 %v6471
        %v6473 = vpop.xlane.xlu0 %6472
        %v6474 = vsel %vm6437, %v6433, 0.0
        %6475 = vadd.xlane.f32.xlu0 %v6474
        %v6476 = vpop.xlane.xlu0 %6475
        %v6477 = vsel %vm6437, %v6434, 0.0
        %6478 = vadd.xlane.f32.xlu0 %v6477
        %v6479 = vpop.xlane.xlu0 %6478
        %v6480 = vsel %vm6437, %v6435, 0.0
        %6481 = vadd.xlane.f32.xlu0 %v6480
        %v6482 = vpop.xlane.xlu0 %6481
        %v6483 = vsel %vm6437, %v6436, 0.0
        %6484 = vadd.xlane.f32.xlu0 %v6483
        %v6485 = vpop.xlane.xlu0 %6484
        %v6486 = vadd.f32 %v6440, 1e-24
        %v6487 = vadd.f32 %v6443, 1e-24
        %v6488 = vadd.f32 %v6446, 1e-24
        %v6489 = vadd.f32 %v6449, 1e-24
        %v6490 = vadd.f32 %v6452, 1e-24
        %v6491 = vadd.f32 %v6455, 1e-24
        %v6492 = vadd.f32 %v6458, 1e-24
        %v6493 = vadd.f32 %v6461, 1e-24
        %v6494 = vadd.f32 %v6464, 1e-24
        %v6495 = vadd.f32 %v6467, 1e-24
        %v6496 = vadd.f32 %v6470, 1e-24
        %v6497 = vadd.f32 %v6473, 1e-24
        %v6498 = vadd.f32 %v6476, 1e-24
        %v6499 = vadd.f32 %v6479, 1e-24
        %v6500 = vadd.f32 %v6482, 1e-24
        %v6501 = vadd.f32 %v6485, 1e-24
        %v6502 = vrsqrt.pop %v6486
        %v6503 = vrsqrt.pop %v6487
        %v6504 = vrsqrt.pop %v6488
        %v6505 = vrsqrt.pop %v6489
        %v6506 = vrsqrt.pop %v6490
        %v6507 = vrsqrt.pop %v6491
        %v6508 = vrsqrt.pop %v6492
        %v6509 = vrsqrt.pop %v6493
        %v6510 = vrsqrt.pop %v6494
        %v6511 = vrsqrt.pop %v6495
        %v6512 = vrsqrt.pop %v6496
        %v6513 = vrsqrt.pop %v6497
        %v6514 = vrsqrt.pop %v6498
        %v6515 = vrsqrt.pop %v6499
        %v6516 = vrsqrt.pop %v6500
        %v6517 = vrsqrt.pop %v6501
        %vm6518 = vcmp.eq.s32.totalorder %v6403, 3
        %v6519 = vsel %vm6518, %v6386, 0.0
        %v6520 = vsel %vm6518, %v6387, 0.0
        %v6521 = vsel %vm6518, %v6388, 0.0
        %v6522 = vsel %vm6518, %v6389, 0.0
        %v6523 = vsel %vm6518, %v6390, 0.0
        %v6524 = vsel %vm6518, %v6391, 0.0
        %v6525 = vsel %vm6518, %v6392, 0.0
        %v6526 = vsel %vm6518, %v6393, 0.0
        %v6527 = vsel %vm6518, %v6394, 0.0
        %v6528 = vsel %vm6518, %v6395, 0.0
        %v6529 = vsel %vm6518, %v6396, 0.0
        %v6530 = vsel %vm6518, %v6397, 0.0
        %v6531 = vsel %vm6518, %v6398, 0.0
        %v6532 = vsel %vm6518, %v6399, 0.0
        %v6533 = vsel %vm6518, %v6400, 0.0
        %v6534 = vsel %vm6518, %v6401, 0.0
        %v6535 = vsel %vm6437, %v6519, 0.0
        %6536 = vadd.xlane.f32.xlu0 %v6535
        %v6537 = vpop.xlane.xlu0 %6536
        %v6538 = vsel %vm6437, %v6520, 0.0
        %6539 = vadd.xlane.f32.xlu0 %v6538
        %v6540 = vpop.xlane.xlu0 %6539
        %v6541 = vsel %vm6437, %v6521, 0.0
        %6542 = vadd.xlane.f32.xlu0 %v6541
        %v6543 = vpop.xlane.xlu0 %6542
        %v6544 = vsel %vm6437, %v6522, 0.0
        %6545 = vadd.xlane.f32.xlu0 %v6544
        %v6546 = vpop.xlane.xlu0 %6545
        %v6547 = vsel %vm6437, %v6523, 0.0
        %6548 = vadd.xlane.f32.xlu0 %v6547
        %v6549 = vpop.xlane.xlu0 %6548
        %v6550 = vsel %vm6437, %v6524, 0.0
        %6551 = vadd.xlane.f32.xlu0 %v6550
        %v6552 = vpop.xlane.xlu0 %6551
        %v6553 = vsel %vm6437, %v6525, 0.0
        %6554 = vadd.xlane.f32.xlu0 %v6553
        %v6555 = vpop.xlane.xlu0 %6554
        %v6556 = vsel %vm6437, %v6526, 0.0
        %6557 = vadd.xlane.f32.xlu0 %v6556
        %v6558 = vpop.xlane.xlu0 %6557
        %v6559 = vsel %vm6437, %v6527, 0.0
        %6560 = vadd.xlane.f32.xlu0 %v6559
        %v6561 = vpop.xlane.xlu0 %6560
        %v6562 = vsel %vm6437, %v6528, 0.0
        %6563 = vadd.xlane.f32.xlu0 %v6562
        %v6564 = vpop.xlane.xlu0 %6563
        %v6565 = vsel %vm6437, %v6529, 0.0
        %6566 = vadd.xlane.f32.xlu0 %v6565
        %v6567 = vpop.xlane.xlu0 %6566
        %v6568 = vsel %vm6437, %v6530, 0.0
        %6569 = vadd.xlane.f32.xlu0 %v6568
        %v6570 = vpop.xlane.xlu0 %6569
        %v6571 = vsel %vm6437, %v6531, 0.0
        %6572 = vadd.xlane.f32.xlu0 %v6571
        %v6573 = vpop.xlane.xlu0 %6572
        %v6574 = vsel %vm6437, %v6532, 0.0
        %6575 = vadd.xlane.f32.xlu0 %v6574
        %v6576 = vpop.xlane.xlu0 %6575
        %v6577 = vsel %vm6437, %v6533, 0.0
        %6578 = vadd.xlane.f32.xlu0 %v6577
        %v6579 = vpop.xlane.xlu0 %6578
        %v6580 = vsel %vm6437, %v6534, 0.0
        %6581 = vadd.xlane.f32.xlu0 %v6580
        %v6582 = vpop.xlane.xlu0 %6581
        %v6583 = vmax.f32 %v6537, %v6543
        %v6584 = vmax.f32 %v6540, %v6546
        %v6585 = vmax.f32 %v6583, %v6549
        %v6586 = vmax.f32 %v6584, %v6552
        %v6587 = vmax.f32 %v6585, %v6555
        %v6588 = vmax.f32 %v6586, %v6558
        %v6589 = vmax.f32 %v6587, %v6588
        %v6590 = vrot.slane %v6589, 4
        %v6591 = vmax.f32 %v6589, %v6590
        %v6592 = vrot.slane %v6591, 2
        %v6593 = vmax.f32 %v6591, %v6592
        %v6594 = vrot.slane %v6593, 1
        %v6595 = vmax.f32 %v6593, %v6594
        %v6596 = vmax.f32 %v6561, %v6567
        %v6597 = vmax.f32 %v6564, %v6570
        %v6598 = vmax.f32 %v6596, %v6573
        %v6599 = vmax.f32 %v6597, %v6576
        %v6600 = vmax.f32 %v6598, %v6579
        %v6601 = vmax.f32 %v6599, %v6582
        %v6602 = vmax.f32 %v6600, %v6601
        %v6603 = vrot.slane %v6602, 4
        %v6604 = vmax.f32 %v6602, %v6603
        %v6605 = vrot.slane %v6604, 2
        %v6606 = vmax.f32 %v6604, %v6605
        %v6607 = vrot.slane %v6606, 1
        %v6608 = vmax.f32 %v6606, %v6607
        %v6609 = vsub.f32 %v6537, %v6595
        %v6610 = vsub.f32 %v6540, %v6595
        %v6611 = vsub.f32 %v6543, %v6595
        %v6612 = vsub.f32 %v6546, %v6595
        %v6613 = vsub.f32 %v6549, %v6595
        %v6614 = vsub.f32 %v6552, %v6595
        %v6615 = vsub.f32 %v6555, %v6595
        %v6616 = vsub.f32 %v6558, %v6595
        %v6617 = vsub.f32 %v6561, %v6608
        %v6618 = vsub.f32 %v6564, %v6608
        %v6619 = vsub.f32 %v6567, %v6608
        %v6620 = vsub.f32 %v6570, %v6608
        %v6621 = vsub.f32 %v6573, %v6608
        %v6622 = vsub.f32 %v6576, %v6608
        %v6623 = vsub.f32 %v6579, %v6608
        %v6624 = vsub.f32 %v6582, %v6608
        %v6625 = vmul.f32 %v6609, 1.442695
        %v6626 = vpow.pop %v6625
        %v6627 = vmul.f32 %v6610, 1.442695
        %v6628 = vpow.pop %v6627
        %v6629 = vmul.f32 %v6611, 1.442695
        %v6630 = vpow.pop %v6629
        %v6631 = vmul.f32 %v6612, 1.442695
        %v6632 = vpow.pop %v6631
        %v6633 = vmul.f32 %v6613, 1.442695
        %v6634 = vpow.pop %v6633
        %v6635 = vmul.f32 %v6614, 1.442695
        %v6636 = vpow.pop %v6635
        %v6637 = vmul.f32 %v6615, 1.442695
        %v6638 = vpow.pop %v6637
        %v6639 = vmul.f32 %v6616, 1.442695
        %v6640 = vpow.pop %v6639
        %v6641 = vmul.f32 %v6617, 1.442695
        %v6642 = vpow.pop %v6641
        %v6643 = vmul.f32 %v6618, 1.442695
        %v6644 = vpow.pop %v6643
        %v6645 = vmul.f32 %v6619, 1.442695
        %v6646 = vpow.pop %v6645
        %v6647 = vmul.f32 %v6620, 1.442695
        %v6648 = vpow.pop %v6647
        %v6649 = vmul.f32 %v6621, 1.442695
        %v6650 = vpow.pop %v6649
        %v6651 = vmul.f32 %v6622, 1.442695
        %v6652 = vpow.pop %v6651
        %v6653 = vmul.f32 %v6623, 1.442695
        %v6654 = vpow.pop %v6653
        %v6655 = vmul.f32 %v6624, 1.442695
        %v6656 = vpow.pop %v6655
        %v6657 = vadd.f32 %v6626, %v6628
        %v6658 = vadd.f32 %v6657, %v6630
        %v6659 = vadd.f32 %v6658, %v6632
        %v6660 = vadd.f32 %v6659, %v6634
        %v6661 = vadd.f32 %v6660, %v6636
        %v6662 = vadd.f32 %v6661, %v6638
        %v6663 = vadd.f32 %v6662, %v6640
        %v6664 = vrot.slane %v6663, 4
        %v6665 = vadd.f32 %v6663, %v6664
        %v6666 = vrot.slane %v6665, 2
        %v6667 = vadd.f32 %v6665, %v6666
        %v6668 = vrot.slane %v6667, 1
        %v6669 = vadd.f32 %v6667, %v6668
        %v6670 = vadd.f32 %v6642, %v6644
        %v6671 = vadd.f32 %v6670, %v6646
        %v6672 = vadd.f32 %v6671, %v6648
        %v6673 = vadd.f32 %v6672, %v6650
        %v6674 = vadd.f32 %v6673, %v6652
        %v6675 = vadd.f32 %v6674, %v6654
        %v6676 = vadd.f32 %v6675, %v6656
        %v6677 = vrot.slane %v6676, 4
        %v6678 = vadd.f32 %v6676, %v6677
        %v6679 = vrot.slane %v6678, 2
        %v6680 = vadd.f32 %v6678, %v6679
        %v6681 = vrot.slane %v6680, 1
        %v6682 = vadd.f32 %v6680, %v6681
        %v6683 = vrcp.pop %v6669
        %v6684 = vrcp.pop %v6682
        %v6685 = vmul.f32 %v6626, %v6683
        %v6686 = vmul.f32 %v6628, %v6683
        %v6687 = vmul.f32 %v6630, %v6683
        %v6688 = vmul.f32 %v6632, %v6683
        %v6689 = vmul.f32 %v6634, %v6683
        %v6690 = vmul.f32 %v6636, %v6683
        %v6691 = vmul.f32 %v6638, %v6683
        %v6692 = vmul.f32 %v6640, %v6683
        %v6693 = vmul.f32 %v6642, %v6684
        %v6694 = vmul.f32 %v6644, %v6684
        %v6695 = vmul.f32 %v6646, %v6684
        %v6696 = vmul.f32 %v6648, %v6684
        %v6697 = vmul.f32 %v6650, %v6684
        %v6698 = vmul.f32 %v6652, %v6684
        %v6699 = vmul.f32 %v6654, %v6684
        %v6700 = vmul.f32 %v6656, %v6684
        %v6701 = vmul.f32 %v6502, %v6685
        %v6702 = vmul.f32 %v6503, %v6686
        %v6703 = vmul.f32 %v6504, %v6687
        %v6704 = vmul.f32 %v6505, %v6688
        %v6705 = vmul.f32 %v6506, %v6689
        %v6706 = vmul.f32 %v6507, %v6690
        %v6707 = vmul.f32 %v6508, %v6691
        %v6708 = vmul.f32 %v6509, %v6692
        %v6709 = vmul.f32 %v6510, %v6693
        %v6710 = vmul.f32 %v6511, %v6694
        %v6711 = vmul.f32 %v6512, %v6695
        %v6712 = vmul.f32 %v6513, %v6696
        %v6713 = vmul.f32 %v6514, %v6697
        %v6714 = vmul.f32 %v6515, %v6698
        %v6715 = vmul.f32 %v6516, %v6699
        %v6716 = vmul.f32 %v6517, %v6700
        %v6717 = vmul.f32 %v6386, %v6701
        %v6718 = vmul.f32 %v6387, %v6702
        %v6719 = vmul.f32 %v6388, %v6703
        %v6720 = vmul.f32 %v6389, %v6704
        %v6721 = vmul.f32 %v6390, %v6705
        %v6722 = vmul.f32 %v6391, %v6706
        %v6723 = vmul.f32 %v6392, %v6707
        %v6724 = vmul.f32 %v6393, %v6708
        %v6725 = vmul.f32 %v6394, %v6709
        %v6726 = vmul.f32 %v6395, %v6710
        %v6727 = vmul.f32 %v6396, %v6711
        %v6728 = vmul.f32 %v6397, %v6712
        %v6729 = vmul.f32 %v6398, %v6713
        %v6730 = vmul.f32 %v6399, %v6714
        %v6731 = vmul.f32 %v6400, %v6715
        %v6732 = vmul.f32 %v6401, %v6716
        %v6733 = vld [vmem:[%s4] sm:$0xff]
        %v6734 = vld [vmem:[%s4 + $0x8] sm:$0xff]
        %v6735 = vld [vmem:[%s4 + $0x10] sm:$0xff]
        %v6736 = vld [vmem:[%s4 + $0x18] sm:$0xff]
        %v6737 = vld [vmem:[%s4 + $0x20] sm:$0xff]
        %v6738 = vld [vmem:[%s4 + $0x28] sm:$0xff]
        %v6739 = vld [vmem:[%s4 + $0x30] sm:$0xff]
        %v6740 = vld [vmem:[%s4 + $0x38] sm:$0xff]
        %v6741 = vmul.f32 %v6717, %v6733
        %v6742 = vmul.f32 %v6718, %v6734
        %v6743 = vmul.f32 %v6719, %v6735
        %v6744 = vmul.f32 %v6720, %v6736
        %v6745 = vmul.f32 %v6721, %v6737
        %v6746 = vmul.f32 %v6722, %v6738
        %v6747 = vmul.f32 %v6723, %v6739
        %v6748 = vmul.f32 %v6724, %v6740
        %v6749 = vmul.f32 %v6725, %v6733
        %v6750 = vmul.f32 %v6726, %v6734
        %v6751 = vmul.f32 %v6727, %v6735
        %v6752 = vmul.f32 %v6728, %v6736
        %v6753 = vmul.f32 %v6729, %v6737
        %v6754 = vmul.f32 %v6730, %v6738
        %v6755 = vmul.f32 %v6731, %v6739
        %v6756 = vmul.f32 %v6732, %v6740
        %v6757 = vsel %vm6437, %v6741, 0.0
        %6758 = vadd.xlane.f32.xlu0 %v6757
        %v6759 = vpop.xlane.xlu0 %6758
        %v6760 = vsel %vm6437, %v6742, 0.0
        %6761 = vadd.xlane.f32.xlu0 %v6760
        %v6762 = vpop.xlane.xlu0 %6761
        %v6763 = vsel %vm6437, %v6743, 0.0
        %6764 = vadd.xlane.f32.xlu0 %v6763
        %v6765 = vpop.xlane.xlu0 %6764
        %v6766 = vsel %vm6437, %v6744, 0.0
        %6767 = vadd.xlane.f32.xlu0 %v6766
        %v6768 = vpop.xlane.xlu0 %6767
        %v6769 = vsel %vm6437, %v6745, 0.0
        %6770 = vadd.xlane.f32.xlu0 %v6769
        %v6771 = vpop.xlane.xlu0 %6770
        %v6772 = vsel %vm6437, %v6746, 0.0
        %6773 = vadd.xlane.f32.xlu0 %v6772
        %v6774 = vpop.xlane.xlu0 %6773
        %v6775 = vsel %vm6437, %v6747, 0.0
        %6776 = vadd.xlane.f32.xlu0 %v6775
        %v6777 = vpop.xlane.xlu0 %6776
        %v6778 = vsel %vm6437, %v6748, 0.0
        %6779 = vadd.xlane.f32.xlu0 %v6778
        %v6780 = vpop.xlane.xlu0 %6779
        %v6781 = vsel %vm6437, %v6749, 0.0
        %6782 = vadd.xlane.f32.xlu0 %v6781
        %v6783 = vpop.xlane.xlu0 %6782
        %v6784 = vsel %vm6437, %v6750, 0.0
        %6785 = vadd.xlane.f32.xlu0 %v6784
        %v6786 = vpop.xlane.xlu0 %6785
        %v6787 = vsel %vm6437, %v6751, 0.0
        %6788 = vadd.xlane.f32.xlu0 %v6787
        %v6789 = vpop.xlane.xlu0 %6788
        %v6790 = vsel %vm6437, %v6752, 0.0
        %6791 = vadd.xlane.f32.xlu0 %v6790
        %v6792 = vpop.xlane.xlu0 %6791
        %v6793 = vsel %vm6437, %v6753, 0.0
        %6794 = vadd.xlane.f32.xlu0 %v6793
        %v6795 = vpop.xlane.xlu0 %6794
        %v6796 = vsel %vm6437, %v6754, 0.0
        %6797 = vadd.xlane.f32.xlu0 %v6796
        %v6798 = vpop.xlane.xlu0 %6797
        %v6799 = vsel %vm6437, %v6755, 0.0
        %6800 = vadd.xlane.f32.xlu0 %v6799
        %v6801 = vpop.xlane.xlu0 %6800
        %v6802 = vsel %vm6437, %v6756, 0.0
        %6803 = vadd.xlane.f32.xlu0 %v6802
        %v6804 = vpop.xlane.xlu0 %6803
        %v6821 = vlaneseq
        %v6822 = vshrl.u32 %v6821, 7
        %v6823 = vsub.s32 %v6403, %v6822
        %v6824 = vrot.slane %v6759, %v6823
        %v6825 = vadd.s32 %v6403, 4294967288
        %v6826 = vlaneseq
        %v6827 = vshrl.u32 %v6826, 7
        %v6828 = vsub.s32 %v6825, %v6827
        %v6829 = vrot.slane %v6762, %v6828
        %vm6830 = vcmask 130112
        %v6831 = vsel %vm6830, %v6829, %v6824
        %v6832 = vadd.s32 %v6403, 4294967280
        %v6833 = vlaneseq
        %v6834 = vshrl.u32 %v6833, 7
        %v6835 = vsub.s32 %v6832, %v6834
        %v6836 = vrot.slane %v6765, %v6835
        %vm6837 = vcmask 195712
        %v6838 = vsel %vm6837, %v6836, %v6831
        %v6839 = vadd.s32 %v6403, 4294967272
        %v6840 = vlaneseq
        %v6841 = vshrl.u32 %v6840, 7
        %v6842 = vsub.s32 %v6839, %v6841
        %v6843 = vrot.slane %v6768, %v6842
        %vm6844 = vcmask 261312
        %v6845 = vsel %vm6844, %v6843, %v6838
        %v6846 = vadd.s32 %v6403, 4294967264
        %v6847 = vlaneseq
        %v6848 = vshrl.u32 %v6847, 7
        %v6849 = vsub.s32 %v6846, %v6848
        %v6850 = vrot.slane %v6771, %v6849
        %vm6851 = vcmask 326912
        %v6852 = vsel %vm6851, %v6850, %v6845
        %v6853 = vadd.s32 %v6403, 4294967256
        %v6854 = vlaneseq
        %v6855 = vshrl.u32 %v6854, 7
        %v6856 = vsub.s32 %v6853, %v6855
        %v6857 = vrot.slane %v6774, %v6856
        %vm6858 = vcmask 392512
        %v6859 = vsel %vm6858, %v6857, %v6852
        %v6860 = vadd.s32 %v6403, 4294967248
        %v6861 = vlaneseq
        %v6862 = vshrl.u32 %v6861, 7
        %v6863 = vsub.s32 %v6860, %v6862
        %v6864 = vrot.slane %v6777, %v6863
        %vm6865 = vcmask 458112
        %v6866 = vsel %vm6865, %v6864, %v6859
        %v6867 = vadd.s32 %v6403, 4294967240
        %v6868 = vlaneseq
        %v6869 = vshrl.u32 %v6868, 7
        %v6870 = vsub.s32 %v6867, %v6869
        %v6871 = vrot.slane %v6780, %v6870
        %vm6872 = vcmask 523712
        %v6873 = vsel %vm6872, %v6871, %v6866
        %v6874 = vlaneseq
        %v6875 = vshrl.u32 %v6874, 7
        %v6876 = vsub.s32 %v6403, %v6875
        %v6877 = vrot.slane %v6783, %v6876
        %v6878 = vlaneseq
        %v6879 = vshrl.u32 %v6878, 7
        %v6880 = vsub.s32 %v6825, %v6879
        %v6881 = vrot.slane %v6786, %v6880
        %v6882 = vsel %vm6830, %v6881, %v6877
        %v6883 = vlaneseq
        %v6884 = vshrl.u32 %v6883, 7
        %v6885 = vsub.s32 %v6832, %v6884
        %v6886 = vrot.slane %v6789, %v6885
        %v6887 = vsel %vm6837, %v6886, %v6882
        %v6888 = vlaneseq
        %v6889 = vshrl.u32 %v6888, 7
        %v6890 = vsub.s32 %v6839, %v6889
        %v6891 = vrot.slane %v6792, %v6890
        %v6892 = vsel %vm6844, %v6891, %v6887
        %v6893 = vlaneseq
        %v6894 = vshrl.u32 %v6893, 7
        %v6895 = vsub.s32 %v6846, %v6894
        %v6896 = vrot.slane %v6795, %v6895
        %v6897 = vsel %vm6851, %v6896, %v6892
        %v6898 = vlaneseq
        %v6899 = vshrl.u32 %v6898, 7
        %v6900 = vsub.s32 %v6853, %v6899
        %v6901 = vrot.slane %v6798, %v6900
        %v6902 = vsel %vm6858, %v6901, %v6897
        %v6903 = vlaneseq
        %v6904 = vshrl.u32 %v6903, 7
        %v6905 = vsub.s32 %v6860, %v6904
        %v6906 = vrot.slane %v6801, %v6905
        %v6907 = vsel %vm6865, %v6906, %v6902
        %v6908 = vlaneseq
        %v6909 = vshrl.u32 %v6908, 7
        %v6910 = vsub.s32 %v6867, %v6909
        %v6911 = vrot.slane %v6804, %v6910
        %v6912 = vsel %vm6872, %v6911, %v6907
        %vm6913 = vcmask 1041409
        %v6914 = vsel %vm6913, %v6912, %v6873
        %vm6916 = vcmask 517120
        %v6917 = vsel %vm6916, %v6914, 0.0
        %6918 = vadd.xlane.f32.xlu0 %v6917
        %v6919 = vpop.xlane.xlu0 %6918
        %vm6920 = vcmp.eq.s32.totalorder %v6403, 0
        %v6921 = vsel %vm6920, 1, 0
        %vm6922 = vcmp.eq.s32.totalorder %v6921, 1
        %v6923 = vsel %vm6922, %v6919, 0.0
        %v6924 = vadd.f32 %v6923, 0.0
        %s6925 = scalar_lea.vmem %s4, 64
        %v6926 = vld [vmem:[%s6925] sm:$0xff]
        %v6927 = vld [vmem:[%s6925 + $0x8] sm:$0xff]
        %v6928 = vld [vmem:[%s6925 + $0x10] sm:$0xff]
        %v6929 = vld [vmem:[%s6925 + $0x18] sm:$0xff]
        %v6930 = vld [vmem:[%s6925 + $0x20] sm:$0xff]
        %v6931 = vld [vmem:[%s6925 + $0x28] sm:$0xff]
        %v6932 = vld [vmem:[%s6925 + $0x30] sm:$0xff]
        %v6933 = vld [vmem:[%s6925 + $0x38] sm:$0xff]
        %v6934 = vmul.f32 %v6717, %v6926
        %v6935 = vmul.f32 %v6718, %v6927
        %v6936 = vmul.f32 %v6719, %v6928
        %v6937 = vmul.f32 %v6720, %v6929
        %v6938 = vmul.f32 %v6721, %v6930
        %v6939 = vmul.f32 %v6722, %v6931
        %v6940 = vmul.f32 %v6723, %v6932
        %v6941 = vmul.f32 %v6724, %v6933
        %v6942 = vmul.f32 %v6725, %v6926
        %v6943 = vmul.f32 %v6726, %v6927
        %v6944 = vmul.f32 %v6727, %v6928
        %v6945 = vmul.f32 %v6728, %v6929
        %v6946 = vmul.f32 %v6729, %v6930
        %v6947 = vmul.f32 %v6730, %v6931
        %v6948 = vmul.f32 %v6731, %v6932
        %v6949 = vmul.f32 %v6732, %v6933
        %v6950 = vsel %vm6437, %v6934, 0.0
        %6951 = vadd.xlane.f32.xlu0 %v6950
        %v6952 = vpop.xlane.xlu0 %6951
        %v6953 = vsel %vm6437, %v6935, 0.0
        %6954 = vadd.xlane.f32.xlu0 %v6953
        %v6955 = vpop.xlane.xlu0 %6954
        %v6956 = vsel %vm6437, %v6936, 0.0
        %6957 = vadd.xlane.f32.xlu0 %v6956
        %v6958 = vpop.xlane.xlu0 %6957
        %v6959 = vsel %vm6437, %v6937, 0.0
        %6960 = vadd.xlane.f32.xlu0 %v6959
        %v6961 = vpop.xlane.xlu0 %6960
        %v6962 = vsel %vm6437, %v6938, 0.0
        %6963 = vadd.xlane.f32.xlu0 %v6962
        %v6964 = vpop.xlane.xlu0 %6963
        %v6965 = vsel %vm6437, %v6939, 0.0
        %6966 = vadd.xlane.f32.xlu0 %v6965
        %v6967 = vpop.xlane.xlu0 %6966
        %v6968 = vsel %vm6437, %v6940, 0.0
        %6969 = vadd.xlane.f32.xlu0 %v6968
        %v6970 = vpop.xlane.xlu0 %6969
        %v6971 = vsel %vm6437, %v6941, 0.0
        %6972 = vadd.xlane.f32.xlu0 %v6971
        %v6973 = vpop.xlane.xlu0 %6972
        %v6974 = vsel %vm6437, %v6942, 0.0
        %6975 = vadd.xlane.f32.xlu0 %v6974
        %v6976 = vpop.xlane.xlu0 %6975
        %v6977 = vsel %vm6437, %v6943, 0.0
        %6978 = vadd.xlane.f32.xlu0 %v6977
        %v6979 = vpop.xlane.xlu0 %6978
        %v6980 = vsel %vm6437, %v6944, 0.0
        %6981 = vadd.xlane.f32.xlu0 %v6980
        %v6982 = vpop.xlane.xlu0 %6981
        %v6983 = vsel %vm6437, %v6945, 0.0
        %6984 = vadd.xlane.f32.xlu0 %v6983
        %v6985 = vpop.xlane.xlu0 %6984
        %v6986 = vsel %vm6437, %v6946, 0.0
        %6987 = vadd.xlane.f32.xlu0 %v6986
        %v6988 = vpop.xlane.xlu0 %6987
        %v6989 = vsel %vm6437, %v6947, 0.0
        %6990 = vadd.xlane.f32.xlu0 %v6989
        %v6991 = vpop.xlane.xlu0 %6990
        %v6992 = vsel %vm6437, %v6948, 0.0
        %6993 = vadd.xlane.f32.xlu0 %v6992
        %v6994 = vpop.xlane.xlu0 %6993
        %v6995 = vsel %vm6437, %v6949, 0.0
        %6996 = vadd.xlane.f32.xlu0 %v6995
        %v6997 = vpop.xlane.xlu0 %6996
        %v7014 = vlaneseq
        %v7015 = vshrl.u32 %v7014, 7
        %v7016 = vsub.s32 %v6403, %v7015
        %v7017 = vrot.slane %v6952, %v7016
        %v7018 = vlaneseq
        %v7019 = vshrl.u32 %v7018, 7
        %v7020 = vsub.s32 %v6825, %v7019
        %v7021 = vrot.slane %v6955, %v7020
        %v7022 = vsel %vm6830, %v7021, %v7017
        %v7023 = vlaneseq
        %v7024 = vshrl.u32 %v7023, 7
        %v7025 = vsub.s32 %v6832, %v7024
        %v7026 = vrot.slane %v6958, %v7025
        %v7027 = vsel %vm6837, %v7026, %v7022
        %v7028 = vlaneseq
        %v7029 = vshrl.u32 %v7028, 7
        %v7030 = vsub.s32 %v6839, %v7029
        %v7031 = vrot.slane %v6961, %v7030
        %v7032 = vsel %vm6844, %v7031, %v7027
        %v7033 = vlaneseq
        %v7034 = vshrl.u32 %v7033, 7
        %v7035 = vsub.s32 %v6846, %v7034
        %v7036 = vrot.slane %v6964, %v7035
        %v7037 = vsel %vm6851, %v7036, %v7032
        %v7038 = vlaneseq
        %v7039 = vshrl.u32 %v7038, 7
        %v7040 = vsub.s32 %v6853, %v7039
        %v7041 = vrot.slane %v6967, %v7040
        %v7042 = vsel %vm6858, %v7041, %v7037
        %v7043 = vlaneseq
        %v7044 = vshrl.u32 %v7043, 7
        %v7045 = vsub.s32 %v6860, %v7044
        %v7046 = vrot.slane %v6970, %v7045
        %v7047 = vsel %vm6865, %v7046, %v7042
        %v7048 = vlaneseq
        %v7049 = vshrl.u32 %v7048, 7
        %v7050 = vsub.s32 %v6867, %v7049
        %v7051 = vrot.slane %v6973, %v7050
        %v7052 = vsel %vm6872, %v7051, %v7047
        %v7053 = vlaneseq
        %v7054 = vshrl.u32 %v7053, 7
        %v7055 = vsub.s32 %v6403, %v7054
        %v7056 = vrot.slane %v6976, %v7055
        %v7057 = vlaneseq
        %v7058 = vshrl.u32 %v7057, 7
        %v7059 = vsub.s32 %v6825, %v7058
        %v7060 = vrot.slane %v6979, %v7059
        %v7061 = vsel %vm6830, %v7060, %v7056
        %v7062 = vlaneseq
        %v7063 = vshrl.u32 %v7062, 7
        %v7064 = vsub.s32 %v6832, %v7063
        %v7065 = vrot.slane %v6982, %v7064
        %v7066 = vsel %vm6837, %v7065, %v7061
        %v7067 = vlaneseq
        %v7068 = vshrl.u32 %v7067, 7
        %v7069 = vsub.s32 %v6839, %v7068
        %v7070 = vrot.slane %v6985, %v7069
        %v7071 = vsel %vm6844, %v7070, %v7066
        %v7072 = vlaneseq
        %v7073 = vshrl.u32 %v7072, 7
        %v7074 = vsub.s32 %v6846, %v7073
        %v7075 = vrot.slane %v6988, %v7074
        %v7076 = vsel %vm6851, %v7075, %v7071
        %v7077 = vlaneseq
        %v7078 = vshrl.u32 %v7077, 7
        %v7079 = vsub.s32 %v6853, %v7078
        %v7080 = vrot.slane %v6991, %v7079
        %v7081 = vsel %vm6858, %v7080, %v7076
        %v7082 = vlaneseq
        %v7083 = vshrl.u32 %v7082, 7
        %v7084 = vsub.s32 %v6860, %v7083
        %v7085 = vrot.slane %v6994, %v7084
        %v7086 = vsel %vm6865, %v7085, %v7081
        %v7087 = vlaneseq
        %v7088 = vshrl.u32 %v7087, 7
        %v7089 = vsub.s32 %v6867, %v7088
        %v7090 = vrot.slane %v6997, %v7089
        %v7091 = vsel %vm6872, %v7090, %v7086
        %v7092 = vsel %vm6913, %v7091, %v7052
        %v7094 = vsel %vm6916, %v7092, 0.0
        %7095 = vadd.xlane.f32.xlu0 %v7094
        %v7096 = vpop.xlane.xlu0 %7095
        %vm7097 = vcmp.eq.s32.totalorder %v6403, 1
        %v7098 = vsel %vm7097, 1, 0
        %vm7099 = vcmp.eq.s32.totalorder %v7098, 1
        %v7100 = vsel %vm7099, %v7096, 0.0
        %v7101 = vadd.f32 %v6924, %v7100
        %s7102 = scalar_lea.vmem %s4, 128
        %v7103 = vld [vmem:[%s7102] sm:$0xff]
        %v7104 = vld [vmem:[%s7102 + $0x8] sm:$0xff]
        %v7105 = vld [vmem:[%s7102 + $0x10] sm:$0xff]
        %v7106 = vld [vmem:[%s7102 + $0x18] sm:$0xff]
        %v7107 = vld [vmem:[%s7102 + $0x20] sm:$0xff]
        %v7108 = vld [vmem:[%s7102 + $0x28] sm:$0xff]
        %v7109 = vld [vmem:[%s7102 + $0x30] sm:$0xff]
        %v7110 = vld [vmem:[%s7102 + $0x38] sm:$0xff]
        %v7111 = vmul.f32 %v6717, %v7103
        %v7112 = vmul.f32 %v6718, %v7104
        %v7113 = vmul.f32 %v6719, %v7105
        %v7114 = vmul.f32 %v6720, %v7106
        %v7115 = vmul.f32 %v6721, %v7107
        %v7116 = vmul.f32 %v6722, %v7108
        %v7117 = vmul.f32 %v6723, %v7109
        %v7118 = vmul.f32 %v6724, %v7110
        %v7119 = vmul.f32 %v6725, %v7103
        %v7120 = vmul.f32 %v6726, %v7104
        %v7121 = vmul.f32 %v6727, %v7105
        %v7122 = vmul.f32 %v6728, %v7106
        %v7123 = vmul.f32 %v6729, %v7107
        %v7124 = vmul.f32 %v6730, %v7108
        %v7125 = vmul.f32 %v6731, %v7109
        %v7126 = vmul.f32 %v6732, %v7110
        %v7127 = vsel %vm6437, %v7111, 0.0
        %7128 = vadd.xlane.f32.xlu0 %v7127
        %v7129 = vpop.xlane.xlu0 %7128
        %v7130 = vsel %vm6437, %v7112, 0.0
        %7131 = vadd.xlane.f32.xlu0 %v7130
        %v7132 = vpop.xlane.xlu0 %7131
        %v7133 = vsel %vm6437, %v7113, 0.0
        %7134 = vadd.xlane.f32.xlu0 %v7133
        %v7135 = vpop.xlane.xlu0 %7134
        %v7136 = vsel %vm6437, %v7114, 0.0
        %7137 = vadd.xlane.f32.xlu0 %v7136
        %v7138 = vpop.xlane.xlu0 %7137
        %v7139 = vsel %vm6437, %v7115, 0.0
        %7140 = vadd.xlane.f32.xlu0 %v7139
        %v7141 = vpop.xlane.xlu0 %7140
        %v7142 = vsel %vm6437, %v7116, 0.0
        %7143 = vadd.xlane.f32.xlu0 %v7142
        %v7144 = vpop.xlane.xlu0 %7143
        %v7145 = vsel %vm6437, %v7117, 0.0
        %7146 = vadd.xlane.f32.xlu0 %v7145
        %v7147 = vpop.xlane.xlu0 %7146
        %v7148 = vsel %vm6437, %v7118, 0.0
        %7149 = vadd.xlane.f32.xlu0 %v7148
        %v7150 = vpop.xlane.xlu0 %7149
        %v7151 = vsel %vm6437, %v7119, 0.0
        %7152 = vadd.xlane.f32.xlu0 %v7151
        %v7153 = vpop.xlane.xlu0 %7152
        %v7154 = vsel %vm6437, %v7120, 0.0
        %7155 = vadd.xlane.f32.xlu0 %v7154
        %v7156 = vpop.xlane.xlu0 %7155
        %v7157 = vsel %vm6437, %v7121, 0.0
        %7158 = vadd.xlane.f32.xlu0 %v7157
        %v7159 = vpop.xlane.xlu0 %7158
        %v7160 = vsel %vm6437, %v7122, 0.0
        %7161 = vadd.xlane.f32.xlu0 %v7160
        %v7162 = vpop.xlane.xlu0 %7161
        %v7163 = vsel %vm6437, %v7123, 0.0
        %7164 = vadd.xlane.f32.xlu0 %v7163
        %v7165 = vpop.xlane.xlu0 %7164
        %v7166 = vsel %vm6437, %v7124, 0.0
        %7167 = vadd.xlane.f32.xlu0 %v7166
        %v7168 = vpop.xlane.xlu0 %7167
        %v7169 = vsel %vm6437, %v7125, 0.0
        %7170 = vadd.xlane.f32.xlu0 %v7169
        %v7171 = vpop.xlane.xlu0 %7170
        %v7172 = vsel %vm6437, %v7126, 0.0
        %7173 = vadd.xlane.f32.xlu0 %v7172
        %v7174 = vpop.xlane.xlu0 %7173
        %v7191 = vlaneseq
        %v7192 = vshrl.u32 %v7191, 7
        %v7193 = vsub.s32 %v6403, %v7192
        %v7194 = vrot.slane %v7129, %v7193
        %v7195 = vlaneseq
        %v7196 = vshrl.u32 %v7195, 7
        %v7197 = vsub.s32 %v6825, %v7196
        %v7198 = vrot.slane %v7132, %v7197
        %v7199 = vsel %vm6830, %v7198, %v7194
        %v7200 = vlaneseq
        %v7201 = vshrl.u32 %v7200, 7
        %v7202 = vsub.s32 %v6832, %v7201
        %v7203 = vrot.slane %v7135, %v7202
        %v7204 = vsel %vm6837, %v7203, %v7199
        %v7205 = vlaneseq
        %v7206 = vshrl.u32 %v7205, 7
        %v7207 = vsub.s32 %v6839, %v7206
        %v7208 = vrot.slane %v7138, %v7207
        %v7209 = vsel %vm6844, %v7208, %v7204
        %v7210 = vlaneseq
        %v7211 = vshrl.u32 %v7210, 7
        %v7212 = vsub.s32 %v6846, %v7211
        %v7213 = vrot.slane %v7141, %v7212
        %v7214 = vsel %vm6851, %v7213, %v7209
        %v7215 = vlaneseq
        %v7216 = vshrl.u32 %v7215, 7
        %v7217 = vsub.s32 %v6853, %v7216
        %v7218 = vrot.slane %v7144, %v7217
        %v7219 = vsel %vm6858, %v7218, %v7214
        %v7220 = vlaneseq
        %v7221 = vshrl.u32 %v7220, 7
        %v7222 = vsub.s32 %v6860, %v7221
        %v7223 = vrot.slane %v7147, %v7222
        %v7224 = vsel %vm6865, %v7223, %v7219
        %v7225 = vlaneseq
        %v7226 = vshrl.u32 %v7225, 7
        %v7227 = vsub.s32 %v6867, %v7226
        %v7228 = vrot.slane %v7150, %v7227
        %v7229 = vsel %vm6872, %v7228, %v7224
        %v7230 = vlaneseq
        %v7231 = vshrl.u32 %v7230, 7
        %v7232 = vsub.s32 %v6403, %v7231
        %v7233 = vrot.slane %v7153, %v7232
        %v7234 = vlaneseq
        %v7235 = vshrl.u32 %v7234, 7
        %v7236 = vsub.s32 %v6825, %v7235
        %v7237 = vrot.slane %v7156, %v7236
        %v7238 = vsel %vm6830, %v7237, %v7233
        %v7239 = vlaneseq
        %v7240 = vshrl.u32 %v7239, 7
        %v7241 = vsub.s32 %v6832, %v7240
        %v7242 = vrot.slane %v7159, %v7241
        %v7243 = vsel %vm6837, %v7242, %v7238
        %v7244 = vlaneseq
        %v7245 = vshrl.u32 %v7244, 7
        %v7246 = vsub.s32 %v6839, %v7245
        %v7247 = vrot.slane %v7162, %v7246
        %v7248 = vsel %vm6844, %v7247, %v7243
        %v7249 = vlaneseq
        %v7250 = vshrl.u32 %v7249, 7
        %v7251 = vsub.s32 %v6846, %v7250
        %v7252 = vrot.slane %v7165, %v7251
        %v7253 = vsel %vm6851, %v7252, %v7248
        %v7254 = vlaneseq
        %v7255 = vshrl.u32 %v7254, 7
        %v7256 = vsub.s32 %v6853, %v7255
        %v7257 = vrot.slane %v7168, %v7256
        %v7258 = vsel %vm6858, %v7257, %v7253
        %v7259 = vlaneseq
        %v7260 = vshrl.u32 %v7259, 7
        %v7261 = vsub.s32 %v6860, %v7260
        %v7262 = vrot.slane %v7171, %v7261
        %v7263 = vsel %vm6865, %v7262, %v7258
        %v7264 = vlaneseq
        %v7265 = vshrl.u32 %v7264, 7
        %v7266 = vsub.s32 %v6867, %v7265
        %v7267 = vrot.slane %v7174, %v7266
        %v7268 = vsel %vm6872, %v7267, %v7263
        %v7269 = vsel %vm6913, %v7268, %v7229
        %v7271 = vsel %vm6916, %v7269, 0.0
        %7272 = vadd.xlane.f32.xlu0 %v7271
        %v7273 = vpop.xlane.xlu0 %7272
        %vm7274 = vcmp.eq.s32.totalorder %v6403, 2
        %v7275 = vsel %vm7274, 1, 0
        %vm7276 = vcmp.eq.s32.totalorder %v7275, 1
        %v7277 = vsel %vm7276, %v7273, 0.0
        %v7278 = vadd.f32 %v7101, %v7277
        %v7279 = vld [vmem:[%s5] sm:$0x1]
        %v7281 = vlaneseq
        %v7282 = vshrl.u32 %v7281, 7
        %v7283 = vsub.s32 0, %v7282
        %v7284 = vrot.slane %v7279, %v7283
        %v7286 = vadd.f32 %v7278, %v7284
        %v7287 = vmax.f32 %v7286, 0.0
        %vm7288 = vcmask 58368
        %7289 = vst.msk [vmem:[%s247] sm:$0x3] %vm7288, %v7287
        %s7290 = sand.u32 %s159, 1
        %s7291 = scalar_lea.sflag [#allocation3], %s7290
        %s7292 = sand.u32 %s159, 1
        %s7293 = smul.addr %s7292, 2
        %s7294 = scalar_lea.vmem [#allocation2], %s7293
        // Predicated region
        $region45: #{tpu_custom_call.1} parent=43 // pred_check
          %p7295 = pneg %p169
        $region46: #{tpu_custom_call.1} parent=43 // pred_check_branch
          %7297 = sbr.rel (%p7295) target = $region48
        $region47: #{tpu_custom_call.1} parent=43 // pred_region
          %s7299 = ssub.s32 32, 32
          %7300 = vsyncadd %s7291, %s7299
          %s7301 = smul.addr %s20, 32
          %s7302 = scalar_lea.hbm %s6, %s7301
          %s7304 = sshll.u32 %s7294, 4
          %s7305 = int_to_ptr.vmem [resolvable:$true] %s7304
          %7307 = dma.vmem_to_hbm [thread:$0]  %s7305, 32, %s7302, %s7291
        $region48: #{tpu_custom_call.1} parent=43 // pred_fallthru
          _
      $region44: #{tpu_custom_call.1} parent=5 // pred_fallthru
        _
      %p7308 = scmp.le.s32.totalorder 2, %s15
      // Predicated region
      $region49: #{tpu_custom_call.1} parent=5 // pred_check
        %p7309 = pneg %p7308
      $region50: #{tpu_custom_call.1} parent=5 // pred_check_branch
        %7311 = sbr.rel (%p7309) target = $region52
      $region51: #{tpu_custom_call.1} parent=5 // pred_region
        %s7312 = ssub.s32 %s15, 2
        // Predicated region
        $region53: #{tpu_custom_call.1} parent=51 // pred_check
          %p7313 = pneg %p175
        $region54: #{tpu_custom_call.1} parent=51 // pred_check_branch
          %7315 = sbr.rel (%p7313) target = $region56
        $region55: #{tpu_custom_call.1} parent=51 // pred_region
          %s7316 = sand.u32 %s160, 1
          %s7317 = scalar_lea.sflag [#allocation3], %s7316
          %s7318 = sand.u32 %s160, 1
          %s7319 = smul.addr %s7318, 2
          %s7320 = scalar_lea.vmem [#allocation2], %s7319
          %7321 = dma.done %s7317, 32
        $region56: #{tpu_custom_call.1} parent=51 // pred_fallthru
          _
      $region52: #{tpu_custom_call.1} parent=5 // pred_fallthru
        _
    $region6: #{tpu_custom_call.1} parent=1 // loop_footer
      %s19 = sadd.s32 1, %s15
    $region7: #{tpu_custom_call.1} parent=1 // loop_footer_branch
      %14 = sbr.rel target = $region3
    $region8: #{tpu_custom_call.1} parent=1 // loop_exit
      _
    %7322 = vsyncpa [#allocation3], 1
    %s7323 = scalar_lea.sflag [#allocation3], 1
    %7324 = vsyncpa %s7323, 1

</llo_original>
